<compile_context>
chip_gen: v5e
topology: v5e:2x2
jax: 0.10.0
libtpu: 0.0.40
codegen_flags: <defaults>
</compile_context>

<pallas_src>
import jax
import jax.numpy as jnp
from jax import lax
from jax.experimental import pallas as pl
from jax.experimental.pallas import tpu as pltpu

K = 3  # kernel size for both convs


def _make_fused_kernel(N, Cin, H, W, C1, C2):
    """Fused conv1 -> pad -> conv2 -> tanh-GELU kernel (stride 1, VALID)."""
    H1, W1 = H - K + 1, W - K + 1                    # conv1 output (14,14)
    Hp, Wp = H1 + 2 * (K - 1), W1 + 2 * (K - 1)      # padded v1    (18,18)
    # conv2 (VALID on padded v1) output is (Hp-K+1, Wp-K+1) == (H, W)

    def kernel(x_ref, w1_ref, b1_ref, w2_ref, b2_ref, o_ref, v1pad_ref):
        # x_ref:     (N, Cin, H, W)   VMEM
        # w1_ref:    (C1*Cin*K*K,)    SMEM   flattened OIHW conv1 weights
        # b1_ref:    (C1,)            SMEM
        # w2_ref:    (C2*C1*K*K,)     SMEM   flattened OIHW *effective* conv2 weights
        # b2_ref:    (C2,)            SMEM
        # o_ref:     (N, C2, H, W)    VMEM
        # v1pad_ref: (C1, N, Hp, Wp)  VMEM scratch (holds zero-padded v1)
        x = x_ref[...]                                # single load of the input

        # ---------------- stage 1: conv1 (VALID, stride 1) ----------------
        # Hoisted slices: each shifted window is materialized once and reused
        # for every output channel.
        acc1 = [jnp.full((N, H1, W1), b1_ref[c], jnp.float32) for c in range(C1)]
        for ci in range(Cin):
            for kh in range(K):
                for kw in range(K):
                    plane = x[:, ci, kh:kh + H1, kw:kw + W1]      # (N, H1, W1)
                    for c in range(C1):
                        w = w1_ref[((c * Cin + ci) * K + kh) * K + kw]
                        acc1[c] = acc1[c] + plane * w

        # ------------- zero-pad v1 inside the VMEM scratch ----------------
        v1pad_ref[...] = jnp.zeros((C1, N, Hp, Wp), jnp.float32)
        for c in range(C1):
            v1pad_ref[c, :, K - 1:K - 1 + H1, K - 1:K - 1 + W1] = acc1[c]
        v1p = v1pad_ref[...]                          # (C1, N, Hp, Wp)

        # ------ stage 2: conv2 (ConvTranspose2d as flipped VALID conv) ----
        acc2 = [jnp.full((N, H, W), b2_ref[c], jnp.float32) for c in range(C2)]
        for c1 in range(C1):
            for kh in range(K):
                for kw in range(K):
                    plane = v1p[c1, :, kh:kh + H, kw:kw + W]      # (N, H, W)
                    for c in range(C2):
                        w = w2_ref[((c * C1 + c1) * K + kh) * K + kw]
                        acc2[c] = acc2[c] + plane * w

        # --------------------- fused tanh-GELU tail -----------------------
        for c in range(C2):
            v2 = acc2[c]
            v7 = v2 + (v2 * v2 * v2) * 0.044715
            v9 = jnp.tanh(v7 * 0.7978845608028654)
            o_ref[:, c, :, :] = ((v2 * 0.5) * (v9 + 1.0)).astype(o_ref.dtype)

    return kernel


def prepare_params(w1, b1, w2t, b2):
    """One-time parameter prep (outside the hot path).

    w1:  Conv2d weight          (C1, Cin, K, K)  OIHW
    w2t: ConvTranspose2d weight (C1, C2,  K, K)  IOHW
    ConvTranspose2d with stride=1, padding=0 equals a VALID conv of the
    zero-padded input with the channel-swapped, spatially flipped kernel.
    """
    eff_w2 = jnp.flip(jnp.transpose(w2t, (1, 0, 2, 3)), axis=(2, 3))   # (C2, C1, K, K)
    return (jnp.asarray(w1, jnp.float32).reshape(-1),
            jnp.asarray(b1, jnp.float32),
            jnp.asarray(eff_w2, jnp.float32).reshape(-1),
            jnp.asarray(b2, jnp.float32))


def model_forward(x, prepped):
    w1f, b1, w2f, b2 = prepped
    N, Cin, H, W = x.shape
    C1 = b1.shape[0]
    C2 = b2.shape[0]
    H1, W1 = H - K + 1, W - K + 1
    Hp, Wp = H1 + 2 * (K - 1), W1 + 2 * (K - 1)

    kernel = _make_fused_kernel(N, Cin, H, W, C1, C2)
    return pl.pallas_call(
        kernel,
        out_shape=jax.ShapeDtypeStruct((N, C2, H, W), jnp.float32),
        grid_spec=pltpu.PrefetchScalarGridSpec(
            num_scalar_prefetch=0,
            grid=(1,),                     # whole (tiny) problem in one grid step
            in_specs=[
                pl.BlockSpec((N, Cin, H, W), lambda i: (0, 0, 0, 0)),
                pl.BlockSpec(memory_space=pltpu.MemorySpace.SMEM),
                pl.BlockSpec(memory_space=pltpu.MemorySpace.SMEM),
                pl.BlockSpec(memory_space=pltpu.MemorySpace.SMEM),
                pl.BlockSpec(memory_space=pltpu.MemorySpace.SMEM),
            ],
            out_specs=pl.BlockSpec((N, C2, H, W), lambda i: (0, 0, 0, 0)),
            scratch_shapes=[pltpu.VMEM((C1, N, Hp, Wp), jnp.float32)],
        ),
        compiler_params=pltpu.CompilerParams(
            dimension_semantics=("arbitrary",)),
    )(x.astype(jnp.float32), w1f, b1, w2f, b2)


if __name__ == "__main__":
    key = jax.random.PRNGKey(0)
    k = jax.random.split(key, 5)

    # Small shapes consistent with the module (Conv2d requires 2 input channels).
    N, Cin, H, W = 2, 2, 16, 16
    C1, C2 = 5, 4

    x = jax.random.normal(k[0], (N, Cin, H, W), jnp.float32)
    w1 = jax.random.normal(k[1], (C1, Cin, K, K), jnp.float32) * 0.2   # Conv2d   OIHW
    b1 = jax.random.normal(k[2], (C1,), jnp.float32) * 0.1
    w2 = jax.random.normal(k[3], (C1, C2, K, K), jnp.float32) * 0.2    # ConvT    IOHW
    b2 = jax.random.normal(k[4], (C2,), jnp.float32) * 0.1

    prepped = prepare_params(w1, b1, w2, b2)
    out = model_forward(x, prepped)
    out = jax.block_until_ready(out)

    # Pure-JAX reference check
    def ref_valid_conv(xx, ww, bb):
        y = lax.conv_general_dilated(
            xx, ww, (1, 1), "VALID",
            dimension_numbers=("NCHW", "OIHW", "NCHW"))
        return y + bb[None, :, None, None]

    v1_ref = ref_valid_conv(x, w1, b1)
    eff = jnp.flip(jnp.transpose(w2, (1, 0, 2, 3)), axis=(2, 3))
    v2_ref = ref_valid_conv(
        jnp.pad(v1_ref, ((0, 0), (0, 0), (K - 1, K - 1), (K - 1, K - 1))), eff, b2)
    out_ref = (v2_ref * 0.5) * (
        jnp.tanh((v2_ref + 0.044715 * v2_ref ** 3) * 0.7978845608028654) + 1.0)

    assert out.shape == (N, C2, H, W), out.shape
    assert jnp.allclose(out, out_ref, atol=1e-4, rtol=1e-4), (
        float(jnp.max(jnp.abs(out - out_ref))))
    print("KERNEL_OK")
</pallas_src>

<mosaic_0001>
module attributes {stable_mosaic.version = 11 : i64} {
  func.func @kernel(%arg0: i32, %arg1: memref<2x2x16x16xf32, #tpu.memory_space<vmem>>, %arg2: memref<90xf32, #tpu.memory_space<smem>>, %arg3: memref<5xf32, #tpu.memory_space<smem>>, %arg4: memref<180xf32, #tpu.memory_space<smem>>, %arg5: memref<4xf32, #tpu.memory_space<smem>>, %arg6: memref<2x4x16x16xf32, #tpu.memory_space<vmem>>, %arg7: memref<5x2x18x18xf32, #tpu.memory_space<vmem>>) attributes {dimension_semantics = [#tpu.dimension_semantics<arbitrary>], iteration_bounds = array<i64: 1>, scalar_prefetch = 0 : i64, scratch_operands = 1 : i64, tpu.core_type = #tpu.core_type<tc>, window_params = [{pipeline_mode = #tpu.pipeline_mode<synchronous>, transform_indices = @transform_0, window_bounds = array<i64: 2, 2, 16, 16>}, {transform_indices = @transform_1, window_bounds = array<i64: 90>}, {transform_indices = @transform_2, window_bounds = array<i64: 5>}, {transform_indices = @transform_3, window_bounds = array<i64: 180>}, {transform_indices = @transform_4, window_bounds = array<i64: 4>}, {pipeline_mode = #tpu.pipeline_mode<synchronous>, transform_indices = @transform_5, window_bounds = array<i64: 2, 4, 16, 16>}]} {
    %c0 = arith.constant 0 : index
    %c0_0 = arith.constant 0 : index
    %c0_1 = arith.constant 0 : index
    %c0_2 = arith.constant 0 : index
    %0 = vector.load %arg1[%c0, %c0_0, %c0_1, %c0_2] : memref<2x2x16x16xf32, #tpu.memory_space<vmem>>, vector<2x2x16x16xf32>
    %c0_3 = arith.constant 0 : index
    %1 = memref.load %arg3[%c0_3] : memref<5xf32, #tpu.memory_space<smem>>
    %2 = vector.broadcast %1 : f32 to vector<2x14x14xf32>
    %c1 = arith.constant 1 : index
    %3 = memref.load %arg3[%c1] : memref<5xf32, #tpu.memory_space<smem>>
    %4 = vector.broadcast %3 : f32 to vector<2x14x14xf32>
    %c2 = arith.constant 2 : index
    %5 = memref.load %arg3[%c2] : memref<5xf32, #tpu.memory_space<smem>>
    %6 = vector.broadcast %5 : f32 to vector<2x14x14xf32>
    %c3 = arith.constant 3 : index
    %7 = memref.load %arg3[%c3] : memref<5xf32, #tpu.memory_space<smem>>
    %8 = vector.broadcast %7 : f32 to vector<2x14x14xf32>
    %c4 = arith.constant 4 : index
    %9 = memref.load %arg3[%c4] : memref<5xf32, #tpu.memory_space<smem>>
    %10 = vector.broadcast %9 : f32 to vector<2x14x14xf32>
    %11 = vector.extract_strided_slice %0 {offsets = [0, 0, 0, 0], sizes = [2, 1, 14, 14], strides = [1, 1, 1, 1]} : vector<2x2x16x16xf32> to vector<2x1x14x14xf32>
    %12 = vector.shape_cast %11 : vector<2x1x14x14xf32> to vector<2x14x14xf32>
    %c0_4 = arith.constant 0 : index
    %13 = memref.load %arg2[%c0_4] : memref<90xf32, #tpu.memory_space<smem>>
    %14 = vector.broadcast %13 : f32 to vector<2x14x14xf32>
    %15 = arith.mulf %12, %14 : vector<2x14x14xf32>
    %16 = arith.addf %2, %15 : vector<2x14x14xf32>
    %c18 = arith.constant 18 : index
    %17 = memref.load %arg2[%c18] : memref<90xf32, #tpu.memory_space<smem>>
    %18 = vector.broadcast %17 : f32 to vector<2x14x14xf32>
    %19 = arith.mulf %12, %18 : vector<2x14x14xf32>
    %20 = arith.addf %4, %19 : vector<2x14x14xf32>
    %c36 = arith.constant 36 : index
    %21 = memref.load %arg2[%c36] : memref<90xf32, #tpu.memory_space<smem>>
    %22 = vector.broadcast %21 : f32 to vector<2x14x14xf32>
    %23 = arith.mulf %12, %22 : vector<2x14x14xf32>
    %24 = arith.addf %6, %23 : vector<2x14x14xf32>
    %c54 = arith.constant 54 : index
    %25 = memref.load %arg2[%c54] : memref<90xf32, #tpu.memory_space<smem>>
    %26 = vector.broadcast %25 : f32 to vector<2x14x14xf32>
    %27 = arith.mulf %12, %26 : vector<2x14x14xf32>
    %28 = arith.addf %8, %27 : vector<2x14x14xf32>
    %c72 = arith.constant 72 : index
    %29 = memref.load %arg2[%c72] : memref<90xf32, #tpu.memory_space<smem>>
    %30 = vector.broadcast %29 : f32 to vector<2x14x14xf32>
    %31 = arith.mulf %12, %30 : vector<2x14x14xf32>
    %32 = arith.addf %10, %31 : vector<2x14x14xf32>
    %33 = vector.extract_strided_slice %0 {offsets = [0, 0, 0, 1], sizes = [2, 1, 14, 14], strides = [1, 1, 1, 1]} : vector<2x2x16x16xf32> to vector<2x1x14x14xf32>
    %34 = vector.shape_cast %33 : vector<2x1x14x14xf32> to vector<2x14x14xf32>
    %c1_5 = arith.constant 1 : index
    %35 = memref.load %arg2[%c1_5] : memref<90xf32, #tpu.memory_space<smem>>
    %36 = vector.broadcast %35 : f32 to vector<2x14x14xf32>
    %37 = arith.mulf %34, %36 : vector<2x14x14xf32>
    %38 = arith.addf %16, %37 : vector<2x14x14xf32>
    %c19 = arith.constant 19 : index
    %39 = memref.load %arg2[%c19] : memref<90xf32, #tpu.memory_space<smem>>
    %40 = vector.broadcast %39 : f32 to vector<2x14x14xf32>
    %41 = arith.mulf %34, %40 : vector<2x14x14xf32>
    %42 = arith.addf %20, %41 : vector<2x14x14xf32>
    %c37 = arith.constant 37 : index
    %43 = memref.load %arg2[%c37] : memref<90xf32, #tpu.memory_space<smem>>
    %44 = vector.broadcast %43 : f32 to vector<2x14x14xf32>
    %45 = arith.mulf %34, %44 : vector<2x14x14xf32>
    %46 = arith.addf %24, %45 : vector<2x14x14xf32>
    %c55 = arith.constant 55 : index
    %47 = memref.load %arg2[%c55] : memref<90xf32, #tpu.memory_space<smem>>
    %48 = vector.broadcast %47 : f32 to vector<2x14x14xf32>
    %49 = arith.mulf %34, %48 : vector<2x14x14xf32>
    %50 = arith.addf %28, %49 : vector<2x14x14xf32>
    %c73 = arith.constant 73 : index
    %51 = memref.load %arg2[%c73] : memref<90xf32, #tpu.memory_space<smem>>
    %52 = vector.broadcast %51 : f32 to vector<2x14x14xf32>
    %53 = arith.mulf %34, %52 : vector<2x14x14xf32>
    %54 = arith.addf %32, %53 : vector<2x14x14xf32>
    %55 = vector.extract_strided_slice %0 {offsets = [0, 0, 0, 2], sizes = [2, 1, 14, 14], strides = [1, 1, 1, 1]} : vector<2x2x16x16xf32> to vector<2x1x14x14xf32>
    %56 = vector.shape_cast %55 : vector<2x1x14x14xf32> to vector<2x14x14xf32>
    %c2_6 = arith.constant 2 : index
    %57 = memref.load %arg2[%c2_6] : memref<90xf32, #tpu.memory_space<smem>>
    %58 = vector.broadcast %57 : f32 to vector<2x14x14xf32>
    %59 = arith.mulf %56, %58 : vector<2x14x14xf32>
    %60 = arith.addf %38, %59 : vector<2x14x14xf32>
    %c20 = arith.constant 20 : index
    %61 = memref.load %arg2[%c20] : memref<90xf32, #tpu.memory_space<smem>>
    %62 = vector.broadcast %61 : f32 to vector<2x14x14xf32>
    %63 = arith.mulf %56, %62 : vector<2x14x14xf32>
    %64 = arith.addf %42, %63 : vector<2x14x14xf32>
    %c38 = arith.constant 38 : index
    %65 = memref.load %arg2[%c38] : memref<90xf32, #tpu.memory_space<smem>>
    %66 = vector.broadcast %65 : f32 to vector<2x14x14xf32>
    %67 = arith.mulf %56, %66 : vector<2x14x14xf32>
    %68 = arith.addf %46, %67 : vector<2x14x14xf32>
    %c56 = arith.constant 56 : index
    %69 = memref.load %arg2[%c56] : memref<90xf32, #tpu.memory_space<smem>>
    %70 = vector.broadcast %69 : f32 to vector<2x14x14xf32>
    %71 = arith.mulf %56, %70 : vector<2x14x14xf32>
    %72 = arith.addf %50, %71 : vector<2x14x14xf32>
    %c74 = arith.constant 74 : index
    %73 = memref.load %arg2[%c74] : memref<90xf32, #tpu.memory_space<smem>>
    %74 = vector.broadcast %73 : f32 to vector<2x14x14xf32>
    %75 = arith.mulf %56, %74 : vector<2x14x14xf32>
    %76 = arith.addf %54, %75 : vector<2x14x14xf32>
    %77 = vector.extract_strided_slice %0 {offsets = [0, 0, 1, 0], sizes = [2, 1, 14, 14], strides = [1, 1, 1, 1]} : vector<2x2x16x16xf32> to vector<2x1x14x14xf32>
    %78 = vector.shape_cast %77 : vector<2x1x14x14xf32> to vector<2x14x14xf32>
    %c3_7 = arith.constant 3 : index
    %79 = memref.load %arg2[%c3_7] : memref<90xf32, #tpu.memory_space<smem>>
    %80 = vector.broadcast %79 : f32 to vector<2x14x14xf32>
    %81 = arith.mulf %78, %80 : vector<2x14x14xf32>
    %82 = arith.addf %60, %81 : vector<2x14x14xf32>
    %c21 = arith.constant 21 : index
    %83 = memref.load %arg2[%c21] : memref<90xf32, #tpu.memory_space<smem>>
    %84 = vector.broadcast %83 : f32 to vector<2x14x14xf32>
    %85 = arith.mulf %78, %84 : vector<2x14x14xf32>
    %86 = arith.addf %64, %85 : vector<2x14x14xf32>
    %c39 = arith.constant 39 : index
    %87 = memref.load %arg2[%c39] : memref<90xf32, #tpu.memory_space<smem>>
    %88 = vector.broadcast %87 : f32 to vector<2x14x14xf32>
    %89 = arith.mulf %78, %88 : vector<2x14x14xf32>
    %90 = arith.addf %68, %89 : vector<2x14x14xf32>
    %c57 = arith.constant 57 : index
    %91 = memref.load %arg2[%c57] : memref<90xf32, #tpu.memory_space<smem>>
    %92 = vector.broadcast %91 : f32 to vector<2x14x14xf32>
    %93 = arith.mulf %78, %92 : vector<2x14x14xf32>
    %94 = arith.addf %72, %93 : vector<2x14x14xf32>
    %c75 = arith.constant 75 : index
    %95 = memref.load %arg2[%c75] : memref<90xf32, #tpu.memory_space<smem>>
    %96 = vector.broadcast %95 : f32 to vector<2x14x14xf32>
    %97 = arith.mulf %78, %96 : vector<2x14x14xf32>
    %98 = arith.addf %76, %97 : vector<2x14x14xf32>
    %99 = vector.extract_strided_slice %0 {offsets = [0, 0, 1, 1], sizes = [2, 1, 14, 14], strides = [1, 1, 1, 1]} : vector<2x2x16x16xf32> to vector<2x1x14x14xf32>
    %100 = vector.shape_cast %99 : vector<2x1x14x14xf32> to vector<2x14x14xf32>
    %c4_8 = arith.constant 4 : index
    %101 = memref.load %arg2[%c4_8] : memref<90xf32, #tpu.memory_space<smem>>
    %102 = vector.broadcast %101 : f32 to vector<2x14x14xf32>
    %103 = arith.mulf %100, %102 : vector<2x14x14xf32>
    %104 = arith.addf %82, %103 : vector<2x14x14xf32>
    %c22 = arith.constant 22 : index
    %105 = memref.load %arg2[%c22] : memref<90xf32, #tpu.memory_space<smem>>
    %106 = vector.broadcast %105 : f32 to vector<2x14x14xf32>
    %107 = arith.mulf %100, %106 : vector<2x14x14xf32>
    %108 = arith.addf %86, %107 : vector<2x14x14xf32>
    %c40 = arith.constant 40 : index
    %109 = memref.load %arg2[%c40] : memref<90xf32, #tpu.memory_space<smem>>
    %110 = vector.broadcast %109 : f32 to vector<2x14x14xf32>
    %111 = arith.mulf %100, %110 : vector<2x14x14xf32>
    %112 = arith.addf %90, %111 : vector<2x14x14xf32>
    %c58 = arith.constant 58 : index
    %113 = memref.load %arg2[%c58] : memref<90xf32, #tpu.memory_space<smem>>
    %114 = vector.broadcast %113 : f32 to vector<2x14x14xf32>
    %115 = arith.mulf %100, %114 : vector<2x14x14xf32>
    %116 = arith.addf %94, %115 : vector<2x14x14xf32>
    %c76 = arith.constant 76 : index
    %117 = memref.load %arg2[%c76] : memref<90xf32, #tpu.memory_space<smem>>
    %118 = vector.broadcast %117 : f32 to vector<2x14x14xf32>
    %119 = arith.mulf %100, %118 : vector<2x14x14xf32>
    %120 = arith.addf %98, %119 : vector<2x14x14xf32>
    %121 = vector.extract_strided_slice %0 {offsets = [0, 0, 1, 2], sizes = [2, 1, 14, 14], strides = [1, 1, 1, 1]} : vector<2x2x16x16xf32> to vector<2x1x14x14xf32>
    %122 = vector.shape_cast %121 : vector<2x1x14x14xf32> to vector<2x14x14xf32>
    %c5 = arith.constant 5 : index
    %123 = memref.load %arg2[%c5] : memref<90xf32, #tpu.memory_space<smem>>
    %124 = vector.broadcast %123 : f32 to vector<2x14x14xf32>
    %125 = arith.mulf %122, %124 : vector<2x14x14xf32>
    %126 = arith.addf %104, %125 : vector<2x14x14xf32>
    %c23 = arith.constant 23 : index
    %127 = memref.load %arg2[%c23] : memref<90xf32, #tpu.memory_space<smem>>
    %128 = vector.broadcast %127 : f32 to vector<2x14x14xf32>
    %129 = arith.mulf %122, %128 : vector<2x14x14xf32>
    %130 = arith.addf %108, %129 : vector<2x14x14xf32>
    %c41 = arith.constant 41 : index
    %131 = memref.load %arg2[%c41] : memref<90xf32, #tpu.memory_space<smem>>
    %132 = vector.broadcast %131 : f32 to vector<2x14x14xf32>
    %133 = arith.mulf %122, %132 : vector<2x14x14xf32>
    %134 = arith.addf %112, %133 : vector<2x14x14xf32>
    %c59 = arith.constant 59 : index
    %135 = memref.load %arg2[%c59] : memref<90xf32, #tpu.memory_space<smem>>
    %136 = vector.broadcast %135 : f32 to vector<2x14x14xf32>
    %137 = arith.mulf %122, %136 : vector<2x14x14xf32>
    %138 = arith.addf %116, %137 : vector<2x14x14xf32>
    %c77 = arith.constant 77 : index
    %139 = memref.load %arg2[%c77] : memref<90xf32, #tpu.memory_space<smem>>
    %140 = vector.broadcast %139 : f32 to vector<2x14x14xf32>
    %141 = arith.mulf %122, %140 : vector<2x14x14xf32>
    %142 = arith.addf %120, %141 : vector<2x14x14xf32>
    %143 = vector.extract_strided_slice %0 {offsets = [0, 0, 2, 0], sizes = [2, 1, 14, 14], strides = [1, 1, 1, 1]} : vector<2x2x16x16xf32> to vector<2x1x14x14xf32>
    %144 = vector.shape_cast %143 : vector<2x1x14x14xf32> to vector<2x14x14xf32>
    %c6 = arith.constant 6 : index
    %145 = memref.load %arg2[%c6] : memref<90xf32, #tpu.memory_space<smem>>
    %146 = vector.broadcast %145 : f32 to vector<2x14x14xf32>
    %147 = arith.mulf %144, %146 : vector<2x14x14xf32>
    %148 = arith.addf %126, %147 : vector<2x14x14xf32>
    %c24 = arith.constant 24 : index
    %149 = memref.load %arg2[%c24] : memref<90xf32, #tpu.memory_space<smem>>
    %150 = vector.broadcast %149 : f32 to vector<2x14x14xf32>
    %151 = arith.mulf %144, %150 : vector<2x14x14xf32>
    %152 = arith.addf %130, %151 : vector<2x14x14xf32>
    %c42 = arith.constant 42 : index
    %153 = memref.load %arg2[%c42] : memref<90xf32, #tpu.memory_space<smem>>
    %154 = vector.broadcast %153 : f32 to vector<2x14x14xf32>
    %155 = arith.mulf %144, %154 : vector<2x14x14xf32>
    %156 = arith.addf %134, %155 : vector<2x14x14xf32>
    %c60 = arith.constant 60 : index
    %157 = memref.load %arg2[%c60] : memref<90xf32, #tpu.memory_space<smem>>
    %158 = vector.broadcast %157 : f32 to vector<2x14x14xf32>
    %159 = arith.mulf %144, %158 : vector<2x14x14xf32>
    %160 = arith.addf %138, %159 : vector<2x14x14xf32>
    %c78 = arith.constant 78 : index
    %161 = memref.load %arg2[%c78] : memref<90xf32, #tpu.memory_space<smem>>
    %162 = vector.broadcast %161 : f32 to vector<2x14x14xf32>
    %163 = arith.mulf %144, %162 : vector<2x14x14xf32>
    %164 = arith.addf %142, %163 : vector<2x14x14xf32>
    %165 = vector.extract_strided_slice %0 {offsets = [0, 0, 2, 1], sizes = [2, 1, 14, 14], strides = [1, 1, 1, 1]} : vector<2x2x16x16xf32> to vector<2x1x14x14xf32>
    %166 = vector.shape_cast %165 : vector<2x1x14x14xf32> to vector<2x14x14xf32>
    %c7 = arith.constant 7 : index
    %167 = memref.load %arg2[%c7] : memref<90xf32, #tpu.memory_space<smem>>
    %168 = vector.broadcast %167 : f32 to vector<2x14x14xf32>
    %169 = arith.mulf %166, %168 : vector<2x14x14xf32>
    %170 = arith.addf %148, %169 : vector<2x14x14xf32>
    %c25 = arith.constant 25 : index
    %171 = memref.load %arg2[%c25] : memref<90xf32, #tpu.memory_space<smem>>
    %172 = vector.broadcast %171 : f32 to vector<2x14x14xf32>
    %173 = arith.mulf %166, %172 : vector<2x14x14xf32>
    %174 = arith.addf %152, %173 : vector<2x14x14xf32>
    %c43 = arith.constant 43 : index
    %175 = memref.load %arg2[%c43] : memref<90xf32, #tpu.memory_space<smem>>
    %176 = vector.broadcast %175 : f32 to vector<2x14x14xf32>
    %177 = arith.mulf %166, %176 : vector<2x14x14xf32>
    %178 = arith.addf %156, %177 : vector<2x14x14xf32>
    %c61 = arith.constant 61 : index
    %179 = memref.load %arg2[%c61] : memref<90xf32, #tpu.memory_space<smem>>
    %180 = vector.broadcast %179 : f32 to vector<2x14x14xf32>
    %181 = arith.mulf %166, %180 : vector<2x14x14xf32>
    %182 = arith.addf %160, %181 : vector<2x14x14xf32>
    %c79 = arith.constant 79 : index
    %183 = memref.load %arg2[%c79] : memref<90xf32, #tpu.memory_space<smem>>
    %184 = vector.broadcast %183 : f32 to vector<2x14x14xf32>
    %185 = arith.mulf %166, %184 : vector<2x14x14xf32>
    %186 = arith.addf %164, %185 : vector<2x14x14xf32>
    %187 = vector.extract_strided_slice %0 {offsets = [0, 0, 2, 2], sizes = [2, 1, 14, 14], strides = [1, 1, 1, 1]} : vector<2x2x16x16xf32> to vector<2x1x14x14xf32>
    %188 = vector.shape_cast %187 : vector<2x1x14x14xf32> to vector<2x14x14xf32>
    %c8 = arith.constant 8 : index
    %189 = memref.load %arg2[%c8] : memref<90xf32, #tpu.memory_space<smem>>
    %190 = vector.broadcast %189 : f32 to vector<2x14x14xf32>
    %191 = arith.mulf %188, %190 : vector<2x14x14xf32>
    %192 = arith.addf %170, %191 : vector<2x14x14xf32>
    %c26 = arith.constant 26 : index
    %193 = memref.load %arg2[%c26] : memref<90xf32, #tpu.memory_space<smem>>
    %194 = vector.broadcast %193 : f32 to vector<2x14x14xf32>
    %195 = arith.mulf %188, %194 : vector<2x14x14xf32>
    %196 = arith.addf %174, %195 : vector<2x14x14xf32>
    %c44 = arith.constant 44 : index
    %197 = memref.load %arg2[%c44] : memref<90xf32, #tpu.memory_space<smem>>
    %198 = vector.broadcast %197 : f32 to vector<2x14x14xf32>
    %199 = arith.mulf %188, %198 : vector<2x14x14xf32>
    %200 = arith.addf %178, %199 : vector<2x14x14xf32>
    %c62 = arith.constant 62 : index
    %201 = memref.load %arg2[%c62] : memref<90xf32, #tpu.memory_space<smem>>
    %202 = vector.broadcast %201 : f32 to vector<2x14x14xf32>
    %203 = arith.mulf %188, %202 : vector<2x14x14xf32>
    %204 = arith.addf %182, %203 : vector<2x14x14xf32>
    %c80 = arith.constant 80 : index
    %205 = memref.load %arg2[%c80] : memref<90xf32, #tpu.memory_space<smem>>
    %206 = vector.broadcast %205 : f32 to vector<2x14x14xf32>
    %207 = arith.mulf %188, %206 : vector<2x14x14xf32>
    %208 = arith.addf %186, %207 : vector<2x14x14xf32>
    %209 = vector.extract_strided_slice %0 {offsets = [0, 1, 0, 0], sizes = [2, 1, 14, 14], strides = [1, 1, 1, 1]} : vector<2x2x16x16xf32> to vector<2x1x14x14xf32>
    %210 = vector.shape_cast %209 : vector<2x1x14x14xf32> to vector<2x14x14xf32>
    %c9 = arith.constant 9 : index
    %211 = memref.load %arg2[%c9] : memref<90xf32, #tpu.memory_space<smem>>
    %212 = vector.broadcast %211 : f32 to vector<2x14x14xf32>
    %213 = arith.mulf %210, %212 : vector<2x14x14xf32>
    %214 = arith.addf %192, %213 : vector<2x14x14xf32>
    %c27 = arith.constant 27 : index
    %215 = memref.load %arg2[%c27] : memref<90xf32, #tpu.memory_space<smem>>
    %216 = vector.broadcast %215 : f32 to vector<2x14x14xf32>
    %217 = arith.mulf %210, %216 : vector<2x14x14xf32>
    %218 = arith.addf %196, %217 : vector<2x14x14xf32>
    %c45 = arith.constant 45 : index
    %219 = memref.load %arg2[%c45] : memref<90xf32, #tpu.memory_space<smem>>
    %220 = vector.broadcast %219 : f32 to vector<2x14x14xf32>
    %221 = arith.mulf %210, %220 : vector<2x14x14xf32>
    %222 = arith.addf %200, %221 : vector<2x14x14xf32>
    %c63 = arith.constant 63 : index
    %223 = memref.load %arg2[%c63] : memref<90xf32, #tpu.memory_space<smem>>
    %224 = vector.broadcast %223 : f32 to vector<2x14x14xf32>
    %225 = arith.mulf %210, %224 : vector<2x14x14xf32>
    %226 = arith.addf %204, %225 : vector<2x14x14xf32>
    %c81 = arith.constant 81 : index
    %227 = memref.load %arg2[%c81] : memref<90xf32, #tpu.memory_space<smem>>
    %228 = vector.broadcast %227 : f32 to vector<2x14x14xf32>
    %229 = arith.mulf %210, %228 : vector<2x14x14xf32>
    %230 = arith.addf %208, %229 : vector<2x14x14xf32>
    %231 = vector.extract_strided_slice %0 {offsets = [0, 1, 0, 1], sizes = [2, 1, 14, 14], strides = [1, 1, 1, 1]} : vector<2x2x16x16xf32> to vector<2x1x14x14xf32>
    %232 = vector.shape_cast %231 : vector<2x1x14x14xf32> to vector<2x14x14xf32>
    %c10 = arith.constant 10 : index
    %233 = memref.load %arg2[%c10] : memref<90xf32, #tpu.memory_space<smem>>
    %234 = vector.broadcast %233 : f32 to vector<2x14x14xf32>
    %235 = arith.mulf %232, %234 : vector<2x14x14xf32>
    %236 = arith.addf %214, %235 : vector<2x14x14xf32>
    %c28 = arith.constant 28 : index
    %237 = memref.load %arg2[%c28] : memref<90xf32, #tpu.memory_space<smem>>
    %238 = vector.broadcast %237 : f32 to vector<2x14x14xf32>
    %239 = arith.mulf %232, %238 : vector<2x14x14xf32>
    %240 = arith.addf %218, %239 : vector<2x14x14xf32>
    %c46 = arith.constant 46 : index
    %241 = memref.load %arg2[%c46] : memref<90xf32, #tpu.memory_space<smem>>
    %242 = vector.broadcast %241 : f32 to vector<2x14x14xf32>
    %243 = arith.mulf %232, %242 : vector<2x14x14xf32>
    %244 = arith.addf %222, %243 : vector<2x14x14xf32>
    %c64 = arith.constant 64 : index
    %245 = memref.load %arg2[%c64] : memref<90xf32, #tpu.memory_space<smem>>
    %246 = vector.broadcast %245 : f32 to vector<2x14x14xf32>
    %247 = arith.mulf %232, %246 : vector<2x14x14xf32>
    %248 = arith.addf %226, %247 : vector<2x14x14xf32>
    %c82 = arith.constant 82 : index
    %249 = memref.load %arg2[%c82] : memref<90xf32, #tpu.memory_space<smem>>
    %250 = vector.broadcast %249 : f32 to vector<2x14x14xf32>
    %251 = arith.mulf %232, %250 : vector<2x14x14xf32>
    %252 = arith.addf %230, %251 : vector<2x14x14xf32>
    %253 = vector.extract_strided_slice %0 {offsets = [0, 1, 0, 2], sizes = [2, 1, 14, 14], strides = [1, 1, 1, 1]} : vector<2x2x16x16xf32> to vector<2x1x14x14xf32>
    %254 = vector.shape_cast %253 : vector<2x1x14x14xf32> to vector<2x14x14xf32>
    %c11 = arith.constant 11 : index
    %255 = memref.load %arg2[%c11] : memref<90xf32, #tpu.memory_space<smem>>
    %256 = vector.broadcast %255 : f32 to vector<2x14x14xf32>
    %257 = arith.mulf %254, %256 : vector<2x14x14xf32>
    %258 = arith.addf %236, %257 : vector<2x14x14xf32>
    %c29 = arith.constant 29 : index
    %259 = memref.load %arg2[%c29] : memref<90xf32, #tpu.memory_space<smem>>
    %260 = vector.broadcast %259 : f32 to vector<2x14x14xf32>
    %261 = arith.mulf %254, %260 : vector<2x14x14xf32>
    %262 = arith.addf %240, %261 : vector<2x14x14xf32>
    %c47 = arith.constant 47 : index
    %263 = memref.load %arg2[%c47] : memref<90xf32, #tpu.memory_space<smem>>
    %264 = vector.broadcast %263 : f32 to vector<2x14x14xf32>
    %265 = arith.mulf %254, %264 : vector<2x14x14xf32>
    %266 = arith.addf %244, %265 : vector<2x14x14xf32>
    %c65 = arith.constant 65 : index
    %267 = memref.load %arg2[%c65] : memref<90xf32, #tpu.memory_space<smem>>
    %268 = vector.broadcast %267 : f32 to vector<2x14x14xf32>
    %269 = arith.mulf %254, %268 : vector<2x14x14xf32>
    %270 = arith.addf %248, %269 : vector<2x14x14xf32>
    %c83 = arith.constant 83 : index
    %271 = memref.load %arg2[%c83] : memref<90xf32, #tpu.memory_space<smem>>
    %272 = vector.broadcast %271 : f32 to vector<2x14x14xf32>
    %273 = arith.mulf %254, %272 : vector<2x14x14xf32>
    %274 = arith.addf %252, %273 : vector<2x14x14xf32>
    %275 = vector.extract_strided_slice %0 {offsets = [0, 1, 1, 0], sizes = [2, 1, 14, 14], strides = [1, 1, 1, 1]} : vector<2x2x16x16xf32> to vector<2x1x14x14xf32>
    %276 = vector.shape_cast %275 : vector<2x1x14x14xf32> to vector<2x14x14xf32>
    %c12 = arith.constant 12 : index
    %277 = memref.load %arg2[%c12] : memref<90xf32, #tpu.memory_space<smem>>
    %278 = vector.broadcast %277 : f32 to vector<2x14x14xf32>
    %279 = arith.mulf %276, %278 : vector<2x14x14xf32>
    %280 = arith.addf %258, %279 : vector<2x14x14xf32>
    %c30 = arith.constant 30 : index
    %281 = memref.load %arg2[%c30] : memref<90xf32, #tpu.memory_space<smem>>
    %282 = vector.broadcast %281 : f32 to vector<2x14x14xf32>
    %283 = arith.mulf %276, %282 : vector<2x14x14xf32>
    %284 = arith.addf %262, %283 : vector<2x14x14xf32>
    %c48 = arith.constant 48 : index
    %285 = memref.load %arg2[%c48] : memref<90xf32, #tpu.memory_space<smem>>
    %286 = vector.broadcast %285 : f32 to vector<2x14x14xf32>
    %287 = arith.mulf %276, %286 : vector<2x14x14xf32>
    %288 = arith.addf %266, %287 : vector<2x14x14xf32>
    %c66 = arith.constant 66 : index
    %289 = memref.load %arg2[%c66] : memref<90xf32, #tpu.memory_space<smem>>
    %290 = vector.broadcast %289 : f32 to vector<2x14x14xf32>
    %291 = arith.mulf %276, %290 : vector<2x14x14xf32>
    %292 = arith.addf %270, %291 : vector<2x14x14xf32>
    %c84 = arith.constant 84 : index
    %293 = memref.load %arg2[%c84] : memref<90xf32, #tpu.memory_space<smem>>
    %294 = vector.broadcast %293 : f32 to vector<2x14x14xf32>
    %295 = arith.mulf %276, %294 : vector<2x14x14xf32>
    %296 = arith.addf %274, %295 : vector<2x14x14xf32>
    %297 = vector.extract_strided_slice %0 {offsets = [0, 1, 1, 1], sizes = [2, 1, 14, 14], strides = [1, 1, 1, 1]} : vector<2x2x16x16xf32> to vector<2x1x14x14xf32>
    %298 = vector.shape_cast %297 : vector<2x1x14x14xf32> to vector<2x14x14xf32>
    %c13 = arith.constant 13 : index
    %299 = memref.load %arg2[%c13] : memref<90xf32, #tpu.memory_space<smem>>
    %300 = vector.broadcast %299 : f32 to vector<2x14x14xf32>
    %301 = arith.mulf %298, %300 : vector<2x14x14xf32>
    %302 = arith.addf %280, %301 : vector<2x14x14xf32>
    %c31 = arith.constant 31 : index
    %303 = memref.load %arg2[%c31] : memref<90xf32, #tpu.memory_space<smem>>
    %304 = vector.broadcast %303 : f32 to vector<2x14x14xf32>
    %305 = arith.mulf %298, %304 : vector<2x14x14xf32>
    %306 = arith.addf %284, %305 : vector<2x14x14xf32>
    %c49 = arith.constant 49 : index
    %307 = memref.load %arg2[%c49] : memref<90xf32, #tpu.memory_space<smem>>
    %308 = vector.broadcast %307 : f32 to vector<2x14x14xf32>
    %309 = arith.mulf %298, %308 : vector<2x14x14xf32>
    %310 = arith.addf %288, %309 : vector<2x14x14xf32>
    %c67 = arith.constant 67 : index
    %311 = memref.load %arg2[%c67] : memref<90xf32, #tpu.memory_space<smem>>
    %312 = vector.broadcast %311 : f32 to vector<2x14x14xf32>
    %313 = arith.mulf %298, %312 : vector<2x14x14xf32>
    %314 = arith.addf %292, %313 : vector<2x14x14xf32>
    %c85 = arith.constant 85 : index
    %315 = memref.load %arg2[%c85] : memref<90xf32, #tpu.memory_space<smem>>
    %316 = vector.broadcast %315 : f32 to vector<2x14x14xf32>
    %317 = arith.mulf %298, %316 : vector<2x14x14xf32>
    %318 = arith.addf %296, %317 : vector<2x14x14xf32>
    %319 = vector.extract_strided_slice %0 {offsets = [0, 1, 1, 2], sizes = [2, 1, 14, 14], strides = [1, 1, 1, 1]} : vector<2x2x16x16xf32> to vector<2x1x14x14xf32>
    %320 = vector.shape_cast %319 : vector<2x1x14x14xf32> to vector<2x14x14xf32>
    %c14 = arith.constant 14 : index
    %321 = memref.load %arg2[%c14] : memref<90xf32, #tpu.memory_space<smem>>
    %322 = vector.broadcast %321 : f32 to vector<2x14x14xf32>
    %323 = arith.mulf %320, %322 : vector<2x14x14xf32>
    %324 = arith.addf %302, %323 : vector<2x14x14xf32>
    %c32 = arith.constant 32 : index
    %325 = memref.load %arg2[%c32] : memref<90xf32, #tpu.memory_space<smem>>
    %326 = vector.broadcast %325 : f32 to vector<2x14x14xf32>
    %327 = arith.mulf %320, %326 : vector<2x14x14xf32>
    %328 = arith.addf %306, %327 : vector<2x14x14xf32>
    %c50 = arith.constant 50 : index
    %329 = memref.load %arg2[%c50] : memref<90xf32, #tpu.memory_space<smem>>
    %330 = vector.broadcast %329 : f32 to vector<2x14x14xf32>
    %331 = arith.mulf %320, %330 : vector<2x14x14xf32>
    %332 = arith.addf %310, %331 : vector<2x14x14xf32>
    %c68 = arith.constant 68 : index
    %333 = memref.load %arg2[%c68] : memref<90xf32, #tpu.memory_space<smem>>
    %334 = vector.broadcast %333 : f32 to vector<2x14x14xf32>
    %335 = arith.mulf %320, %334 : vector<2x14x14xf32>
    %336 = arith.addf %314, %335 : vector<2x14x14xf32>
    %c86 = arith.constant 86 : index
    %337 = memref.load %arg2[%c86] : memref<90xf32, #tpu.memory_space<smem>>
    %338 = vector.broadcast %337 : f32 to vector<2x14x14xf32>
    %339 = arith.mulf %320, %338 : vector<2x14x14xf32>
    %340 = arith.addf %318, %339 : vector<2x14x14xf32>
    %341 = vector.extract_strided_slice %0 {offsets = [0, 1, 2, 0], sizes = [2, 1, 14, 14], strides = [1, 1, 1, 1]} : vector<2x2x16x16xf32> to vector<2x1x14x14xf32>
    %342 = vector.shape_cast %341 : vector<2x1x14x14xf32> to vector<2x14x14xf32>
    %c15 = arith.constant 15 : index
    %343 = memref.load %arg2[%c15] : memref<90xf32, #tpu.memory_space<smem>>
    %344 = vector.broadcast %343 : f32 to vector<2x14x14xf32>
    %345 = arith.mulf %342, %344 : vector<2x14x14xf32>
    %346 = arith.addf %324, %345 : vector<2x14x14xf32>
    %c33 = arith.constant 33 : index
    %347 = memref.load %arg2[%c33] : memref<90xf32, #tpu.memory_space<smem>>
    %348 = vector.broadcast %347 : f32 to vector<2x14x14xf32>
    %349 = arith.mulf %342, %348 : vector<2x14x14xf32>
    %350 = arith.addf %328, %349 : vector<2x14x14xf32>
    %c51 = arith.constant 51 : index
    %351 = memref.load %arg2[%c51] : memref<90xf32, #tpu.memory_space<smem>>
    %352 = vector.broadcast %351 : f32 to vector<2x14x14xf32>
    %353 = arith.mulf %342, %352 : vector<2x14x14xf32>
    %354 = arith.addf %332, %353 : vector<2x14x14xf32>
    %c69 = arith.constant 69 : index
    %355 = memref.load %arg2[%c69] : memref<90xf32, #tpu.memory_space<smem>>
    %356 = vector.broadcast %355 : f32 to vector<2x14x14xf32>
    %357 = arith.mulf %342, %356 : vector<2x14x14xf32>
    %358 = arith.addf %336, %357 : vector<2x14x14xf32>
    %c87 = arith.constant 87 : index
    %359 = memref.load %arg2[%c87] : memref<90xf32, #tpu.memory_space<smem>>
    %360 = vector.broadcast %359 : f32 to vector<2x14x14xf32>
    %361 = arith.mulf %342, %360 : vector<2x14x14xf32>
    %362 = arith.addf %340, %361 : vector<2x14x14xf32>
    %363 = vector.extract_strided_slice %0 {offsets = [0, 1, 2, 1], sizes = [2, 1, 14, 14], strides = [1, 1, 1, 1]} : vector<2x2x16x16xf32> to vector<2x1x14x14xf32>
    %364 = vector.shape_cast %363 : vector<2x1x14x14xf32> to vector<2x14x14xf32>
    %c16 = arith.constant 16 : index
    %365 = memref.load %arg2[%c16] : memref<90xf32, #tpu.memory_space<smem>>
    %366 = vector.broadcast %365 : f32 to vector<2x14x14xf32>
    %367 = arith.mulf %364, %366 : vector<2x14x14xf32>
    %368 = arith.addf %346, %367 : vector<2x14x14xf32>
    %c34 = arith.constant 34 : index
    %369 = memref.load %arg2[%c34] : memref<90xf32, #tpu.memory_space<smem>>
    %370 = vector.broadcast %369 : f32 to vector<2x14x14xf32>
    %371 = arith.mulf %364, %370 : vector<2x14x14xf32>
    %372 = arith.addf %350, %371 : vector<2x14x14xf32>
    %c52 = arith.constant 52 : index
    %373 = memref.load %arg2[%c52] : memref<90xf32, #tpu.memory_space<smem>>
    %374 = vector.broadcast %373 : f32 to vector<2x14x14xf32>
    %375 = arith.mulf %364, %374 : vector<2x14x14xf32>
    %376 = arith.addf %354, %375 : vector<2x14x14xf32>
    %c70 = arith.constant 70 : index
    %377 = memref.load %arg2[%c70] : memref<90xf32, #tpu.memory_space<smem>>
    %378 = vector.broadcast %377 : f32 to vector<2x14x14xf32>
    %379 = arith.mulf %364, %378 : vector<2x14x14xf32>
    %380 = arith.addf %358, %379 : vector<2x14x14xf32>
    %c88 = arith.constant 88 : index
    %381 = memref.load %arg2[%c88] : memref<90xf32, #tpu.memory_space<smem>>
    %382 = vector.broadcast %381 : f32 to vector<2x14x14xf32>
    %383 = arith.mulf %364, %382 : vector<2x14x14xf32>
    %384 = arith.addf %362, %383 : vector<2x14x14xf32>
    %385 = vector.extract_strided_slice %0 {offsets = [0, 1, 2, 2], sizes = [2, 1, 14, 14], strides = [1, 1, 1, 1]} : vector<2x2x16x16xf32> to vector<2x1x14x14xf32>
    %386 = vector.shape_cast %385 : vector<2x1x14x14xf32> to vector<2x14x14xf32>
    %c17 = arith.constant 17 : index
    %387 = memref.load %arg2[%c17] : memref<90xf32, #tpu.memory_space<smem>>
    %388 = vector.broadcast %387 : f32 to vector<2x14x14xf32>
    %389 = arith.mulf %386, %388 : vector<2x14x14xf32>
    %390 = arith.addf %368, %389 : vector<2x14x14xf32>
    %c35 = arith.constant 35 : index
    %391 = memref.load %arg2[%c35] : memref<90xf32, #tpu.memory_space<smem>>
    %392 = vector.broadcast %391 : f32 to vector<2x14x14xf32>
    %393 = arith.mulf %386, %392 : vector<2x14x14xf32>
    %394 = arith.addf %372, %393 : vector<2x14x14xf32>
    %c53 = arith.constant 53 : index
    %395 = memref.load %arg2[%c53] : memref<90xf32, #tpu.memory_space<smem>>
    %396 = vector.broadcast %395 : f32 to vector<2x14x14xf32>
    %397 = arith.mulf %386, %396 : vector<2x14x14xf32>
    %398 = arith.addf %376, %397 : vector<2x14x14xf32>
    %c71 = arith.constant 71 : index
    %399 = memref.load %arg2[%c71] : memref<90xf32, #tpu.memory_space<smem>>
    %400 = vector.broadcast %399 : f32 to vector<2x14x14xf32>
    %401 = arith.mulf %386, %400 : vector<2x14x14xf32>
    %402 = arith.addf %380, %401 : vector<2x14x14xf32>
    %c89 = arith.constant 89 : index
    %403 = memref.load %arg2[%c89] : memref<90xf32, #tpu.memory_space<smem>>
    %404 = vector.broadcast %403 : f32 to vector<2x14x14xf32>
    %405 = arith.mulf %386, %404 : vector<2x14x14xf32>
    %406 = arith.addf %384, %405 : vector<2x14x14xf32>
    %cst = arith.constant 0.000000e+00 : f32
    %407 = vector.broadcast %cst : f32 to vector<5x2x18x18xf32>
    %c0_9 = arith.constant 0 : index
    %c0_10 = arith.constant 0 : index
    %c0_11 = arith.constant 0 : index
    %c0_12 = arith.constant 0 : index
    %408 = vector.load %arg7[%c0_9, %c0_10, %c0_11, %c0_12] : memref<5x2x18x18xf32, #tpu.memory_space<vmem>>, vector<5x2x18x18xf32>
    tpu.vector_store %arg7[%c0_9, %c0_10, %c0_11, %c0_12], %407 {strides = array<i32>} : memref<5x2x18x18xf32, #tpu.memory_space<vmem>>, vector<5x2x18x18xf32>,
    %c0_13 = arith.constant 0 : index
    %c0_14 = arith.constant 0 : index
    %c2_15 = arith.constant 2 : index
    %c2_16 = arith.constant 2 : index
    %409 = vector.load %arg7[%c0_13, %c0_14, %c2_15, %c2_16] : memref<5x2x18x18xf32, #tpu.memory_space<vmem>>, vector<1x2x14x14xf32>
    %410 = vector.shape_cast %409 : vector<1x2x14x14xf32> to vector<2x14x14xf32>
    %411 = vector.shape_cast %390 : vector<2x14x14xf32> to vector<1x2x14x14xf32>
    tpu.vector_store %arg7[%c0_13, %c0_14, %c2_15, %c2_16], %411 {strides = array<i32>} : memref<5x2x18x18xf32, #tpu.memory_space<vmem>>, vector<1x2x14x14xf32>,
    %c1_17 = arith.constant 1 : index
    %c0_18 = arith.constant 0 : index
    %c2_19 = arith.constant 2 : index
    %c2_20 = arith.constant 2 : index
    %412 = vector.load %arg7[%c1_17, %c0_18, %c2_19, %c2_20] : memref<5x2x18x18xf32, #tpu.memory_space<vmem>>, vector<1x2x14x14xf32>
    %413 = vector.shape_cast %412 : vector<1x2x14x14xf32> to vector<2x14x14xf32>
    %414 = vector.shape_cast %394 : vector<2x14x14xf32> to vector<1x2x14x14xf32>
    tpu.vector_store %arg7[%c1_17, %c0_18, %c2_19, %c2_20], %414 {strides = array<i32>} : memref<5x2x18x18xf32, #tpu.memory_space<vmem>>, vector<1x2x14x14xf32>,
    %c2_21 = arith.constant 2 : index
    %c0_22 = arith.constant 0 : index
    %c2_23 = arith.constant 2 : index
    %c2_24 = arith.constant 2 : index
    %415 = vector.load %arg7[%c2_21, %c0_22, %c2_23, %c2_24] : memref<5x2x18x18xf32, #tpu.memory_space<vmem>>, vector<1x2x14x14xf32>
    %416 = vector.shape_cast %415 : vector<1x2x14x14xf32> to vector<2x14x14xf32>
    %417 = vector.shape_cast %398 : vector<2x14x14xf32> to vector<1x2x14x14xf32>
    tpu.vector_store %arg7[%c2_21, %c0_22, %c2_23, %c2_24], %417 {strides = array<i32>} : memref<5x2x18x18xf32, #tpu.memory_space<vmem>>, vector<1x2x14x14xf32>,
    %c3_25 = arith.constant 3 : index
    %c0_26 = arith.constant 0 : index
    %c2_27 = arith.constant 2 : index
    %c2_28 = arith.constant 2 : index
    %418 = vector.load %arg7[%c3_25, %c0_26, %c2_27, %c2_28] : memref<5x2x18x18xf32, #tpu.memory_space<vmem>>, vector<1x2x14x14xf32>
    %419 = vector.shape_cast %418 : vector<1x2x14x14xf32> to vector<2x14x14xf32>
    %420 = vector.shape_cast %402 : vector<2x14x14xf32> to vector<1x2x14x14xf32>
    tpu.vector_store %arg7[%c3_25, %c0_26, %c2_27, %c2_28], %420 {strides = array<i32>} : memref<5x2x18x18xf32, #tpu.memory_space<vmem>>, vector<1x2x14x14xf32>,
    %c4_29 = arith.constant 4 : index
    %c0_30 = arith.constant 0 : index
    %c2_31 = arith.constant 2 : index
    %c2_32 = arith.constant 2 : index
    %421 = vector.load %arg7[%c4_29, %c0_30, %c2_31, %c2_32] : memref<5x2x18x18xf32, #tpu.memory_space<vmem>>, vector<1x2x14x14xf32>
    %422 = vector.shape_cast %421 : vector<1x2x14x14xf32> to vector<2x14x14xf32>
    %423 = vector.shape_cast %406 : vector<2x14x14xf32> to vector<1x2x14x14xf32>
    tpu.vector_store %arg7[%c4_29, %c0_30, %c2_31, %c2_32], %423 {strides = array<i32>} : memref<5x2x18x18xf32, #tpu.memory_space<vmem>>, vector<1x2x14x14xf32>,
    %c0_33 = arith.constant 0 : index
    %c0_34 = arith.constant 0 : index
    %c0_35 = arith.constant 0 : index
    %c0_36 = arith.constant 0 : index
    %424 = vector.load %arg7[%c0_33, %c0_34, %c0_35, %c0_36] : memref<5x2x18x18xf32, #tpu.memory_space<vmem>>, vector<5x2x18x18xf32>
    %c0_37 = arith.constant 0 : index
    %425 = memref.load %arg5[%c0_37] : memref<4xf32, #tpu.memory_space<smem>>
    %426 = vector.broadcast %425 : f32 to vector<2x16x16xf32>
    %c1_38 = arith.constant 1 : index
    %427 = memref.load %arg5[%c1_38] : memref<4xf32, #tpu.memory_space<smem>>
    %428 = vector.broadcast %427 : f32 to vector<2x16x16xf32>
    %c2_39 = arith.constant 2 : index
    %429 = memref.load %arg5[%c2_39] : memref<4xf32, #tpu.memory_space<smem>>
    %430 = vector.broadcast %429 : f32 to vector<2x16x16xf32>
    %c3_40 = arith.constant 3 : index
    %431 = memref.load %arg5[%c3_40] : memref<4xf32, #tpu.memory_space<smem>>
    %432 = vector.broadcast %431 : f32 to vector<2x16x16xf32>
    %433 = vector.extract_strided_slice %424 {offsets = [0, 0, 0, 0], sizes = [1, 2, 16, 16], strides = [1, 1, 1, 1]} : vector<5x2x18x18xf32> to vector<1x2x16x16xf32>
    %434 = vector.shape_cast %433 : vector<1x2x16x16xf32> to vector<2x16x16xf32>
    %c0_41 = arith.constant 0 : index
    %435 = memref.load %arg4[%c0_41] : memref<180xf32, #tpu.memory_space<smem>>
    %436 = vector.broadcast %435 : f32 to vector<2x16x16xf32>
    %437 = arith.mulf %434, %436 : vector<2x16x16xf32>
    %438 = arith.addf %426, %437 : vector<2x16x16xf32>
    %c45_42 = arith.constant 45 : index
    %439 = memref.load %arg4[%c45_42] : memref<180xf32, #tpu.memory_space<smem>>
    %440 = vector.broadcast %439 : f32 to vector<2x16x16xf32>
    %441 = arith.mulf %434, %440 : vector<2x16x16xf32>
    %442 = arith.addf %428, %441 : vector<2x16x16xf32>
    %c90 = arith.constant 90 : index
    %443 = memref.load %arg4[%c90] : memref<180xf32, #tpu.memory_space<smem>>
    %444 = vector.broadcast %443 : f32 to vector<2x16x16xf32>
    %445 = arith.mulf %434, %444 : vector<2x16x16xf32>
    %446 = arith.addf %430, %445 : vector<2x16x16xf32>
    %c135 = arith.constant 135 : index
    %447 = memref.load %arg4[%c135] : memref<180xf32, #tpu.memory_space<smem>>
    %448 = vector.broadcast %447 : f32 to vector<2x16x16xf32>
    %449 = arith.mulf %434, %448 : vector<2x16x16xf32>
    %450 = arith.addf %432, %449 : vector<2x16x16xf32>
    %451 = vector.extract_strided_slice %424 {offsets = [0, 0, 0, 1], sizes = [1, 2, 16, 16], strides = [1, 1, 1, 1]} : vector<5x2x18x18xf32> to vector<1x2x16x16xf32>
    %452 = vector.shape_cast %451 : vector<1x2x16x16xf32> to vector<2x16x16xf32>
    %c1_43 = arith.constant 1 : index
    %453 = memref.load %arg4[%c1_43] : memref<180xf32, #tpu.memory_space<smem>>
    %454 = vector.broadcast %453 : f32 to vector<2x16x16xf32>
    %455 = arith.mulf %452, %454 : vector<2x16x16xf32>
    %456 = arith.addf %438, %455 : vector<2x16x16xf32>
    %c46_44 = arith.constant 46 : index
    %457 = memref.load %arg4[%c46_44] : memref<180xf32, #tpu.memory_space<smem>>
    %458 = vector.broadcast %457 : f32 to vector<2x16x16xf32>
    %459 = arith.mulf %452, %458 : vector<2x16x16xf32>
    %460 = arith.addf %442, %459 : vector<2x16x16xf32>
    %c91 = arith.constant 91 : index
    %461 = memref.load %arg4[%c91] : memref<180xf32, #tpu.memory_space<smem>>
    %462 = vector.broadcast %461 : f32 to vector<2x16x16xf32>
    %463 = arith.mulf %452, %462 : vector<2x16x16xf32>
    %464 = arith.addf %446, %463 : vector<2x16x16xf32>
    %c136 = arith.constant 136 : index
    %465 = memref.load %arg4[%c136] : memref<180xf32, #tpu.memory_space<smem>>
    %466 = vector.broadcast %465 : f32 to vector<2x16x16xf32>
    %467 = arith.mulf %452, %466 : vector<2x16x16xf32>
    %468 = arith.addf %450, %467 : vector<2x16x16xf32>
    %469 = vector.extract_strided_slice %424 {offsets = [0, 0, 0, 2], sizes = [1, 2, 16, 16], strides = [1, 1, 1, 1]} : vector<5x2x18x18xf32> to vector<1x2x16x16xf32>
    %470 = vector.shape_cast %469 : vector<1x2x16x16xf32> to vector<2x16x16xf32>
    %c2_45 = arith.constant 2 : index
    %471 = memref.load %arg4[%c2_45] : memref<180xf32, #tpu.memory_space<smem>>
    %472 = vector.broadcast %471 : f32 to vector<2x16x16xf32>
    %473 = arith.mulf %470, %472 : vector<2x16x16xf32>
    %474 = arith.addf %456, %473 : vector<2x16x16xf32>
    %c47_46 = arith.constant 47 : index
    %475 = memref.load %arg4[%c47_46] : memref<180xf32, #tpu.memory_space<smem>>
    %476 = vector.broadcast %475 : f32 to vector<2x16x16xf32>
    %477 = arith.mulf %470, %476 : vector<2x16x16xf32>
    %478 = arith.addf %460, %477 : vector<2x16x16xf32>
    %c92 = arith.constant 92 : index
    %479 = memref.load %arg4[%c92] : memref<180xf32, #tpu.memory_space<smem>>
    %480 = vector.broadcast %479 : f32 to vector<2x16x16xf32>
    %481 = arith.mulf %470, %480 : vector<2x16x16xf32>
    %482 = arith.addf %464, %481 : vector<2x16x16xf32>
    %c137 = arith.constant 137 : index
    %483 = memref.load %arg4[%c137] : memref<180xf32, #tpu.memory_space<smem>>
    %484 = vector.broadcast %483 : f32 to vector<2x16x16xf32>
    %485 = arith.mulf %470, %484 : vector<2x16x16xf32>
    %486 = arith.addf %468, %485 : vector<2x16x16xf32>
    %487 = vector.extract_strided_slice %424 {offsets = [0, 0, 1, 0], sizes = [1, 2, 16, 16], strides = [1, 1, 1, 1]} : vector<5x2x18x18xf32> to vector<1x2x16x16xf32>
    %488 = vector.shape_cast %487 : vector<1x2x16x16xf32> to vector<2x16x16xf32>
    %c3_47 = arith.constant 3 : index
    %489 = memref.load %arg4[%c3_47] : memref<180xf32, #tpu.memory_space<smem>>
    %490 = vector.broadcast %489 : f32 to vector<2x16x16xf32>
    %491 = arith.mulf %488, %490 : vector<2x16x16xf32>
    %492 = arith.addf %474, %491 : vector<2x16x16xf32>
    %c48_48 = arith.constant 48 : index
    %493 = memref.load %arg4[%c48_48] : memref<180xf32, #tpu.memory_space<smem>>
    %494 = vector.broadcast %493 : f32 to vector<2x16x16xf32>
    %495 = arith.mulf %488, %494 : vector<2x16x16xf32>
    %496 = arith.addf %478, %495 : vector<2x16x16xf32>
    %c93 = arith.constant 93 : index
    %497 = memref.load %arg4[%c93] : memref<180xf32, #tpu.memory_space<smem>>
    %498 = vector.broadcast %497 : f32 to vector<2x16x16xf32>
    %499 = arith.mulf %488, %498 : vector<2x16x16xf32>
    %500 = arith.addf %482, %499 : vector<2x16x16xf32>
    %c138 = arith.constant 138 : index
    %501 = memref.load %arg4[%c138] : memref<180xf32, #tpu.memory_space<smem>>
    %502 = vector.broadcast %501 : f32 to vector<2x16x16xf32>
    %503 = arith.mulf %488, %502 : vector<2x16x16xf32>
    %504 = arith.addf %486, %503 : vector<2x16x16xf32>
    %505 = vector.extract_strided_slice %424 {offsets = [0, 0, 1, 1], sizes = [1, 2, 16, 16], strides = [1, 1, 1, 1]} : vector<5x2x18x18xf32> to vector<1x2x16x16xf32>
    %506 = vector.shape_cast %505 : vector<1x2x16x16xf32> to vector<2x16x16xf32>
    %c4_49 = arith.constant 4 : index
    %507 = memref.load %arg4[%c4_49] : memref<180xf32, #tpu.memory_space<smem>>
    %508 = vector.broadcast %507 : f32 to vector<2x16x16xf32>
    %509 = arith.mulf %506, %508 : vector<2x16x16xf32>
    %510 = arith.addf %492, %509 : vector<2x16x16xf32>
    %c49_50 = arith.constant 49 : index
    %511 = memref.load %arg4[%c49_50] : memref<180xf32, #tpu.memory_space<smem>>
    %512 = vector.broadcast %511 : f32 to vector<2x16x16xf32>
    %513 = arith.mulf %506, %512 : vector<2x16x16xf32>
    %514 = arith.addf %496, %513 : vector<2x16x16xf32>
    %c94 = arith.constant 94 : index
    %515 = memref.load %arg4[%c94] : memref<180xf32, #tpu.memory_space<smem>>
    %516 = vector.broadcast %515 : f32 to vector<2x16x16xf32>
    %517 = arith.mulf %506, %516 : vector<2x16x16xf32>
    %518 = arith.addf %500, %517 : vector<2x16x16xf32>
    %c139 = arith.constant 139 : index
    %519 = memref.load %arg4[%c139] : memref<180xf32, #tpu.memory_space<smem>>
    %520 = vector.broadcast %519 : f32 to vector<2x16x16xf32>
    %521 = arith.mulf %506, %520 : vector<2x16x16xf32>
    %522 = arith.addf %504, %521 : vector<2x16x16xf32>
    %523 = vector.extract_strided_slice %424 {offsets = [0, 0, 1, 2], sizes = [1, 2, 16, 16], strides = [1, 1, 1, 1]} : vector<5x2x18x18xf32> to vector<1x2x16x16xf32>
    %524 = vector.shape_cast %523 : vector<1x2x16x16xf32> to vector<2x16x16xf32>
    %c5_51 = arith.constant 5 : index
    %525 = memref.load %arg4[%c5_51] : memref<180xf32, #tpu.memory_space<smem>>
    %526 = vector.broadcast %525 : f32 to vector<2x16x16xf32>
    %527 = arith.mulf %524, %526 : vector<2x16x16xf32>
    %528 = arith.addf %510, %527 : vector<2x16x16xf32>
    %c50_52 = arith.constant 50 : index
    %529 = memref.load %arg4[%c50_52] : memref<180xf32, #tpu.memory_space<smem>>
    %530 = vector.broadcast %529 : f32 to vector<2x16x16xf32>
    %531 = arith.mulf %524, %530 : vector<2x16x16xf32>
    %532 = arith.addf %514, %531 : vector<2x16x16xf32>
    %c95 = arith.constant 95 : index
    %533 = memref.load %arg4[%c95] : memref<180xf32, #tpu.memory_space<smem>>
    %534 = vector.broadcast %533 : f32 to vector<2x16x16xf32>
    %535 = arith.mulf %524, %534 : vector<2x16x16xf32>
    %536 = arith.addf %518, %535 : vector<2x16x16xf32>
    %c140 = arith.constant 140 : index
    %537 = memref.load %arg4[%c140] : memref<180xf32, #tpu.memory_space<smem>>
    %538 = vector.broadcast %537 : f32 to vector<2x16x16xf32>
    %539 = arith.mulf %524, %538 : vector<2x16x16xf32>
    %540 = arith.addf %522, %539 : vector<2x16x16xf32>
    %541 = vector.extract_strided_slice %424 {offsets = [0, 0, 2, 0], sizes = [1, 2, 16, 16], strides = [1, 1, 1, 1]} : vector<5x2x18x18xf32> to vector<1x2x16x16xf32>
    %542 = vector.shape_cast %541 : vector<1x2x16x16xf32> to vector<2x16x16xf32>
    %c6_53 = arith.constant 6 : index
    %543 = memref.load %arg4[%c6_53] : memref<180xf32, #tpu.memory_space<smem>>
    %544 = vector.broadcast %543 : f32 to vector<2x16x16xf32>
    %545 = arith.mulf %542, %544 : vector<2x16x16xf32>
    %546 = arith.addf %528, %545 : vector<2x16x16xf32>
    %c51_54 = arith.constant 51 : index
    %547 = memref.load %arg4[%c51_54] : memref<180xf32, #tpu.memory_space<smem>>
    %548 = vector.broadcast %547 : f32 to vector<2x16x16xf32>
    %549 = arith.mulf %542, %548 : vector<2x16x16xf32>
    %550 = arith.addf %532, %549 : vector<2x16x16xf32>
    %c96 = arith.constant 96 : index
    %551 = memref.load %arg4[%c96] : memref<180xf32, #tpu.memory_space<smem>>
    %552 = vector.broadcast %551 : f32 to vector<2x16x16xf32>
    %553 = arith.mulf %542, %552 : vector<2x16x16xf32>
    %554 = arith.addf %536, %553 : vector<2x16x16xf32>
    %c141 = arith.constant 141 : index
    %555 = memref.load %arg4[%c141] : memref<180xf32, #tpu.memory_space<smem>>
    %556 = vector.broadcast %555 : f32 to vector<2x16x16xf32>
    %557 = arith.mulf %542, %556 : vector<2x16x16xf32>
    %558 = arith.addf %540, %557 : vector<2x16x16xf32>
    %559 = vector.extract_strided_slice %424 {offsets = [0, 0, 2, 1], sizes = [1, 2, 16, 16], strides = [1, 1, 1, 1]} : vector<5x2x18x18xf32> to vector<1x2x16x16xf32>
    %560 = vector.shape_cast %559 : vector<1x2x16x16xf32> to vector<2x16x16xf32>
    %c7_55 = arith.constant 7 : index
    %561 = memref.load %arg4[%c7_55] : memref<180xf32, #tpu.memory_space<smem>>
    %562 = vector.broadcast %561 : f32 to vector<2x16x16xf32>
    %563 = arith.mulf %560, %562 : vector<2x16x16xf32>
    %564 = arith.addf %546, %563 : vector<2x16x16xf32>
    %c52_56 = arith.constant 52 : index
    %565 = memref.load %arg4[%c52_56] : memref<180xf32, #tpu.memory_space<smem>>
    %566 = vector.broadcast %565 : f32 to vector<2x16x16xf32>
    %567 = arith.mulf %560, %566 : vector<2x16x16xf32>
    %568 = arith.addf %550, %567 : vector<2x16x16xf32>
    %c97 = arith.constant 97 : index
    %569 = memref.load %arg4[%c97] : memref<180xf32, #tpu.memory_space<smem>>
    %570 = vector.broadcast %569 : f32 to vector<2x16x16xf32>
    %571 = arith.mulf %560, %570 : vector<2x16x16xf32>
    %572 = arith.addf %554, %571 : vector<2x16x16xf32>
    %c142 = arith.constant 142 : index
    %573 = memref.load %arg4[%c142] : memref<180xf32, #tpu.memory_space<smem>>
    %574 = vector.broadcast %573 : f32 to vector<2x16x16xf32>
    %575 = arith.mulf %560, %574 : vector<2x16x16xf32>
    %576 = arith.addf %558, %575 : vector<2x16x16xf32>
    %577 = vector.extract_strided_slice %424 {offsets = [0, 0, 2, 2], sizes = [1, 2, 16, 16], strides = [1, 1, 1, 1]} : vector<5x2x18x18xf32> to vector<1x2x16x16xf32>
    %578 = vector.shape_cast %577 : vector<1x2x16x16xf32> to vector<2x16x16xf32>
    %c8_57 = arith.constant 8 : index
    %579 = memref.load %arg4[%c8_57] : memref<180xf32, #tpu.memory_space<smem>>
    %580 = vector.broadcast %579 : f32 to vector<2x16x16xf32>
    %581 = arith.mulf %578, %580 : vector<2x16x16xf32>
    %582 = arith.addf %564, %581 : vector<2x16x16xf32>
    %c53_58 = arith.constant 53 : index
    %583 = memref.load %arg4[%c53_58] : memref<180xf32, #tpu.memory_space<smem>>
    %584 = vector.broadcast %583 : f32 to vector<2x16x16xf32>
    %585 = arith.mulf %578, %584 : vector<2x16x16xf32>
    %586 = arith.addf %568, %585 : vector<2x16x16xf32>
    %c98 = arith.constant 98 : index
    %587 = memref.load %arg4[%c98] : memref<180xf32, #tpu.memory_space<smem>>
    %588 = vector.broadcast %587 : f32 to vector<2x16x16xf32>
    %589 = arith.mulf %578, %588 : vector<2x16x16xf32>
    %590 = arith.addf %572, %589 : vector<2x16x16xf32>
    %c143 = arith.constant 143 : index
    %591 = memref.load %arg4[%c143] : memref<180xf32, #tpu.memory_space<smem>>
    %592 = vector.broadcast %591 : f32 to vector<2x16x16xf32>
    %593 = arith.mulf %578, %592 : vector<2x16x16xf32>
    %594 = arith.addf %576, %593 : vector<2x16x16xf32>
    %595 = vector.extract_strided_slice %424 {offsets = [1, 0, 0, 0], sizes = [1, 2, 16, 16], strides = [1, 1, 1, 1]} : vector<5x2x18x18xf32> to vector<1x2x16x16xf32>
    %596 = vector.shape_cast %595 : vector<1x2x16x16xf32> to vector<2x16x16xf32>
    %c9_59 = arith.constant 9 : index
    %597 = memref.load %arg4[%c9_59] : memref<180xf32, #tpu.memory_space<smem>>
    %598 = vector.broadcast %597 : f32 to vector<2x16x16xf32>
    %599 = arith.mulf %596, %598 : vector<2x16x16xf32>
    %600 = arith.addf %582, %599 : vector<2x16x16xf32>
    %c54_60 = arith.constant 54 : index
    %601 = memref.load %arg4[%c54_60] : memref<180xf32, #tpu.memory_space<smem>>
    %602 = vector.broadcast %601 : f32 to vector<2x16x16xf32>
    %603 = arith.mulf %596, %602 : vector<2x16x16xf32>
    %604 = arith.addf %586, %603 : vector<2x16x16xf32>
    %c99 = arith.constant 99 : index
    %605 = memref.load %arg4[%c99] : memref<180xf32, #tpu.memory_space<smem>>
    %606 = vector.broadcast %605 : f32 to vector<2x16x16xf32>
    %607 = arith.mulf %596, %606 : vector<2x16x16xf32>
    %608 = arith.addf %590, %607 : vector<2x16x16xf32>
    %c144 = arith.constant 144 : index
    %609 = memref.load %arg4[%c144] : memref<180xf32, #tpu.memory_space<smem>>
    %610 = vector.broadcast %609 : f32 to vector<2x16x16xf32>
    %611 = arith.mulf %596, %610 : vector<2x16x16xf32>
    %612 = arith.addf %594, %611 : vector<2x16x16xf32>
    %613 = vector.extract_strided_slice %424 {offsets = [1, 0, 0, 1], sizes = [1, 2, 16, 16], strides = [1, 1, 1, 1]} : vector<5x2x18x18xf32> to vector<1x2x16x16xf32>
    %614 = vector.shape_cast %613 : vector<1x2x16x16xf32> to vector<2x16x16xf32>
    %c10_61 = arith.constant 10 : index
    %615 = memref.load %arg4[%c10_61] : memref<180xf32, #tpu.memory_space<smem>>
    %616 = vector.broadcast %615 : f32 to vector<2x16x16xf32>
    %617 = arith.mulf %614, %616 : vector<2x16x16xf32>
    %618 = arith.addf %600, %617 : vector<2x16x16xf32>
    %c55_62 = arith.constant 55 : index
    %619 = memref.load %arg4[%c55_62] : memref<180xf32, #tpu.memory_space<smem>>
    %620 = vector.broadcast %619 : f32 to vector<2x16x16xf32>
    %621 = arith.mulf %614, %620 : vector<2x16x16xf32>
    %622 = arith.addf %604, %621 : vector<2x16x16xf32>
    %c100 = arith.constant 100 : index
    %623 = memref.load %arg4[%c100] : memref<180xf32, #tpu.memory_space<smem>>
    %624 = vector.broadcast %623 : f32 to vector<2x16x16xf32>
    %625 = arith.mulf %614, %624 : vector<2x16x16xf32>
    %626 = arith.addf %608, %625 : vector<2x16x16xf32>
    %c145 = arith.constant 145 : index
    %627 = memref.load %arg4[%c145] : memref<180xf32, #tpu.memory_space<smem>>
    %628 = vector.broadcast %627 : f32 to vector<2x16x16xf32>
    %629 = arith.mulf %614, %628 : vector<2x16x16xf32>
    %630 = arith.addf %612, %629 : vector<2x16x16xf32>
    %631 = vector.extract_strided_slice %424 {offsets = [1, 0, 0, 2], sizes = [1, 2, 16, 16], strides = [1, 1, 1, 1]} : vector<5x2x18x18xf32> to vector<1x2x16x16xf32>
    %632 = vector.shape_cast %631 : vector<1x2x16x16xf32> to vector<2x16x16xf32>
    %c11_63 = arith.constant 11 : index
    %633 = memref.load %arg4[%c11_63] : memref<180xf32, #tpu.memory_space<smem>>
    %634 = vector.broadcast %633 : f32 to vector<2x16x16xf32>
    %635 = arith.mulf %632, %634 : vector<2x16x16xf32>
    %636 = arith.addf %618, %635 : vector<2x16x16xf32>
    %c56_64 = arith.constant 56 : index
    %637 = memref.load %arg4[%c56_64] : memref<180xf32, #tpu.memory_space<smem>>
    %638 = vector.broadcast %637 : f32 to vector<2x16x16xf32>
    %639 = arith.mulf %632, %638 : vector<2x16x16xf32>
    %640 = arith.addf %622, %639 : vector<2x16x16xf32>
    %c101 = arith.constant 101 : index
    %641 = memref.load %arg4[%c101] : memref<180xf32, #tpu.memory_space<smem>>
    %642 = vector.broadcast %641 : f32 to vector<2x16x16xf32>
    %643 = arith.mulf %632, %642 : vector<2x16x16xf32>
    %644 = arith.addf %626, %643 : vector<2x16x16xf32>
    %c146 = arith.constant 146 : index
    %645 = memref.load %arg4[%c146] : memref<180xf32, #tpu.memory_space<smem>>
    %646 = vector.broadcast %645 : f32 to vector<2x16x16xf32>
    %647 = arith.mulf %632, %646 : vector<2x16x16xf32>
    %648 = arith.addf %630, %647 : vector<2x16x16xf32>
    %649 = vector.extract_strided_slice %424 {offsets = [1, 0, 1, 0], sizes = [1, 2, 16, 16], strides = [1, 1, 1, 1]} : vector<5x2x18x18xf32> to vector<1x2x16x16xf32>
    %650 = vector.shape_cast %649 : vector<1x2x16x16xf32> to vector<2x16x16xf32>
    %c12_65 = arith.constant 12 : index
    %651 = memref.load %arg4[%c12_65] : memref<180xf32, #tpu.memory_space<smem>>
    %652 = vector.broadcast %651 : f32 to vector<2x16x16xf32>
    %653 = arith.mulf %650, %652 : vector<2x16x16xf32>
    %654 = arith.addf %636, %653 : vector<2x16x16xf32>
    %c57_66 = arith.constant 57 : index
    %655 = memref.load %arg4[%c57_66] : memref<180xf32, #tpu.memory_space<smem>>
    %656 = vector.broadcast %655 : f32 to vector<2x16x16xf32>
    %657 = arith.mulf %650, %656 : vector<2x16x16xf32>
    %658 = arith.addf %640, %657 : vector<2x16x16xf32>
    %c102 = arith.constant 102 : index
    %659 = memref.load %arg4[%c102] : memref<180xf32, #tpu.memory_space<smem>>
    %660 = vector.broadcast %659 : f32 to vector<2x16x16xf32>
    %661 = arith.mulf %650, %660 : vector<2x16x16xf32>
    %662 = arith.addf %644, %661 : vector<2x16x16xf32>
    %c147 = arith.constant 147 : index
    %663 = memref.load %arg4[%c147] : memref<180xf32, #tpu.memory_space<smem>>
    %664 = vector.broadcast %663 : f32 to vector<2x16x16xf32>
    %665 = arith.mulf %650, %664 : vector<2x16x16xf32>
    %666 = arith.addf %648, %665 : vector<2x16x16xf32>
    %667 = vector.extract_strided_slice %424 {offsets = [1, 0, 1, 1], sizes = [1, 2, 16, 16], strides = [1, 1, 1, 1]} : vector<5x2x18x18xf32> to vector<1x2x16x16xf32>
    %668 = vector.shape_cast %667 : vector<1x2x16x16xf32> to vector<2x16x16xf32>
    %c13_67 = arith.constant 13 : index
    %669 = memref.load %arg4[%c13_67] : memref<180xf32, #tpu.memory_space<smem>>
    %670 = vector.broadcast %669 : f32 to vector<2x16x16xf32>
    %671 = arith.mulf %668, %670 : vector<2x16x16xf32>
    %672 = arith.addf %654, %671 : vector<2x16x16xf32>
    %c58_68 = arith.constant 58 : index
    %673 = memref.load %arg4[%c58_68] : memref<180xf32, #tpu.memory_space<smem>>
    %674 = vector.broadcast %673 : f32 to vector<2x16x16xf32>
    %675 = arith.mulf %668, %674 : vector<2x16x16xf32>
    %676 = arith.addf %658, %675 : vector<2x16x16xf32>
    %c103 = arith.constant 103 : index
    %677 = memref.load %arg4[%c103] : memref<180xf32, #tpu.memory_space<smem>>
    %678 = vector.broadcast %677 : f32 to vector<2x16x16xf32>
    %679 = arith.mulf %668, %678 : vector<2x16x16xf32>
    %680 = arith.addf %662, %679 : vector<2x16x16xf32>
    %c148 = arith.constant 148 : index
    %681 = memref.load %arg4[%c148] : memref<180xf32, #tpu.memory_space<smem>>
    %682 = vector.broadcast %681 : f32 to vector<2x16x16xf32>
    %683 = arith.mulf %668, %682 : vector<2x16x16xf32>
    %684 = arith.addf %666, %683 : vector<2x16x16xf32>
    %685 = vector.extract_strided_slice %424 {offsets = [1, 0, 1, 2], sizes = [1, 2, 16, 16], strides = [1, 1, 1, 1]} : vector<5x2x18x18xf32> to vector<1x2x16x16xf32>
    %686 = vector.shape_cast %685 : vector<1x2x16x16xf32> to vector<2x16x16xf32>
    %c14_69 = arith.constant 14 : index
    %687 = memref.load %arg4[%c14_69] : memref<180xf32, #tpu.memory_space<smem>>
    %688 = vector.broadcast %687 : f32 to vector<2x16x16xf32>
    %689 = arith.mulf %686, %688 : vector<2x16x16xf32>
    %690 = arith.addf %672, %689 : vector<2x16x16xf32>
    %c59_70 = arith.constant 59 : index
    %691 = memref.load %arg4[%c59_70] : memref<180xf32, #tpu.memory_space<smem>>
    %692 = vector.broadcast %691 : f32 to vector<2x16x16xf32>
    %693 = arith.mulf %686, %692 : vector<2x16x16xf32>
    %694 = arith.addf %676, %693 : vector<2x16x16xf32>
    %c104 = arith.constant 104 : index
    %695 = memref.load %arg4[%c104] : memref<180xf32, #tpu.memory_space<smem>>
    %696 = vector.broadcast %695 : f32 to vector<2x16x16xf32>
    %697 = arith.mulf %686, %696 : vector<2x16x16xf32>
    %698 = arith.addf %680, %697 : vector<2x16x16xf32>
    %c149 = arith.constant 149 : index
    %699 = memref.load %arg4[%c149] : memref<180xf32, #tpu.memory_space<smem>>
    %700 = vector.broadcast %699 : f32 to vector<2x16x16xf32>
    %701 = arith.mulf %686, %700 : vector<2x16x16xf32>
    %702 = arith.addf %684, %701 : vector<2x16x16xf32>
    %703 = vector.extract_strided_slice %424 {offsets = [1, 0, 2, 0], sizes = [1, 2, 16, 16], strides = [1, 1, 1, 1]} : vector<5x2x18x18xf32> to vector<1x2x16x16xf32>
    %704 = vector.shape_cast %703 : vector<1x2x16x16xf32> to vector<2x16x16xf32>
    %c15_71 = arith.constant 15 : index
    %705 = memref.load %arg4[%c15_71] : memref<180xf32, #tpu.memory_space<smem>>
    %706 = vector.broadcast %705 : f32 to vector<2x16x16xf32>
    %707 = arith.mulf %704, %706 : vector<2x16x16xf32>
    %708 = arith.addf %690, %707 : vector<2x16x16xf32>
    %c60_72 = arith.constant 60 : index
    %709 = memref.load %arg4[%c60_72] : memref<180xf32, #tpu.memory_space<smem>>
    %710 = vector.broadcast %709 : f32 to vector<2x16x16xf32>
    %711 = arith.mulf %704, %710 : vector<2x16x16xf32>
    %712 = arith.addf %694, %711 : vector<2x16x16xf32>
    %c105 = arith.constant 105 : index
    %713 = memref.load %arg4[%c105] : memref<180xf32, #tpu.memory_space<smem>>
    %714 = vector.broadcast %713 : f32 to vector<2x16x16xf32>
    %715 = arith.mulf %704, %714 : vector<2x16x16xf32>
    %716 = arith.addf %698, %715 : vector<2x16x16xf32>
    %c150 = arith.constant 150 : index
    %717 = memref.load %arg4[%c150] : memref<180xf32, #tpu.memory_space<smem>>
    %718 = vector.broadcast %717 : f32 to vector<2x16x16xf32>
    %719 = arith.mulf %704, %718 : vector<2x16x16xf32>
    %720 = arith.addf %702, %719 : vector<2x16x16xf32>
    %721 = vector.extract_strided_slice %424 {offsets = [1, 0, 2, 1], sizes = [1, 2, 16, 16], strides = [1, 1, 1, 1]} : vector<5x2x18x18xf32> to vector<1x2x16x16xf32>
    %722 = vector.shape_cast %721 : vector<1x2x16x16xf32> to vector<2x16x16xf32>
    %c16_73 = arith.constant 16 : index
    %723 = memref.load %arg4[%c16_73] : memref<180xf32, #tpu.memory_space<smem>>
    %724 = vector.broadcast %723 : f32 to vector<2x16x16xf32>
    %725 = arith.mulf %722, %724 : vector<2x16x16xf32>
    %726 = arith.addf %708, %725 : vector<2x16x16xf32>
    %c61_74 = arith.constant 61 : index
    %727 = memref.load %arg4[%c61_74] : memref<180xf32, #tpu.memory_space<smem>>
    %728 = vector.broadcast %727 : f32 to vector<2x16x16xf32>
    %729 = arith.mulf %722, %728 : vector<2x16x16xf32>
    %730 = arith.addf %712, %729 : vector<2x16x16xf32>
    %c106 = arith.constant 106 : index
    %731 = memref.load %arg4[%c106] : memref<180xf32, #tpu.memory_space<smem>>
    %732 = vector.broadcast %731 : f32 to vector<2x16x16xf32>
    %733 = arith.mulf %722, %732 : vector<2x16x16xf32>
    %734 = arith.addf %716, %733 : vector<2x16x16xf32>
    %c151 = arith.constant 151 : index
    %735 = memref.load %arg4[%c151] : memref<180xf32, #tpu.memory_space<smem>>
    %736 = vector.broadcast %735 : f32 to vector<2x16x16xf32>
    %737 = arith.mulf %722, %736 : vector<2x16x16xf32>
    %738 = arith.addf %720, %737 : vector<2x16x16xf32>
    %739 = vector.extract_strided_slice %424 {offsets = [1, 0, 2, 2], sizes = [1, 2, 16, 16], strides = [1, 1, 1, 1]} : vector<5x2x18x18xf32> to vector<1x2x16x16xf32>
    %740 = vector.shape_cast %739 : vector<1x2x16x16xf32> to vector<2x16x16xf32>
    %c17_75 = arith.constant 17 : index
    %741 = memref.load %arg4[%c17_75] : memref<180xf32, #tpu.memory_space<smem>>
    %742 = vector.broadcast %741 : f32 to vector<2x16x16xf32>
    %743 = arith.mulf %740, %742 : vector<2x16x16xf32>
    %744 = arith.addf %726, %743 : vector<2x16x16xf32>
    %c62_76 = arith.constant 62 : index
    %745 = memref.load %arg4[%c62_76] : memref<180xf32, #tpu.memory_space<smem>>
    %746 = vector.broadcast %745 : f32 to vector<2x16x16xf32>
    %747 = arith.mulf %740, %746 : vector<2x16x16xf32>
    %748 = arith.addf %730, %747 : vector<2x16x16xf32>
    %c107 = arith.constant 107 : index
    %749 = memref.load %arg4[%c107] : memref<180xf32, #tpu.memory_space<smem>>
    %750 = vector.broadcast %749 : f32 to vector<2x16x16xf32>
    %751 = arith.mulf %740, %750 : vector<2x16x16xf32>
    %752 = arith.addf %734, %751 : vector<2x16x16xf32>
    %c152 = arith.constant 152 : index
    %753 = memref.load %arg4[%c152] : memref<180xf32, #tpu.memory_space<smem>>
    %754 = vector.broadcast %753 : f32 to vector<2x16x16xf32>
    %755 = arith.mulf %740, %754 : vector<2x16x16xf32>
    %756 = arith.addf %738, %755 : vector<2x16x16xf32>
    %757 = vector.extract_strided_slice %424 {offsets = [2, 0, 0, 0], sizes = [1, 2, 16, 16], strides = [1, 1, 1, 1]} : vector<5x2x18x18xf32> to vector<1x2x16x16xf32>
    %758 = vector.shape_cast %757 : vector<1x2x16x16xf32> to vector<2x16x16xf32>
    %c18_77 = arith.constant 18 : index
    %759 = memref.load %arg4[%c18_77] : memref<180xf32, #tpu.memory_space<smem>>
    %760 = vector.broadcast %759 : f32 to vector<2x16x16xf32>
    %761 = arith.mulf %758, %760 : vector<2x16x16xf32>
    %762 = arith.addf %744, %761 : vector<2x16x16xf32>
    %c63_78 = arith.constant 63 : index
    %763 = memref.load %arg4[%c63_78] : memref<180xf32, #tpu.memory_space<smem>>
    %764 = vector.broadcast %763 : f32 to vector<2x16x16xf32>
    %765 = arith.mulf %758, %764 : vector<2x16x16xf32>
    %766 = arith.addf %748, %765 : vector<2x16x16xf32>
    %c108 = arith.constant 108 : index
    %767 = memref.load %arg4[%c108] : memref<180xf32, #tpu.memory_space<smem>>
    %768 = vector.broadcast %767 : f32 to vector<2x16x16xf32>
    %769 = arith.mulf %758, %768 : vector<2x16x16xf32>
    %770 = arith.addf %752, %769 : vector<2x16x16xf32>
    %c153 = arith.constant 153 : index
    %771 = memref.load %arg4[%c153] : memref<180xf32, #tpu.memory_space<smem>>
    %772 = vector.broadcast %771 : f32 to vector<2x16x16xf32>
    %773 = arith.mulf %758, %772 : vector<2x16x16xf32>
    %774 = arith.addf %756, %773 : vector<2x16x16xf32>
    %775 = vector.extract_strided_slice %424 {offsets = [2, 0, 0, 1], sizes = [1, 2, 16, 16], strides = [1, 1, 1, 1]} : vector<5x2x18x18xf32> to vector<1x2x16x16xf32>
    %776 = vector.shape_cast %775 : vector<1x2x16x16xf32> to vector<2x16x16xf32>
    %c19_79 = arith.constant 19 : index
    %777 = memref.load %arg4[%c19_79] : memref<180xf32, #tpu.memory_space<smem>>
    %778 = vector.broadcast %777 : f32 to vector<2x16x16xf32>
    %779 = arith.mulf %776, %778 : vector<2x16x16xf32>
    %780 = arith.addf %762, %779 : vector<2x16x16xf32>
    %c64_80 = arith.constant 64 : index
    %781 = memref.load %arg4[%c64_80] : memref<180xf32, #tpu.memory_space<smem>>
    %782 = vector.broadcast %781 : f32 to vector<2x16x16xf32>
    %783 = arith.mulf %776, %782 : vector<2x16x16xf32>
    %784 = arith.addf %766, %783 : vector<2x16x16xf32>
    %c109 = arith.constant 109 : index
    %785 = memref.load %arg4[%c109] : memref<180xf32, #tpu.memory_space<smem>>
    %786 = vector.broadcast %785 : f32 to vector<2x16x16xf32>
    %787 = arith.mulf %776, %786 : vector<2x16x16xf32>
    %788 = arith.addf %770, %787 : vector<2x16x16xf32>
    %c154 = arith.constant 154 : index
    %789 = memref.load %arg4[%c154] : memref<180xf32, #tpu.memory_space<smem>>
    %790 = vector.broadcast %789 : f32 to vector<2x16x16xf32>
    %791 = arith.mulf %776, %790 : vector<2x16x16xf32>
    %792 = arith.addf %774, %791 : vector<2x16x16xf32>
    %793 = vector.extract_strided_slice %424 {offsets = [2, 0, 0, 2], sizes = [1, 2, 16, 16], strides = [1, 1, 1, 1]} : vector<5x2x18x18xf32> to vector<1x2x16x16xf32>
    %794 = vector.shape_cast %793 : vector<1x2x16x16xf32> to vector<2x16x16xf32>
    %c20_81 = arith.constant 20 : index
    %795 = memref.load %arg4[%c20_81] : memref<180xf32, #tpu.memory_space<smem>>
    %796 = vector.broadcast %795 : f32 to vector<2x16x16xf32>
    %797 = arith.mulf %794, %796 : vector<2x16x16xf32>
    %798 = arith.addf %780, %797 : vector<2x16x16xf32>
    %c65_82 = arith.constant 65 : index
    %799 = memref.load %arg4[%c65_82] : memref<180xf32, #tpu.memory_space<smem>>
    %800 = vector.broadcast %799 : f32 to vector<2x16x16xf32>
    %801 = arith.mulf %794, %800 : vector<2x16x16xf32>
    %802 = arith.addf %784, %801 : vector<2x16x16xf32>
    %c110 = arith.constant 110 : index
    %803 = memref.load %arg4[%c110] : memref<180xf32, #tpu.memory_space<smem>>
    %804 = vector.broadcast %803 : f32 to vector<2x16x16xf32>
    %805 = arith.mulf %794, %804 : vector<2x16x16xf32>
    %806 = arith.addf %788, %805 : vector<2x16x16xf32>
    %c155 = arith.constant 155 : index
    %807 = memref.load %arg4[%c155] : memref<180xf32, #tpu.memory_space<smem>>
    %808 = vector.broadcast %807 : f32 to vector<2x16x16xf32>
    %809 = arith.mulf %794, %808 : vector<2x16x16xf32>
    %810 = arith.addf %792, %809 : vector<2x16x16xf32>
    %811 = vector.extract_strided_slice %424 {offsets = [2, 0, 1, 0], sizes = [1, 2, 16, 16], strides = [1, 1, 1, 1]} : vector<5x2x18x18xf32> to vector<1x2x16x16xf32>
    %812 = vector.shape_cast %811 : vector<1x2x16x16xf32> to vector<2x16x16xf32>
    %c21_83 = arith.constant 21 : index
    %813 = memref.load %arg4[%c21_83] : memref<180xf32, #tpu.memory_space<smem>>
    %814 = vector.broadcast %813 : f32 to vector<2x16x16xf32>
    %815 = arith.mulf %812, %814 : vector<2x16x16xf32>
    %816 = arith.addf %798, %815 : vector<2x16x16xf32>
    %c66_84 = arith.constant 66 : index
    %817 = memref.load %arg4[%c66_84] : memref<180xf32, #tpu.memory_space<smem>>
    %818 = vector.broadcast %817 : f32 to vector<2x16x16xf32>
    %819 = arith.mulf %812, %818 : vector<2x16x16xf32>
    %820 = arith.addf %802, %819 : vector<2x16x16xf32>
    %c111 = arith.constant 111 : index
    %821 = memref.load %arg4[%c111] : memref<180xf32, #tpu.memory_space<smem>>
    %822 = vector.broadcast %821 : f32 to vector<2x16x16xf32>
    %823 = arith.mulf %812, %822 : vector<2x16x16xf32>
    %824 = arith.addf %806, %823 : vector<2x16x16xf32>
    %c156 = arith.constant 156 : index
    %825 = memref.load %arg4[%c156] : memref<180xf32, #tpu.memory_space<smem>>
    %826 = vector.broadcast %825 : f32 to vector<2x16x16xf32>
    %827 = arith.mulf %812, %826 : vector<2x16x16xf32>
    %828 = arith.addf %810, %827 : vector<2x16x16xf32>
    %829 = vector.extract_strided_slice %424 {offsets = [2, 0, 1, 1], sizes = [1, 2, 16, 16], strides = [1, 1, 1, 1]} : vector<5x2x18x18xf32> to vector<1x2x16x16xf32>
    %830 = vector.shape_cast %829 : vector<1x2x16x16xf32> to vector<2x16x16xf32>
    %c22_85 = arith.constant 22 : index
    %831 = memref.load %arg4[%c22_85] : memref<180xf32, #tpu.memory_space<smem>>
    %832 = vector.broadcast %831 : f32 to vector<2x16x16xf32>
    %833 = arith.mulf %830, %832 : vector<2x16x16xf32>
    %834 = arith.addf %816, %833 : vector<2x16x16xf32>
    %c67_86 = arith.constant 67 : index
    %835 = memref.load %arg4[%c67_86] : memref<180xf32, #tpu.memory_space<smem>>
    %836 = vector.broadcast %835 : f32 to vector<2x16x16xf32>
    %837 = arith.mulf %830, %836 : vector<2x16x16xf32>
    %838 = arith.addf %820, %837 : vector<2x16x16xf32>
    %c112 = arith.constant 112 : index
    %839 = memref.load %arg4[%c112] : memref<180xf32, #tpu.memory_space<smem>>
    %840 = vector.broadcast %839 : f32 to vector<2x16x16xf32>
    %841 = arith.mulf %830, %840 : vector<2x16x16xf32>
    %842 = arith.addf %824, %841 : vector<2x16x16xf32>
    %c157 = arith.constant 157 : index
    %843 = memref.load %arg4[%c157] : memref<180xf32, #tpu.memory_space<smem>>
    %844 = vector.broadcast %843 : f32 to vector<2x16x16xf32>
    %845 = arith.mulf %830, %844 : vector<2x16x16xf32>
    %846 = arith.addf %828, %845 : vector<2x16x16xf32>
    %847 = vector.extract_strided_slice %424 {offsets = [2, 0, 1, 2], sizes = [1, 2, 16, 16], strides = [1, 1, 1, 1]} : vector<5x2x18x18xf32> to vector<1x2x16x16xf32>
    %848 = vector.shape_cast %847 : vector<1x2x16x16xf32> to vector<2x16x16xf32>
    %c23_87 = arith.constant 23 : index
    %849 = memref.load %arg4[%c23_87] : memref<180xf32, #tpu.memory_space<smem>>
    %850 = vector.broadcast %849 : f32 to vector<2x16x16xf32>
    %851 = arith.mulf %848, %850 : vector<2x16x16xf32>
    %852 = arith.addf %834, %851 : vector<2x16x16xf32>
    %c68_88 = arith.constant 68 : index
    %853 = memref.load %arg4[%c68_88] : memref<180xf32, #tpu.memory_space<smem>>
    %854 = vector.broadcast %853 : f32 to vector<2x16x16xf32>
    %855 = arith.mulf %848, %854 : vector<2x16x16xf32>
    %856 = arith.addf %838, %855 : vector<2x16x16xf32>
    %c113 = arith.constant 113 : index
    %857 = memref.load %arg4[%c113] : memref<180xf32, #tpu.memory_space<smem>>
    %858 = vector.broadcast %857 : f32 to vector<2x16x16xf32>
    %859 = arith.mulf %848, %858 : vector<2x16x16xf32>
    %860 = arith.addf %842, %859 : vector<2x16x16xf32>
    %c158 = arith.constant 158 : index
    %861 = memref.load %arg4[%c158] : memref<180xf32, #tpu.memory_space<smem>>
    %862 = vector.broadcast %861 : f32 to vector<2x16x16xf32>
    %863 = arith.mulf %848, %862 : vector<2x16x16xf32>
    %864 = arith.addf %846, %863 : vector<2x16x16xf32>
    %865 = vector.extract_strided_slice %424 {offsets = [2, 0, 2, 0], sizes = [1, 2, 16, 16], strides = [1, 1, 1, 1]} : vector<5x2x18x18xf32> to vector<1x2x16x16xf32>
    %866 = vector.shape_cast %865 : vector<1x2x16x16xf32> to vector<2x16x16xf32>
    %c24_89 = arith.constant 24 : index
    %867 = memref.load %arg4[%c24_89] : memref<180xf32, #tpu.memory_space<smem>>
    %868 = vector.broadcast %867 : f32 to vector<2x16x16xf32>
    %869 = arith.mulf %866, %868 : vector<2x16x16xf32>
    %870 = arith.addf %852, %869 : vector<2x16x16xf32>
    %c69_90 = arith.constant 69 : index
    %871 = memref.load %arg4[%c69_90] : memref<180xf32, #tpu.memory_space<smem>>
    %872 = vector.broadcast %871 : f32 to vector<2x16x16xf32>
    %873 = arith.mulf %866, %872 : vector<2x16x16xf32>
    %874 = arith.addf %856, %873 : vector<2x16x16xf32>
    %c114 = arith.constant 114 : index
    %875 = memref.load %arg4[%c114] : memref<180xf32, #tpu.memory_space<smem>>
    %876 = vector.broadcast %875 : f32 to vector<2x16x16xf32>
    %877 = arith.mulf %866, %876 : vector<2x16x16xf32>
    %878 = arith.addf %860, %877 : vector<2x16x16xf32>
    %c159 = arith.constant 159 : index
    %879 = memref.load %arg4[%c159] : memref<180xf32, #tpu.memory_space<smem>>
    %880 = vector.broadcast %879 : f32 to vector<2x16x16xf32>
    %881 = arith.mulf %866, %880 : vector<2x16x16xf32>
    %882 = arith.addf %864, %881 : vector<2x16x16xf32>
    %883 = vector.extract_strided_slice %424 {offsets = [2, 0, 2, 1], sizes = [1, 2, 16, 16], strides = [1, 1, 1, 1]} : vector<5x2x18x18xf32> to vector<1x2x16x16xf32>
    %884 = vector.shape_cast %883 : vector<1x2x16x16xf32> to vector<2x16x16xf32>
    %c25_91 = arith.constant 25 : index
    %885 = memref.load %arg4[%c25_91] : memref<180xf32, #tpu.memory_space<smem>>
    %886 = vector.broadcast %885 : f32 to vector<2x16x16xf32>
    %887 = arith.mulf %884, %886 : vector<2x16x16xf32>
    %888 = arith.addf %870, %887 : vector<2x16x16xf32>
    %c70_92 = arith.constant 70 : index
    %889 = memref.load %arg4[%c70_92] : memref<180xf32, #tpu.memory_space<smem>>
    %890 = vector.broadcast %889 : f32 to vector<2x16x16xf32>
    %891 = arith.mulf %884, %890 : vector<2x16x16xf32>
    %892 = arith.addf %874, %891 : vector<2x16x16xf32>
    %c115 = arith.constant 115 : index
    %893 = memref.load %arg4[%c115] : memref<180xf32, #tpu.memory_space<smem>>
    %894 = vector.broadcast %893 : f32 to vector<2x16x16xf32>
    %895 = arith.mulf %884, %894 : vector<2x16x16xf32>
    %896 = arith.addf %878, %895 : vector<2x16x16xf32>
    %c160 = arith.constant 160 : index
    %897 = memref.load %arg4[%c160] : memref<180xf32, #tpu.memory_space<smem>>
    %898 = vector.broadcast %897 : f32 to vector<2x16x16xf32>
    %899 = arith.mulf %884, %898 : vector<2x16x16xf32>
    %900 = arith.addf %882, %899 : vector<2x16x16xf32>
    %901 = vector.extract_strided_slice %424 {offsets = [2, 0, 2, 2], sizes = [1, 2, 16, 16], strides = [1, 1, 1, 1]} : vector<5x2x18x18xf32> to vector<1x2x16x16xf32>
    %902 = vector.shape_cast %901 : vector<1x2x16x16xf32> to vector<2x16x16xf32>
    %c26_93 = arith.constant 26 : index
    %903 = memref.load %arg4[%c26_93] : memref<180xf32, #tpu.memory_space<smem>>
    %904 = vector.broadcast %903 : f32 to vector<2x16x16xf32>
    %905 = arith.mulf %902, %904 : vector<2x16x16xf32>
    %906 = arith.addf %888, %905 : vector<2x16x16xf32>
    %c71_94 = arith.constant 71 : index
    %907 = memref.load %arg4[%c71_94] : memref<180xf32, #tpu.memory_space<smem>>
    %908 = vector.broadcast %907 : f32 to vector<2x16x16xf32>
    %909 = arith.mulf %902, %908 : vector<2x16x16xf32>
    %910 = arith.addf %892, %909 : vector<2x16x16xf32>
    %c116 = arith.constant 116 : index
    %911 = memref.load %arg4[%c116] : memref<180xf32, #tpu.memory_space<smem>>
    %912 = vector.broadcast %911 : f32 to vector<2x16x16xf32>
    %913 = arith.mulf %902, %912 : vector<2x16x16xf32>
    %914 = arith.addf %896, %913 : vector<2x16x16xf32>
    %c161 = arith.constant 161 : index
    %915 = memref.load %arg4[%c161] : memref<180xf32, #tpu.memory_space<smem>>
    %916 = vector.broadcast %915 : f32 to vector<2x16x16xf32>
    %917 = arith.mulf %902, %916 : vector<2x16x16xf32>
    %918 = arith.addf %900, %917 : vector<2x16x16xf32>
    %919 = vector.extract_strided_slice %424 {offsets = [3, 0, 0, 0], sizes = [1, 2, 16, 16], strides = [1, 1, 1, 1]} : vector<5x2x18x18xf32> to vector<1x2x16x16xf32>
    %920 = vector.shape_cast %919 : vector<1x2x16x16xf32> to vector<2x16x16xf32>
    %c27_95 = arith.constant 27 : index
    %921 = memref.load %arg4[%c27_95] : memref<180xf32, #tpu.memory_space<smem>>
    %922 = vector.broadcast %921 : f32 to vector<2x16x16xf32>
    %923 = arith.mulf %920, %922 : vector<2x16x16xf32>
    %924 = arith.addf %906, %923 : vector<2x16x16xf32>
    %c72_96 = arith.constant 72 : index
    %925 = memref.load %arg4[%c72_96] : memref<180xf32, #tpu.memory_space<smem>>
    %926 = vector.broadcast %925 : f32 to vector<2x16x16xf32>
    %927 = arith.mulf %920, %926 : vector<2x16x16xf32>
    %928 = arith.addf %910, %927 : vector<2x16x16xf32>
    %c117 = arith.constant 117 : index
    %929 = memref.load %arg4[%c117] : memref<180xf32, #tpu.memory_space<smem>>
    %930 = vector.broadcast %929 : f32 to vector<2x16x16xf32>
    %931 = arith.mulf %920, %930 : vector<2x16x16xf32>
    %932 = arith.addf %914, %931 : vector<2x16x16xf32>
    %c162 = arith.constant 162 : index
    %933 = memref.load %arg4[%c162] : memref<180xf32, #tpu.memory_space<smem>>
    %934 = vector.broadcast %933 : f32 to vector<2x16x16xf32>
    %935 = arith.mulf %920, %934 : vector<2x16x16xf32>
    %936 = arith.addf %918, %935 : vector<2x16x16xf32>
    %937 = vector.extract_strided_slice %424 {offsets = [3, 0, 0, 1], sizes = [1, 2, 16, 16], strides = [1, 1, 1, 1]} : vector<5x2x18x18xf32> to vector<1x2x16x16xf32>
    %938 = vector.shape_cast %937 : vector<1x2x16x16xf32> to vector<2x16x16xf32>
    %c28_97 = arith.constant 28 : index
    %939 = memref.load %arg4[%c28_97] : memref<180xf32, #tpu.memory_space<smem>>
    %940 = vector.broadcast %939 : f32 to vector<2x16x16xf32>
    %941 = arith.mulf %938, %940 : vector<2x16x16xf32>
    %942 = arith.addf %924, %941 : vector<2x16x16xf32>
    %c73_98 = arith.constant 73 : index
    %943 = memref.load %arg4[%c73_98] : memref<180xf32, #tpu.memory_space<smem>>
    %944 = vector.broadcast %943 : f32 to vector<2x16x16xf32>
    %945 = arith.mulf %938, %944 : vector<2x16x16xf32>
    %946 = arith.addf %928, %945 : vector<2x16x16xf32>
    %c118 = arith.constant 118 : index
    %947 = memref.load %arg4[%c118] : memref<180xf32, #tpu.memory_space<smem>>
    %948 = vector.broadcast %947 : f32 to vector<2x16x16xf32>
    %949 = arith.mulf %938, %948 : vector<2x16x16xf32>
    %950 = arith.addf %932, %949 : vector<2x16x16xf32>
    %c163 = arith.constant 163 : index
    %951 = memref.load %arg4[%c163] : memref<180xf32, #tpu.memory_space<smem>>
    %952 = vector.broadcast %951 : f32 to vector<2x16x16xf32>
    %953 = arith.mulf %938, %952 : vector<2x16x16xf32>
    %954 = arith.addf %936, %953 : vector<2x16x16xf32>
    %955 = vector.extract_strided_slice %424 {offsets = [3, 0, 0, 2], sizes = [1, 2, 16, 16], strides = [1, 1, 1, 1]} : vector<5x2x18x18xf32> to vector<1x2x16x16xf32>
    %956 = vector.shape_cast %955 : vector<1x2x16x16xf32> to vector<2x16x16xf32>
    %c29_99 = arith.constant 29 : index
    %957 = memref.load %arg4[%c29_99] : memref<180xf32, #tpu.memory_space<smem>>
    %958 = vector.broadcast %957 : f32 to vector<2x16x16xf32>
    %959 = arith.mulf %956, %958 : vector<2x16x16xf32>
    %960 = arith.addf %942, %959 : vector<2x16x16xf32>
    %c74_100 = arith.constant 74 : index
    %961 = memref.load %arg4[%c74_100] : memref<180xf32, #tpu.memory_space<smem>>
    %962 = vector.broadcast %961 : f32 to vector<2x16x16xf32>
    %963 = arith.mulf %956, %962 : vector<2x16x16xf32>
    %964 = arith.addf %946, %963 : vector<2x16x16xf32>
    %c119 = arith.constant 119 : index
    %965 = memref.load %arg4[%c119] : memref<180xf32, #tpu.memory_space<smem>>
    %966 = vector.broadcast %965 : f32 to vector<2x16x16xf32>
    %967 = arith.mulf %956, %966 : vector<2x16x16xf32>
    %968 = arith.addf %950, %967 : vector<2x16x16xf32>
    %c164 = arith.constant 164 : index
    %969 = memref.load %arg4[%c164] : memref<180xf32, #tpu.memory_space<smem>>
    %970 = vector.broadcast %969 : f32 to vector<2x16x16xf32>
    %971 = arith.mulf %956, %970 : vector<2x16x16xf32>
    %972 = arith.addf %954, %971 : vector<2x16x16xf32>
    %973 = vector.extract_strided_slice %424 {offsets = [3, 0, 1, 0], sizes = [1, 2, 16, 16], strides = [1, 1, 1, 1]} : vector<5x2x18x18xf32> to vector<1x2x16x16xf32>
    %974 = vector.shape_cast %973 : vector<1x2x16x16xf32> to vector<2x16x16xf32>
    %c30_101 = arith.constant 30 : index
    %975 = memref.load %arg4[%c30_101] : memref<180xf32, #tpu.memory_space<smem>>
    %976 = vector.broadcast %975 : f32 to vector<2x16x16xf32>
    %977 = arith.mulf %974, %976 : vector<2x16x16xf32>
    %978 = arith.addf %960, %977 : vector<2x16x16xf32>
    %c75_102 = arith.constant 75 : index
    %979 = memref.load %arg4[%c75_102] : memref<180xf32, #tpu.memory_space<smem>>
    %980 = vector.broadcast %979 : f32 to vector<2x16x16xf32>
    %981 = arith.mulf %974, %980 : vector<2x16x16xf32>
    %982 = arith.addf %964, %981 : vector<2x16x16xf32>
    %c120 = arith.constant 120 : index
    %983 = memref.load %arg4[%c120] : memref<180xf32, #tpu.memory_space<smem>>
    %984 = vector.broadcast %983 : f32 to vector<2x16x16xf32>
    %985 = arith.mulf %974, %984 : vector<2x16x16xf32>
    %986 = arith.addf %968, %985 : vector<2x16x16xf32>
    %c165 = arith.constant 165 : index
    %987 = memref.load %arg4[%c165] : memref<180xf32, #tpu.memory_space<smem>>
    %988 = vector.broadcast %987 : f32 to vector<2x16x16xf32>
    %989 = arith.mulf %974, %988 : vector<2x16x16xf32>
    %990 = arith.addf %972, %989 : vector<2x16x16xf32>
    %991 = vector.extract_strided_slice %424 {offsets = [3, 0, 1, 1], sizes = [1, 2, 16, 16], strides = [1, 1, 1, 1]} : vector<5x2x18x18xf32> to vector<1x2x16x16xf32>
    %992 = vector.shape_cast %991 : vector<1x2x16x16xf32> to vector<2x16x16xf32>
    %c31_103 = arith.constant 31 : index
    %993 = memref.load %arg4[%c31_103] : memref<180xf32, #tpu.memory_space<smem>>
    %994 = vector.broadcast %993 : f32 to vector<2x16x16xf32>
    %995 = arith.mulf %992, %994 : vector<2x16x16xf32>
    %996 = arith.addf %978, %995 : vector<2x16x16xf32>
    %c76_104 = arith.constant 76 : index
    %997 = memref.load %arg4[%c76_104] : memref<180xf32, #tpu.memory_space<smem>>
    %998 = vector.broadcast %997 : f32 to vector<2x16x16xf32>
    %999 = arith.mulf %992, %998 : vector<2x16x16xf32>
    %1000 = arith.addf %982, %999 : vector<2x16x16xf32>
    %c121 = arith.constant 121 : index
    %1001 = memref.load %arg4[%c121] : memref<180xf32, #tpu.memory_space<smem>>
    %1002 = vector.broadcast %1001 : f32 to vector<2x16x16xf32>
    %1003 = arith.mulf %992, %1002 : vector<2x16x16xf32>
    %1004 = arith.addf %986, %1003 : vector<2x16x16xf32>
    %c166 = arith.constant 166 : index
    %1005 = memref.load %arg4[%c166] : memref<180xf32, #tpu.memory_space<smem>>
    %1006 = vector.broadcast %1005 : f32 to vector<2x16x16xf32>
    %1007 = arith.mulf %992, %1006 : vector<2x16x16xf32>
    %1008 = arith.addf %990, %1007 : vector<2x16x16xf32>
    %1009 = vector.extract_strided_slice %424 {offsets = [3, 0, 1, 2], sizes = [1, 2, 16, 16], strides = [1, 1, 1, 1]} : vector<5x2x18x18xf32> to vector<1x2x16x16xf32>
    %1010 = vector.shape_cast %1009 : vector<1x2x16x16xf32> to vector<2x16x16xf32>
    %c32_105 = arith.constant 32 : index
    %1011 = memref.load %arg4[%c32_105] : memref<180xf32, #tpu.memory_space<smem>>
    %1012 = vector.broadcast %1011 : f32 to vector<2x16x16xf32>
    %1013 = arith.mulf %1010, %1012 : vector<2x16x16xf32>
    %1014 = arith.addf %996, %1013 : vector<2x16x16xf32>
    %c77_106 = arith.constant 77 : index
    %1015 = memref.load %arg4[%c77_106] : memref<180xf32, #tpu.memory_space<smem>>
    %1016 = vector.broadcast %1015 : f32 to vector<2x16x16xf32>
    %1017 = arith.mulf %1010, %1016 : vector<2x16x16xf32>
    %1018 = arith.addf %1000, %1017 : vector<2x16x16xf32>
    %c122 = arith.constant 122 : index
    %1019 = memref.load %arg4[%c122] : memref<180xf32, #tpu.memory_space<smem>>
    %1020 = vector.broadcast %1019 : f32 to vector<2x16x16xf32>
    %1021 = arith.mulf %1010, %1020 : vector<2x16x16xf32>
    %1022 = arith.addf %1004, %1021 : vector<2x16x16xf32>
    %c167 = arith.constant 167 : index
    %1023 = memref.load %arg4[%c167] : memref<180xf32, #tpu.memory_space<smem>>
    %1024 = vector.broadcast %1023 : f32 to vector<2x16x16xf32>
    %1025 = arith.mulf %1010, %1024 : vector<2x16x16xf32>
    %1026 = arith.addf %1008, %1025 : vector<2x16x16xf32>
    %1027 = vector.extract_strided_slice %424 {offsets = [3, 0, 2, 0], sizes = [1, 2, 16, 16], strides = [1, 1, 1, 1]} : vector<5x2x18x18xf32> to vector<1x2x16x16xf32>
    %1028 = vector.shape_cast %1027 : vector<1x2x16x16xf32> to vector<2x16x16xf32>
    %c33_107 = arith.constant 33 : index
    %1029 = memref.load %arg4[%c33_107] : memref<180xf32, #tpu.memory_space<smem>>
    %1030 = vector.broadcast %1029 : f32 to vector<2x16x16xf32>
    %1031 = arith.mulf %1028, %1030 : vector<2x16x16xf32>
    %1032 = arith.addf %1014, %1031 : vector<2x16x16xf32>
    %c78_108 = arith.constant 78 : index
    %1033 = memref.load %arg4[%c78_108] : memref<180xf32, #tpu.memory_space<smem>>
    %1034 = vector.broadcast %1033 : f32 to vector<2x16x16xf32>
    %1035 = arith.mulf %1028, %1034 : vector<2x16x16xf32>
    %1036 = arith.addf %1018, %1035 : vector<2x16x16xf32>
    %c123 = arith.constant 123 : index
    %1037 = memref.load %arg4[%c123] : memref<180xf32, #tpu.memory_space<smem>>
    %1038 = vector.broadcast %1037 : f32 to vector<2x16x16xf32>
    %1039 = arith.mulf %1028, %1038 : vector<2x16x16xf32>
    %1040 = arith.addf %1022, %1039 : vector<2x16x16xf32>
    %c168 = arith.constant 168 : index
    %1041 = memref.load %arg4[%c168] : memref<180xf32, #tpu.memory_space<smem>>
    %1042 = vector.broadcast %1041 : f32 to vector<2x16x16xf32>
    %1043 = arith.mulf %1028, %1042 : vector<2x16x16xf32>
    %1044 = arith.addf %1026, %1043 : vector<2x16x16xf32>
    %1045 = vector.extract_strided_slice %424 {offsets = [3, 0, 2, 1], sizes = [1, 2, 16, 16], strides = [1, 1, 1, 1]} : vector<5x2x18x18xf32> to vector<1x2x16x16xf32>
    %1046 = vector.shape_cast %1045 : vector<1x2x16x16xf32> to vector<2x16x16xf32>
    %c34_109 = arith.constant 34 : index
    %1047 = memref.load %arg4[%c34_109] : memref<180xf32, #tpu.memory_space<smem>>
    %1048 = vector.broadcast %1047 : f32 to vector<2x16x16xf32>
    %1049 = arith.mulf %1046, %1048 : vector<2x16x16xf32>
    %1050 = arith.addf %1032, %1049 : vector<2x16x16xf32>
    %c79_110 = arith.constant 79 : index
    %1051 = memref.load %arg4[%c79_110] : memref<180xf32, #tpu.memory_space<smem>>
    %1052 = vector.broadcast %1051 : f32 to vector<2x16x16xf32>
    %1053 = arith.mulf %1046, %1052 : vector<2x16x16xf32>
    %1054 = arith.addf %1036, %1053 : vector<2x16x16xf32>
    %c124 = arith.constant 124 : index
    %1055 = memref.load %arg4[%c124] : memref<180xf32, #tpu.memory_space<smem>>
    %1056 = vector.broadcast %1055 : f32 to vector<2x16x16xf32>
    %1057 = arith.mulf %1046, %1056 : vector<2x16x16xf32>
    %1058 = arith.addf %1040, %1057 : vector<2x16x16xf32>
    %c169 = arith.constant 169 : index
    %1059 = memref.load %arg4[%c169] : memref<180xf32, #tpu.memory_space<smem>>
    %1060 = vector.broadcast %1059 : f32 to vector<2x16x16xf32>
    %1061 = arith.mulf %1046, %1060 : vector<2x16x16xf32>
    %1062 = arith.addf %1044, %1061 : vector<2x16x16xf32>
    %1063 = vector.extract_strided_slice %424 {offsets = [3, 0, 2, 2], sizes = [1, 2, 16, 16], strides = [1, 1, 1, 1]} : vector<5x2x18x18xf32> to vector<1x2x16x16xf32>
    %1064 = vector.shape_cast %1063 : vector<1x2x16x16xf32> to vector<2x16x16xf32>
    %c35_111 = arith.constant 35 : index
    %1065 = memref.load %arg4[%c35_111] : memref<180xf32, #tpu.memory_space<smem>>
    %1066 = vector.broadcast %1065 : f32 to vector<2x16x16xf32>
    %1067 = arith.mulf %1064, %1066 : vector<2x16x16xf32>
    %1068 = arith.addf %1050, %1067 : vector<2x16x16xf32>
    %c80_112 = arith.constant 80 : index
    %1069 = memref.load %arg4[%c80_112] : memref<180xf32, #tpu.memory_space<smem>>
    %1070 = vector.broadcast %1069 : f32 to vector<2x16x16xf32>
    %1071 = arith.mulf %1064, %1070 : vector<2x16x16xf32>
    %1072 = arith.addf %1054, %1071 : vector<2x16x16xf32>
    %c125 = arith.constant 125 : index
    %1073 = memref.load %arg4[%c125] : memref<180xf32, #tpu.memory_space<smem>>
    %1074 = vector.broadcast %1073 : f32 to vector<2x16x16xf32>
    %1075 = arith.mulf %1064, %1074 : vector<2x16x16xf32>
    %1076 = arith.addf %1058, %1075 : vector<2x16x16xf32>
    %c170 = arith.constant 170 : index
    %1077 = memref.load %arg4[%c170] : memref<180xf32, #tpu.memory_space<smem>>
    %1078 = vector.broadcast %1077 : f32 to vector<2x16x16xf32>
    %1079 = arith.mulf %1064, %1078 : vector<2x16x16xf32>
    %1080 = arith.addf %1062, %1079 : vector<2x16x16xf32>
    %1081 = vector.extract_strided_slice %424 {offsets = [4, 0, 0, 0], sizes = [1, 2, 16, 16], strides = [1, 1, 1, 1]} : vector<5x2x18x18xf32> to vector<1x2x16x16xf32>
    %1082 = vector.shape_cast %1081 : vector<1x2x16x16xf32> to vector<2x16x16xf32>
    %c36_113 = arith.constant 36 : index
    %1083 = memref.load %arg4[%c36_113] : memref<180xf32, #tpu.memory_space<smem>>
    %1084 = vector.broadcast %1083 : f32 to vector<2x16x16xf32>
    %1085 = arith.mulf %1082, %1084 : vector<2x16x16xf32>
    %1086 = arith.addf %1068, %1085 : vector<2x16x16xf32>
    %c81_114 = arith.constant 81 : index
    %1087 = memref.load %arg4[%c81_114] : memref<180xf32, #tpu.memory_space<smem>>
    %1088 = vector.broadcast %1087 : f32 to vector<2x16x16xf32>
    %1089 = arith.mulf %1082, %1088 : vector<2x16x16xf32>
    %1090 = arith.addf %1072, %1089 : vector<2x16x16xf32>
    %c126 = arith.constant 126 : index
    %1091 = memref.load %arg4[%c126] : memref<180xf32, #tpu.memory_space<smem>>
    %1092 = vector.broadcast %1091 : f32 to vector<2x16x16xf32>
    %1093 = arith.mulf %1082, %1092 : vector<2x16x16xf32>
    %1094 = arith.addf %1076, %1093 : vector<2x16x16xf32>
    %c171 = arith.constant 171 : index
    %1095 = memref.load %arg4[%c171] : memref<180xf32, #tpu.memory_space<smem>>
    %1096 = vector.broadcast %1095 : f32 to vector<2x16x16xf32>
    %1097 = arith.mulf %1082, %1096 : vector<2x16x16xf32>
    %1098 = arith.addf %1080, %1097 : vector<2x16x16xf32>
    %1099 = vector.extract_strided_slice %424 {offsets = [4, 0, 0, 1], sizes = [1, 2, 16, 16], strides = [1, 1, 1, 1]} : vector<5x2x18x18xf32> to vector<1x2x16x16xf32>
    %1100 = vector.shape_cast %1099 : vector<1x2x16x16xf32> to vector<2x16x16xf32>
    %c37_115 = arith.constant 37 : index
    %1101 = memref.load %arg4[%c37_115] : memref<180xf32, #tpu.memory_space<smem>>
    %1102 = vector.broadcast %1101 : f32 to vector<2x16x16xf32>
    %1103 = arith.mulf %1100, %1102 : vector<2x16x16xf32>
    %1104 = arith.addf %1086, %1103 : vector<2x16x16xf32>
    %c82_116 = arith.constant 82 : index
    %1105 = memref.load %arg4[%c82_116] : memref<180xf32, #tpu.memory_space<smem>>
    %1106 = vector.broadcast %1105 : f32 to vector<2x16x16xf32>
    %1107 = arith.mulf %1100, %1106 : vector<2x16x16xf32>
    %1108 = arith.addf %1090, %1107 : vector<2x16x16xf32>
    %c127 = arith.constant 127 : index
    %1109 = memref.load %arg4[%c127] : memref<180xf32, #tpu.memory_space<smem>>
    %1110 = vector.broadcast %1109 : f32 to vector<2x16x16xf32>
    %1111 = arith.mulf %1100, %1110 : vector<2x16x16xf32>
    %1112 = arith.addf %1094, %1111 : vector<2x16x16xf32>
    %c172 = arith.constant 172 : index
    %1113 = memref.load %arg4[%c172] : memref<180xf32, #tpu.memory_space<smem>>
    %1114 = vector.broadcast %1113 : f32 to vector<2x16x16xf32>
    %1115 = arith.mulf %1100, %1114 : vector<2x16x16xf32>
    %1116 = arith.addf %1098, %1115 : vector<2x16x16xf32>
    %1117 = vector.extract_strided_slice %424 {offsets = [4, 0, 0, 2], sizes = [1, 2, 16, 16], strides = [1, 1, 1, 1]} : vector<5x2x18x18xf32> to vector<1x2x16x16xf32>
    %1118 = vector.shape_cast %1117 : vector<1x2x16x16xf32> to vector<2x16x16xf32>
    %c38_117 = arith.constant 38 : index
    %1119 = memref.load %arg4[%c38_117] : memref<180xf32, #tpu.memory_space<smem>>
    %1120 = vector.broadcast %1119 : f32 to vector<2x16x16xf32>
    %1121 = arith.mulf %1118, %1120 : vector<2x16x16xf32>
    %1122 = arith.addf %1104, %1121 : vector<2x16x16xf32>
    %c83_118 = arith.constant 83 : index
    %1123 = memref.load %arg4[%c83_118] : memref<180xf32, #tpu.memory_space<smem>>
    %1124 = vector.broadcast %1123 : f32 to vector<2x16x16xf32>
    %1125 = arith.mulf %1118, %1124 : vector<2x16x16xf32>
    %1126 = arith.addf %1108, %1125 : vector<2x16x16xf32>
    %c128 = arith.constant 128 : index
    %1127 = memref.load %arg4[%c128] : memref<180xf32, #tpu.memory_space<smem>>
    %1128 = vector.broadcast %1127 : f32 to vector<2x16x16xf32>
    %1129 = arith.mulf %1118, %1128 : vector<2x16x16xf32>
    %1130 = arith.addf %1112, %1129 : vector<2x16x16xf32>
    %c173 = arith.constant 173 : index
    %1131 = memref.load %arg4[%c173] : memref<180xf32, #tpu.memory_space<smem>>
    %1132 = vector.broadcast %1131 : f32 to vector<2x16x16xf32>
    %1133 = arith.mulf %1118, %1132 : vector<2x16x16xf32>
    %1134 = arith.addf %1116, %1133 : vector<2x16x16xf32>
    %1135 = vector.extract_strided_slice %424 {offsets = [4, 0, 1, 0], sizes = [1, 2, 16, 16], strides = [1, 1, 1, 1]} : vector<5x2x18x18xf32> to vector<1x2x16x16xf32>
    %1136 = vector.shape_cast %1135 : vector<1x2x16x16xf32> to vector<2x16x16xf32>
    %c39_119 = arith.constant 39 : index
    %1137 = memref.load %arg4[%c39_119] : memref<180xf32, #tpu.memory_space<smem>>
    %1138 = vector.broadcast %1137 : f32 to vector<2x16x16xf32>
    %1139 = arith.mulf %1136, %1138 : vector<2x16x16xf32>
    %1140 = arith.addf %1122, %1139 : vector<2x16x16xf32>
    %c84_120 = arith.constant 84 : index
    %1141 = memref.load %arg4[%c84_120] : memref<180xf32, #tpu.memory_space<smem>>
    %1142 = vector.broadcast %1141 : f32 to vector<2x16x16xf32>
    %1143 = arith.mulf %1136, %1142 : vector<2x16x16xf32>
    %1144 = arith.addf %1126, %1143 : vector<2x16x16xf32>
    %c129 = arith.constant 129 : index
    %1145 = memref.load %arg4[%c129] : memref<180xf32, #tpu.memory_space<smem>>
    %1146 = vector.broadcast %1145 : f32 to vector<2x16x16xf32>
    %1147 = arith.mulf %1136, %1146 : vector<2x16x16xf32>
    %1148 = arith.addf %1130, %1147 : vector<2x16x16xf32>
    %c174 = arith.constant 174 : index
    %1149 = memref.load %arg4[%c174] : memref<180xf32, #tpu.memory_space<smem>>
    %1150 = vector.broadcast %1149 : f32 to vector<2x16x16xf32>
    %1151 = arith.mulf %1136, %1150 : vector<2x16x16xf32>
    %1152 = arith.addf %1134, %1151 : vector<2x16x16xf32>
    %1153 = vector.extract_strided_slice %424 {offsets = [4, 0, 1, 1], sizes = [1, 2, 16, 16], strides = [1, 1, 1, 1]} : vector<5x2x18x18xf32> to vector<1x2x16x16xf32>
    %1154 = vector.shape_cast %1153 : vector<1x2x16x16xf32> to vector<2x16x16xf32>
    %c40_121 = arith.constant 40 : index
    %1155 = memref.load %arg4[%c40_121] : memref<180xf32, #tpu.memory_space<smem>>
    %1156 = vector.broadcast %1155 : f32 to vector<2x16x16xf32>
    %1157 = arith.mulf %1154, %1156 : vector<2x16x16xf32>
    %1158 = arith.addf %1140, %1157 : vector<2x16x16xf32>
    %c85_122 = arith.constant 85 : index
    %1159 = memref.load %arg4[%c85_122] : memref<180xf32, #tpu.memory_space<smem>>
    %1160 = vector.broadcast %1159 : f32 to vector<2x16x16xf32>
    %1161 = arith.mulf %1154, %1160 : vector<2x16x16xf32>
    %1162 = arith.addf %1144, %1161 : vector<2x16x16xf32>
    %c130 = arith.constant 130 : index
    %1163 = memref.load %arg4[%c130] : memref<180xf32, #tpu.memory_space<smem>>
    %1164 = vector.broadcast %1163 : f32 to vector<2x16x16xf32>
    %1165 = arith.mulf %1154, %1164 : vector<2x16x16xf32>
    %1166 = arith.addf %1148, %1165 : vector<2x16x16xf32>
    %c175 = arith.constant 175 : index
    %1167 = memref.load %arg4[%c175] : memref<180xf32, #tpu.memory_space<smem>>
    %1168 = vector.broadcast %1167 : f32 to vector<2x16x16xf32>
    %1169 = arith.mulf %1154, %1168 : vector<2x16x16xf32>
    %1170 = arith.addf %1152, %1169 : vector<2x16x16xf32>
    %1171 = vector.extract_strided_slice %424 {offsets = [4, 0, 1, 2], sizes = [1, 2, 16, 16], strides = [1, 1, 1, 1]} : vector<5x2x18x18xf32> to vector<1x2x16x16xf32>
    %1172 = vector.shape_cast %1171 : vector<1x2x16x16xf32> to vector<2x16x16xf32>
    %c41_123 = arith.constant 41 : index
    %1173 = memref.load %arg4[%c41_123] : memref<180xf32, #tpu.memory_space<smem>>
    %1174 = vector.broadcast %1173 : f32 to vector<2x16x16xf32>
    %1175 = arith.mulf %1172, %1174 : vector<2x16x16xf32>
    %1176 = arith.addf %1158, %1175 : vector<2x16x16xf32>
    %c86_124 = arith.constant 86 : index
    %1177 = memref.load %arg4[%c86_124] : memref<180xf32, #tpu.memory_space<smem>>
    %1178 = vector.broadcast %1177 : f32 to vector<2x16x16xf32>
    %1179 = arith.mulf %1172, %1178 : vector<2x16x16xf32>
    %1180 = arith.addf %1162, %1179 : vector<2x16x16xf32>
    %c131 = arith.constant 131 : index
    %1181 = memref.load %arg4[%c131] : memref<180xf32, #tpu.memory_space<smem>>
    %1182 = vector.broadcast %1181 : f32 to vector<2x16x16xf32>
    %1183 = arith.mulf %1172, %1182 : vector<2x16x16xf32>
    %1184 = arith.addf %1166, %1183 : vector<2x16x16xf32>
    %c176 = arith.constant 176 : index
    %1185 = memref.load %arg4[%c176] : memref<180xf32, #tpu.memory_space<smem>>
    %1186 = vector.broadcast %1185 : f32 to vector<2x16x16xf32>
    %1187 = arith.mulf %1172, %1186 : vector<2x16x16xf32>
    %1188 = arith.addf %1170, %1187 : vector<2x16x16xf32>
    %1189 = vector.extract_strided_slice %424 {offsets = [4, 0, 2, 0], sizes = [1, 2, 16, 16], strides = [1, 1, 1, 1]} : vector<5x2x18x18xf32> to vector<1x2x16x16xf32>
    %1190 = vector.shape_cast %1189 : vector<1x2x16x16xf32> to vector<2x16x16xf32>
    %c42_125 = arith.constant 42 : index
    %1191 = memref.load %arg4[%c42_125] : memref<180xf32, #tpu.memory_space<smem>>
    %1192 = vector.broadcast %1191 : f32 to vector<2x16x16xf32>
    %1193 = arith.mulf %1190, %1192 : vector<2x16x16xf32>
    %1194 = arith.addf %1176, %1193 : vector<2x16x16xf32>
    %c87_126 = arith.constant 87 : index
    %1195 = memref.load %arg4[%c87_126] : memref<180xf32, #tpu.memory_space<smem>>
    %1196 = vector.broadcast %1195 : f32 to vector<2x16x16xf32>
    %1197 = arith.mulf %1190, %1196 : vector<2x16x16xf32>
    %1198 = arith.addf %1180, %1197 : vector<2x16x16xf32>
    %c132 = arith.constant 132 : index
    %1199 = memref.load %arg4[%c132] : memref<180xf32, #tpu.memory_space<smem>>
    %1200 = vector.broadcast %1199 : f32 to vector<2x16x16xf32>
    %1201 = arith.mulf %1190, %1200 : vector<2x16x16xf32>
    %1202 = arith.addf %1184, %1201 : vector<2x16x16xf32>
    %c177 = arith.constant 177 : index
    %1203 = memref.load %arg4[%c177] : memref<180xf32, #tpu.memory_space<smem>>
    %1204 = vector.broadcast %1203 : f32 to vector<2x16x16xf32>
    %1205 = arith.mulf %1190, %1204 : vector<2x16x16xf32>
    %1206 = arith.addf %1188, %1205 : vector<2x16x16xf32>
    %1207 = vector.extract_strided_slice %424 {offsets = [4, 0, 2, 1], sizes = [1, 2, 16, 16], strides = [1, 1, 1, 1]} : vector<5x2x18x18xf32> to vector<1x2x16x16xf32>
    %1208 = vector.shape_cast %1207 : vector<1x2x16x16xf32> to vector<2x16x16xf32>
    %c43_127 = arith.constant 43 : index
    %1209 = memref.load %arg4[%c43_127] : memref<180xf32, #tpu.memory_space<smem>>
    %1210 = vector.broadcast %1209 : f32 to vector<2x16x16xf32>
    %1211 = arith.mulf %1208, %1210 : vector<2x16x16xf32>
    %1212 = arith.addf %1194, %1211 : vector<2x16x16xf32>
    %c88_128 = arith.constant 88 : index
    %1213 = memref.load %arg4[%c88_128] : memref<180xf32, #tpu.memory_space<smem>>
    %1214 = vector.broadcast %1213 : f32 to vector<2x16x16xf32>
    %1215 = arith.mulf %1208, %1214 : vector<2x16x16xf32>
    %1216 = arith.addf %1198, %1215 : vector<2x16x16xf32>
    %c133 = arith.constant 133 : index
    %1217 = memref.load %arg4[%c133] : memref<180xf32, #tpu.memory_space<smem>>
    %1218 = vector.broadcast %1217 : f32 to vector<2x16x16xf32>
    %1219 = arith.mulf %1208, %1218 : vector<2x16x16xf32>
    %1220 = arith.addf %1202, %1219 : vector<2x16x16xf32>
    %c178 = arith.constant 178 : index
    %1221 = memref.load %arg4[%c178] : memref<180xf32, #tpu.memory_space<smem>>
    %1222 = vector.broadcast %1221 : f32 to vector<2x16x16xf32>
    %1223 = arith.mulf %1208, %1222 : vector<2x16x16xf32>
    %1224 = arith.addf %1206, %1223 : vector<2x16x16xf32>
    %1225 = vector.extract_strided_slice %424 {offsets = [4, 0, 2, 2], sizes = [1, 2, 16, 16], strides = [1, 1, 1, 1]} : vector<5x2x18x18xf32> to vector<1x2x16x16xf32>
    %1226 = vector.shape_cast %1225 : vector<1x2x16x16xf32> to vector<2x16x16xf32>
    %c44_129 = arith.constant 44 : index
    %1227 = memref.load %arg4[%c44_129] : memref<180xf32, #tpu.memory_space<smem>>
    %1228 = vector.broadcast %1227 : f32 to vector<2x16x16xf32>
    %1229 = arith.mulf %1226, %1228 : vector<2x16x16xf32>
    %1230 = arith.addf %1212, %1229 : vector<2x16x16xf32>
    %c89_130 = arith.constant 89 : index
    %1231 = memref.load %arg4[%c89_130] : memref<180xf32, #tpu.memory_space<smem>>
    %1232 = vector.broadcast %1231 : f32 to vector<2x16x16xf32>
    %1233 = arith.mulf %1226, %1232 : vector<2x16x16xf32>
    %1234 = arith.addf %1216, %1233 : vector<2x16x16xf32>
    %c134 = arith.constant 134 : index
    %1235 = memref.load %arg4[%c134] : memref<180xf32, #tpu.memory_space<smem>>
    %1236 = vector.broadcast %1235 : f32 to vector<2x16x16xf32>
    %1237 = arith.mulf %1226, %1236 : vector<2x16x16xf32>
    %1238 = arith.addf %1220, %1237 : vector<2x16x16xf32>
    %c179 = arith.constant 179 : index
    %1239 = memref.load %arg4[%c179] : memref<180xf32, #tpu.memory_space<smem>>
    %1240 = vector.broadcast %1239 : f32 to vector<2x16x16xf32>
    %1241 = arith.mulf %1226, %1240 : vector<2x16x16xf32>
    %1242 = arith.addf %1224, %1241 : vector<2x16x16xf32>
    %1243 = arith.mulf %1230, %1230 : vector<2x16x16xf32>
    %1244 = arith.mulf %1243, %1230 : vector<2x16x16xf32>
    %cst_131 = arith.constant 4.471500e-02 : f32
    %1245 = vector.broadcast %cst_131 : f32 to vector<2x16x16xf32>
    %1246 = arith.mulf %1244, %1245 : vector<2x16x16xf32>
    %1247 = arith.addf %1230, %1246 : vector<2x16x16xf32>
    %cst_132 = arith.constant 0.797884583 : f32
    %1248 = vector.broadcast %cst_132 : f32 to vector<2x16x16xf32>
    %1249 = arith.mulf %1247, %1248 : vector<2x16x16xf32>
    %1250 = math.tanh %1249 : vector<2x16x16xf32>
    %cst_133 = arith.constant 5.000000e-01 : f32
    %1251 = vector.broadcast %cst_133 : f32 to vector<2x16x16xf32>
    %1252 = arith.mulf %1230, %1251 : vector<2x16x16xf32>
    %cst_134 = arith.constant 1.000000e+00 : f32
    %1253 = vector.broadcast %cst_134 : f32 to vector<2x16x16xf32>
    %1254 = arith.addf %1250, %1253 : vector<2x16x16xf32>
    %1255 = arith.mulf %1252, %1254 : vector<2x16x16xf32>
    %c0_135 = arith.constant 0 : index
    %c0_136 = arith.constant 0 : index
    %c0_137 = arith.constant 0 : index
    %c0_138 = arith.constant 0 : index
    %1256 = vector.load %arg6[%c0_135, %c0_136, %c0_137, %c0_138] : memref<2x4x16x16xf32, #tpu.memory_space<vmem>>, vector<2x1x16x16xf32>
    %1257 = vector.shape_cast %1256 : vector<2x1x16x16xf32> to vector<2x16x16xf32>
    %1258 = vector.shape_cast %1255 : vector<2x16x16xf32> to vector<2x1x16x16xf32>
    tpu.vector_store %arg6[%c0_135, %c0_136, %c0_137, %c0_138], %1258 {strides = array<i32>} : memref<2x4x16x16xf32, #tpu.memory_space<vmem>>, vector<2x1x16x16xf32>,
    %1259 = arith.mulf %1234, %1234 : vector<2x16x16xf32>
    %1260 = arith.mulf %1259, %1234 : vector<2x16x16xf32>
    %cst_139 = arith.constant 4.471500e-02 : f32
    %1261 = vector.broadcast %cst_139 : f32 to vector<2x16x16xf32>
    %1262 = arith.mulf %1260, %1261 : vector<2x16x16xf32>
    %1263 = arith.addf %1234, %1262 : vector<2x16x16xf32>
    %cst_140 = arith.constant 0.797884583 : f32
    %1264 = vector.broadcast %cst_140 : f32 to vector<2x16x16xf32>
    %1265 = arith.mulf %1263, %1264 : vector<2x16x16xf32>
    %1266 = math.tanh %1265 : vector<2x16x16xf32>
    %cst_141 = arith.constant 5.000000e-01 : f32
    %1267 = vector.broadcast %cst_141 : f32 to vector<2x16x16xf32>
    %1268 = arith.mulf %1234, %1267 : vector<2x16x16xf32>
    %cst_142 = arith.constant 1.000000e+00 : f32
    %1269 = vector.broadcast %cst_142 : f32 to vector<2x16x16xf32>
    %1270 = arith.addf %1266, %1269 : vector<2x16x16xf32>
    %1271 = arith.mulf %1268, %1270 : vector<2x16x16xf32>
    %c0_143 = arith.constant 0 : index
    %c1_144 = arith.constant 1 : index
    %c0_145 = arith.constant 0 : index
    %c0_146 = arith.constant 0 : index
    %1272 = vector.load %arg6[%c0_143, %c1_144, %c0_145, %c0_146] : memref<2x4x16x16xf32, #tpu.memory_space<vmem>>, vector<2x1x16x16xf32>
    %1273 = vector.shape_cast %1272 : vector<2x1x16x16xf32> to vector<2x16x16xf32>
    %1274 = vector.shape_cast %1271 : vector<2x16x16xf32> to vector<2x1x16x16xf32>
    tpu.vector_store %arg6[%c0_143, %c1_144, %c0_145, %c0_146], %1274 {strides = array<i32>} : memref<2x4x16x16xf32, #tpu.memory_space<vmem>>, vector<2x1x16x16xf32>,
    %1275 = arith.mulf %1238, %1238 : vector<2x16x16xf32>
    %1276 = arith.mulf %1275, %1238 : vector<2x16x16xf32>
    %cst_147 = arith.constant 4.471500e-02 : f32
    %1277 = vector.broadcast %cst_147 : f32 to vector<2x16x16xf32>
    %1278 = arith.mulf %1276, %1277 : vector<2x16x16xf32>
    %1279 = arith.addf %1238, %1278 : vector<2x16x16xf32>
    %cst_148 = arith.constant 0.797884583 : f32
    %1280 = vector.broadcast %cst_148 : f32 to vector<2x16x16xf32>
    %1281 = arith.mulf %1279, %1280 : vector<2x16x16xf32>
    %1282 = math.tanh %1281 : vector<2x16x16xf32>
    %cst_149 = arith.constant 5.000000e-01 : f32
    %1283 = vector.broadcast %cst_149 : f32 to vector<2x16x16xf32>
    %1284 = arith.mulf %1238, %1283 : vector<2x16x16xf32>
    %cst_150 = arith.constant 1.000000e+00 : f32
    %1285 = vector.broadcast %cst_150 : f32 to vector<2x16x16xf32>
    %1286 = arith.addf %1282, %1285 : vector<2x16x16xf32>
    %1287 = arith.mulf %1284, %1286 : vector<2x16x16xf32>
    %c0_151 = arith.constant 0 : index
    %c2_152 = arith.constant 2 : index
    %c0_153 = arith.constant 0 : index
    %c0_154 = arith.constant 0 : index
    %1288 = vector.load %arg6[%c0_151, %c2_152, %c0_153, %c0_154] : memref<2x4x16x16xf32, #tpu.memory_space<vmem>>, vector<2x1x16x16xf32>
    %1289 = vector.shape_cast %1288 : vector<2x1x16x16xf32> to vector<2x16x16xf32>
    %1290 = vector.shape_cast %1287 : vector<2x16x16xf32> to vector<2x1x16x16xf32>
    tpu.vector_store %arg6[%c0_151, %c2_152, %c0_153, %c0_154], %1290 {strides = array<i32>} : memref<2x4x16x16xf32, #tpu.memory_space<vmem>>, vector<2x1x16x16xf32>,
    %1291 = arith.mulf %1242, %1242 : vector<2x16x16xf32>
    %1292 = arith.mulf %1291, %1242 : vector<2x16x16xf32>
    %cst_155 = arith.constant 4.471500e-02 : f32
    %1293 = vector.broadcast %cst_155 : f32 to vector<2x16x16xf32>
    %1294 = arith.mulf %1292, %1293 : vector<2x16x16xf32>
    %1295 = arith.addf %1242, %1294 : vector<2x16x16xf32>
    %cst_156 = arith.constant 0.797884583 : f32
    %1296 = vector.broadcast %cst_156 : f32 to vector<2x16x16xf32>
    %1297 = arith.mulf %1295, %1296 : vector<2x16x16xf32>
    %1298 = math.tanh %1297 : vector<2x16x16xf32>
    %cst_157 = arith.constant 5.000000e-01 : f32
    %1299 = vector.broadcast %cst_157 : f32 to vector<2x16x16xf32>
    %1300 = arith.mulf %1242, %1299 : vector<2x16x16xf32>
    %cst_158 = arith.constant 1.000000e+00 : f32
    %1301 = vector.broadcast %cst_158 : f32 to vector<2x16x16xf32>
    %1302 = arith.addf %1298, %1301 : vector<2x16x16xf32>
    %1303 = arith.mulf %1300, %1302 : vector<2x16x16xf32>
    %c0_159 = arith.constant 0 : index
    %c3_160 = arith.constant 3 : index
    %c0_161 = arith.constant 0 : index
    %c0_162 = arith.constant 0 : index
    %1304 = vector.load %arg6[%c0_159, %c3_160, %c0_161, %c0_162] : memref<2x4x16x16xf32, #tpu.memory_space<vmem>>, vector<2x1x16x16xf32>
    %1305 = vector.shape_cast %1304 : vector<2x1x16x16xf32> to vector<2x16x16xf32>
    %1306 = vector.shape_cast %1303 : vector<2x16x16xf32> to vector<2x1x16x16xf32>
    tpu.vector_store %arg6[%c0_159, %c3_160, %c0_161, %c0_162], %1306 {strides = array<i32>} : memref<2x4x16x16xf32, #tpu.memory_space<vmem>>, vector<2x1x16x16xf32>,
    return
  }
  func.func @transform_0(%arg0: i32) -> (i32, i32, i32, i32) {
    %c0_i32 = arith.constant 0 : i32
    %c0_i32_0 = arith.constant 0 : i32
    %c0_i32_1 = arith.constant 0 : i32
    %c0_i32_2 = arith.constant 0 : i32
    %c0_i32_3 = arith.constant 0 : i32
    return %c0_i32, %c0_i32_0, %c0_i32_1, %c0_i32_2 : i32, i32, i32, i32
  }
  func.func @transform_1(%arg0: i32) -> i32 {
    %c0_i32 = arith.constant 0 : i32
    %c0_i32_0 = arith.constant 0 : i32
    return %c0_i32 : i32
  }
  func.func @transform_2(%arg0: i32) -> i32 {
    %c0_i32 = arith.constant 0 : i32
    %c0_i32_0 = arith.constant 0 : i32
    return %c0_i32 : i32
  }
  func.func @transform_3(%arg0: i32) -> i32 {
    %c0_i32 = arith.constant 0 : i32
    %c0_i32_0 = arith.constant 0 : i32
    return %c0_i32 : i32
  }
  func.func @transform_4(%arg0: i32) -> i32 {
    %c0_i32 = arith.constant 0 : i32
    %c0_i32_0 = arith.constant 0 : i32
    return %c0_i32 : i32
  }
  func.func @transform_5(%arg0: i32) -> (i32, i32, i32, i32) {
    %c0_i32 = arith.constant 0 : i32
    %c0_i32_0 = arith.constant 0 : i32
    %c0_i32_1 = arith.constant 0 : i32
    %c0_i32_2 = arith.constant 0 : i32
    %c0_i32_3 = arith.constant 0 : i32
    return %c0_i32, %c0_i32_0, %c0_i32_1, %c0_i32_2 : i32, i32, i32, i32
  }
}

</mosaic_0001>

<llo_original>
// kernel: tpu_custom_call.1
$region0: #{tpu_custom_call.1}
  #allocation0 [shape = 'u32[]', space=smem, size = 0x4, offset = 0x4, fixed_abs, tag = 'smem constant byte address 0x4 - core index']
  #allocation1 [shape = 'u32[72,128]{1,0:T(1,128)}', space=vmem, size = 0x9000, scoped, tag = 'internal scratch']
  #allocation2 [shape = 'f32[5,2,18,18]{3,2,1,0:T(8,128)}', space=vmem, size = 0x1e000, scoped, tag = 'scratch operand']
  %s0 = inlined_call_operand.hbm [shape: f32[2,2,16,16], index: 0, kind: input, shape index: {}]
  %s1 = inlined_call_operand.hbm [shape: f32[90], index: 1, kind: input, shape index: {}]
  %s2 = inlined_call_operand.hbm [shape: f32[5], index: 2, kind: input, shape index: {}]
  %s3 = inlined_call_operand.vmem [shape: f32[180], index: 3, kind: input, shape index: {}]
  %s4 = inlined_call_operand.vmem [shape: f32[4], index: 4, kind: input, shape index: {}]
  %s5 = inlined_call_operand.hbm [shape: f32[2,4,16,16], index: 5, kind: output, shape index: {}]
  %s6 = sld [smem:[#allocation0]]
  $region50: #{tpu_custom_call.1} parent=0
    _
  %s8 = ssub.s32 1, %s6
  %s9 = scalar_select 0, %s8, %s6
  $region1: #{tpu_custom_call.1} parent=0
    #allocation3 [shape = 'u8[32768]{0}', space=vmem, size = 0x8000, scoped, tag = 'input window, operand 0, single buffered']
    #allocation4 [shape = 's32[1]{0}', space=sflag, size = 0x4, scoped, tag = 'scoped memory for tpu_custom_call.1']
    #allocation5 [shape = 's32[1]{0}', space=sflag, size = 0x4, scoped, tag = 'scoped memory for tpu_custom_call.1']
    #allocation6 [shape = 's32[1]{0}', space=sflag, size = 0x4, scoped, tag = 'scoped memory for tpu_custom_call.1']
    #allocation7 [shape = 's32[1]{0}', space=sflag, size = 0x4, scoped, tag = 'scoped memory for tpu_custom_call.1']
    #allocation8 [shape = 'u8[512]{0}', space=smem, size = 0x200, scoped, tag = 'input window, operand 1, single buffered']
    #allocation9 [shape = 'u8[512]{0}', space=smem, size = 0x200, scoped, tag = 'input window, operand 2, single buffered']
    #allocation10 [shape = 's32[1]{0}', space=sflag, size = 0x4, scoped, tag = 'scoped memory for tpu_custom_call.1']
    #allocation11 [shape = 'u8[1024]{0}', space=smem, size = 0x400, scoped, tag = 'input window, operand 3, single buffered']
    #allocation12 [shape = 'u8[512]{0}', space=smem, size = 0x200, scoped, tag = 'input window, operand 4, single buffered']
    #allocation13 [shape = 's32[1]{0}', space=sflag, size = 0x4, scoped, tag = 'scoped memory for tpu_custom_call.1']
    #allocation14 [shape = 'u8[65536]{0}', space=vmem, size = 0x10000, scoped, tag = 'output window, operand 0, single buffered']
    %10 = vsyncpa [#allocation4], 0
    %11 = vsyncpa [#allocation6], 0
    %12 = vsyncpa [#allocation10], 0
    %13 = vsyncpa [#allocation7], 0
    %14 = vsyncpa [#allocation13], 0
    %15 = vsyncpa [#allocation5], 0
    // Predicated region
    $region2: #{tpu_custom_call.1} parent=1 // pred_check
      _
    $region3: #{tpu_custom_call.1} parent=1 // pred_check_branch
      %17 = sbr.rel (0) target = $region5
    $region4: #{tpu_custom_call.1} parent=1 // pred_region
      %19 = vsyncadd [#allocation4], 0
      %s20 = sshll.u32 %s0, 4
      %s21 = int_to_ptr.hbm [resolvable:$true] %s20
      %s22 = sshll.u32 [#allocation3], 4
      %s23 = int_to_ptr.vmem [resolvable:$true] %s22
      %28 = dma.hbm_to_vmem [thread:$0]  %s21, 1024, %s23, [#allocation4], 128, 128, 8
    $region5: #{tpu_custom_call.1} parent=1 // pred_fallthru
      _
    // Predicated region
    $region6: #{tpu_custom_call.1} parent=1 // pred_check
      _
    $region7: #{tpu_custom_call.1} parent=1 // pred_check_branch
      %30 = sbr.rel (0) target = $region9
    $region8: #{tpu_custom_call.1} parent=1 // pred_region
      %32 = vsyncadd [#allocation6], 0
      %s34 = sshll.u32 %s1, 4
      %s35 = int_to_ptr.hbm [resolvable:$true] %s34
      %37 = dma.hbm_to_smem %s35, 16, [#allocation8], [#allocation6]
    $region9: #{tpu_custom_call.1} parent=1 // pred_fallthru
      _
    // Predicated region
    $region10: #{tpu_custom_call.1} parent=1 // pred_check
      _
    $region11: #{tpu_custom_call.1} parent=1 // pred_check_branch
      %39 = sbr.rel (0) target = $region13
    $region12: #{tpu_custom_call.1} parent=1 // pred_region
      %41 = vsyncadd [#allocation10], 0
      %s43 = sshll.u32 %s2, 4
      %s44 = int_to_ptr.hbm [resolvable:$true] %s43
      %46 = dma.hbm_to_smem %s44, 16, [#allocation9], [#allocation10]
    $region13: #{tpu_custom_call.1} parent=1 // pred_fallthru
      _
    // Predicated region
    $region14: #{tpu_custom_call.1} parent=1 // pred_check
      _
    $region15: #{tpu_custom_call.1} parent=1 // pred_check_branch
      %48 = sbr.rel (0) target = $region17
    $region16: #{tpu_custom_call.1} parent=1 // pred_region
      %50 = vsyncadd [#allocation7], 0
      %s52 = sshll.u32 %s3, 4
      %s53 = int_to_ptr.vmem [resolvable:$true] %s52
      %55 = dma.vmem_to_smem %s53, 32, [#allocation11], [#allocation7]
    $region17: #{tpu_custom_call.1} parent=1 // pred_fallthru
      _
    // Predicated region
    $region18: #{tpu_custom_call.1} parent=1 // pred_check
      _
    $region19: #{tpu_custom_call.1} parent=1 // pred_check_branch
      %57 = sbr.rel (0) target = $region21
    $region20: #{tpu_custom_call.1} parent=1 // pred_region
      %59 = vsyncadd [#allocation13], 0
      %s61 = sshll.u32 %s4, 4
      %s62 = int_to_ptr.vmem [resolvable:$true] %s61
      %64 = dma.vmem_to_smem %s62, 16, [#allocation12], [#allocation13]
    $region21: #{tpu_custom_call.1} parent=1 // pred_fallthru
      _
    // Predicated region
    $region22: #{tpu_custom_call.1} parent=1 // pred_check
      _
    $region23: #{tpu_custom_call.1} parent=1 // pred_check_branch
      %66 = sbr.rel (0) target = $region25
    $region24: #{tpu_custom_call.1} parent=1 // pred_region
      %68 = dma.done [#allocation4], 1024
    $region25: #{tpu_custom_call.1} parent=1 // pred_fallthru
      _
    // Predicated region
    $region26: #{tpu_custom_call.1} parent=1 // pred_check
      _
    $region27: #{tpu_custom_call.1} parent=1 // pred_check_branch
      %70 = sbr.rel (0) target = $region29
    $region28: #{tpu_custom_call.1} parent=1 // pred_region
      %72 = dma.done [#allocation6], 16
    $region29: #{tpu_custom_call.1} parent=1 // pred_fallthru
      _
    // Predicated region
    $region30: #{tpu_custom_call.1} parent=1 // pred_check
      _
    $region31: #{tpu_custom_call.1} parent=1 // pred_check_branch
      %74 = sbr.rel (0) target = $region33
    $region32: #{tpu_custom_call.1} parent=1 // pred_region
      %76 = dma.done [#allocation10], 16
    $region33: #{tpu_custom_call.1} parent=1 // pred_fallthru
      _
    // Predicated region
    $region34: #{tpu_custom_call.1} parent=1 // pred_check
      _
    $region35: #{tpu_custom_call.1} parent=1 // pred_check_branch
      %78 = sbr.rel (0) target = $region37
    $region36: #{tpu_custom_call.1} parent=1 // pred_region
      %80 = dma.done [#allocation7], 32
    $region37: #{tpu_custom_call.1} parent=1 // pred_fallthru
      _
    // Predicated region
    $region38: #{tpu_custom_call.1} parent=1 // pred_check
      _
    $region39: #{tpu_custom_call.1} parent=1 // pred_check_branch
      %82 = sbr.rel (0) target = $region41
    $region40: #{tpu_custom_call.1} parent=1 // pred_region
      %84 = dma.done [#allocation13], 16
    $region41: #{tpu_custom_call.1} parent=1 // pred_fallthru
      _
    %85 = sfence
    %v86 = vld [vmem:[#allocation3] sm:$0xff]
    %v87 = vld [vmem:[#allocation3 + $0x8] sm:$0xff]
    %v88 = vld [vmem:[#allocation3 + $0x10] sm:$0xff]
    %v89 = vld [vmem:[#allocation3 + $0x18] sm:$0xff]
    %v90 = vld [vmem:[#allocation3 + $0x20] sm:$0xff]
    %v91 = vld [vmem:[#allocation3 + $0x28] sm:$0xff]
    %v92 = vld [vmem:[#allocation3 + $0x30] sm:$0xff]
    %v93 = vld [vmem:[#allocation3 + $0x38] sm:$0xff]
    %s94 = sld [smem:[#allocation9]]
    %v95 = vstv %s94
    %s96 = sld [smem:[#allocation9 + $0x1]]
    %v97 = vstv %s96
    %s98 = sld [smem:[#allocation9 + $0x2]]
    %v99 = vstv %s98
    %s100 = sld [smem:[#allocation9 + $0x3]]
    %v101 = vstv %s100
    %s102 = sld [smem:[#allocation9 + $0x4]]
    %v103 = vstv %s102
    %s104 = sld [smem:[#allocation8]]
    %v105 = vstv %s104
    %v106 = vmul.f32 %v86, %v105
    %v107 = vmul.f32 %v87, %v105
    %v108 = vmul.f32 %v90, %v105
    %v109 = vmul.f32 %v91, %v105
    %v110 = vadd.f32 %v95, %v106
    %v111 = vadd.f32 %v95, %v107
    %v112 = vadd.f32 %v95, %v108
    %v113 = vadd.f32 %v95, %v109
    %s114 = sld [smem:[#allocation8 + $0x12]]
    %v115 = vstv %s114
    %v116 = vmul.f32 %v86, %v115
    %v117 = vmul.f32 %v87, %v115
    %v118 = vmul.f32 %v90, %v115
    %v119 = vmul.f32 %v91, %v115
    %v120 = vadd.f32 %v97, %v116
    %v121 = vadd.f32 %v97, %v117
    %v122 = vadd.f32 %v97, %v118
    %v123 = vadd.f32 %v97, %v119
    %s124 = sld [smem:[#allocation8 + $0x24]]
    %v125 = vstv %s124
    %v126 = vmul.f32 %v86, %v125
    %v127 = vmul.f32 %v87, %v125
    %v128 = vmul.f32 %v90, %v125
    %v129 = vmul.f32 %v91, %v125
    %v130 = vadd.f32 %v99, %v126
    %v131 = vadd.f32 %v99, %v127
    %v132 = vadd.f32 %v99, %v128
    %v133 = vadd.f32 %v99, %v129
    %s134 = sld [smem:[#allocation8 + $0x36]]
    %v135 = vstv %s134
    %v136 = vmul.f32 %v86, %v135
    %v137 = vmul.f32 %v87, %v135
    %v138 = vmul.f32 %v90, %v135
    %v139 = vmul.f32 %v91, %v135
    %v140 = vadd.f32 %v101, %v136
    %v141 = vadd.f32 %v101, %v137
    %v142 = vadd.f32 %v101, %v138
    %v143 = vadd.f32 %v101, %v139
    %s144 = sld [smem:[#allocation8 + $0x48]]
    %v145 = vstv %s144
    %v146 = vmul.f32 %v86, %v145
    %v147 = vmul.f32 %v87, %v145
    %v148 = vmul.f32 %v90, %v145
    %v149 = vmul.f32 %v91, %v145
    %v150 = vadd.f32 %v103, %v146
    %v151 = vadd.f32 %v103, %v147
    %v152 = vadd.f32 %v103, %v148
    %v153 = vadd.f32 %v103, %v149
    %s154 = sld [smem:[#allocation8 + $0x1]]
    %v155 = vstv %s154
    %v156 = vmul.f32 %v86, %v155
    %v157 = vmul.f32 %v87, %v155
    %v158 = vmul.f32 %v90, %v155
    %v159 = vmul.f32 %v91, %v155
    %164 = vrot.lane.b32.xlu0 %v156, 127
    %v165 = vpop.permute.xlu0 %164
    %166 = vrot.lane.b32.xlu0 %v157, 127
    %v167 = vpop.permute.xlu0 %166
    %168 = vrot.lane.b32.xlu0 %v158, 127
    %v169 = vpop.permute.xlu0 %168
    %170 = vrot.lane.b32.xlu0 %v159, 127
    %v171 = vpop.permute.xlu0 %170
    %v176 = vadd.f32 %v110, %v165
    %v177 = vadd.f32 %v111, %v167
    %v178 = vadd.f32 %v112, %v169
    %v179 = vadd.f32 %v113, %v171
    %s180 = sld [smem:[#allocation8 + $0x13]]
    %v181 = vstv %s180
    %v182 = vmul.f32 %v86, %v181
    %v183 = vmul.f32 %v87, %v181
    %v184 = vmul.f32 %v90, %v181
    %v185 = vmul.f32 %v91, %v181
    %190 = vrot.lane.b32.xlu0 %v182, 127
    %v191 = vpop.permute.xlu0 %190
    %192 = vrot.lane.b32.xlu0 %v183, 127
    %v193 = vpop.permute.xlu0 %192
    %194 = vrot.lane.b32.xlu0 %v184, 127
    %v195 = vpop.permute.xlu0 %194
    %196 = vrot.lane.b32.xlu0 %v185, 127
    %v197 = vpop.permute.xlu0 %196
    %v202 = vadd.f32 %v120, %v191
    %v203 = vadd.f32 %v121, %v193
    %v204 = vadd.f32 %v122, %v195
    %v205 = vadd.f32 %v123, %v197
    %s206 = sld [smem:[#allocation8 + $0x25]]
    %v207 = vstv %s206
    %v208 = vmul.f32 %v86, %v207
    %v209 = vmul.f32 %v87, %v207
    %v210 = vmul.f32 %v90, %v207
    %v211 = vmul.f32 %v91, %v207
    %216 = vrot.lane.b32.xlu0 %v208, 127
    %v217 = vpop.permute.xlu0 %216
    %218 = vrot.lane.b32.xlu0 %v209, 127
    %v219 = vpop.permute.xlu0 %218
    %220 = vrot.lane.b32.xlu0 %v210, 127
    %v221 = vpop.permute.xlu0 %220
    %222 = vrot.lane.b32.xlu0 %v211, 127
    %v223 = vpop.permute.xlu0 %222
    %v228 = vadd.f32 %v130, %v217
    %v229 = vadd.f32 %v131, %v219
    %v230 = vadd.f32 %v132, %v221
    %v231 = vadd.f32 %v133, %v223
    %s232 = sld [smem:[#allocation8 + $0x37]]
    %v233 = vstv %s232
    %v234 = vmul.f32 %v86, %v233
    %v235 = vmul.f32 %v87, %v233
    %v236 = vmul.f32 %v90, %v233
    %v237 = vmul.f32 %v91, %v233
    %242 = vrot.lane.b32.xlu0 %v234, 127
    %v243 = vpop.permute.xlu0 %242
    %244 = vrot.lane.b32.xlu0 %v235, 127
    %v245 = vpop.permute.xlu0 %244
    %246 = vrot.lane.b32.xlu0 %v236, 127
    %v247 = vpop.permute.xlu0 %246
    %248 = vrot.lane.b32.xlu0 %v237, 127
    %v249 = vpop.permute.xlu0 %248
    %v254 = vadd.f32 %v140, %v243
    %v255 = vadd.f32 %v141, %v245
    %v256 = vadd.f32 %v142, %v247
    %v257 = vadd.f32 %v143, %v249
    %s258 = sld [smem:[#allocation8 + $0x49]]
    %v259 = vstv %s258
    %v260 = vmul.f32 %v86, %v259
    %v261 = vmul.f32 %v87, %v259
    %v262 = vmul.f32 %v90, %v259
    %v263 = vmul.f32 %v91, %v259
    %268 = vrot.lane.b32.xlu0 %v260, 127
    %v269 = vpop.permute.xlu0 %268
    %270 = vrot.lane.b32.xlu0 %v261, 127
    %v271 = vpop.permute.xlu0 %270
    %272 = vrot.lane.b32.xlu0 %v262, 127
    %v273 = vpop.permute.xlu0 %272
    %274 = vrot.lane.b32.xlu0 %v263, 127
    %v275 = vpop.permute.xlu0 %274
    %v280 = vadd.f32 %v150, %v269
    %v281 = vadd.f32 %v151, %v271
    %v282 = vadd.f32 %v152, %v273
    %v283 = vadd.f32 %v153, %v275
    %s284 = sld [smem:[#allocation8 + $0x2]]
    %v285 = vstv %s284
    %v286 = vmul.f32 %v86, %v285
    %v287 = vmul.f32 %v87, %v285
    %v288 = vmul.f32 %v90, %v285
    %v289 = vmul.f32 %v91, %v285
    %294 = vrot.lane.b32.xlu0 %v286, 126
    %v295 = vpop.permute.xlu0 %294
    %296 = vrot.lane.b32.xlu0 %v287, 126
    %v297 = vpop.permute.xlu0 %296
    %298 = vrot.lane.b32.xlu0 %v288, 126
    %v299 = vpop.permute.xlu0 %298
    %300 = vrot.lane.b32.xlu0 %v289, 126
    %v301 = vpop.permute.xlu0 %300
    %v306 = vadd.f32 %v176, %v295
    %v307 = vadd.f32 %v177, %v297
    %v308 = vadd.f32 %v178, %v299
    %v309 = vadd.f32 %v179, %v301
    %s310 = sld [smem:[#allocation8 + $0x14]]
    %v311 = vstv %s310
    %v312 = vmul.f32 %v86, %v311
    %v313 = vmul.f32 %v87, %v311
    %v314 = vmul.f32 %v90, %v311
    %v315 = vmul.f32 %v91, %v311
    %320 = vrot.lane.b32.xlu0 %v312, 126
    %v321 = vpop.permute.xlu0 %320
    %322 = vrot.lane.b32.xlu0 %v313, 126
    %v323 = vpop.permute.xlu0 %322
    %324 = vrot.lane.b32.xlu0 %v314, 126
    %v325 = vpop.permute.xlu0 %324
    %326 = vrot.lane.b32.xlu0 %v315, 126
    %v327 = vpop.permute.xlu0 %326
    %v332 = vadd.f32 %v202, %v321
    %v333 = vadd.f32 %v203, %v323
    %v334 = vadd.f32 %v204, %v325
    %v335 = vadd.f32 %v205, %v327
    %s336 = sld [smem:[#allocation8 + $0x26]]
    %v337 = vstv %s336
    %v338 = vmul.f32 %v86, %v337
    %v339 = vmul.f32 %v87, %v337
    %v340 = vmul.f32 %v90, %v337
    %v341 = vmul.f32 %v91, %v337
    %346 = vrot.lane.b32.xlu0 %v338, 126
    %v347 = vpop.permute.xlu0 %346
    %348 = vrot.lane.b32.xlu0 %v339, 126
    %v349 = vpop.permute.xlu0 %348
    %350 = vrot.lane.b32.xlu0 %v340, 126
    %v351 = vpop.permute.xlu0 %350
    %352 = vrot.lane.b32.xlu0 %v341, 126
    %v353 = vpop.permute.xlu0 %352
    %v358 = vadd.f32 %v228, %v347
    %v359 = vadd.f32 %v229, %v349
    %v360 = vadd.f32 %v230, %v351
    %v361 = vadd.f32 %v231, %v353
    %s362 = sld [smem:[#allocation8 + $0x38]]
    %v363 = vstv %s362
    %v364 = vmul.f32 %v86, %v363
    %v365 = vmul.f32 %v87, %v363
    %v366 = vmul.f32 %v90, %v363
    %v367 = vmul.f32 %v91, %v363
    %372 = vrot.lane.b32.xlu0 %v364, 126
    %v373 = vpop.permute.xlu0 %372
    %374 = vrot.lane.b32.xlu0 %v365, 126
    %v375 = vpop.permute.xlu0 %374
    %376 = vrot.lane.b32.xlu0 %v366, 126
    %v377 = vpop.permute.xlu0 %376
    %378 = vrot.lane.b32.xlu0 %v367, 126
    %v379 = vpop.permute.xlu0 %378
    %v384 = vadd.f32 %v254, %v373
    %v385 = vadd.f32 %v255, %v375
    %v386 = vadd.f32 %v256, %v377
    %v387 = vadd.f32 %v257, %v379
    %s388 = sld [smem:[#allocation8 + $0x4a]]
    %v389 = vstv %s388
    %v390 = vmul.f32 %v86, %v389
    %v391 = vmul.f32 %v87, %v389
    %v392 = vmul.f32 %v90, %v389
    %v393 = vmul.f32 %v91, %v389
    %398 = vrot.lane.b32.xlu0 %v390, 126
    %v399 = vpop.permute.xlu0 %398
    %400 = vrot.lane.b32.xlu0 %v391, 126
    %v401 = vpop.permute.xlu0 %400
    %402 = vrot.lane.b32.xlu0 %v392, 126
    %v403 = vpop.permute.xlu0 %402
    %404 = vrot.lane.b32.xlu0 %v393, 126
    %v405 = vpop.permute.xlu0 %404
    %v410 = vadd.f32 %v280, %v399
    %v411 = vadd.f32 %v281, %v401
    %v412 = vadd.f32 %v282, %v403
    %v413 = vadd.f32 %v283, %v405
    %s414 = sld [smem:[#allocation8 + $0x3]]
    %v415 = vstv %s414
    %v416 = vmul.f32 %v86, %v415
    %v417 = vmul.f32 %v87, %v415
    %v418 = vmul.f32 %v90, %v415
    %v419 = vmul.f32 %v91, %v415
    %vm424 = vcmask 1046528
    %v425 = vrot.slane %v416, 1
    %v426 = vrot.slane %v417, 1
    %v427 = vsel %vm424, %v425, %v426
    %v428 = vrot.slane %v418, 1
    %v429 = vrot.slane %v419, 1
    %v430 = vsel %vm424, %v428, %v429
    %v435 = vadd.f32 %v306, %v427
    %v436 = vadd.f32 %v307, %v426
    %v437 = vadd.f32 %v308, %v430
    %v438 = vadd.f32 %v309, %v429
    %s439 = sld [smem:[#allocation8 + $0x15]]
    %v440 = vstv %s439
    %v441 = vmul.f32 %v86, %v440
    %v442 = vmul.f32 %v87, %v440
    %v443 = vmul.f32 %v90, %v440
    %v444 = vmul.f32 %v91, %v440
    %v449 = vrot.slane %v441, 1
    %v450 = vrot.slane %v442, 1
    %v451 = vsel %vm424, %v449, %v450
    %v452 = vrot.slane %v443, 1
    %v453 = vrot.slane %v444, 1
    %v454 = vsel %vm424, %v452, %v453
    %v459 = vadd.f32 %v332, %v451
    %v460 = vadd.f32 %v333, %v450
    %v461 = vadd.f32 %v334, %v454
    %v462 = vadd.f32 %v335, %v453
    %s463 = sld [smem:[#allocation8 + $0x27]]
    %v464 = vstv %s463
    %v465 = vmul.f32 %v86, %v464
    %v466 = vmul.f32 %v87, %v464
    %v467 = vmul.f32 %v90, %v464
    %v468 = vmul.f32 %v91, %v464
    %v473 = vrot.slane %v465, 1
    %v474 = vrot.slane %v466, 1
    %v475 = vsel %vm424, %v473, %v474
    %v476 = vrot.slane %v467, 1
    %v477 = vrot.slane %v468, 1
    %v478 = vsel %vm424, %v476, %v477
    %v483 = vadd.f32 %v358, %v475
    %v484 = vadd.f32 %v359, %v474
    %v485 = vadd.f32 %v360, %v478
    %v486 = vadd.f32 %v361, %v477
    %s487 = sld [smem:[#allocation8 + $0x39]]
    %v488 = vstv %s487
    %v489 = vmul.f32 %v86, %v488
    %v490 = vmul.f32 %v87, %v488
    %v491 = vmul.f32 %v90, %v488
    %v492 = vmul.f32 %v91, %v488
    %v497 = vrot.slane %v489, 1
    %v498 = vrot.slane %v490, 1
    %v499 = vsel %vm424, %v497, %v498
    %v500 = vrot.slane %v491, 1
    %v501 = vrot.slane %v492, 1
    %v502 = vsel %vm424, %v500, %v501
    %v507 = vadd.f32 %v384, %v499
    %v508 = vadd.f32 %v385, %v498
    %v509 = vadd.f32 %v386, %v502
    %v510 = vadd.f32 %v387, %v501
    %s511 = sld [smem:[#allocation8 + $0x4b]]
    %v512 = vstv %s511
    %v513 = vmul.f32 %v86, %v512
    %v514 = vmul.f32 %v87, %v512
    %v515 = vmul.f32 %v90, %v512
    %v516 = vmul.f32 %v91, %v512
    %v521 = vrot.slane %v513, 1
    %v522 = vrot.slane %v514, 1
    %v523 = vsel %vm424, %v521, %v522
    %v524 = vrot.slane %v515, 1
    %v525 = vrot.slane %v516, 1
    %v526 = vsel %vm424, %v524, %v525
    %v531 = vadd.f32 %v410, %v523
    %v532 = vadd.f32 %v411, %v522
    %v533 = vadd.f32 %v412, %v526
    %v534 = vadd.f32 %v413, %v525
    %s535 = sld [smem:[#allocation8 + $0x4]]
    %v536 = vstv %s535
    %v537 = vmul.f32 %v86, %v536
    %v538 = vmul.f32 %v87, %v536
    %v539 = vmul.f32 %v90, %v536
    %v540 = vmul.f32 %v91, %v536
    %v545 = vrot.slane %v537, 1
    %v546 = vrot.slane %v538, 1
    %v547 = vsel %vm424, %v545, %v546
    %v548 = vrot.slane %v539, 1
    %v549 = vrot.slane %v540, 1
    %v550 = vsel %vm424, %v548, %v549
    %551 = vrot.lane.b32.xlu0 %v547, 127
    %v552 = vpop.permute.xlu0 %551
    %553 = vrot.lane.b32.xlu0 %v546, 127
    %v554 = vpop.permute.xlu0 %553
    %555 = vrot.lane.b32.xlu0 %v550, 127
    %v556 = vpop.permute.xlu0 %555
    %557 = vrot.lane.b32.xlu0 %v549, 127
    %v558 = vpop.permute.xlu0 %557
    %v563 = vadd.f32 %v435, %v552
    %v564 = vadd.f32 %v436, %v554
    %v565 = vadd.f32 %v437, %v556
    %v566 = vadd.f32 %v438, %v558
    %s567 = sld [smem:[#allocation8 + $0x16]]
    %v568 = vstv %s567
    %v569 = vmul.f32 %v86, %v568
    %v570 = vmul.f32 %v87, %v568
    %v571 = vmul.f32 %v90, %v568
    %v572 = vmul.f32 %v91, %v568
    %v577 = vrot.slane %v569, 1
    %v578 = vrot.slane %v570, 1
    %v579 = vsel %vm424, %v577, %v578
    %v580 = vrot.slane %v571, 1
    %v581 = vrot.slane %v572, 1
    %v582 = vsel %vm424, %v580, %v581
    %583 = vrot.lane.b32.xlu0 %v579, 127
    %v584 = vpop.permute.xlu0 %583
    %585 = vrot.lane.b32.xlu0 %v578, 127
    %v586 = vpop.permute.xlu0 %585
    %587 = vrot.lane.b32.xlu0 %v582, 127
    %v588 = vpop.permute.xlu0 %587
    %589 = vrot.lane.b32.xlu0 %v581, 127
    %v590 = vpop.permute.xlu0 %589
    %v595 = vadd.f32 %v459, %v584
    %v596 = vadd.f32 %v460, %v586
    %v597 = vadd.f32 %v461, %v588
    %v598 = vadd.f32 %v462, %v590
    %s599 = sld [smem:[#allocation8 + $0x28]]
    %v600 = vstv %s599
    %v601 = vmul.f32 %v86, %v600
    %v602 = vmul.f32 %v87, %v600
    %v603 = vmul.f32 %v90, %v600
    %v604 = vmul.f32 %v91, %v600
    %v609 = vrot.slane %v601, 1
    %v610 = vrot.slane %v602, 1
    %v611 = vsel %vm424, %v609, %v610
    %v612 = vrot.slane %v603, 1
    %v613 = vrot.slane %v604, 1
    %v614 = vsel %vm424, %v612, %v613
    %615 = vrot.lane.b32.xlu0 %v611, 127
    %v616 = vpop.permute.xlu0 %615
    %617 = vrot.lane.b32.xlu0 %v610, 127
    %v618 = vpop.permute.xlu0 %617
    %619 = vrot.lane.b32.xlu0 %v614, 127
    %v620 = vpop.permute.xlu0 %619
    %621 = vrot.lane.b32.xlu0 %v613, 127
    %v622 = vpop.permute.xlu0 %621
    %v627 = vadd.f32 %v483, %v616
    %v628 = vadd.f32 %v484, %v618
    %v629 = vadd.f32 %v485, %v620
    %v630 = vadd.f32 %v486, %v622
    %s631 = sld [smem:[#allocation8 + $0x3a]]
    %v632 = vstv %s631
    %v633 = vmul.f32 %v86, %v632
    %v634 = vmul.f32 %v87, %v632
    %v635 = vmul.f32 %v90, %v632
    %v636 = vmul.f32 %v91, %v632
    %v641 = vrot.slane %v633, 1
    %v642 = vrot.slane %v634, 1
    %v643 = vsel %vm424, %v641, %v642
    %v644 = vrot.slane %v635, 1
    %v645 = vrot.slane %v636, 1
    %v646 = vsel %vm424, %v644, %v645
    %647 = vrot.lane.b32.xlu0 %v643, 127
    %v648 = vpop.permute.xlu0 %647
    %649 = vrot.lane.b32.xlu0 %v642, 127
    %v650 = vpop.permute.xlu0 %649
    %651 = vrot.lane.b32.xlu0 %v646, 127
    %v652 = vpop.permute.xlu0 %651
    %653 = vrot.lane.b32.xlu0 %v645, 127
    %v654 = vpop.permute.xlu0 %653
    %v659 = vadd.f32 %v507, %v648
    %v660 = vadd.f32 %v508, %v650
    %v661 = vadd.f32 %v509, %v652
    %v662 = vadd.f32 %v510, %v654
    %s663 = sld [smem:[#allocation8 + $0x4c]]
    %v664 = vstv %s663
    %v665 = vmul.f32 %v86, %v664
    %v666 = vmul.f32 %v87, %v664
    %v667 = vmul.f32 %v90, %v664
    %v668 = vmul.f32 %v91, %v664
    %v673 = vrot.slane %v665, 1
    %v674 = vrot.slane %v666, 1
    %v675 = vsel %vm424, %v673, %v674
    %v676 = vrot.slane %v667, 1
    %v677 = vrot.slane %v668, 1
    %v678 = vsel %vm424, %v676, %v677
    %679 = vrot.lane.b32.xlu0 %v675, 127
    %v680 = vpop.permute.xlu0 %679
    %681 = vrot.lane.b32.xlu0 %v674, 127
    %v682 = vpop.permute.xlu0 %681
    %683 = vrot.lane.b32.xlu0 %v678, 127
    %v684 = vpop.permute.xlu0 %683
    %685 = vrot.lane.b32.xlu0 %v677, 127
    %v686 = vpop.permute.xlu0 %685
    %v691 = vadd.f32 %v531, %v680
    %v692 = vadd.f32 %v532, %v682
    %v693 = vadd.f32 %v533, %v684
    %v694 = vadd.f32 %v534, %v686
    %s695 = sld [smem:[#allocation8 + $0x5]]
    %v696 = vstv %s695
    %v697 = vmul.f32 %v86, %v696
    %v698 = vmul.f32 %v87, %v696
    %v699 = vmul.f32 %v90, %v696
    %v700 = vmul.f32 %v91, %v696
    %v705 = vrot.slane %v697, 1
    %v706 = vrot.slane %v698, 1
    %v707 = vsel %vm424, %v705, %v706
    %v708 = vrot.slane %v699, 1
    %v709 = vrot.slane %v700, 1
    %v710 = vsel %vm424, %v708, %v709
    %711 = vrot.lane.b32.xlu0 %v707, 126
    %v712 = vpop.permute.xlu0 %711
    %713 = vrot.lane.b32.xlu0 %v706, 126
    %v714 = vpop.permute.xlu0 %713
    %715 = vrot.lane.b32.xlu0 %v710, 126
    %v716 = vpop.permute.xlu0 %715
    %717 = vrot.lane.b32.xlu0 %v709, 126
    %v718 = vpop.permute.xlu0 %717
    %v723 = vadd.f32 %v563, %v712
    %v724 = vadd.f32 %v564, %v714
    %v725 = vadd.f32 %v565, %v716
    %v726 = vadd.f32 %v566, %v718
    %s727 = sld [smem:[#allocation8 + $0x17]]
    %v728 = vstv %s727
    %v729 = vmul.f32 %v86, %v728
    %v730 = vmul.f32 %v87, %v728
    %v731 = vmul.f32 %v90, %v728
    %v732 = vmul.f32 %v91, %v728
    %v737 = vrot.slane %v729, 1
    %v738 = vrot.slane %v730, 1
    %v739 = vsel %vm424, %v737, %v738
    %v740 = vrot.slane %v731, 1
    %v741 = vrot.slane %v732, 1
    %v742 = vsel %vm424, %v740, %v741
    %743 = vrot.lane.b32.xlu0 %v739, 126
    %v744 = vpop.permute.xlu0 %743
    %745 = vrot.lane.b32.xlu0 %v738, 126
    %v746 = vpop.permute.xlu0 %745
    %747 = vrot.lane.b32.xlu0 %v742, 126
    %v748 = vpop.permute.xlu0 %747
    %749 = vrot.lane.b32.xlu0 %v741, 126
    %v750 = vpop.permute.xlu0 %749
    %v755 = vadd.f32 %v595, %v744
    %v756 = vadd.f32 %v596, %v746
    %v757 = vadd.f32 %v597, %v748
    %v758 = vadd.f32 %v598, %v750
    %s759 = sld [smem:[#allocation8 + $0x29]]
    %v760 = vstv %s759
    %v761 = vmul.f32 %v86, %v760
    %v762 = vmul.f32 %v87, %v760
    %v763 = vmul.f32 %v90, %v760
    %v764 = vmul.f32 %v91, %v760
    %v769 = vrot.slane %v761, 1
    %v770 = vrot.slane %v762, 1
    %v771 = vsel %vm424, %v769, %v770
    %v772 = vrot.slane %v763, 1
    %v773 = vrot.slane %v764, 1
    %v774 = vsel %vm424, %v772, %v773
    %775 = vrot.lane.b32.xlu0 %v771, 126
    %v776 = vpop.permute.xlu0 %775
    %777 = vrot.lane.b32.xlu0 %v770, 126
    %v778 = vpop.permute.xlu0 %777
    %779 = vrot.lane.b32.xlu0 %v774, 126
    %v780 = vpop.permute.xlu0 %779
    %781 = vrot.lane.b32.xlu0 %v773, 126
    %v782 = vpop.permute.xlu0 %781
    %v787 = vadd.f32 %v627, %v776
    %v788 = vadd.f32 %v628, %v778
    %v789 = vadd.f32 %v629, %v780
    %v790 = vadd.f32 %v630, %v782
    %s791 = sld [smem:[#allocation8 + $0x3b]]
    %v792 = vstv %s791
    %v793 = vmul.f32 %v86, %v792
    %v794 = vmul.f32 %v87, %v792
    %v795 = vmul.f32 %v90, %v792
    %v796 = vmul.f32 %v91, %v792
    %v801 = vrot.slane %v793, 1
    %v802 = vrot.slane %v794, 1
    %v803 = vsel %vm424, %v801, %v802
    %v804 = vrot.slane %v795, 1
    %v805 = vrot.slane %v796, 1
    %v806 = vsel %vm424, %v804, %v805
    %807 = vrot.lane.b32.xlu0 %v803, 126
    %v808 = vpop.permute.xlu0 %807
    %809 = vrot.lane.b32.xlu0 %v802, 126
    %v810 = vpop.permute.xlu0 %809
    %811 = vrot.lane.b32.xlu0 %v806, 126
    %v812 = vpop.permute.xlu0 %811
    %813 = vrot.lane.b32.xlu0 %v805, 126
    %v814 = vpop.permute.xlu0 %813
    %v819 = vadd.f32 %v659, %v808
    %v820 = vadd.f32 %v660, %v810
    %v821 = vadd.f32 %v661, %v812
    %v822 = vadd.f32 %v662, %v814
    %s823 = sld [smem:[#allocation8 + $0x4d]]
    %v824 = vstv %s823
    %v825 = vmul.f32 %v86, %v824
    %v826 = vmul.f32 %v87, %v824
    %v827 = vmul.f32 %v90, %v824
    %v828 = vmul.f32 %v91, %v824
    %v833 = vrot.slane %v825, 1
    %v834 = vrot.slane %v826, 1
    %v835 = vsel %vm424, %v833, %v834
    %v836 = vrot.slane %v827, 1
    %v837 = vrot.slane %v828, 1
    %v838 = vsel %vm424, %v836, %v837
    %839 = vrot.lane.b32.xlu0 %v835, 126
    %v840 = vpop.permute.xlu0 %839
    %841 = vrot.lane.b32.xlu0 %v834, 126
    %v842 = vpop.permute.xlu0 %841
    %843 = vrot.lane.b32.xlu0 %v838, 126
    %v844 = vpop.permute.xlu0 %843
    %845 = vrot.lane.b32.xlu0 %v837, 126
    %v846 = vpop.permute.xlu0 %845
    %v851 = vadd.f32 %v691, %v840
    %v852 = vadd.f32 %v692, %v842
    %v853 = vadd.f32 %v693, %v844
    %v854 = vadd.f32 %v694, %v846
    %s855 = sld [smem:[#allocation8 + $0x6]]
    %v856 = vstv %s855
    %v857 = vmul.f32 %v86, %v856
    %v858 = vmul.f32 %v87, %v856
    %v859 = vmul.f32 %v90, %v856
    %v860 = vmul.f32 %v91, %v856
    %vm865 = vcmask 1045504
    %v866 = vrot.slane %v857, 2
    %v867 = vrot.slane %v858, 2
    %v868 = vsel %vm865, %v866, %v867
    %v869 = vrot.slane %v859, 2
    %v870 = vrot.slane %v860, 2
    %v871 = vsel %vm865, %v869, %v870
    %v876 = vadd.f32 %v723, %v868
    %v877 = vadd.f32 %v724, %v867
    %v878 = vadd.f32 %v725, %v871
    %v879 = vadd.f32 %v726, %v870
    %s880 = sld [smem:[#allocation8 + $0x18]]
    %v881 = vstv %s880
    %v882 = vmul.f32 %v86, %v881
    %v883 = vmul.f32 %v87, %v881
    %v884 = vmul.f32 %v90, %v881
    %v885 = vmul.f32 %v91, %v881
    %v890 = vrot.slane %v882, 2
    %v891 = vrot.slane %v883, 2
    %v892 = vsel %vm865, %v890, %v891
    %v893 = vrot.slane %v884, 2
    %v894 = vrot.slane %v885, 2
    %v895 = vsel %vm865, %v893, %v894
    %v900 = vadd.f32 %v755, %v892
    %v901 = vadd.f32 %v756, %v891
    %v902 = vadd.f32 %v757, %v895
    %v903 = vadd.f32 %v758, %v894
    %s904 = sld [smem:[#allocation8 + $0x2a]]
    %v905 = vstv %s904
    %v906 = vmul.f32 %v86, %v905
    %v907 = vmul.f32 %v87, %v905
    %v908 = vmul.f32 %v90, %v905
    %v909 = vmul.f32 %v91, %v905
    %v914 = vrot.slane %v906, 2
    %v915 = vrot.slane %v907, 2
    %v916 = vsel %vm865, %v914, %v915
    %v917 = vrot.slane %v908, 2
    %v918 = vrot.slane %v909, 2
    %v919 = vsel %vm865, %v917, %v918
    %v924 = vadd.f32 %v787, %v916
    %v925 = vadd.f32 %v788, %v915
    %v926 = vadd.f32 %v789, %v919
    %v927 = vadd.f32 %v790, %v918
    %s928 = sld [smem:[#allocation8 + $0x3c]]
    %v929 = vstv %s928
    %v930 = vmul.f32 %v86, %v929
    %v931 = vmul.f32 %v87, %v929
    %v932 = vmul.f32 %v90, %v929
    %v933 = vmul.f32 %v91, %v929
    %v938 = vrot.slane %v930, 2
    %v939 = vrot.slane %v931, 2
    %v940 = vsel %vm865, %v938, %v939
    %v941 = vrot.slane %v932, 2
    %v942 = vrot.slane %v933, 2
    %v943 = vsel %vm865, %v941, %v942
    %v948 = vadd.f32 %v819, %v940
    %v949 = vadd.f32 %v820, %v939
    %v950 = vadd.f32 %v821, %v943
    %v951 = vadd.f32 %v822, %v942
    %s952 = sld [smem:[#allocation8 + $0x4e]]
    %v953 = vstv %s952
    %v954 = vmul.f32 %v86, %v953
    %v955 = vmul.f32 %v87, %v953
    %v956 = vmul.f32 %v90, %v953
    %v957 = vmul.f32 %v91, %v953
    %v962 = vrot.slane %v954, 2
    %v963 = vrot.slane %v955, 2
    %v964 = vsel %vm865, %v962, %v963
    %v965 = vrot.slane %v956, 2
    %v966 = vrot.slane %v957, 2
    %v967 = vsel %vm865, %v965, %v966
    %v972 = vadd.f32 %v851, %v964
    %v973 = vadd.f32 %v852, %v963
    %v974 = vadd.f32 %v853, %v967
    %v975 = vadd.f32 %v854, %v966
    %s976 = sld [smem:[#allocation8 + $0x7]]
    %v977 = vstv %s976
    %v978 = vmul.f32 %v86, %v977
    %v979 = vmul.f32 %v87, %v977
    %v980 = vmul.f32 %v90, %v977
    %v981 = vmul.f32 %v91, %v977
    %v986 = vrot.slane %v978, 2
    %v987 = vrot.slane %v979, 2
    %v988 = vsel %vm865, %v986, %v987
    %v989 = vrot.slane %v980, 2
    %v990 = vrot.slane %v981, 2
    %v991 = vsel %vm865, %v989, %v990
    %992 = vrot.lane.b32.xlu0 %v988, 127
    %v993 = vpop.permute.xlu0 %992
    %994 = vrot.lane.b32.xlu0 %v987, 127
    %v995 = vpop.permute.xlu0 %994
    %996 = vrot.lane.b32.xlu0 %v991, 127
    %v997 = vpop.permute.xlu0 %996
    %998 = vrot.lane.b32.xlu0 %v990, 127
    %v999 = vpop.permute.xlu0 %998
    %v1004 = vadd.f32 %v876, %v993
    %v1005 = vadd.f32 %v877, %v995
    %v1006 = vadd.f32 %v878, %v997
    %v1007 = vadd.f32 %v879, %v999
    %s1008 = sld [smem:[#allocation8 + $0x19]]
    %v1009 = vstv %s1008
    %v1010 = vmul.f32 %v86, %v1009
    %v1011 = vmul.f32 %v87, %v1009
    %v1012 = vmul.f32 %v90, %v1009
    %v1013 = vmul.f32 %v91, %v1009
    %v1018 = vrot.slane %v1010, 2
    %v1019 = vrot.slane %v1011, 2
    %v1020 = vsel %vm865, %v1018, %v1019
    %v1021 = vrot.slane %v1012, 2
    %v1022 = vrot.slane %v1013, 2
    %v1023 = vsel %vm865, %v1021, %v1022
    %1024 = vrot.lane.b32.xlu0 %v1020, 127
    %v1025 = vpop.permute.xlu0 %1024
    %1026 = vrot.lane.b32.xlu0 %v1019, 127
    %v1027 = vpop.permute.xlu0 %1026
    %1028 = vrot.lane.b32.xlu0 %v1023, 127
    %v1029 = vpop.permute.xlu0 %1028
    %1030 = vrot.lane.b32.xlu0 %v1022, 127
    %v1031 = vpop.permute.xlu0 %1030
    %v1036 = vadd.f32 %v900, %v1025
    %v1037 = vadd.f32 %v901, %v1027
    %v1038 = vadd.f32 %v902, %v1029
    %v1039 = vadd.f32 %v903, %v1031
    %s1040 = sld [smem:[#allocation8 + $0x2b]]
    %v1041 = vstv %s1040
    %v1042 = vmul.f32 %v86, %v1041
    %v1043 = vmul.f32 %v87, %v1041
    %v1044 = vmul.f32 %v90, %v1041
    %v1045 = vmul.f32 %v91, %v1041
    %v1050 = vrot.slane %v1042, 2
    %v1051 = vrot.slane %v1043, 2
    %v1052 = vsel %vm865, %v1050, %v1051
    %v1053 = vrot.slane %v1044, 2
    %v1054 = vrot.slane %v1045, 2
    %v1055 = vsel %vm865, %v1053, %v1054
    %1056 = vrot.lane.b32.xlu0 %v1052, 127
    %v1057 = vpop.permute.xlu0 %1056
    %1058 = vrot.lane.b32.xlu0 %v1051, 127
    %v1059 = vpop.permute.xlu0 %1058
    %1060 = vrot.lane.b32.xlu0 %v1055, 127
    %v1061 = vpop.permute.xlu0 %1060
    %1062 = vrot.lane.b32.xlu0 %v1054, 127
    %v1063 = vpop.permute.xlu0 %1062
    %v1068 = vadd.f32 %v924, %v1057
    %v1069 = vadd.f32 %v925, %v1059
    %v1070 = vadd.f32 %v926, %v1061
    %v1071 = vadd.f32 %v927, %v1063
    %s1072 = sld [smem:[#allocation8 + $0x3d]]
    %v1073 = vstv %s1072
    %v1074 = vmul.f32 %v86, %v1073
    %v1075 = vmul.f32 %v87, %v1073
    %v1076 = vmul.f32 %v90, %v1073
    %v1077 = vmul.f32 %v91, %v1073
    %v1082 = vrot.slane %v1074, 2
    %v1083 = vrot.slane %v1075, 2
    %v1084 = vsel %vm865, %v1082, %v1083
    %v1085 = vrot.slane %v1076, 2
    %v1086 = vrot.slane %v1077, 2
    %v1087 = vsel %vm865, %v1085, %v1086
    %1088 = vrot.lane.b32.xlu0 %v1084, 127
    %v1089 = vpop.permute.xlu0 %1088
    %1090 = vrot.lane.b32.xlu0 %v1083, 127
    %v1091 = vpop.permute.xlu0 %1090
    %1092 = vrot.lane.b32.xlu0 %v1087, 127
    %v1093 = vpop.permute.xlu0 %1092
    %1094 = vrot.lane.b32.xlu0 %v1086, 127
    %v1095 = vpop.permute.xlu0 %1094
    %v1100 = vadd.f32 %v948, %v1089
    %v1101 = vadd.f32 %v949, %v1091
    %v1102 = vadd.f32 %v950, %v1093
    %v1103 = vadd.f32 %v951, %v1095
    %s1104 = sld [smem:[#allocation8 + $0x4f]]
    %v1105 = vstv %s1104
    %v1106 = vmul.f32 %v86, %v1105
    %v1107 = vmul.f32 %v87, %v1105
    %v1108 = vmul.f32 %v90, %v1105
    %v1109 = vmul.f32 %v91, %v1105
    %v1114 = vrot.slane %v1106, 2
    %v1115 = vrot.slane %v1107, 2
    %v1116 = vsel %vm865, %v1114, %v1115
    %v1117 = vrot.slane %v1108, 2
    %v1118 = vrot.slane %v1109, 2
    %v1119 = vsel %vm865, %v1117, %v1118
    %1120 = vrot.lane.b32.xlu0 %v1116, 127
    %v1121 = vpop.permute.xlu0 %1120
    %1122 = vrot.lane.b32.xlu0 %v1115, 127
    %v1123 = vpop.permute.xlu0 %1122
    %1124 = vrot.lane.b32.xlu0 %v1119, 127
    %v1125 = vpop.permute.xlu0 %1124
    %1126 = vrot.lane.b32.xlu0 %v1118, 127
    %v1127 = vpop.permute.xlu0 %1126
    %v1132 = vadd.f32 %v972, %v1121
    %v1133 = vadd.f32 %v973, %v1123
    %v1134 = vadd.f32 %v974, %v1125
    %v1135 = vadd.f32 %v975, %v1127
    %s1136 = sld [smem:[#allocation8 + $0x8]]
    %v1137 = vstv %s1136
    %v1138 = vmul.f32 %v86, %v1137
    %v1139 = vmul.f32 %v87, %v1137
    %v1140 = vmul.f32 %v90, %v1137
    %v1141 = vmul.f32 %v91, %v1137
    %v1146 = vrot.slane %v1138, 2
    %v1147 = vrot.slane %v1139, 2
    %v1148 = vsel %vm865, %v1146, %v1147
    %v1149 = vrot.slane %v1140, 2
    %v1150 = vrot.slane %v1141, 2
    %v1151 = vsel %vm865, %v1149, %v1150
    %1152 = vrot.lane.b32.xlu0 %v1148, 126
    %v1153 = vpop.permute.xlu0 %1152
    %1154 = vrot.lane.b32.xlu0 %v1147, 126
    %v1155 = vpop.permute.xlu0 %1154
    %1156 = vrot.lane.b32.xlu0 %v1151, 126
    %v1157 = vpop.permute.xlu0 %1156
    %1158 = vrot.lane.b32.xlu0 %v1150, 126
    %v1159 = vpop.permute.xlu0 %1158
    %v1164 = vadd.f32 %v1004, %v1153
    %v1165 = vadd.f32 %v1005, %v1155
    %v1166 = vadd.f32 %v1006, %v1157
    %v1167 = vadd.f32 %v1007, %v1159
    %s1168 = sld [smem:[#allocation8 + $0x1a]]
    %v1169 = vstv %s1168
    %v1170 = vmul.f32 %v86, %v1169
    %v1171 = vmul.f32 %v87, %v1169
    %v1172 = vmul.f32 %v90, %v1169
    %v1173 = vmul.f32 %v91, %v1169
    %v1178 = vrot.slane %v1170, 2
    %v1179 = vrot.slane %v1171, 2
    %v1180 = vsel %vm865, %v1178, %v1179
    %v1181 = vrot.slane %v1172, 2
    %v1182 = vrot.slane %v1173, 2
    %v1183 = vsel %vm865, %v1181, %v1182
    %1184 = vrot.lane.b32.xlu0 %v1180, 126
    %v1185 = vpop.permute.xlu0 %1184
    %1186 = vrot.lane.b32.xlu0 %v1179, 126
    %v1187 = vpop.permute.xlu0 %1186
    %1188 = vrot.lane.b32.xlu0 %v1183, 126
    %v1189 = vpop.permute.xlu0 %1188
    %1190 = vrot.lane.b32.xlu0 %v1182, 126
    %v1191 = vpop.permute.xlu0 %1190
    %v1196 = vadd.f32 %v1036, %v1185
    %v1197 = vadd.f32 %v1037, %v1187
    %v1198 = vadd.f32 %v1038, %v1189
    %v1199 = vadd.f32 %v1039, %v1191
    %s1200 = sld [smem:[#allocation8 + $0x2c]]
    %v1201 = vstv %s1200
    %v1202 = vmul.f32 %v86, %v1201
    %v1203 = vmul.f32 %v87, %v1201
    %v1204 = vmul.f32 %v90, %v1201
    %v1205 = vmul.f32 %v91, %v1201
    %v1210 = vrot.slane %v1202, 2
    %v1211 = vrot.slane %v1203, 2
    %v1212 = vsel %vm865, %v1210, %v1211
    %v1213 = vrot.slane %v1204, 2
    %v1214 = vrot.slane %v1205, 2
    %v1215 = vsel %vm865, %v1213, %v1214
    %1216 = vrot.lane.b32.xlu0 %v1212, 126
    %v1217 = vpop.permute.xlu0 %1216
    %1218 = vrot.lane.b32.xlu0 %v1211, 126
    %v1219 = vpop.permute.xlu0 %1218
    %1220 = vrot.lane.b32.xlu0 %v1215, 126
    %v1221 = vpop.permute.xlu0 %1220
    %1222 = vrot.lane.b32.xlu0 %v1214, 126
    %v1223 = vpop.permute.xlu0 %1222
    %v1228 = vadd.f32 %v1068, %v1217
    %v1229 = vadd.f32 %v1069, %v1219
    %v1230 = vadd.f32 %v1070, %v1221
    %v1231 = vadd.f32 %v1071, %v1223
    %s1232 = sld [smem:[#allocation8 + $0x3e]]
    %v1233 = vstv %s1232
    %v1234 = vmul.f32 %v86, %v1233
    %v1235 = vmul.f32 %v87, %v1233
    %v1236 = vmul.f32 %v90, %v1233
    %v1237 = vmul.f32 %v91, %v1233
    %v1242 = vrot.slane %v1234, 2
    %v1243 = vrot.slane %v1235, 2
    %v1244 = vsel %vm865, %v1242, %v1243
    %v1245 = vrot.slane %v1236, 2
    %v1246 = vrot.slane %v1237, 2
    %v1247 = vsel %vm865, %v1245, %v1246
    %1248 = vrot.lane.b32.xlu0 %v1244, 126
    %v1249 = vpop.permute.xlu0 %1248
    %1250 = vrot.lane.b32.xlu0 %v1243, 126
    %v1251 = vpop.permute.xlu0 %1250
    %1252 = vrot.lane.b32.xlu0 %v1247, 126
    %v1253 = vpop.permute.xlu0 %1252
    %1254 = vrot.lane.b32.xlu0 %v1246, 126
    %v1255 = vpop.permute.xlu0 %1254
    %v1260 = vadd.f32 %v1100, %v1249
    %v1261 = vadd.f32 %v1101, %v1251
    %v1262 = vadd.f32 %v1102, %v1253
    %v1263 = vadd.f32 %v1103, %v1255
    %s1264 = sld [smem:[#allocation8 + $0x50]]
    %v1265 = vstv %s1264
    %v1266 = vmul.f32 %v86, %v1265
    %v1267 = vmul.f32 %v87, %v1265
    %v1268 = vmul.f32 %v90, %v1265
    %v1269 = vmul.f32 %v91, %v1265
    %v1274 = vrot.slane %v1266, 2
    %v1275 = vrot.slane %v1267, 2
    %v1276 = vsel %vm865, %v1274, %v1275
    %v1277 = vrot.slane %v1268, 2
    %v1278 = vrot.slane %v1269, 2
    %v1279 = vsel %vm865, %v1277, %v1278
    %1280 = vrot.lane.b32.xlu0 %v1276, 126
    %v1281 = vpop.permute.xlu0 %1280
    %1282 = vrot.lane.b32.xlu0 %v1275, 126
    %v1283 = vpop.permute.xlu0 %1282
    %1284 = vrot.lane.b32.xlu0 %v1279, 126
    %v1285 = vpop.permute.xlu0 %1284
    %1286 = vrot.lane.b32.xlu0 %v1278, 126
    %v1287 = vpop.permute.xlu0 %1286
    %v1292 = vadd.f32 %v1132, %v1281
    %v1293 = vadd.f32 %v1133, %v1283
    %v1294 = vadd.f32 %v1134, %v1285
    %v1295 = vadd.f32 %v1135, %v1287
    %s1296 = sld [smem:[#allocation8 + $0x9]]
    %v1297 = vstv %s1296
    %v1298 = vmul.f32 %v88, %v1297
    %v1299 = vmul.f32 %v89, %v1297
    %v1300 = vmul.f32 %v92, %v1297
    %v1301 = vmul.f32 %v93, %v1297
    %v1302 = vadd.f32 %v1164, %v1298
    %v1303 = vadd.f32 %v1165, %v1299
    %v1304 = vadd.f32 %v1166, %v1300
    %v1305 = vadd.f32 %v1167, %v1301
    %s1306 = sld [smem:[#allocation8 + $0x1b]]
    %v1307 = vstv %s1306
    %v1308 = vmul.f32 %v88, %v1307
    %v1309 = vmul.f32 %v89, %v1307
    %v1310 = vmul.f32 %v92, %v1307
    %v1311 = vmul.f32 %v93, %v1307
    %v1312 = vadd.f32 %v1196, %v1308
    %v1313 = vadd.f32 %v1197, %v1309
    %v1314 = vadd.f32 %v1198, %v1310
    %v1315 = vadd.f32 %v1199, %v1311
    %s1316 = sld [smem:[#allocation8 + $0x2d]]
    %v1317 = vstv %s1316
    %v1318 = vmul.f32 %v88, %v1317
    %v1319 = vmul.f32 %v89, %v1317
    %v1320 = vmul.f32 %v92, %v1317
    %v1321 = vmul.f32 %v93, %v1317
    %v1322 = vadd.f32 %v1228, %v1318
    %v1323 = vadd.f32 %v1229, %v1319
    %v1324 = vadd.f32 %v1230, %v1320
    %v1325 = vadd.f32 %v1231, %v1321
    %s1326 = sld [smem:[#allocation8 + $0x3f]]
    %v1327 = vstv %s1326
    %v1328 = vmul.f32 %v88, %v1327
    %v1329 = vmul.f32 %v89, %v1327
    %v1330 = vmul.f32 %v92, %v1327
    %v1331 = vmul.f32 %v93, %v1327
    %v1332 = vadd.f32 %v1260, %v1328
    %v1333 = vadd.f32 %v1261, %v1329
    %v1334 = vadd.f32 %v1262, %v1330
    %v1335 = vadd.f32 %v1263, %v1331
    %s1336 = sld [smem:[#allocation8 + $0x51]]
    %v1337 = vstv %s1336
    %v1338 = vmul.f32 %v88, %v1337
    %v1339 = vmul.f32 %v89, %v1337
    %v1340 = vmul.f32 %v92, %v1337
    %v1341 = vmul.f32 %v93, %v1337
    %v1342 = vadd.f32 %v1292, %v1338
    %v1343 = vadd.f32 %v1293, %v1339
    %v1344 = vadd.f32 %v1294, %v1340
    %v1345 = vadd.f32 %v1295, %v1341
    %s1346 = sld [smem:[#allocation8 + $0xa]]
    %v1347 = vstv %s1346
    %v1348 = vmul.f32 %v88, %v1347
    %v1349 = vmul.f32 %v89, %v1347
    %v1350 = vmul.f32 %v92, %v1347
    %v1351 = vmul.f32 %v93, %v1347
    %1356 = vrot.lane.b32.xlu0 %v1348, 127
    %v1357 = vpop.permute.xlu0 %1356
    %1358 = vrot.lane.b32.xlu0 %v1349, 127
    %v1359 = vpop.permute.xlu0 %1358
    %1360 = vrot.lane.b32.xlu0 %v1350, 127
    %v1361 = vpop.permute.xlu0 %1360
    %1362 = vrot.lane.b32.xlu0 %v1351, 127
    %v1363 = vpop.permute.xlu0 %1362
    %v1368 = vadd.f32 %v1302, %v1357
    %v1369 = vadd.f32 %v1303, %v1359
    %v1370 = vadd.f32 %v1304, %v1361
    %v1371 = vadd.f32 %v1305, %v1363
    %s1372 = sld [smem:[#allocation8 + $0x1c]]
    %v1373 = vstv %s1372
    %v1374 = vmul.f32 %v88, %v1373
    %v1375 = vmul.f32 %v89, %v1373
    %v1376 = vmul.f32 %v92, %v1373
    %v1377 = vmul.f32 %v93, %v1373
    %1382 = vrot.lane.b32.xlu0 %v1374, 127
    %v1383 = vpop.permute.xlu0 %1382
    %1384 = vrot.lane.b32.xlu0 %v1375, 127
    %v1385 = vpop.permute.xlu0 %1384
    %1386 = vrot.lane.b32.xlu0 %v1376, 127
    %v1387 = vpop.permute.xlu0 %1386
    %1388 = vrot.lane.b32.xlu0 %v1377, 127
    %v1389 = vpop.permute.xlu0 %1388
    %v1394 = vadd.f32 %v1312, %v1383
    %v1395 = vadd.f32 %v1313, %v1385
    %v1396 = vadd.f32 %v1314, %v1387
    %v1397 = vadd.f32 %v1315, %v1389
    %s1398 = sld [smem:[#allocation8 + $0x2e]]
    %v1399 = vstv %s1398
    %v1400 = vmul.f32 %v88, %v1399
    %v1401 = vmul.f32 %v89, %v1399
    %v1402 = vmul.f32 %v92, %v1399
    %v1403 = vmul.f32 %v93, %v1399
    %1408 = vrot.lane.b32.xlu0 %v1400, 127
    %v1409 = vpop.permute.xlu0 %1408
    %1410 = vrot.lane.b32.xlu0 %v1401, 127
    %v1411 = vpop.permute.xlu0 %1410
    %1412 = vrot.lane.b32.xlu0 %v1402, 127
    %v1413 = vpop.permute.xlu0 %1412
    %1414 = vrot.lane.b32.xlu0 %v1403, 127
    %v1415 = vpop.permute.xlu0 %1414
    %v1420 = vadd.f32 %v1322, %v1409
    %v1421 = vadd.f32 %v1323, %v1411
    %v1422 = vadd.f32 %v1324, %v1413
    %v1423 = vadd.f32 %v1325, %v1415
    %s1424 = sld [smem:[#allocation8 + $0x40]]
    %v1425 = vstv %s1424
    %v1426 = vmul.f32 %v88, %v1425
    %v1427 = vmul.f32 %v89, %v1425
    %v1428 = vmul.f32 %v92, %v1425
    %v1429 = vmul.f32 %v93, %v1425
    %1434 = vrot.lane.b32.xlu0 %v1426, 127
    %v1435 = vpop.permute.xlu0 %1434
    %1436 = vrot.lane.b32.xlu0 %v1427, 127
    %v1437 = vpop.permute.xlu0 %1436
    %1438 = vrot.lane.b32.xlu0 %v1428, 127
    %v1439 = vpop.permute.xlu0 %1438
    %1440 = vrot.lane.b32.xlu0 %v1429, 127
    %v1441 = vpop.permute.xlu0 %1440
    %v1446 = vadd.f32 %v1332, %v1435
    %v1447 = vadd.f32 %v1333, %v1437
    %v1448 = vadd.f32 %v1334, %v1439
    %v1449 = vadd.f32 %v1335, %v1441
    %s1450 = sld [smem:[#allocation8 + $0x52]]
    %v1451 = vstv %s1450
    %v1452 = vmul.f32 %v88, %v1451
    %v1453 = vmul.f32 %v89, %v1451
    %v1454 = vmul.f32 %v92, %v1451
    %v1455 = vmul.f32 %v93, %v1451
    %1460 = vrot.lane.b32.xlu0 %v1452, 127
    %v1461 = vpop.permute.xlu0 %1460
    %1462 = vrot.lane.b32.xlu0 %v1453, 127
    %v1463 = vpop.permute.xlu0 %1462
    %1464 = vrot.lane.b32.xlu0 %v1454, 127
    %v1465 = vpop.permute.xlu0 %1464
    %1466 = vrot.lane.b32.xlu0 %v1455, 127
    %v1467 = vpop.permute.xlu0 %1466
    %v1472 = vadd.f32 %v1342, %v1461
    %v1473 = vadd.f32 %v1343, %v1463
    %v1474 = vadd.f32 %v1344, %v1465
    %v1475 = vadd.f32 %v1345, %v1467
    %s1476 = sld [smem:[#allocation8 + $0xb]]
    %v1477 = vstv %s1476
    %v1478 = vmul.f32 %v88, %v1477
    %v1479 = vmul.f32 %v89, %v1477
    %v1480 = vmul.f32 %v92, %v1477
    %v1481 = vmul.f32 %v93, %v1477
    %1486 = vrot.lane.b32.xlu0 %v1478, 126
    %v1487 = vpop.permute.xlu0 %1486
    %1488 = vrot.lane.b32.xlu0 %v1479, 126
    %v1489 = vpop.permute.xlu0 %1488
    %1490 = vrot.lane.b32.xlu0 %v1480, 126
    %v1491 = vpop.permute.xlu0 %1490
    %1492 = vrot.lane.b32.xlu0 %v1481, 126
    %v1493 = vpop.permute.xlu0 %1492
    %v1498 = vadd.f32 %v1368, %v1487
    %v1499 = vadd.f32 %v1369, %v1489
    %v1500 = vadd.f32 %v1370, %v1491
    %v1501 = vadd.f32 %v1371, %v1493
    %s1502 = sld [smem:[#allocation8 + $0x1d]]
    %v1503 = vstv %s1502
    %v1504 = vmul.f32 %v88, %v1503
    %v1505 = vmul.f32 %v89, %v1503
    %v1506 = vmul.f32 %v92, %v1503
    %v1507 = vmul.f32 %v93, %v1503
    %1512 = vrot.lane.b32.xlu0 %v1504, 126
    %v1513 = vpop.permute.xlu0 %1512
    %1514 = vrot.lane.b32.xlu0 %v1505, 126
    %v1515 = vpop.permute.xlu0 %1514
    %1516 = vrot.lane.b32.xlu0 %v1506, 126
    %v1517 = vpop.permute.xlu0 %1516
    %1518 = vrot.lane.b32.xlu0 %v1507, 126
    %v1519 = vpop.permute.xlu0 %1518
    %v1524 = vadd.f32 %v1394, %v1513
    %v1525 = vadd.f32 %v1395, %v1515
    %v1526 = vadd.f32 %v1396, %v1517
    %v1527 = vadd.f32 %v1397, %v1519
    %s1528 = sld [smem:[#allocation8 + $0x2f]]
    %v1529 = vstv %s1528
    %v1530 = vmul.f32 %v88, %v1529
    %v1531 = vmul.f32 %v89, %v1529
    %v1532 = vmul.f32 %v92, %v1529
    %v1533 = vmul.f32 %v93, %v1529
    %1538 = vrot.lane.b32.xlu0 %v1530, 126
    %v1539 = vpop.permute.xlu0 %1538
    %1540 = vrot.lane.b32.xlu0 %v1531, 126
    %v1541 = vpop.permute.xlu0 %1540
    %1542 = vrot.lane.b32.xlu0 %v1532, 126
    %v1543 = vpop.permute.xlu0 %1542
    %1544 = vrot.lane.b32.xlu0 %v1533, 126
    %v1545 = vpop.permute.xlu0 %1544
    %v1550 = vadd.f32 %v1420, %v1539
    %v1551 = vadd.f32 %v1421, %v1541
    %v1552 = vadd.f32 %v1422, %v1543
    %v1553 = vadd.f32 %v1423, %v1545
    %s1554 = sld [smem:[#allocation8 + $0x41]]
    %v1555 = vstv %s1554
    %v1556 = vmul.f32 %v88, %v1555
    %v1557 = vmul.f32 %v89, %v1555
    %v1558 = vmul.f32 %v92, %v1555
    %v1559 = vmul.f32 %v93, %v1555
    %1564 = vrot.lane.b32.xlu0 %v1556, 126
    %v1565 = vpop.permute.xlu0 %1564
    %1566 = vrot.lane.b32.xlu0 %v1557, 126
    %v1567 = vpop.permute.xlu0 %1566
    %1568 = vrot.lane.b32.xlu0 %v1558, 126
    %v1569 = vpop.permute.xlu0 %1568
    %1570 = vrot.lane.b32.xlu0 %v1559, 126
    %v1571 = vpop.permute.xlu0 %1570
    %v1576 = vadd.f32 %v1446, %v1565
    %v1577 = vadd.f32 %v1447, %v1567
    %v1578 = vadd.f32 %v1448, %v1569
    %v1579 = vadd.f32 %v1449, %v1571
    %s1580 = sld [smem:[#allocation8 + $0x53]]
    %v1581 = vstv %s1580
    %v1582 = vmul.f32 %v88, %v1581
    %v1583 = vmul.f32 %v89, %v1581
    %v1584 = vmul.f32 %v92, %v1581
    %v1585 = vmul.f32 %v93, %v1581
    %1590 = vrot.lane.b32.xlu0 %v1582, 126
    %v1591 = vpop.permute.xlu0 %1590
    %1592 = vrot.lane.b32.xlu0 %v1583, 126
    %v1593 = vpop.permute.xlu0 %1592
    %1594 = vrot.lane.b32.xlu0 %v1584, 126
    %v1595 = vpop.permute.xlu0 %1594
    %1596 = vrot.lane.b32.xlu0 %v1585, 126
    %v1597 = vpop.permute.xlu0 %1596
    %v1602 = vadd.f32 %v1472, %v1591
    %v1603 = vadd.f32 %v1473, %v1593
    %v1604 = vadd.f32 %v1474, %v1595
    %v1605 = vadd.f32 %v1475, %v1597
    %s1606 = sld [smem:[#allocation8 + $0xc]]
    %v1607 = vstv %s1606
    %v1608 = vmul.f32 %v88, %v1607
    %v1609 = vmul.f32 %v89, %v1607
    %v1610 = vmul.f32 %v92, %v1607
    %v1611 = vmul.f32 %v93, %v1607
    %v1616 = vrot.slane %v1608, 1
    %v1617 = vrot.slane %v1609, 1
    %v1618 = vsel %vm424, %v1616, %v1617
    %v1619 = vrot.slane %v1610, 1
    %v1620 = vrot.slane %v1611, 1
    %v1621 = vsel %vm424, %v1619, %v1620
    %v1626 = vadd.f32 %v1498, %v1618
    %v1627 = vadd.f32 %v1499, %v1617
    %v1628 = vadd.f32 %v1500, %v1621
    %v1629 = vadd.f32 %v1501, %v1620
    %s1630 = sld [smem:[#allocation8 + $0x1e]]
    %v1631 = vstv %s1630
    %v1632 = vmul.f32 %v88, %v1631
    %v1633 = vmul.f32 %v89, %v1631
    %v1634 = vmul.f32 %v92, %v1631
    %v1635 = vmul.f32 %v93, %v1631
    %v1640 = vrot.slane %v1632, 1
    %v1641 = vrot.slane %v1633, 1
    %v1642 = vsel %vm424, %v1640, %v1641
    %v1643 = vrot.slane %v1634, 1
    %v1644 = vrot.slane %v1635, 1
    %v1645 = vsel %vm424, %v1643, %v1644
    %v1650 = vadd.f32 %v1524, %v1642
    %v1651 = vadd.f32 %v1525, %v1641
    %v1652 = vadd.f32 %v1526, %v1645
    %v1653 = vadd.f32 %v1527, %v1644
    %s1654 = sld [smem:[#allocation8 + $0x30]]
    %v1655 = vstv %s1654
    %v1656 = vmul.f32 %v88, %v1655
    %v1657 = vmul.f32 %v89, %v1655
    %v1658 = vmul.f32 %v92, %v1655
    %v1659 = vmul.f32 %v93, %v1655
    %v1664 = vrot.slane %v1656, 1
    %v1665 = vrot.slane %v1657, 1
    %v1666 = vsel %vm424, %v1664, %v1665
    %v1667 = vrot.slane %v1658, 1
    %v1668 = vrot.slane %v1659, 1
    %v1669 = vsel %vm424, %v1667, %v1668
    %v1674 = vadd.f32 %v1550, %v1666
    %v1675 = vadd.f32 %v1551, %v1665
    %v1676 = vadd.f32 %v1552, %v1669
    %v1677 = vadd.f32 %v1553, %v1668
    %s1678 = sld [smem:[#allocation8 + $0x42]]
    %v1679 = vstv %s1678
    %v1680 = vmul.f32 %v88, %v1679
    %v1681 = vmul.f32 %v89, %v1679
    %v1682 = vmul.f32 %v92, %v1679
    %v1683 = vmul.f32 %v93, %v1679
    %v1688 = vrot.slane %v1680, 1
    %v1689 = vrot.slane %v1681, 1
    %v1690 = vsel %vm424, %v1688, %v1689
    %v1691 = vrot.slane %v1682, 1
    %v1692 = vrot.slane %v1683, 1
    %v1693 = vsel %vm424, %v1691, %v1692
    %v1698 = vadd.f32 %v1576, %v1690
    %v1699 = vadd.f32 %v1577, %v1689
    %v1700 = vadd.f32 %v1578, %v1693
    %v1701 = vadd.f32 %v1579, %v1692
    %s1702 = sld [smem:[#allocation8 + $0x54]]
    %v1703 = vstv %s1702
    %v1704 = vmul.f32 %v88, %v1703
    %v1705 = vmul.f32 %v89, %v1703
    %v1706 = vmul.f32 %v92, %v1703
    %v1707 = vmul.f32 %v93, %v1703
    %v1712 = vrot.slane %v1704, 1
    %v1713 = vrot.slane %v1705, 1
    %v1714 = vsel %vm424, %v1712, %v1713
    %v1715 = vrot.slane %v1706, 1
    %v1716 = vrot.slane %v1707, 1
    %v1717 = vsel %vm424, %v1715, %v1716
    %v1722 = vadd.f32 %v1602, %v1714
    %v1723 = vadd.f32 %v1603, %v1713
    %v1724 = vadd.f32 %v1604, %v1717
    %v1725 = vadd.f32 %v1605, %v1716
    %s1726 = sld [smem:[#allocation8 + $0xd]]
    %v1727 = vstv %s1726
    %v1728 = vmul.f32 %v88, %v1727
    %v1729 = vmul.f32 %v89, %v1727
    %v1730 = vmul.f32 %v92, %v1727
    %v1731 = vmul.f32 %v93, %v1727
    %v1736 = vrot.slane %v1728, 1
    %v1737 = vrot.slane %v1729, 1
    %v1738 = vsel %vm424, %v1736, %v1737
    %v1739 = vrot.slane %v1730, 1
    %v1740 = vrot.slane %v1731, 1
    %v1741 = vsel %vm424, %v1739, %v1740
    %1742 = vrot.lane.b32.xlu0 %v1738, 127
    %v1743 = vpop.permute.xlu0 %1742
    %1744 = vrot.lane.b32.xlu0 %v1737, 127
    %v1745 = vpop.permute.xlu0 %1744
    %1746 = vrot.lane.b32.xlu0 %v1741, 127
    %v1747 = vpop.permute.xlu0 %1746
    %1748 = vrot.lane.b32.xlu0 %v1740, 127
    %v1749 = vpop.permute.xlu0 %1748
    %v1754 = vadd.f32 %v1626, %v1743
    %v1755 = vadd.f32 %v1627, %v1745
    %v1756 = vadd.f32 %v1628, %v1747
    %v1757 = vadd.f32 %v1629, %v1749
    %s1758 = sld [smem:[#allocation8 + $0x1f]]
    %v1759 = vstv %s1758
    %v1760 = vmul.f32 %v88, %v1759
    %v1761 = vmul.f32 %v89, %v1759
    %v1762 = vmul.f32 %v92, %v1759
    %v1763 = vmul.f32 %v93, %v1759
    %v1768 = vrot.slane %v1760, 1
    %v1769 = vrot.slane %v1761, 1
    %v1770 = vsel %vm424, %v1768, %v1769
    %v1771 = vrot.slane %v1762, 1
    %v1772 = vrot.slane %v1763, 1
    %v1773 = vsel %vm424, %v1771, %v1772
    %1774 = vrot.lane.b32.xlu0 %v1770, 127
    %v1775 = vpop.permute.xlu0 %1774
    %1776 = vrot.lane.b32.xlu0 %v1769, 127
    %v1777 = vpop.permute.xlu0 %1776
    %1778 = vrot.lane.b32.xlu0 %v1773, 127
    %v1779 = vpop.permute.xlu0 %1778
    %1780 = vrot.lane.b32.xlu0 %v1772, 127
    %v1781 = vpop.permute.xlu0 %1780
    %v1786 = vadd.f32 %v1650, %v1775
    %v1787 = vadd.f32 %v1651, %v1777
    %v1788 = vadd.f32 %v1652, %v1779
    %v1789 = vadd.f32 %v1653, %v1781
    %s1790 = sld [smem:[#allocation8 + $0x31]]
    %v1791 = vstv %s1790
    %v1792 = vmul.f32 %v88, %v1791
    %v1793 = vmul.f32 %v89, %v1791
    %v1794 = vmul.f32 %v92, %v1791
    %v1795 = vmul.f32 %v93, %v1791
    %v1800 = vrot.slane %v1792, 1
    %v1801 = vrot.slane %v1793, 1
    %v1802 = vsel %vm424, %v1800, %v1801
    %v1803 = vrot.slane %v1794, 1
    %v1804 = vrot.slane %v1795, 1
    %v1805 = vsel %vm424, %v1803, %v1804
    %1806 = vrot.lane.b32.xlu0 %v1802, 127
    %v1807 = vpop.permute.xlu0 %1806
    %1808 = vrot.lane.b32.xlu0 %v1801, 127
    %v1809 = vpop.permute.xlu0 %1808
    %1810 = vrot.lane.b32.xlu0 %v1805, 127
    %v1811 = vpop.permute.xlu0 %1810
    %1812 = vrot.lane.b32.xlu0 %v1804, 127
    %v1813 = vpop.permute.xlu0 %1812
    %v1818 = vadd.f32 %v1674, %v1807
    %v1819 = vadd.f32 %v1675, %v1809
    %v1820 = vadd.f32 %v1676, %v1811
    %v1821 = vadd.f32 %v1677, %v1813
    %s1822 = sld [smem:[#allocation8 + $0x43]]
    %v1823 = vstv %s1822
    %v1824 = vmul.f32 %v88, %v1823
    %v1825 = vmul.f32 %v89, %v1823
    %v1826 = vmul.f32 %v92, %v1823
    %v1827 = vmul.f32 %v93, %v1823
    %v1832 = vrot.slane %v1824, 1
    %v1833 = vrot.slane %v1825, 1
    %v1834 = vsel %vm424, %v1832, %v1833
    %v1835 = vrot.slane %v1826, 1
    %v1836 = vrot.slane %v1827, 1
    %v1837 = vsel %vm424, %v1835, %v1836
    %1838 = vrot.lane.b32.xlu0 %v1834, 127
    %v1839 = vpop.permute.xlu0 %1838
    %1840 = vrot.lane.b32.xlu0 %v1833, 127
    %v1841 = vpop.permute.xlu0 %1840
    %1842 = vrot.lane.b32.xlu0 %v1837, 127
    %v1843 = vpop.permute.xlu0 %1842
    %1844 = vrot.lane.b32.xlu0 %v1836, 127
    %v1845 = vpop.permute.xlu0 %1844
    %v1850 = vadd.f32 %v1698, %v1839
    %v1851 = vadd.f32 %v1699, %v1841
    %v1852 = vadd.f32 %v1700, %v1843
    %v1853 = vadd.f32 %v1701, %v1845
    %s1854 = sld [smem:[#allocation8 + $0x55]]
    %v1855 = vstv %s1854
    %v1856 = vmul.f32 %v88, %v1855
    %v1857 = vmul.f32 %v89, %v1855
    %v1858 = vmul.f32 %v92, %v1855
    %v1859 = vmul.f32 %v93, %v1855
    %v1864 = vrot.slane %v1856, 1
    %v1865 = vrot.slane %v1857, 1
    %v1866 = vsel %vm424, %v1864, %v1865
    %v1867 = vrot.slane %v1858, 1
    %v1868 = vrot.slane %v1859, 1
    %v1869 = vsel %vm424, %v1867, %v1868
    %1870 = vrot.lane.b32.xlu0 %v1866, 127
    %v1871 = vpop.permute.xlu0 %1870
    %1872 = vrot.lane.b32.xlu0 %v1865, 127
    %v1873 = vpop.permute.xlu0 %1872
    %1874 = vrot.lane.b32.xlu0 %v1869, 127
    %v1875 = vpop.permute.xlu0 %1874
    %1876 = vrot.lane.b32.xlu0 %v1868, 127
    %v1877 = vpop.permute.xlu0 %1876
    %v1882 = vadd.f32 %v1722, %v1871
    %v1883 = vadd.f32 %v1723, %v1873
    %v1884 = vadd.f32 %v1724, %v1875
    %v1885 = vadd.f32 %v1725, %v1877
    %s1886 = sld [smem:[#allocation8 + $0xe]]
    %v1887 = vstv %s1886
    %v1888 = vmul.f32 %v88, %v1887
    %v1889 = vmul.f32 %v89, %v1887
    %v1890 = vmul.f32 %v92, %v1887
    %v1891 = vmul.f32 %v93, %v1887
    %v1896 = vrot.slane %v1888, 1
    %v1897 = vrot.slane %v1889, 1
    %v1898 = vsel %vm424, %v1896, %v1897
    %v1899 = vrot.slane %v1890, 1
    %v1900 = vrot.slane %v1891, 1
    %v1901 = vsel %vm424, %v1899, %v1900
    %1902 = vrot.lane.b32.xlu0 %v1898, 126
    %v1903 = vpop.permute.xlu0 %1902
    %1904 = vrot.lane.b32.xlu0 %v1897, 126
    %v1905 = vpop.permute.xlu0 %1904
    %1906 = vrot.lane.b32.xlu0 %v1901, 126
    %v1907 = vpop.permute.xlu0 %1906
    %1908 = vrot.lane.b32.xlu0 %v1900, 126
    %v1909 = vpop.permute.xlu0 %1908
    %v1914 = vadd.f32 %v1754, %v1903
    %v1915 = vadd.f32 %v1755, %v1905
    %v1916 = vadd.f32 %v1756, %v1907
    %v1917 = vadd.f32 %v1757, %v1909
    %s1918 = sld [smem:[#allocation8 + $0x20]]
    %v1919 = vstv %s1918
    %v1920 = vmul.f32 %v88, %v1919
    %v1921 = vmul.f32 %v89, %v1919
    %v1922 = vmul.f32 %v92, %v1919
    %v1923 = vmul.f32 %v93, %v1919
    %v1928 = vrot.slane %v1920, 1
    %v1929 = vrot.slane %v1921, 1
    %v1930 = vsel %vm424, %v1928, %v1929
    %v1931 = vrot.slane %v1922, 1
    %v1932 = vrot.slane %v1923, 1
    %v1933 = vsel %vm424, %v1931, %v1932
    %1934 = vrot.lane.b32.xlu0 %v1930, 126
    %v1935 = vpop.permute.xlu0 %1934
    %1936 = vrot.lane.b32.xlu0 %v1929, 126
    %v1937 = vpop.permute.xlu0 %1936
    %1938 = vrot.lane.b32.xlu0 %v1933, 126
    %v1939 = vpop.permute.xlu0 %1938
    %1940 = vrot.lane.b32.xlu0 %v1932, 126
    %v1941 = vpop.permute.xlu0 %1940
    %v1946 = vadd.f32 %v1786, %v1935
    %v1947 = vadd.f32 %v1787, %v1937
    %v1948 = vadd.f32 %v1788, %v1939
    %v1949 = vadd.f32 %v1789, %v1941
    %s1950 = sld [smem:[#allocation8 + $0x32]]
    %v1951 = vstv %s1950
    %v1952 = vmul.f32 %v88, %v1951
    %v1953 = vmul.f32 %v89, %v1951
    %v1954 = vmul.f32 %v92, %v1951
    %v1955 = vmul.f32 %v93, %v1951
    %v1960 = vrot.slane %v1952, 1
    %v1961 = vrot.slane %v1953, 1
    %v1962 = vsel %vm424, %v1960, %v1961
    %v1963 = vrot.slane %v1954, 1
    %v1964 = vrot.slane %v1955, 1
    %v1965 = vsel %vm424, %v1963, %v1964
    %1966 = vrot.lane.b32.xlu0 %v1962, 126
    %v1967 = vpop.permute.xlu0 %1966
    %1968 = vrot.lane.b32.xlu0 %v1961, 126
    %v1969 = vpop.permute.xlu0 %1968
    %1970 = vrot.lane.b32.xlu0 %v1965, 126
    %v1971 = vpop.permute.xlu0 %1970
    %1972 = vrot.lane.b32.xlu0 %v1964, 126
    %v1973 = vpop.permute.xlu0 %1972
    %v1978 = vadd.f32 %v1818, %v1967
    %v1979 = vadd.f32 %v1819, %v1969
    %v1980 = vadd.f32 %v1820, %v1971
    %v1981 = vadd.f32 %v1821, %v1973
    %s1982 = sld [smem:[#allocation8 + $0x44]]
    %v1983 = vstv %s1982
    %v1984 = vmul.f32 %v88, %v1983
    %v1985 = vmul.f32 %v89, %v1983
    %v1986 = vmul.f32 %v92, %v1983
    %v1987 = vmul.f32 %v93, %v1983
    %v1992 = vrot.slane %v1984, 1
    %v1993 = vrot.slane %v1985, 1
    %v1994 = vsel %vm424, %v1992, %v1993
    %v1995 = vrot.slane %v1986, 1
    %v1996 = vrot.slane %v1987, 1
    %v1997 = vsel %vm424, %v1995, %v1996
    %1998 = vrot.lane.b32.xlu0 %v1994, 126
    %v1999 = vpop.permute.xlu0 %1998
    %2000 = vrot.lane.b32.xlu0 %v1993, 126
    %v2001 = vpop.permute.xlu0 %2000
    %2002 = vrot.lane.b32.xlu0 %v1997, 126
    %v2003 = vpop.permute.xlu0 %2002
    %2004 = vrot.lane.b32.xlu0 %v1996, 126
    %v2005 = vpop.permute.xlu0 %2004
    %v2010 = vadd.f32 %v1850, %v1999
    %v2011 = vadd.f32 %v1851, %v2001
    %v2012 = vadd.f32 %v1852, %v2003
    %v2013 = vadd.f32 %v1853, %v2005
    %s2014 = sld [smem:[#allocation8 + $0x56]]
    %v2015 = vstv %s2014
    %v2016 = vmul.f32 %v88, %v2015
    %v2017 = vmul.f32 %v89, %v2015
    %v2018 = vmul.f32 %v92, %v2015
    %v2019 = vmul.f32 %v93, %v2015
    %v2024 = vrot.slane %v2016, 1
    %v2025 = vrot.slane %v2017, 1
    %v2026 = vsel %vm424, %v2024, %v2025
    %v2027 = vrot.slane %v2018, 1
    %v2028 = vrot.slane %v2019, 1
    %v2029 = vsel %vm424, %v2027, %v2028
    %2030 = vrot.lane.b32.xlu0 %v2026, 126
    %v2031 = vpop.permute.xlu0 %2030
    %2032 = vrot.lane.b32.xlu0 %v2025, 126
    %v2033 = vpop.permute.xlu0 %2032
    %2034 = vrot.lane.b32.xlu0 %v2029, 126
    %v2035 = vpop.permute.xlu0 %2034
    %2036 = vrot.lane.b32.xlu0 %v2028, 126
    %v2037 = vpop.permute.xlu0 %2036
    %v2042 = vadd.f32 %v1882, %v2031
    %v2043 = vadd.f32 %v1883, %v2033
    %v2044 = vadd.f32 %v1884, %v2035
    %v2045 = vadd.f32 %v1885, %v2037
    %s2046 = sld [smem:[#allocation8 + $0xf]]
    %v2047 = vstv %s2046
    %v2048 = vmul.f32 %v88, %v2047
    %v2049 = vmul.f32 %v89, %v2047
    %v2050 = vmul.f32 %v92, %v2047
    %v2051 = vmul.f32 %v93, %v2047
    %v2056 = vrot.slane %v2048, 2
    %v2057 = vrot.slane %v2049, 2
    %v2058 = vsel %vm865, %v2056, %v2057
    %v2059 = vrot.slane %v2050, 2
    %v2060 = vrot.slane %v2051, 2
    %v2061 = vsel %vm865, %v2059, %v2060
    %v2066 = vadd.f32 %v1914, %v2058
    %v2067 = vadd.f32 %v1915, %v2057
    %v2068 = vadd.f32 %v1916, %v2061
    %v2069 = vadd.f32 %v1917, %v2060
    %s2070 = sld [smem:[#allocation8 + $0x21]]
    %v2071 = vstv %s2070
    %v2072 = vmul.f32 %v88, %v2071
    %v2073 = vmul.f32 %v89, %v2071
    %v2074 = vmul.f32 %v92, %v2071
    %v2075 = vmul.f32 %v93, %v2071
    %v2080 = vrot.slane %v2072, 2
    %v2081 = vrot.slane %v2073, 2
    %v2082 = vsel %vm865, %v2080, %v2081
    %v2083 = vrot.slane %v2074, 2
    %v2084 = vrot.slane %v2075, 2
    %v2085 = vsel %vm865, %v2083, %v2084
    %v2090 = vadd.f32 %v1946, %v2082
    %v2091 = vadd.f32 %v1947, %v2081
    %v2092 = vadd.f32 %v1948, %v2085
    %v2093 = vadd.f32 %v1949, %v2084
    %s2094 = sld [smem:[#allocation8 + $0x33]]
    %v2095 = vstv %s2094
    %v2096 = vmul.f32 %v88, %v2095
    %v2097 = vmul.f32 %v89, %v2095
    %v2098 = vmul.f32 %v92, %v2095
    %v2099 = vmul.f32 %v93, %v2095
    %v2104 = vrot.slane %v2096, 2
    %v2105 = vrot.slane %v2097, 2
    %v2106 = vsel %vm865, %v2104, %v2105
    %v2107 = vrot.slane %v2098, 2
    %v2108 = vrot.slane %v2099, 2
    %v2109 = vsel %vm865, %v2107, %v2108
    %v2114 = vadd.f32 %v1978, %v2106
    %v2115 = vadd.f32 %v1979, %v2105
    %v2116 = vadd.f32 %v1980, %v2109
    %v2117 = vadd.f32 %v1981, %v2108
    %s2118 = sld [smem:[#allocation8 + $0x45]]
    %v2119 = vstv %s2118
    %v2120 = vmul.f32 %v88, %v2119
    %v2121 = vmul.f32 %v89, %v2119
    %v2122 = vmul.f32 %v92, %v2119
    %v2123 = vmul.f32 %v93, %v2119
    %v2128 = vrot.slane %v2120, 2
    %v2129 = vrot.slane %v2121, 2
    %v2130 = vsel %vm865, %v2128, %v2129
    %v2131 = vrot.slane %v2122, 2
    %v2132 = vrot.slane %v2123, 2
    %v2133 = vsel %vm865, %v2131, %v2132
    %v2138 = vadd.f32 %v2010, %v2130
    %v2139 = vadd.f32 %v2011, %v2129
    %v2140 = vadd.f32 %v2012, %v2133
    %v2141 = vadd.f32 %v2013, %v2132
    %s2142 = sld [smem:[#allocation8 + $0x57]]
    %v2143 = vstv %s2142
    %v2144 = vmul.f32 %v88, %v2143
    %v2145 = vmul.f32 %v89, %v2143
    %v2146 = vmul.f32 %v92, %v2143
    %v2147 = vmul.f32 %v93, %v2143
    %v2152 = vrot.slane %v2144, 2
    %v2153 = vrot.slane %v2145, 2
    %v2154 = vsel %vm865, %v2152, %v2153
    %v2155 = vrot.slane %v2146, 2
    %v2156 = vrot.slane %v2147, 2
    %v2157 = vsel %vm865, %v2155, %v2156
    %v2162 = vadd.f32 %v2042, %v2154
    %v2163 = vadd.f32 %v2043, %v2153
    %v2164 = vadd.f32 %v2044, %v2157
    %v2165 = vadd.f32 %v2045, %v2156
    %s2166 = sld [smem:[#allocation8 + $0x10]]
    %v2167 = vstv %s2166
    %v2168 = vmul.f32 %v88, %v2167
    %v2169 = vmul.f32 %v89, %v2167
    %v2170 = vmul.f32 %v92, %v2167
    %v2171 = vmul.f32 %v93, %v2167
    %v2176 = vrot.slane %v2168, 2
    %v2177 = vrot.slane %v2169, 2
    %v2178 = vsel %vm865, %v2176, %v2177
    %v2179 = vrot.slane %v2170, 2
    %v2180 = vrot.slane %v2171, 2
    %v2181 = vsel %vm865, %v2179, %v2180
    %2182 = vrot.lane.b32.xlu0 %v2178, 127
    %v2183 = vpop.permute.xlu0 %2182
    %2184 = vrot.lane.b32.xlu0 %v2177, 127
    %v2185 = vpop.permute.xlu0 %2184
    %2186 = vrot.lane.b32.xlu0 %v2181, 127
    %v2187 = vpop.permute.xlu0 %2186
    %2188 = vrot.lane.b32.xlu0 %v2180, 127
    %v2189 = vpop.permute.xlu0 %2188
    %v2194 = vadd.f32 %v2066, %v2183
    %v2195 = vadd.f32 %v2067, %v2185
    %v2196 = vadd.f32 %v2068, %v2187
    %v2197 = vadd.f32 %v2069, %v2189
    %s2198 = sld [smem:[#allocation8 + $0x22]]
    %v2199 = vstv %s2198
    %v2200 = vmul.f32 %v88, %v2199
    %v2201 = vmul.f32 %v89, %v2199
    %v2202 = vmul.f32 %v92, %v2199
    %v2203 = vmul.f32 %v93, %v2199
    %v2208 = vrot.slane %v2200, 2
    %v2209 = vrot.slane %v2201, 2
    %v2210 = vsel %vm865, %v2208, %v2209
    %v2211 = vrot.slane %v2202, 2
    %v2212 = vrot.slane %v2203, 2
    %v2213 = vsel %vm865, %v2211, %v2212
    %2214 = vrot.lane.b32.xlu0 %v2210, 127
    %v2215 = vpop.permute.xlu0 %2214
    %2216 = vrot.lane.b32.xlu0 %v2209, 127
    %v2217 = vpop.permute.xlu0 %2216
    %2218 = vrot.lane.b32.xlu0 %v2213, 127
    %v2219 = vpop.permute.xlu0 %2218
    %2220 = vrot.lane.b32.xlu0 %v2212, 127
    %v2221 = vpop.permute.xlu0 %2220
    %v2226 = vadd.f32 %v2090, %v2215
    %v2227 = vadd.f32 %v2091, %v2217
    %v2228 = vadd.f32 %v2092, %v2219
    %v2229 = vadd.f32 %v2093, %v2221
    %s2230 = sld [smem:[#allocation8 + $0x34]]
    %v2231 = vstv %s2230
    %v2232 = vmul.f32 %v88, %v2231
    %v2233 = vmul.f32 %v89, %v2231
    %v2234 = vmul.f32 %v92, %v2231
    %v2235 = vmul.f32 %v93, %v2231
    %v2240 = vrot.slane %v2232, 2
    %v2241 = vrot.slane %v2233, 2
    %v2242 = vsel %vm865, %v2240, %v2241
    %v2243 = vrot.slane %v2234, 2
    %v2244 = vrot.slane %v2235, 2
    %v2245 = vsel %vm865, %v2243, %v2244
    %2246 = vrot.lane.b32.xlu0 %v2242, 127
    %v2247 = vpop.permute.xlu0 %2246
    %2248 = vrot.lane.b32.xlu0 %v2241, 127
    %v2249 = vpop.permute.xlu0 %2248
    %2250 = vrot.lane.b32.xlu0 %v2245, 127
    %v2251 = vpop.permute.xlu0 %2250
    %2252 = vrot.lane.b32.xlu0 %v2244, 127
    %v2253 = vpop.permute.xlu0 %2252
    %v2258 = vadd.f32 %v2114, %v2247
    %v2259 = vadd.f32 %v2115, %v2249
    %v2260 = vadd.f32 %v2116, %v2251
    %v2261 = vadd.f32 %v2117, %v2253
    %s2262 = sld [smem:[#allocation8 + $0x46]]
    %v2263 = vstv %s2262
    %v2264 = vmul.f32 %v88, %v2263
    %v2265 = vmul.f32 %v89, %v2263
    %v2266 = vmul.f32 %v92, %v2263
    %v2267 = vmul.f32 %v93, %v2263
    %v2272 = vrot.slane %v2264, 2
    %v2273 = vrot.slane %v2265, 2
    %v2274 = vsel %vm865, %v2272, %v2273
    %v2275 = vrot.slane %v2266, 2
    %v2276 = vrot.slane %v2267, 2
    %v2277 = vsel %vm865, %v2275, %v2276
    %2278 = vrot.lane.b32.xlu0 %v2274, 127
    %v2279 = vpop.permute.xlu0 %2278
    %2280 = vrot.lane.b32.xlu0 %v2273, 127
    %v2281 = vpop.permute.xlu0 %2280
    %2282 = vrot.lane.b32.xlu0 %v2277, 127
    %v2283 = vpop.permute.xlu0 %2282
    %2284 = vrot.lane.b32.xlu0 %v2276, 127
    %v2285 = vpop.permute.xlu0 %2284
    %v2290 = vadd.f32 %v2138, %v2279
    %v2291 = vadd.f32 %v2139, %v2281
    %v2292 = vadd.f32 %v2140, %v2283
    %v2293 = vadd.f32 %v2141, %v2285
    %s2294 = sld [smem:[#allocation8 + $0x58]]
    %v2295 = vstv %s2294
    %v2296 = vmul.f32 %v88, %v2295
    %v2297 = vmul.f32 %v89, %v2295
    %v2298 = vmul.f32 %v92, %v2295
    %v2299 = vmul.f32 %v93, %v2295
    %v2304 = vrot.slane %v2296, 2
    %v2305 = vrot.slane %v2297, 2
    %v2306 = vsel %vm865, %v2304, %v2305
    %v2307 = vrot.slane %v2298, 2
    %v2308 = vrot.slane %v2299, 2
    %v2309 = vsel %vm865, %v2307, %v2308
    %2310 = vrot.lane.b32.xlu0 %v2306, 127
    %v2311 = vpop.permute.xlu0 %2310
    %2312 = vrot.lane.b32.xlu0 %v2305, 127
    %v2313 = vpop.permute.xlu0 %2312
    %2314 = vrot.lane.b32.xlu0 %v2309, 127
    %v2315 = vpop.permute.xlu0 %2314
    %2316 = vrot.lane.b32.xlu0 %v2308, 127
    %v2317 = vpop.permute.xlu0 %2316
    %v2322 = vadd.f32 %v2162, %v2311
    %v2323 = vadd.f32 %v2163, %v2313
    %v2324 = vadd.f32 %v2164, %v2315
    %v2325 = vadd.f32 %v2165, %v2317
    %s2326 = sld [smem:[#allocation8 + $0x11]]
    %v2327 = vstv %s2326
    %v2328 = vmul.f32 %v88, %v2327
    %v2329 = vmul.f32 %v89, %v2327
    %v2330 = vmul.f32 %v92, %v2327
    %v2331 = vmul.f32 %v93, %v2327
    %v2336 = vrot.slane %v2328, 2
    %v2337 = vrot.slane %v2329, 2
    %v2338 = vsel %vm865, %v2336, %v2337
    %v2339 = vrot.slane %v2330, 2
    %v2340 = vrot.slane %v2331, 2
    %v2341 = vsel %vm865, %v2339, %v2340
    %2342 = vrot.lane.b32.xlu0 %v2338, 126
    %v2343 = vpop.permute.xlu0 %2342
    %2344 = vrot.lane.b32.xlu0 %v2337, 126
    %v2345 = vpop.permute.xlu0 %2344
    %2346 = vrot.lane.b32.xlu0 %v2341, 126
    %v2347 = vpop.permute.xlu0 %2346
    %2348 = vrot.lane.b32.xlu0 %v2340, 126
    %v2349 = vpop.permute.xlu0 %2348
    %v2354 = vadd.f32 %v2194, %v2343
    %v2355 = vadd.f32 %v2195, %v2345
    %v2356 = vadd.f32 %v2196, %v2347
    %v2357 = vadd.f32 %v2197, %v2349
    %s2358 = sld [smem:[#allocation8 + $0x23]]
    %v2359 = vstv %s2358
    %v2360 = vmul.f32 %v88, %v2359
    %v2361 = vmul.f32 %v89, %v2359
    %v2362 = vmul.f32 %v92, %v2359
    %v2363 = vmul.f32 %v93, %v2359
    %v2368 = vrot.slane %v2360, 2
    %v2369 = vrot.slane %v2361, 2
    %v2370 = vsel %vm865, %v2368, %v2369
    %v2371 = vrot.slane %v2362, 2
    %v2372 = vrot.slane %v2363, 2
    %v2373 = vsel %vm865, %v2371, %v2372
    %2374 = vrot.lane.b32.xlu0 %v2370, 126
    %v2375 = vpop.permute.xlu0 %2374
    %2376 = vrot.lane.b32.xlu0 %v2369, 126
    %v2377 = vpop.permute.xlu0 %2376
    %2378 = vrot.lane.b32.xlu0 %v2373, 126
    %v2379 = vpop.permute.xlu0 %2378
    %2380 = vrot.lane.b32.xlu0 %v2372, 126
    %v2381 = vpop.permute.xlu0 %2380
    %v2386 = vadd.f32 %v2226, %v2375
    %v2387 = vadd.f32 %v2227, %v2377
    %v2388 = vadd.f32 %v2228, %v2379
    %v2389 = vadd.f32 %v2229, %v2381
    %s2390 = sld [smem:[#allocation8 + $0x35]]
    %v2391 = vstv %s2390
    %v2392 = vmul.f32 %v88, %v2391
    %v2393 = vmul.f32 %v89, %v2391
    %v2394 = vmul.f32 %v92, %v2391
    %v2395 = vmul.f32 %v93, %v2391
    %v2400 = vrot.slane %v2392, 2
    %v2401 = vrot.slane %v2393, 2
    %v2402 = vsel %vm865, %v2400, %v2401
    %v2403 = vrot.slane %v2394, 2
    %v2404 = vrot.slane %v2395, 2
    %v2405 = vsel %vm865, %v2403, %v2404
    %2406 = vrot.lane.b32.xlu0 %v2402, 126
    %v2407 = vpop.permute.xlu0 %2406
    %2408 = vrot.lane.b32.xlu0 %v2401, 126
    %v2409 = vpop.permute.xlu0 %2408
    %2410 = vrot.lane.b32.xlu0 %v2405, 126
    %v2411 = vpop.permute.xlu0 %2410
    %2412 = vrot.lane.b32.xlu0 %v2404, 126
    %v2413 = vpop.permute.xlu0 %2412
    %v2418 = vadd.f32 %v2258, %v2407
    %v2419 = vadd.f32 %v2259, %v2409
    %v2420 = vadd.f32 %v2260, %v2411
    %v2421 = vadd.f32 %v2261, %v2413
    %s2422 = sld [smem:[#allocation8 + $0x47]]
    %v2423 = vstv %s2422
    %v2424 = vmul.f32 %v88, %v2423
    %v2425 = vmul.f32 %v89, %v2423
    %v2426 = vmul.f32 %v92, %v2423
    %v2427 = vmul.f32 %v93, %v2423
    %v2432 = vrot.slane %v2424, 2
    %v2433 = vrot.slane %v2425, 2
    %v2434 = vsel %vm865, %v2432, %v2433
    %v2435 = vrot.slane %v2426, 2
    %v2436 = vrot.slane %v2427, 2
    %v2437 = vsel %vm865, %v2435, %v2436
    %2438 = vrot.lane.b32.xlu0 %v2434, 126
    %v2439 = vpop.permute.xlu0 %2438
    %2440 = vrot.lane.b32.xlu0 %v2433, 126
    %v2441 = vpop.permute.xlu0 %2440
    %2442 = vrot.lane.b32.xlu0 %v2437, 126
    %v2443 = vpop.permute.xlu0 %2442
    %2444 = vrot.lane.b32.xlu0 %v2436, 126
    %v2445 = vpop.permute.xlu0 %2444
    %v2450 = vadd.f32 %v2290, %v2439
    %v2451 = vadd.f32 %v2291, %v2441
    %v2452 = vadd.f32 %v2292, %v2443
    %v2453 = vadd.f32 %v2293, %v2445
    %s2454 = sld [smem:[#allocation8 + $0x59]]
    %v2455 = vstv %s2454
    %v2456 = vmul.f32 %v88, %v2455
    %v2457 = vmul.f32 %v89, %v2455
    %v2458 = vmul.f32 %v92, %v2455
    %v2459 = vmul.f32 %v93, %v2455
    %v2464 = vrot.slane %v2456, 2
    %v2465 = vrot.slane %v2457, 2
    %v2466 = vsel %vm865, %v2464, %v2465
    %v2467 = vrot.slane %v2458, 2
    %v2468 = vrot.slane %v2459, 2
    %v2469 = vsel %vm865, %v2467, %v2468
    %2470 = vrot.lane.b32.xlu0 %v2466, 126
    %v2471 = vpop.permute.xlu0 %2470
    %2472 = vrot.lane.b32.xlu0 %v2465, 126
    %v2473 = vpop.permute.xlu0 %2472
    %2474 = vrot.lane.b32.xlu0 %v2469, 126
    %v2475 = vpop.permute.xlu0 %2474
    %2476 = vrot.lane.b32.xlu0 %v2468, 126
    %v2477 = vpop.permute.xlu0 %2476
    %v2482 = vadd.f32 %v2322, %v2471
    %v2483 = vadd.f32 %v2323, %v2473
    %v2484 = vadd.f32 %v2324, %v2475
    %v2485 = vadd.f32 %v2325, %v2477
    %vm2486 = vcmask 146432
    %2487 = vst.msk [vmem:[#allocation2] sm:$0xff] %vm2486, 0.0
    %2488 = vst.msk [vmem:[#allocation2 + $0x8] sm:$0xff] %vm2486, 0.0
    %vm2489 = vcmask 140288
    %2490 = vst.msk [vmem:[#allocation2 + $0x10] sm:$0x3] %vm2489, 0.0
    %2491 = vst.msk [vmem:[#allocation2 + $0x18] sm:$0xff] %vm2486, 0.0
    %2492 = vst.msk [vmem:[#allocation2 + $0x20] sm:$0xff] %vm2486, 0.0
    %2493 = vst.msk [vmem:[#allocation2 + $0x28] sm:$0x3] %vm2489, 0.0
    %2494 = vst.msk [vmem:[#allocation2 + $0x30] sm:$0xff] %vm2486, 0.0
    %2495 = vst.msk [vmem:[#allocation2 + $0x38] sm:$0xff] %vm2486, 0.0
    %2496 = vst.msk [vmem:[#allocation2 + $0x40] sm:$0x3] %vm2489, 0.0
    %2497 = vst.msk [vmem:[#allocation2 + $0x48] sm:$0xff] %vm2486, 0.0
    %2498 = vst.msk [vmem:[#allocation2 + $0x50] sm:$0xff] %vm2486, 0.0
    %2499 = vst.msk [vmem:[#allocation2 + $0x58] sm:$0x3] %vm2489, 0.0
    %2500 = vst.msk [vmem:[#allocation2 + $0x60] sm:$0xff] %vm2486, 0.0
    %2501 = vst.msk [vmem:[#allocation2 + $0x68] sm:$0xff] %vm2486, 0.0
    %2502 = vst.msk [vmem:[#allocation2 + $0x70] sm:$0x3] %vm2489, 0.0
    %2503 = vst.msk [vmem:[#allocation2 + $0x78] sm:$0xff] %vm2486, 0.0
    %2504 = vst.msk [vmem:[#allocation2 + $0x80] sm:$0xff] %vm2486, 0.0
    %2505 = vst.msk [vmem:[#allocation2 + $0x88] sm:$0x3] %vm2489, 0.0
    %2506 = vst.msk [vmem:[#allocation2 + $0x90] sm:$0xff] %vm2486, 0.0
    %2507 = vst.msk [vmem:[#allocation2 + $0x98] sm:$0xff] %vm2486, 0.0
    %2508 = vst.msk [vmem:[#allocation2 + $0xa0] sm:$0x3] %vm2489, 0.0
    %2509 = vst.msk [vmem:[#allocation2 + $0xa8] sm:$0xff] %vm2486, 0.0
    %2510 = vst.msk [vmem:[#allocation2 + $0xb0] sm:$0xff] %vm2486, 0.0
    %2511 = vst.msk [vmem:[#allocation2 + $0xb8] sm:$0x3] %vm2489, 0.0
    %2512 = vst.msk [vmem:[#allocation2 + $0xc0] sm:$0xff] %vm2486, 0.0
    %2513 = vst.msk [vmem:[#allocation2 + $0xc8] sm:$0xff] %vm2486, 0.0
    %2514 = vst.msk [vmem:[#allocation2 + $0xd0] sm:$0x3] %vm2489, 0.0
    %2515 = vst.msk [vmem:[#allocation2 + $0xd8] sm:$0xff] %vm2486, 0.0
    %2516 = vst.msk [vmem:[#allocation2 + $0xe0] sm:$0xff] %vm2486, 0.0
    %2517 = vst.msk [vmem:[#allocation2 + $0xe8] sm:$0x3] %vm2489, 0.0
    %2522 = vrot.lane.b32.xlu0 %v2354, 2
    %v2523 = vpop.permute.xlu0 %2522
    %2524 = vrot.lane.b32.xlu0 %v2355, 2
    %v2525 = vpop.permute.xlu0 %2524
    %2526 = vrot.lane.b32.xlu0 %v2356, 2
    %v2527 = vpop.permute.xlu0 %2526
    %2528 = vrot.lane.b32.xlu0 %v2357, 2
    %v2529 = vpop.permute.xlu0 %2528
    %vm2534 = vcmask 130064
    %2535 = vst.msk [vmem:[#allocation2 + $0x2] sm:$0xff] %vm2534, %v2523
    %vm2536 = vcmask 128016
    %2537 = vst.msk [vmem:[#allocation2 + $0xa] sm:$0x3f] %vm2536, %v2525
    %2538 = vst.msk [vmem:[#allocation2 + $0x1a] sm:$0xff] %vm2534, %v2527
    %2539 = vst.msk [vmem:[#allocation2 + $0x22] sm:$0x3f] %vm2536, %v2529
    %2544 = vrot.lane.b32.xlu0 %v2386, 2
    %v2545 = vpop.permute.xlu0 %2544
    %2546 = vrot.lane.b32.xlu0 %v2387, 2
    %v2547 = vpop.permute.xlu0 %2546
    %2548 = vrot.lane.b32.xlu0 %v2388, 2
    %v2549 = vpop.permute.xlu0 %2548
    %2550 = vrot.lane.b32.xlu0 %v2389, 2
    %v2551 = vpop.permute.xlu0 %2550
    %s2556 = scalar_lea.vmem [#allocation2], 48
    %2557 = vst.msk [vmem:[%s2556 + $0x2] sm:$0xff] %vm2534, %v2545
    %2558 = vst.msk [vmem:[%s2556 + $0xa] sm:$0x3f] %vm2536, %v2547
    %2559 = vst.msk [vmem:[%s2556 + $0x1a] sm:$0xff] %vm2534, %v2549
    %2560 = vst.msk [vmem:[%s2556 + $0x22] sm:$0x3f] %vm2536, %v2551
    %2565 = vrot.lane.b32.xlu0 %v2418, 2
    %v2566 = vpop.permute.xlu0 %2565
    %2567 = vrot.lane.b32.xlu0 %v2419, 2
    %v2568 = vpop.permute.xlu0 %2567
    %2569 = vrot.lane.b32.xlu0 %v2420, 2
    %v2570 = vpop.permute.xlu0 %2569
    %2571 = vrot.lane.b32.xlu0 %v2421, 2
    %v2572 = vpop.permute.xlu0 %2571
    %s2577 = scalar_lea.vmem [#allocation2], 96
    %2578 = vst.msk [vmem:[%s2577 + $0x2] sm:$0xff] %vm2534, %v2566
    %2579 = vst.msk [vmem:[%s2577 + $0xa] sm:$0x3f] %vm2536, %v2568
    %2580 = vst.msk [vmem:[%s2577 + $0x1a] sm:$0xff] %vm2534, %v2570
    %2581 = vst.msk [vmem:[%s2577 + $0x22] sm:$0x3f] %vm2536, %v2572
    %2586 = vrot.lane.b32.xlu0 %v2450, 2
    %v2587 = vpop.permute.xlu0 %2586
    %2588 = vrot.lane.b32.xlu0 %v2451, 2
    %v2589 = vpop.permute.xlu0 %2588
    %2590 = vrot.lane.b32.xlu0 %v2452, 2
    %v2591 = vpop.permute.xlu0 %2590
    %2592 = vrot.lane.b32.xlu0 %v2453, 2
    %v2593 = vpop.permute.xlu0 %2592
    %s2598 = scalar_lea.vmem [#allocation2], 144
    %2599 = vst.msk [vmem:[%s2598 + $0x2] sm:$0xff] %vm2534, %v2587
    %2600 = vst.msk [vmem:[%s2598 + $0xa] sm:$0x3f] %vm2536, %v2589
    %2601 = vst.msk [vmem:[%s2598 + $0x1a] sm:$0xff] %vm2534, %v2591
    %2602 = vst.msk [vmem:[%s2598 + $0x22] sm:$0x3f] %vm2536, %v2593
    %2607 = vrot.lane.b32.xlu0 %v2482, 2
    %v2608 = vpop.permute.xlu0 %2607
    %2609 = vrot.lane.b32.xlu0 %v2483, 2
    %v2610 = vpop.permute.xlu0 %2609
    %2611 = vrot.lane.b32.xlu0 %v2484, 2
    %v2612 = vpop.permute.xlu0 %2611
    %2613 = vrot.lane.b32.xlu0 %v2485, 2
    %v2614 = vpop.permute.xlu0 %2613
    %s2619 = scalar_lea.vmem [#allocation2], 192
    %2620 = vst.msk [vmem:[%s2619 + $0x2] sm:$0xff] %vm2534, %v2608
    %2621 = vst.msk [vmem:[%s2619 + $0xa] sm:$0x3f] %vm2536, %v2610
    %2622 = vst.msk [vmem:[%s2619 + $0x1a] sm:$0xff] %vm2534, %v2612
    %2623 = vst.msk [vmem:[%s2619 + $0x22] sm:$0x3f] %vm2536, %v2614
    %v2624 = vld [vmem:[#allocation2] sm:$0xff]
    %v2625 = vld [vmem:[#allocation2 + $0x8] sm:$0xff]
    %v2626 = vld [vmem:[#allocation2 + $0x10] sm:$0x3]
    %v2627 = vld [vmem:[#allocation2 + $0x18] sm:$0xff]
    %v2628 = vld [vmem:[#allocation2 + $0x20] sm:$0xff]
    %v2629 = vld [vmem:[#allocation2 + $0x28] sm:$0x3]
    %v2630 = vld [vmem:[#allocation2 + $0x30] sm:$0xff]
    %v2631 = vld [vmem:[#allocation2 + $0x38] sm:$0xff]
    %v2632 = vld [vmem:[#allocation2 + $0x40] sm:$0x3]
    %v2633 = vld [vmem:[#allocation2 + $0x48] sm:$0xff]
    %v2634 = vld [vmem:[#allocation2 + $0x50] sm:$0xff]
    %v2635 = vld [vmem:[#allocation2 + $0x58] sm:$0x3]
    %v2636 = vld [vmem:[#allocation2 + $0x60] sm:$0xff]
    %v2637 = vld [vmem:[#allocation2 + $0x68] sm:$0xff]
    %v2638 = vld [vmem:[#allocation2 + $0x70] sm:$0x3]
    %v2639 = vld [vmem:[#allocation2 + $0x78] sm:$0xff]
    %v2640 = vld [vmem:[#allocation2 + $0x80] sm:$0xff]
    %v2641 = vld [vmem:[#allocation2 + $0x88] sm:$0x3]
    %v2642 = vld [vmem:[#allocation2 + $0x90] sm:$0xff]
    %v2643 = vld [vmem:[#allocation2 + $0x98] sm:$0xff]
    %v2644 = vld [vmem:[#allocation2 + $0xa0] sm:$0x3]
    %v2645 = vld [vmem:[#allocation2 + $0xa8] sm:$0xff]
    %v2646 = vld [vmem:[#allocation2 + $0xb0] sm:$0xff]
    %v2647 = vld [vmem:[#allocation2 + $0xb8] sm:$0x3]
    %v2648 = vld [vmem:[#allocation2 + $0xc0] sm:$0xff]
    %v2649 = vld [vmem:[#allocation2 + $0xc8] sm:$0xff]
    %v2650 = vld [vmem:[#allocation2 + $0xd0] sm:$0x3]
    %v2651 = vld [vmem:[#allocation2 + $0xd8] sm:$0xff]
    %v2652 = vld [vmem:[#allocation2 + $0xe0] sm:$0xff]
    %v2653 = vld [vmem:[#allocation2 + $0xe8] sm:$0x3]
    %s2654 = sld [smem:[#allocation12]]
    %v2655 = vstv %s2654
    %s2656 = sld [smem:[#allocation12 + $0x1]]
    %v2657 = vstv %s2656
    %s2658 = sld [smem:[#allocation12 + $0x2]]
    %v2659 = vstv %s2658
    %s2660 = sld [smem:[#allocation12 + $0x3]]
    %v2661 = vstv %s2660
    %s2662 = sld [smem:[#allocation11]]
    %v2663 = vstv %s2662
    %v2664 = vmul.f32 %v2624, %v2663
    %v2665 = vmul.f32 %v2625, %v2663
    %v2666 = vmul.f32 %v2627, %v2663
    %v2667 = vmul.f32 %v2628, %v2663
    %v2668 = vadd.f32 %v2655, %v2664
    %v2669 = vadd.f32 %v2655, %v2665
    %v2670 = vadd.f32 %v2655, %v2666
    %v2671 = vadd.f32 %v2655, %v2667
    %s2672 = sld [smem:[#allocation11 + $0x2d]]
    %v2673 = vstv %s2672
    %v2674 = vmul.f32 %v2624, %v2673
    %v2675 = vmul.f32 %v2625, %v2673
    %v2676 = vmul.f32 %v2627, %v2673
    %v2677 = vmul.f32 %v2628, %v2673
    %v2678 = vadd.f32 %v2657, %v2674
    %v2679 = vadd.f32 %v2657, %v2675
    %v2680 = vadd.f32 %v2657, %v2676
    %v2681 = vadd.f32 %v2657, %v2677
    %s2682 = sld [smem:[#allocation11 + $0x5a]]
    %v2683 = vstv %s2682
    %v2684 = vmul.f32 %v2624, %v2683
    %v2685 = vmul.f32 %v2625, %v2683
    %v2686 = vmul.f32 %v2627, %v2683
    %v2687 = vmul.f32 %v2628, %v2683
    %v2688 = vadd.f32 %v2659, %v2684
    %v2689 = vadd.f32 %v2659, %v2685
    %v2690 = vadd.f32 %v2659, %v2686
    %v2691 = vadd.f32 %v2659, %v2687
    %s2692 = sld [smem:[#allocation11 + $0x87]]
    %v2693 = vstv %s2692
    %v2694 = vmul.f32 %v2624, %v2693
    %v2695 = vmul.f32 %v2625, %v2693
    %v2696 = vmul.f32 %v2627, %v2693
    %v2697 = vmul.f32 %v2628, %v2693
    %v2698 = vadd.f32 %v2661, %v2694
    %v2699 = vadd.f32 %v2661, %v2695
    %v2700 = vadd.f32 %v2661, %v2696
    %v2701 = vadd.f32 %v2661, %v2697
    %s2702 = sld [smem:[#allocation11 + $0x1]]
    %v2703 = vstv %s2702
    %v2704 = vmul.f32 %v2624, %v2703
    %v2705 = vmul.f32 %v2625, %v2703
    %v2706 = vmul.f32 %v2627, %v2703
    %v2707 = vmul.f32 %v2628, %v2703
    %2712 = vrot.lane.b32.xlu0 %v2704, 127
    %v2713 = vpop.permute.xlu0 %2712
    %2714 = vrot.lane.b32.xlu0 %v2705, 127
    %v2715 = vpop.permute.xlu0 %2714
    %2716 = vrot.lane.b32.xlu0 %v2706, 127
    %v2717 = vpop.permute.xlu0 %2716
    %2718 = vrot.lane.b32.xlu0 %v2707, 127
    %v2719 = vpop.permute.xlu0 %2718
    %v2724 = vadd.f32 %v2668, %v2713
    %v2725 = vadd.f32 %v2669, %v2715
    %v2726 = vadd.f32 %v2670, %v2717
    %v2727 = vadd.f32 %v2671, %v2719
    %s2728 = sld [smem:[#allocation11 + $0x2e]]
    %v2729 = vstv %s2728
    %v2730 = vmul.f32 %v2624, %v2729
    %v2731 = vmul.f32 %v2625, %v2729
    %v2732 = vmul.f32 %v2627, %v2729
    %v2733 = vmul.f32 %v2628, %v2729
    %2738 = vrot.lane.b32.xlu0 %v2730, 127
    %v2739 = vpop.permute.xlu0 %2738
    %2740 = vrot.lane.b32.xlu0 %v2731, 127
    %v2741 = vpop.permute.xlu0 %2740
    %2742 = vrot.lane.b32.xlu0 %v2732, 127
    %v2743 = vpop.permute.xlu0 %2742
    %2744 = vrot.lane.b32.xlu0 %v2733, 127
    %v2745 = vpop.permute.xlu0 %2744
    %v2750 = vadd.f32 %v2678, %v2739
    %v2751 = vadd.f32 %v2679, %v2741
    %v2752 = vadd.f32 %v2680, %v2743
    %v2753 = vadd.f32 %v2681, %v2745
    %s2754 = sld [smem:[#allocation11 + $0x5b]]
    %v2755 = vstv %s2754
    %v2756 = vmul.f32 %v2624, %v2755
    %v2757 = vmul.f32 %v2625, %v2755
    %v2758 = vmul.f32 %v2627, %v2755
    %v2759 = vmul.f32 %v2628, %v2755
    %2764 = vrot.lane.b32.xlu0 %v2756, 127
    %v2765 = vpop.permute.xlu0 %2764
    %2766 = vrot.lane.b32.xlu0 %v2757, 127
    %v2767 = vpop.permute.xlu0 %2766
    %2768 = vrot.lane.b32.xlu0 %v2758, 127
    %v2769 = vpop.permute.xlu0 %2768
    %2770 = vrot.lane.b32.xlu0 %v2759, 127
    %v2771 = vpop.permute.xlu0 %2770
    %v2776 = vadd.f32 %v2688, %v2765
    %v2777 = vadd.f32 %v2689, %v2767
    %v2778 = vadd.f32 %v2690, %v2769
    %v2779 = vadd.f32 %v2691, %v2771
    %s2780 = sld [smem:[#allocation11 + $0x88]]
    %v2781 = vstv %s2780
    %v2782 = vmul.f32 %v2624, %v2781
    %v2783 = vmul.f32 %v2625, %v2781
    %v2784 = vmul.f32 %v2627, %v2781
    %v2785 = vmul.f32 %v2628, %v2781
    %2790 = vrot.lane.b32.xlu0 %v2782, 127
    %v2791 = vpop.permute.xlu0 %2790
    %2792 = vrot.lane.b32.xlu0 %v2783, 127
    %v2793 = vpop.permute.xlu0 %2792
    %2794 = vrot.lane.b32.xlu0 %v2784, 127
    %v2795 = vpop.permute.xlu0 %2794
    %2796 = vrot.lane.b32.xlu0 %v2785, 127
    %v2797 = vpop.permute.xlu0 %2796
    %v2802 = vadd.f32 %v2698, %v2791
    %v2803 = vadd.f32 %v2699, %v2793
    %v2804 = vadd.f32 %v2700, %v2795
    %v2805 = vadd.f32 %v2701, %v2797
    %s2806 = sld [smem:[#allocation11 + $0x2]]
    %v2807 = vstv %s2806
    %v2808 = vmul.f32 %v2624, %v2807
    %v2809 = vmul.f32 %v2625, %v2807
    %v2810 = vmul.f32 %v2627, %v2807
    %v2811 = vmul.f32 %v2628, %v2807
    %2816 = vrot.lane.b32.xlu0 %v2808, 126
    %v2817 = vpop.permute.xlu0 %2816
    %2818 = vrot.lane.b32.xlu0 %v2809, 126
    %v2819 = vpop.permute.xlu0 %2818
    %2820 = vrot.lane.b32.xlu0 %v2810, 126
    %v2821 = vpop.permute.xlu0 %2820
    %2822 = vrot.lane.b32.xlu0 %v2811, 126
    %v2823 = vpop.permute.xlu0 %2822
    %v2828 = vadd.f32 %v2724, %v2817
    %v2829 = vadd.f32 %v2725, %v2819
    %v2830 = vadd.f32 %v2726, %v2821
    %v2831 = vadd.f32 %v2727, %v2823
    %s2832 = sld [smem:[#allocation11 + $0x2f]]
    %v2833 = vstv %s2832
    %v2834 = vmul.f32 %v2624, %v2833
    %v2835 = vmul.f32 %v2625, %v2833
    %v2836 = vmul.f32 %v2627, %v2833
    %v2837 = vmul.f32 %v2628, %v2833
    %2842 = vrot.lane.b32.xlu0 %v2834, 126
    %v2843 = vpop.permute.xlu0 %2842
    %2844 = vrot.lane.b32.xlu0 %v2835, 126
    %v2845 = vpop.permute.xlu0 %2844
    %2846 = vrot.lane.b32.xlu0 %v2836, 126
    %v2847 = vpop.permute.xlu0 %2846
    %2848 = vrot.lane.b32.xlu0 %v2837, 126
    %v2849 = vpop.permute.xlu0 %2848
    %v2854 = vadd.f32 %v2750, %v2843
    %v2855 = vadd.f32 %v2751, %v2845
    %v2856 = vadd.f32 %v2752, %v2847
    %v2857 = vadd.f32 %v2753, %v2849
    %s2858 = sld [smem:[#allocation11 + $0x5c]]
    %v2859 = vstv %s2858
    %v2860 = vmul.f32 %v2624, %v2859
    %v2861 = vmul.f32 %v2625, %v2859
    %v2862 = vmul.f32 %v2627, %v2859
    %v2863 = vmul.f32 %v2628, %v2859
    %2868 = vrot.lane.b32.xlu0 %v2860, 126
    %v2869 = vpop.permute.xlu0 %2868
    %2870 = vrot.lane.b32.xlu0 %v2861, 126
    %v2871 = vpop.permute.xlu0 %2870
    %2872 = vrot.lane.b32.xlu0 %v2862, 126
    %v2873 = vpop.permute.xlu0 %2872
    %2874 = vrot.lane.b32.xlu0 %v2863, 126
    %v2875 = vpop.permute.xlu0 %2874
    %v2880 = vadd.f32 %v2776, %v2869
    %v2881 = vadd.f32 %v2777, %v2871
    %v2882 = vadd.f32 %v2778, %v2873
    %v2883 = vadd.f32 %v2779, %v2875
    %s2884 = sld [smem:[#allocation11 + $0x89]]
    %v2885 = vstv %s2884
    %v2886 = vmul.f32 %v2624, %v2885
    %v2887 = vmul.f32 %v2625, %v2885
    %v2888 = vmul.f32 %v2627, %v2885
    %v2889 = vmul.f32 %v2628, %v2885
    %2894 = vrot.lane.b32.xlu0 %v2886, 126
    %v2895 = vpop.permute.xlu0 %2894
    %2896 = vrot.lane.b32.xlu0 %v2887, 126
    %v2897 = vpop.permute.xlu0 %2896
    %2898 = vrot.lane.b32.xlu0 %v2888, 126
    %v2899 = vpop.permute.xlu0 %2898
    %2900 = vrot.lane.b32.xlu0 %v2889, 126
    %v2901 = vpop.permute.xlu0 %2900
    %v2906 = vadd.f32 %v2802, %v2895
    %v2907 = vadd.f32 %v2803, %v2897
    %v2908 = vadd.f32 %v2804, %v2899
    %v2909 = vadd.f32 %v2805, %v2901
    %s2910 = sld [smem:[#allocation11 + $0x3]]
    %v2911 = vstv %s2910
    %v2912 = vmul.f32 %v2624, %v2911
    %v2913 = vmul.f32 %v2625, %v2911
    %v2914 = vmul.f32 %v2626, %v2911
    %v2915 = vmul.f32 %v2627, %v2911
    %v2916 = vmul.f32 %v2628, %v2911
    %v2917 = vmul.f32 %v2629, %v2911
    %v2924 = vrot.slane %v2912, 1
    %v2925 = vrot.slane %v2913, 1
    %v2926 = vsel %vm424, %v2924, %v2925
    %v2927 = vrot.slane %v2914, 1
    %v2928 = vsel %vm424, %v2925, %v2927
    %v2929 = vrot.slane %v2915, 1
    %v2930 = vrot.slane %v2916, 1
    %v2931 = vsel %vm424, %v2929, %v2930
    %v2932 = vrot.slane %v2917, 1
    %v2933 = vsel %vm424, %v2930, %v2932
    %v2938 = vadd.f32 %v2828, %v2926
    %v2939 = vadd.f32 %v2829, %v2928
    %v2940 = vadd.f32 %v2830, %v2931
    %v2941 = vadd.f32 %v2831, %v2933
    %s2942 = sld [smem:[#allocation11 + $0x30]]
    %v2943 = vstv %s2942
    %v2944 = vmul.f32 %v2624, %v2943
    %v2945 = vmul.f32 %v2625, %v2943
    %v2946 = vmul.f32 %v2626, %v2943
    %v2947 = vmul.f32 %v2627, %v2943
    %v2948 = vmul.f32 %v2628, %v2943
    %v2949 = vmul.f32 %v2629, %v2943
    %v2956 = vrot.slane %v2944, 1
    %v2957 = vrot.slane %v2945, 1
    %v2958 = vsel %vm424, %v2956, %v2957
    %v2959 = vrot.slane %v2946, 1
    %v2960 = vsel %vm424, %v2957, %v2959
    %v2961 = vrot.slane %v2947, 1
    %v2962 = vrot.slane %v2948, 1
    %v2963 = vsel %vm424, %v2961, %v2962
    %v2964 = vrot.slane %v2949, 1
    %v2965 = vsel %vm424, %v2962, %v2964
    %v2970 = vadd.f32 %v2854, %v2958
    %v2971 = vadd.f32 %v2855, %v2960
    %v2972 = vadd.f32 %v2856, %v2963
    %v2973 = vadd.f32 %v2857, %v2965
    %s2974 = sld [smem:[#allocation11 + $0x5d]]
    %v2975 = vstv %s2974
    %v2976 = vmul.f32 %v2624, %v2975
    %v2977 = vmul.f32 %v2625, %v2975
    %v2978 = vmul.f32 %v2626, %v2975
    %v2979 = vmul.f32 %v2627, %v2975
    %v2980 = vmul.f32 %v2628, %v2975
    %v2981 = vmul.f32 %v2629, %v2975
    %v2988 = vrot.slane %v2976, 1
    %v2989 = vrot.slane %v2977, 1
    %v2990 = vsel %vm424, %v2988, %v2989
    %v2991 = vrot.slane %v2978, 1
    %v2992 = vsel %vm424, %v2989, %v2991
    %v2993 = vrot.slane %v2979, 1
    %v2994 = vrot.slane %v2980, 1
    %v2995 = vsel %vm424, %v2993, %v2994
    %v2996 = vrot.slane %v2981, 1
    %v2997 = vsel %vm424, %v2994, %v2996
    %v3002 = vadd.f32 %v2880, %v2990
    %v3003 = vadd.f32 %v2881, %v2992
    %v3004 = vadd.f32 %v2882, %v2995
    %v3005 = vadd.f32 %v2883, %v2997
    %s3006 = sld [smem:[#allocation11 + $0x8a]]
    %v3007 = vstv %s3006
    %v3008 = vmul.f32 %v2624, %v3007
    %v3009 = vmul.f32 %v2625, %v3007
    %v3010 = vmul.f32 %v2626, %v3007
    %v3011 = vmul.f32 %v2627, %v3007
    %v3012 = vmul.f32 %v2628, %v3007
    %v3013 = vmul.f32 %v2629, %v3007
    %v3020 = vrot.slane %v3008, 1
    %v3021 = vrot.slane %v3009, 1
    %v3022 = vsel %vm424, %v3020, %v3021
    %v3023 = vrot.slane %v3010, 1
    %v3024 = vsel %vm424, %v3021, %v3023
    %v3025 = vrot.slane %v3011, 1
    %v3026 = vrot.slane %v3012, 1
    %v3027 = vsel %vm424, %v3025, %v3026
    %v3028 = vrot.slane %v3013, 1
    %v3029 = vsel %vm424, %v3026, %v3028
    %v3034 = vadd.f32 %v2906, %v3022
    %v3035 = vadd.f32 %v2907, %v3024
    %v3036 = vadd.f32 %v2908, %v3027
    %v3037 = vadd.f32 %v2909, %v3029
    %s3038 = sld [smem:[#allocation11 + $0x4]]
    %v3039 = vstv %s3038
    %v3040 = vmul.f32 %v2624, %v3039
    %v3041 = vmul.f32 %v2625, %v3039
    %v3042 = vmul.f32 %v2626, %v3039
    %v3043 = vmul.f32 %v2627, %v3039
    %v3044 = vmul.f32 %v2628, %v3039
    %v3045 = vmul.f32 %v2629, %v3039
    %v3052 = vrot.slane %v3040, 1
    %v3053 = vrot.slane %v3041, 1
    %v3054 = vsel %vm424, %v3052, %v3053
    %v3055 = vrot.slane %v3042, 1
    %v3056 = vsel %vm424, %v3053, %v3055
    %v3057 = vrot.slane %v3043, 1
    %v3058 = vrot.slane %v3044, 1
    %v3059 = vsel %vm424, %v3057, %v3058
    %v3060 = vrot.slane %v3045, 1
    %v3061 = vsel %vm424, %v3058, %v3060
    %3062 = vrot.lane.b32.xlu0 %v3054, 127
    %v3063 = vpop.permute.xlu0 %3062
    %3064 = vrot.lane.b32.xlu0 %v3056, 127
    %v3065 = vpop.permute.xlu0 %3064
    %3066 = vrot.lane.b32.xlu0 %v3059, 127
    %v3067 = vpop.permute.xlu0 %3066
    %3068 = vrot.lane.b32.xlu0 %v3061, 127
    %v3069 = vpop.permute.xlu0 %3068
    %v3074 = vadd.f32 %v2938, %v3063
    %v3075 = vadd.f32 %v2939, %v3065
    %v3076 = vadd.f32 %v2940, %v3067
    %v3077 = vadd.f32 %v2941, %v3069
    %s3078 = sld [smem:[#allocation11 + $0x31]]
    %v3079 = vstv %s3078
    %v3080 = vmul.f32 %v2624, %v3079
    %v3081 = vmul.f32 %v2625, %v3079
    %v3082 = vmul.f32 %v2626, %v3079
    %v3083 = vmul.f32 %v2627, %v3079
    %v3084 = vmul.f32 %v2628, %v3079
    %v3085 = vmul.f32 %v2629, %v3079
    %v3092 = vrot.slane %v3080, 1
    %v3093 = vrot.slane %v3081, 1
    %v3094 = vsel %vm424, %v3092, %v3093
    %v3095 = vrot.slane %v3082, 1
    %v3096 = vsel %vm424, %v3093, %v3095
    %v3097 = vrot.slane %v3083, 1
    %v3098 = vrot.slane %v3084, 1
    %v3099 = vsel %vm424, %v3097, %v3098
    %v3100 = vrot.slane %v3085, 1
    %v3101 = vsel %vm424, %v3098, %v3100
    %3102 = vrot.lane.b32.xlu0 %v3094, 127
    %v3103 = vpop.permute.xlu0 %3102
    %3104 = vrot.lane.b32.xlu0 %v3096, 127
    %v3105 = vpop.permute.xlu0 %3104
    %3106 = vrot.lane.b32.xlu0 %v3099, 127
    %v3107 = vpop.permute.xlu0 %3106
    %3108 = vrot.lane.b32.xlu0 %v3101, 127
    %v3109 = vpop.permute.xlu0 %3108
    %v3114 = vadd.f32 %v2970, %v3103
    %v3115 = vadd.f32 %v2971, %v3105
    %v3116 = vadd.f32 %v2972, %v3107
    %v3117 = vadd.f32 %v2973, %v3109
    %s3118 = sld [smem:[#allocation11 + $0x5e]]
    %v3119 = vstv %s3118
    %v3120 = vmul.f32 %v2624, %v3119
    %v3121 = vmul.f32 %v2625, %v3119
    %v3122 = vmul.f32 %v2626, %v3119
    %v3123 = vmul.f32 %v2627, %v3119
    %v3124 = vmul.f32 %v2628, %v3119
    %v3125 = vmul.f32 %v2629, %v3119
    %v3132 = vrot.slane %v3120, 1
    %v3133 = vrot.slane %v3121, 1
    %v3134 = vsel %vm424, %v3132, %v3133
    %v3135 = vrot.slane %v3122, 1
    %v3136 = vsel %vm424, %v3133, %v3135
    %v3137 = vrot.slane %v3123, 1
    %v3138 = vrot.slane %v3124, 1
    %v3139 = vsel %vm424, %v3137, %v3138
    %v3140 = vrot.slane %v3125, 1
    %v3141 = vsel %vm424, %v3138, %v3140
    %3142 = vrot.lane.b32.xlu0 %v3134, 127
    %v3143 = vpop.permute.xlu0 %3142
    %3144 = vrot.lane.b32.xlu0 %v3136, 127
    %v3145 = vpop.permute.xlu0 %3144
    %3146 = vrot.lane.b32.xlu0 %v3139, 127
    %v3147 = vpop.permute.xlu0 %3146
    %3148 = vrot.lane.b32.xlu0 %v3141, 127
    %v3149 = vpop.permute.xlu0 %3148
    %v3154 = vadd.f32 %v3002, %v3143
    %v3155 = vadd.f32 %v3003, %v3145
    %v3156 = vadd.f32 %v3004, %v3147
    %v3157 = vadd.f32 %v3005, %v3149
    %s3158 = sld [smem:[#allocation11 + $0x8b]]
    %v3159 = vstv %s3158
    %v3160 = vmul.f32 %v2624, %v3159
    %v3161 = vmul.f32 %v2625, %v3159
    %v3162 = vmul.f32 %v2626, %v3159
    %v3163 = vmul.f32 %v2627, %v3159
    %v3164 = vmul.f32 %v2628, %v3159
    %v3165 = vmul.f32 %v2629, %v3159
    %v3172 = vrot.slane %v3160, 1
    %v3173 = vrot.slane %v3161, 1
    %v3174 = vsel %vm424, %v3172, %v3173
    %v3175 = vrot.slane %v3162, 1
    %v3176 = vsel %vm424, %v3173, %v3175
    %v3177 = vrot.slane %v3163, 1
    %v3178 = vrot.slane %v3164, 1
    %v3179 = vsel %vm424, %v3177, %v3178
    %v3180 = vrot.slane %v3165, 1
    %v3181 = vsel %vm424, %v3178, %v3180
    %3182 = vrot.lane.b32.xlu0 %v3174, 127
    %v3183 = vpop.permute.xlu0 %3182
    %3184 = vrot.lane.b32.xlu0 %v3176, 127
    %v3185 = vpop.permute.xlu0 %3184
    %3186 = vrot.lane.b32.xlu0 %v3179, 127
    %v3187 = vpop.permute.xlu0 %3186
    %3188 = vrot.lane.b32.xlu0 %v3181, 127
    %v3189 = vpop.permute.xlu0 %3188
    %v3194 = vadd.f32 %v3034, %v3183
    %v3195 = vadd.f32 %v3035, %v3185
    %v3196 = vadd.f32 %v3036, %v3187
    %v3197 = vadd.f32 %v3037, %v3189
    %s3198 = sld [smem:[#allocation11 + $0x5]]
    %v3199 = vstv %s3198
    %v3200 = vmul.f32 %v2624, %v3199
    %v3201 = vmul.f32 %v2625, %v3199
    %v3202 = vmul.f32 %v2626, %v3199
    %v3203 = vmul.f32 %v2627, %v3199
    %v3204 = vmul.f32 %v2628, %v3199
    %v3205 = vmul.f32 %v2629, %v3199
    %v3212 = vrot.slane %v3200, 1
    %v3213 = vrot.slane %v3201, 1
    %v3214 = vsel %vm424, %v3212, %v3213
    %v3215 = vrot.slane %v3202, 1
    %v3216 = vsel %vm424, %v3213, %v3215
    %v3217 = vrot.slane %v3203, 1
    %v3218 = vrot.slane %v3204, 1
    %v3219 = vsel %vm424, %v3217, %v3218
    %v3220 = vrot.slane %v3205, 1
    %v3221 = vsel %vm424, %v3218, %v3220
    %3222 = vrot.lane.b32.xlu0 %v3214, 126
    %v3223 = vpop.permute.xlu0 %3222
    %3224 = vrot.lane.b32.xlu0 %v3216, 126
    %v3225 = vpop.permute.xlu0 %3224
    %3226 = vrot.lane.b32.xlu0 %v3219, 126
    %v3227 = vpop.permute.xlu0 %3226
    %3228 = vrot.lane.b32.xlu0 %v3221, 126
    %v3229 = vpop.permute.xlu0 %3228
    %v3234 = vadd.f32 %v3074, %v3223
    %v3235 = vadd.f32 %v3075, %v3225
    %v3236 = vadd.f32 %v3076, %v3227
    %v3237 = vadd.f32 %v3077, %v3229
    %s3238 = sld [smem:[#allocation11 + $0x32]]
    %v3239 = vstv %s3238
    %v3240 = vmul.f32 %v2624, %v3239
    %v3241 = vmul.f32 %v2625, %v3239
    %v3242 = vmul.f32 %v2626, %v3239
    %v3243 = vmul.f32 %v2627, %v3239
    %v3244 = vmul.f32 %v2628, %v3239
    %v3245 = vmul.f32 %v2629, %v3239
    %v3252 = vrot.slane %v3240, 1
    %v3253 = vrot.slane %v3241, 1
    %v3254 = vsel %vm424, %v3252, %v3253
    %v3255 = vrot.slane %v3242, 1
    %v3256 = vsel %vm424, %v3253, %v3255
    %v3257 = vrot.slane %v3243, 1
    %v3258 = vrot.slane %v3244, 1
    %v3259 = vsel %vm424, %v3257, %v3258
    %v3260 = vrot.slane %v3245, 1
    %v3261 = vsel %vm424, %v3258, %v3260
    %3262 = vrot.lane.b32.xlu0 %v3254, 126
    %v3263 = vpop.permute.xlu0 %3262
    %3264 = vrot.lane.b32.xlu0 %v3256, 126
    %v3265 = vpop.permute.xlu0 %3264
    %3266 = vrot.lane.b32.xlu0 %v3259, 126
    %v3267 = vpop.permute.xlu0 %3266
    %3268 = vrot.lane.b32.xlu0 %v3261, 126
    %v3269 = vpop.permute.xlu0 %3268
    %v3274 = vadd.f32 %v3114, %v3263
    %v3275 = vadd.f32 %v3115, %v3265
    %v3276 = vadd.f32 %v3116, %v3267
    %v3277 = vadd.f32 %v3117, %v3269
    %s3278 = sld [smem:[#allocation11 + $0x5f]]
    %v3279 = vstv %s3278
    %v3280 = vmul.f32 %v2624, %v3279
    %v3281 = vmul.f32 %v2625, %v3279
    %v3282 = vmul.f32 %v2626, %v3279
    %v3283 = vmul.f32 %v2627, %v3279
    %v3284 = vmul.f32 %v2628, %v3279
    %v3285 = vmul.f32 %v2629, %v3279
    %v3292 = vrot.slane %v3280, 1
    %v3293 = vrot.slane %v3281, 1
    %v3294 = vsel %vm424, %v3292, %v3293
    %v3295 = vrot.slane %v3282, 1
    %v3296 = vsel %vm424, %v3293, %v3295
    %v3297 = vrot.slane %v3283, 1
    %v3298 = vrot.slane %v3284, 1
    %v3299 = vsel %vm424, %v3297, %v3298
    %v3300 = vrot.slane %v3285, 1
    %v3301 = vsel %vm424, %v3298, %v3300
    %3302 = vrot.lane.b32.xlu0 %v3294, 126
    %v3303 = vpop.permute.xlu0 %3302
    %3304 = vrot.lane.b32.xlu0 %v3296, 126
    %v3305 = vpop.permute.xlu0 %3304
    %3306 = vrot.lane.b32.xlu0 %v3299, 126
    %v3307 = vpop.permute.xlu0 %3306
    %3308 = vrot.lane.b32.xlu0 %v3301, 126
    %v3309 = vpop.permute.xlu0 %3308
    %v3314 = vadd.f32 %v3154, %v3303
    %v3315 = vadd.f32 %v3155, %v3305
    %v3316 = vadd.f32 %v3156, %v3307
    %v3317 = vadd.f32 %v3157, %v3309
    %s3318 = sld [smem:[#allocation11 + $0x8c]]
    %v3319 = vstv %s3318
    %v3320 = vmul.f32 %v2624, %v3319
    %v3321 = vmul.f32 %v2625, %v3319
    %v3322 = vmul.f32 %v2626, %v3319
    %v3323 = vmul.f32 %v2627, %v3319
    %v3324 = vmul.f32 %v2628, %v3319
    %v3325 = vmul.f32 %v2629, %v3319
    %v3332 = vrot.slane %v3320, 1
    %v3333 = vrot.slane %v3321, 1
    %v3334 = vsel %vm424, %v3332, %v3333
    %v3335 = vrot.slane %v3322, 1
    %v3336 = vsel %vm424, %v3333, %v3335
    %v3337 = vrot.slane %v3323, 1
    %v3338 = vrot.slane %v3324, 1
    %v3339 = vsel %vm424, %v3337, %v3338
    %v3340 = vrot.slane %v3325, 1
    %v3341 = vsel %vm424, %v3338, %v3340
    %3342 = vrot.lane.b32.xlu0 %v3334, 126
    %v3343 = vpop.permute.xlu0 %3342
    %3344 = vrot.lane.b32.xlu0 %v3336, 126
    %v3345 = vpop.permute.xlu0 %3344
    %3346 = vrot.lane.b32.xlu0 %v3339, 126
    %v3347 = vpop.permute.xlu0 %3346
    %3348 = vrot.lane.b32.xlu0 %v3341, 126
    %v3349 = vpop.permute.xlu0 %3348
    %v3354 = vadd.f32 %v3194, %v3343
    %v3355 = vadd.f32 %v3195, %v3345
    %v3356 = vadd.f32 %v3196, %v3347
    %v3357 = vadd.f32 %v3197, %v3349
    %s3358 = sld [smem:[#allocation11 + $0x6]]
    %v3359 = vstv %s3358
    %v3360 = vmul.f32 %v2624, %v3359
    %v3361 = vmul.f32 %v2625, %v3359
    %v3362 = vmul.f32 %v2626, %v3359
    %v3363 = vmul.f32 %v2627, %v3359
    %v3364 = vmul.f32 %v2628, %v3359
    %v3365 = vmul.f32 %v2629, %v3359
    %v3372 = vrot.slane %v3360, 2
    %v3373 = vrot.slane %v3361, 2
    %v3374 = vsel %vm865, %v3372, %v3373
    %v3375 = vrot.slane %v3362, 2
    %v3376 = vsel %vm865, %v3373, %v3375
    %v3377 = vrot.slane %v3363, 2
    %v3378 = vrot.slane %v3364, 2
    %v3379 = vsel %vm865, %v3377, %v3378
    %v3380 = vrot.slane %v3365, 2
    %v3381 = vsel %vm865, %v3378, %v3380
    %v3386 = vadd.f32 %v3234, %v3374
    %v3387 = vadd.f32 %v3235, %v3376
    %v3388 = vadd.f32 %v3236, %v3379
    %v3389 = vadd.f32 %v3237, %v3381
    %s3390 = sld [smem:[#allocation11 + $0x33]]
    %v3391 = vstv %s3390
    %v3392 = vmul.f32 %v2624, %v3391
    %v3393 = vmul.f32 %v2625, %v3391
    %v3394 = vmul.f32 %v2626, %v3391
    %v3395 = vmul.f32 %v2627, %v3391
    %v3396 = vmul.f32 %v2628, %v3391
    %v3397 = vmul.f32 %v2629, %v3391
    %v3404 = vrot.slane %v3392, 2
    %v3405 = vrot.slane %v3393, 2
    %v3406 = vsel %vm865, %v3404, %v3405
    %v3407 = vrot.slane %v3394, 2
    %v3408 = vsel %vm865, %v3405, %v3407
    %v3409 = vrot.slane %v3395, 2
    %v3410 = vrot.slane %v3396, 2
    %v3411 = vsel %vm865, %v3409, %v3410
    %v3412 = vrot.slane %v3397, 2
    %v3413 = vsel %vm865, %v3410, %v3412
    %v3418 = vadd.f32 %v3274, %v3406
    %v3419 = vadd.f32 %v3275, %v3408
    %v3420 = vadd.f32 %v3276, %v3411
    %v3421 = vadd.f32 %v3277, %v3413
    %s3422 = sld [smem:[#allocation11 + $0x60]]
    %v3423 = vstv %s3422
    %v3424 = vmul.f32 %v2624, %v3423
    %v3425 = vmul.f32 %v2625, %v3423
    %v3426 = vmul.f32 %v2626, %v3423
    %v3427 = vmul.f32 %v2627, %v3423
    %v3428 = vmul.f32 %v2628, %v3423
    %v3429 = vmul.f32 %v2629, %v3423
    %v3436 = vrot.slane %v3424, 2
    %v3437 = vrot.slane %v3425, 2
    %v3438 = vsel %vm865, %v3436, %v3437
    %v3439 = vrot.slane %v3426, 2
    %v3440 = vsel %vm865, %v3437, %v3439
    %v3441 = vrot.slane %v3427, 2
    %v3442 = vrot.slane %v3428, 2
    %v3443 = vsel %vm865, %v3441, %v3442
    %v3444 = vrot.slane %v3429, 2
    %v3445 = vsel %vm865, %v3442, %v3444
    %v3450 = vadd.f32 %v3314, %v3438
    %v3451 = vadd.f32 %v3315, %v3440
    %v3452 = vadd.f32 %v3316, %v3443
    %v3453 = vadd.f32 %v3317, %v3445
    %s3454 = sld [smem:[#allocation11 + $0x8d]]
    %v3455 = vstv %s3454
    %v3456 = vmul.f32 %v2624, %v3455
    %v3457 = vmul.f32 %v2625, %v3455
    %v3458 = vmul.f32 %v2626, %v3455
    %v3459 = vmul.f32 %v2627, %v3455
    %v3460 = vmul.f32 %v2628, %v3455
    %v3461 = vmul.f32 %v2629, %v3455
    %v3468 = vrot.slane %v3456, 2
    %v3469 = vrot.slane %v3457, 2
    %v3470 = vsel %vm865, %v3468, %v3469
    %v3471 = vrot.slane %v3458, 2
    %v3472 = vsel %vm865, %v3469, %v3471
    %v3473 = vrot.slane %v3459, 2
    %v3474 = vrot.slane %v3460, 2
    %v3475 = vsel %vm865, %v3473, %v3474
    %v3476 = vrot.slane %v3461, 2
    %v3477 = vsel %vm865, %v3474, %v3476
    %v3482 = vadd.f32 %v3354, %v3470
    %v3483 = vadd.f32 %v3355, %v3472
    %v3484 = vadd.f32 %v3356, %v3475
    %v3485 = vadd.f32 %v3357, %v3477
    %s3486 = sld [smem:[#allocation11 + $0x7]]
    %v3487 = vstv %s3486
    %v3488 = vmul.f32 %v2624, %v3487
    %v3489 = vmul.f32 %v2625, %v3487
    %v3490 = vmul.f32 %v2626, %v3487
    %v3491 = vmul.f32 %v2627, %v3487
    %v3492 = vmul.f32 %v2628, %v3487
    %v3493 = vmul.f32 %v2629, %v3487
    %v3500 = vrot.slane %v3488, 2
    %v3501 = vrot.slane %v3489, 2
    %v3502 = vsel %vm865, %v3500, %v3501
    %v3503 = vrot.slane %v3490, 2
    %v3504 = vsel %vm865, %v3501, %v3503
    %v3505 = vrot.slane %v3491, 2
    %v3506 = vrot.slane %v3492, 2
    %v3507 = vsel %vm865, %v3505, %v3506
    %v3508 = vrot.slane %v3493, 2
    %v3509 = vsel %vm865, %v3506, %v3508
    %3510 = vrot.lane.b32.xlu0 %v3502, 127
    %v3511 = vpop.permute.xlu0 %3510
    %3512 = vrot.lane.b32.xlu0 %v3504, 127
    %v3513 = vpop.permute.xlu0 %3512
    %3514 = vrot.lane.b32.xlu0 %v3507, 127
    %v3515 = vpop.permute.xlu0 %3514
    %3516 = vrot.lane.b32.xlu0 %v3509, 127
    %v3517 = vpop.permute.xlu0 %3516
    %v3522 = vadd.f32 %v3386, %v3511
    %v3523 = vadd.f32 %v3387, %v3513
    %v3524 = vadd.f32 %v3388, %v3515
    %v3525 = vadd.f32 %v3389, %v3517
    %s3526 = sld [smem:[#allocation11 + $0x34]]
    %v3527 = vstv %s3526
    %v3528 = vmul.f32 %v2624, %v3527
    %v3529 = vmul.f32 %v2625, %v3527
    %v3530 = vmul.f32 %v2626, %v3527
    %v3531 = vmul.f32 %v2627, %v3527
    %v3532 = vmul.f32 %v2628, %v3527
    %v3533 = vmul.f32 %v2629, %v3527
    %v3540 = vrot.slane %v3528, 2
    %v3541 = vrot.slane %v3529, 2
    %v3542 = vsel %vm865, %v3540, %v3541
    %v3543 = vrot.slane %v3530, 2
    %v3544 = vsel %vm865, %v3541, %v3543
    %v3545 = vrot.slane %v3531, 2
    %v3546 = vrot.slane %v3532, 2
    %v3547 = vsel %vm865, %v3545, %v3546
    %v3548 = vrot.slane %v3533, 2
    %v3549 = vsel %vm865, %v3546, %v3548
    %3550 = vrot.lane.b32.xlu0 %v3542, 127
    %v3551 = vpop.permute.xlu0 %3550
    %3552 = vrot.lane.b32.xlu0 %v3544, 127
    %v3553 = vpop.permute.xlu0 %3552
    %3554 = vrot.lane.b32.xlu0 %v3547, 127
    %v3555 = vpop.permute.xlu0 %3554
    %3556 = vrot.lane.b32.xlu0 %v3549, 127
    %v3557 = vpop.permute.xlu0 %3556
    %v3562 = vadd.f32 %v3418, %v3551
    %v3563 = vadd.f32 %v3419, %v3553
    %v3564 = vadd.f32 %v3420, %v3555
    %v3565 = vadd.f32 %v3421, %v3557
    %s3566 = sld [smem:[#allocation11 + $0x61]]
    %v3567 = vstv %s3566
    %v3568 = vmul.f32 %v2624, %v3567
    %v3569 = vmul.f32 %v2625, %v3567
    %v3570 = vmul.f32 %v2626, %v3567
    %v3571 = vmul.f32 %v2627, %v3567
    %v3572 = vmul.f32 %v2628, %v3567
    %v3573 = vmul.f32 %v2629, %v3567
    %v3580 = vrot.slane %v3568, 2
    %v3581 = vrot.slane %v3569, 2
    %v3582 = vsel %vm865, %v3580, %v3581
    %v3583 = vrot.slane %v3570, 2
    %v3584 = vsel %vm865, %v3581, %v3583
    %v3585 = vrot.slane %v3571, 2
    %v3586 = vrot.slane %v3572, 2
    %v3587 = vsel %vm865, %v3585, %v3586
    %v3588 = vrot.slane %v3573, 2
    %v3589 = vsel %vm865, %v3586, %v3588
    %3590 = vrot.lane.b32.xlu0 %v3582, 127
    %v3591 = vpop.permute.xlu0 %3590
    %3592 = vrot.lane.b32.xlu0 %v3584, 127
    %v3593 = vpop.permute.xlu0 %3592
    %3594 = vrot.lane.b32.xlu0 %v3587, 127
    %v3595 = vpop.permute.xlu0 %3594
    %3596 = vrot.lane.b32.xlu0 %v3589, 127
    %v3597 = vpop.permute.xlu0 %3596
    %v3602 = vadd.f32 %v3450, %v3591
    %v3603 = vadd.f32 %v3451, %v3593
    %v3604 = vadd.f32 %v3452, %v3595
    %v3605 = vadd.f32 %v3453, %v3597
    %s3606 = sld [smem:[#allocation11 + $0x8e]]
    %v3607 = vstv %s3606
    %v3608 = vmul.f32 %v2624, %v3607
    %v3609 = vmul.f32 %v2625, %v3607
    %v3610 = vmul.f32 %v2626, %v3607
    %v3611 = vmul.f32 %v2627, %v3607
    %v3612 = vmul.f32 %v2628, %v3607
    %v3613 = vmul.f32 %v2629, %v3607
    %v3620 = vrot.slane %v3608, 2
    %v3621 = vrot.slane %v3609, 2
    %v3622 = vsel %vm865, %v3620, %v3621
    %v3623 = vrot.slane %v3610, 2
    %v3624 = vsel %vm865, %v3621, %v3623
    %v3625 = vrot.slane %v3611, 2
    %v3626 = vrot.slane %v3612, 2
    %v3627 = vsel %vm865, %v3625, %v3626
    %v3628 = vrot.slane %v3613, 2
    %v3629 = vsel %vm865, %v3626, %v3628
    %3630 = vrot.lane.b32.xlu0 %v3622, 127
    %v3631 = vpop.permute.xlu0 %3630
    %3632 = vrot.lane.b32.xlu0 %v3624, 127
    %v3633 = vpop.permute.xlu0 %3632
    %3634 = vrot.lane.b32.xlu0 %v3627, 127
    %v3635 = vpop.permute.xlu0 %3634
    %3636 = vrot.lane.b32.xlu0 %v3629, 127
    %v3637 = vpop.permute.xlu0 %3636
    %v3642 = vadd.f32 %v3482, %v3631
    %v3643 = vadd.f32 %v3483, %v3633
    %v3644 = vadd.f32 %v3484, %v3635
    %v3645 = vadd.f32 %v3485, %v3637
    %s3646 = sld [smem:[#allocation11 + $0x8]]
    %v3647 = vstv %s3646
    %v3648 = vmul.f32 %v2624, %v3647
    %v3649 = vmul.f32 %v2625, %v3647
    %v3650 = vmul.f32 %v2626, %v3647
    %v3651 = vmul.f32 %v2627, %v3647
    %v3652 = vmul.f32 %v2628, %v3647
    %v3653 = vmul.f32 %v2629, %v3647
    %v3660 = vrot.slane %v3648, 2
    %v3661 = vrot.slane %v3649, 2
    %v3662 = vsel %vm865, %v3660, %v3661
    %v3663 = vrot.slane %v3650, 2
    %v3664 = vsel %vm865, %v3661, %v3663
    %v3665 = vrot.slane %v3651, 2
    %v3666 = vrot.slane %v3652, 2
    %v3667 = vsel %vm865, %v3665, %v3666
    %v3668 = vrot.slane %v3653, 2
    %v3669 = vsel %vm865, %v3666, %v3668
    %3670 = vrot.lane.b32.xlu0 %v3662, 126
    %v3671 = vpop.permute.xlu0 %3670
    %3672 = vrot.lane.b32.xlu0 %v3664, 126
    %v3673 = vpop.permute.xlu0 %3672
    %3674 = vrot.lane.b32.xlu0 %v3667, 126
    %v3675 = vpop.permute.xlu0 %3674
    %3676 = vrot.lane.b32.xlu0 %v3669, 126
    %v3677 = vpop.permute.xlu0 %3676
    %v3682 = vadd.f32 %v3522, %v3671
    %v3683 = vadd.f32 %v3523, %v3673
    %v3684 = vadd.f32 %v3524, %v3675
    %v3685 = vadd.f32 %v3525, %v3677
    %s3686 = sld [smem:[#allocation11 + $0x35]]
    %v3687 = vstv %s3686
    %v3688 = vmul.f32 %v2624, %v3687
    %v3689 = vmul.f32 %v2625, %v3687
    %v3690 = vmul.f32 %v2626, %v3687
    %v3691 = vmul.f32 %v2627, %v3687
    %v3692 = vmul.f32 %v2628, %v3687
    %v3693 = vmul.f32 %v2629, %v3687
    %v3700 = vrot.slane %v3688, 2
    %v3701 = vrot.slane %v3689, 2
    %v3702 = vsel %vm865, %v3700, %v3701
    %v3703 = vrot.slane %v3690, 2
    %v3704 = vsel %vm865, %v3701, %v3703
    %v3705 = vrot.slane %v3691, 2
    %v3706 = vrot.slane %v3692, 2
    %v3707 = vsel %vm865, %v3705, %v3706
    %v3708 = vrot.slane %v3693, 2
    %v3709 = vsel %vm865, %v3706, %v3708
    %3710 = vrot.lane.b32.xlu0 %v3702, 126
    %v3711 = vpop.permute.xlu0 %3710
    %3712 = vrot.lane.b32.xlu0 %v3704, 126
    %v3713 = vpop.permute.xlu0 %3712
    %3714 = vrot.lane.b32.xlu0 %v3707, 126
    %v3715 = vpop.permute.xlu0 %3714
    %3716 = vrot.lane.b32.xlu0 %v3709, 126
    %v3717 = vpop.permute.xlu0 %3716
    %v3722 = vadd.f32 %v3562, %v3711
    %v3723 = vadd.f32 %v3563, %v3713
    %v3724 = vadd.f32 %v3564, %v3715
    %v3725 = vadd.f32 %v3565, %v3717
    %s3726 = sld [smem:[#allocation11 + $0x62]]
    %v3727 = vstv %s3726
    %v3728 = vmul.f32 %v2624, %v3727
    %v3729 = vmul.f32 %v2625, %v3727
    %v3730 = vmul.f32 %v2626, %v3727
    %v3731 = vmul.f32 %v2627, %v3727
    %v3732 = vmul.f32 %v2628, %v3727
    %v3733 = vmul.f32 %v2629, %v3727
    %v3740 = vrot.slane %v3728, 2
    %v3741 = vrot.slane %v3729, 2
    %v3742 = vsel %vm865, %v3740, %v3741
    %v3743 = vrot.slane %v3730, 2
    %v3744 = vsel %vm865, %v3741, %v3743
    %v3745 = vrot.slane %v3731, 2
    %v3746 = vrot.slane %v3732, 2
    %v3747 = vsel %vm865, %v3745, %v3746
    %v3748 = vrot.slane %v3733, 2
    %v3749 = vsel %vm865, %v3746, %v3748
    %3750 = vrot.lane.b32.xlu0 %v3742, 126
    %v3751 = vpop.permute.xlu0 %3750
    %3752 = vrot.lane.b32.xlu0 %v3744, 126
    %v3753 = vpop.permute.xlu0 %3752
    %3754 = vrot.lane.b32.xlu0 %v3747, 126
    %v3755 = vpop.permute.xlu0 %3754
    %3756 = vrot.lane.b32.xlu0 %v3749, 126
    %v3757 = vpop.permute.xlu0 %3756
    %v3762 = vadd.f32 %v3602, %v3751
    %v3763 = vadd.f32 %v3603, %v3753
    %v3764 = vadd.f32 %v3604, %v3755
    %v3765 = vadd.f32 %v3605, %v3757
    %s3766 = sld [smem:[#allocation11 + $0x8f]]
    %v3767 = vstv %s3766
    %v3768 = vmul.f32 %v2624, %v3767
    %v3769 = vmul.f32 %v2625, %v3767
    %v3770 = vmul.f32 %v2626, %v3767
    %v3771 = vmul.f32 %v2627, %v3767
    %v3772 = vmul.f32 %v2628, %v3767
    %v3773 = vmul.f32 %v2629, %v3767
    %v3780 = vrot.slane %v3768, 2
    %v3781 = vrot.slane %v3769, 2
    %v3782 = vsel %vm865, %v3780, %v3781
    %v3783 = vrot.slane %v3770, 2
    %v3784 = vsel %vm865, %v3781, %v3783
    %v3785 = vrot.slane %v3771, 2
    %v3786 = vrot.slane %v3772, 2
    %v3787 = vsel %vm865, %v3785, %v3786
    %v3788 = vrot.slane %v3773, 2
    %v3789 = vsel %vm865, %v3786, %v3788
    %3790 = vrot.lane.b32.xlu0 %v3782, 126
    %v3791 = vpop.permute.xlu0 %3790
    %3792 = vrot.lane.b32.xlu0 %v3784, 126
    %v3793 = vpop.permute.xlu0 %3792
    %3794 = vrot.lane.b32.xlu0 %v3787, 126
    %v3795 = vpop.permute.xlu0 %3794
    %3796 = vrot.lane.b32.xlu0 %v3789, 126
    %v3797 = vpop.permute.xlu0 %3796
    %v3802 = vadd.f32 %v3642, %v3791
    %v3803 = vadd.f32 %v3643, %v3793
    %v3804 = vadd.f32 %v3644, %v3795
    %v3805 = vadd.f32 %v3645, %v3797
    %s3806 = sld [smem:[#allocation11 + $0x9]]
    %v3807 = vstv %s3806
    %v3808 = vmul.f32 %v2630, %v3807
    %v3809 = vmul.f32 %v2631, %v3807
    %v3810 = vmul.f32 %v2633, %v3807
    %v3811 = vmul.f32 %v2634, %v3807
    %v3812 = vadd.f32 %v3682, %v3808
    %v3813 = vadd.f32 %v3683, %v3809
    %v3814 = vadd.f32 %v3684, %v3810
    %v3815 = vadd.f32 %v3685, %v3811
    %s3816 = sld [smem:[#allocation11 + $0x36]]
    %v3817 = vstv %s3816
    %v3818 = vmul.f32 %v2630, %v3817
    %v3819 = vmul.f32 %v2631, %v3817
    %v3820 = vmul.f32 %v2633, %v3817
    %v3821 = vmul.f32 %v2634, %v3817
    %v3822 = vadd.f32 %v3722, %v3818
    %v3823 = vadd.f32 %v3723, %v3819
    %v3824 = vadd.f32 %v3724, %v3820
    %v3825 = vadd.f32 %v3725, %v3821
    %s3826 = sld [smem:[#allocation11 + $0x63]]
    %v3827 = vstv %s3826
    %v3828 = vmul.f32 %v2630, %v3827
    %v3829 = vmul.f32 %v2631, %v3827
    %v3830 = vmul.f32 %v2633, %v3827
    %v3831 = vmul.f32 %v2634, %v3827
    %v3832 = vadd.f32 %v3762, %v3828
    %v3833 = vadd.f32 %v3763, %v3829
    %v3834 = vadd.f32 %v3764, %v3830
    %v3835 = vadd.f32 %v3765, %v3831
    %s3836 = sld [smem:[#allocation11 + $0x90]]
    %v3837 = vstv %s3836
    %v3838 = vmul.f32 %v2630, %v3837
    %v3839 = vmul.f32 %v2631, %v3837
    %v3840 = vmul.f32 %v2633, %v3837
    %v3841 = vmul.f32 %v2634, %v3837
    %v3842 = vadd.f32 %v3802, %v3838
    %v3843 = vadd.f32 %v3803, %v3839
    %v3844 = vadd.f32 %v3804, %v3840
    %v3845 = vadd.f32 %v3805, %v3841
    %s3846 = sld [smem:[#allocation11 + $0xa]]
    %v3847 = vstv %s3846
    %v3848 = vmul.f32 %v2630, %v3847
    %v3849 = vmul.f32 %v2631, %v3847
    %v3850 = vmul.f32 %v2633, %v3847
    %v3851 = vmul.f32 %v2634, %v3847
    %3856 = vrot.lane.b32.xlu0 %v3848, 127
    %v3857 = vpop.permute.xlu0 %3856
    %3858 = vrot.lane.b32.xlu0 %v3849, 127
    %v3859 = vpop.permute.xlu0 %3858
    %3860 = vrot.lane.b32.xlu0 %v3850, 127
    %v3861 = vpop.permute.xlu0 %3860
    %3862 = vrot.lane.b32.xlu0 %v3851, 127
    %v3863 = vpop.permute.xlu0 %3862
    %v3868 = vadd.f32 %v3812, %v3857
    %v3869 = vadd.f32 %v3813, %v3859
    %v3870 = vadd.f32 %v3814, %v3861
    %v3871 = vadd.f32 %v3815, %v3863
    %s3872 = sld [smem:[#allocation11 + $0x37]]
    %v3873 = vstv %s3872
    %v3874 = vmul.f32 %v2630, %v3873
    %v3875 = vmul.f32 %v2631, %v3873
    %v3876 = vmul.f32 %v2633, %v3873
    %v3877 = vmul.f32 %v2634, %v3873
    %3882 = vrot.lane.b32.xlu0 %v3874, 127
    %v3883 = vpop.permute.xlu0 %3882
    %3884 = vrot.lane.b32.xlu0 %v3875, 127
    %v3885 = vpop.permute.xlu0 %3884
    %3886 = vrot.lane.b32.xlu0 %v3876, 127
    %v3887 = vpop.permute.xlu0 %3886
    %3888 = vrot.lane.b32.xlu0 %v3877, 127
    %v3889 = vpop.permute.xlu0 %3888
    %v3894 = vadd.f32 %v3822, %v3883
    %v3895 = vadd.f32 %v3823, %v3885
    %v3896 = vadd.f32 %v3824, %v3887
    %v3897 = vadd.f32 %v3825, %v3889
    %s3898 = sld [smem:[#allocation11 + $0x64]]
    %v3899 = vstv %s3898
    %v3900 = vmul.f32 %v2630, %v3899
    %v3901 = vmul.f32 %v2631, %v3899
    %v3902 = vmul.f32 %v2633, %v3899
    %v3903 = vmul.f32 %v2634, %v3899
    %3908 = vrot.lane.b32.xlu0 %v3900, 127
    %v3909 = vpop.permute.xlu0 %3908
    %3910 = vrot.lane.b32.xlu0 %v3901, 127
    %v3911 = vpop.permute.xlu0 %3910
    %3912 = vrot.lane.b32.xlu0 %v3902, 127
    %v3913 = vpop.permute.xlu0 %3912
    %3914 = vrot.lane.b32.xlu0 %v3903, 127
    %v3915 = vpop.permute.xlu0 %3914
    %v3920 = vadd.f32 %v3832, %v3909
    %v3921 = vadd.f32 %v3833, %v3911
    %v3922 = vadd.f32 %v3834, %v3913
    %v3923 = vadd.f32 %v3835, %v3915
    %s3924 = sld [smem:[#allocation11 + $0x91]]
    %v3925 = vstv %s3924
    %v3926 = vmul.f32 %v2630, %v3925
    %v3927 = vmul.f32 %v2631, %v3925
    %v3928 = vmul.f32 %v2633, %v3925
    %v3929 = vmul.f32 %v2634, %v3925
    %3934 = vrot.lane.b32.xlu0 %v3926, 127
    %v3935 = vpop.permute.xlu0 %3934
    %3936 = vrot.lane.b32.xlu0 %v3927, 127
    %v3937 = vpop.permute.xlu0 %3936
    %3938 = vrot.lane.b32.xlu0 %v3928, 127
    %v3939 = vpop.permute.xlu0 %3938
    %3940 = vrot.lane.b32.xlu0 %v3929, 127
    %v3941 = vpop.permute.xlu0 %3940
    %v3946 = vadd.f32 %v3842, %v3935
    %v3947 = vadd.f32 %v3843, %v3937
    %v3948 = vadd.f32 %v3844, %v3939
    %v3949 = vadd.f32 %v3845, %v3941
    %s3950 = sld [smem:[#allocation11 + $0xb]]
    %v3951 = vstv %s3950
    %v3952 = vmul.f32 %v2630, %v3951
    %v3953 = vmul.f32 %v2631, %v3951
    %v3954 = vmul.f32 %v2633, %v3951
    %v3955 = vmul.f32 %v2634, %v3951
    %3960 = vrot.lane.b32.xlu0 %v3952, 126
    %v3961 = vpop.permute.xlu0 %3960
    %3962 = vrot.lane.b32.xlu0 %v3953, 126
    %v3963 = vpop.permute.xlu0 %3962
    %3964 = vrot.lane.b32.xlu0 %v3954, 126
    %v3965 = vpop.permute.xlu0 %3964
    %3966 = vrot.lane.b32.xlu0 %v3955, 126
    %v3967 = vpop.permute.xlu0 %3966
    %v3972 = vadd.f32 %v3868, %v3961
    %v3973 = vadd.f32 %v3869, %v3963
    %v3974 = vadd.f32 %v3870, %v3965
    %v3975 = vadd.f32 %v3871, %v3967
    %s3976 = sld [smem:[#allocation11 + $0x38]]
    %v3977 = vstv %s3976
    %v3978 = vmul.f32 %v2630, %v3977
    %v3979 = vmul.f32 %v2631, %v3977
    %v3980 = vmul.f32 %v2633, %v3977
    %v3981 = vmul.f32 %v2634, %v3977
    %3986 = vrot.lane.b32.xlu0 %v3978, 126
    %v3987 = vpop.permute.xlu0 %3986
    %3988 = vrot.lane.b32.xlu0 %v3979, 126
    %v3989 = vpop.permute.xlu0 %3988
    %3990 = vrot.lane.b32.xlu0 %v3980, 126
    %v3991 = vpop.permute.xlu0 %3990
    %3992 = vrot.lane.b32.xlu0 %v3981, 126
    %v3993 = vpop.permute.xlu0 %3992
    %v3998 = vadd.f32 %v3894, %v3987
    %v3999 = vadd.f32 %v3895, %v3989
    %v4000 = vadd.f32 %v3896, %v3991
    %v4001 = vadd.f32 %v3897, %v3993
    %s4002 = sld [smem:[#allocation11 + $0x65]]
    %v4003 = vstv %s4002
    %v4004 = vmul.f32 %v2630, %v4003
    %v4005 = vmul.f32 %v2631, %v4003
    %v4006 = vmul.f32 %v2633, %v4003
    %v4007 = vmul.f32 %v2634, %v4003
    %4012 = vrot.lane.b32.xlu0 %v4004, 126
    %v4013 = vpop.permute.xlu0 %4012
    %4014 = vrot.lane.b32.xlu0 %v4005, 126
    %v4015 = vpop.permute.xlu0 %4014
    %4016 = vrot.lane.b32.xlu0 %v4006, 126
    %v4017 = vpop.permute.xlu0 %4016
    %4018 = vrot.lane.b32.xlu0 %v4007, 126
    %v4019 = vpop.permute.xlu0 %4018
    %v4024 = vadd.f32 %v3920, %v4013
    %v4025 = vadd.f32 %v3921, %v4015
    %v4026 = vadd.f32 %v3922, %v4017
    %v4027 = vadd.f32 %v3923, %v4019
    %s4028 = sld [smem:[#allocation11 + $0x92]]
    %v4029 = vstv %s4028
    %v4030 = vmul.f32 %v2630, %v4029
    %v4031 = vmul.f32 %v2631, %v4029
    %v4032 = vmul.f32 %v2633, %v4029
    %v4033 = vmul.f32 %v2634, %v4029
    %4038 = vrot.lane.b32.xlu0 %v4030, 126
    %v4039 = vpop.permute.xlu0 %4038
    %4040 = vrot.lane.b32.xlu0 %v4031, 126
    %v4041 = vpop.permute.xlu0 %4040
    %4042 = vrot.lane.b32.xlu0 %v4032, 126
    %v4043 = vpop.permute.xlu0 %4042
    %4044 = vrot.lane.b32.xlu0 %v4033, 126
    %v4045 = vpop.permute.xlu0 %4044
    %v4050 = vadd.f32 %v3946, %v4039
    %v4051 = vadd.f32 %v3947, %v4041
    %v4052 = vadd.f32 %v3948, %v4043
    %v4053 = vadd.f32 %v3949, %v4045
    %s4054 = sld [smem:[#allocation11 + $0xc]]
    %v4055 = vstv %s4054
    %v4056 = vmul.f32 %v2630, %v4055
    %v4057 = vmul.f32 %v2631, %v4055
    %v4058 = vmul.f32 %v2632, %v4055
    %v4059 = vmul.f32 %v2633, %v4055
    %v4060 = vmul.f32 %v2634, %v4055
    %v4061 = vmul.f32 %v2635, %v4055
    %v4068 = vrot.slane %v4056, 1
    %v4069 = vrot.slane %v4057, 1
    %v4070 = vsel %vm424, %v4068, %v4069
    %v4071 = vrot.slane %v4058, 1
    %v4072 = vsel %vm424, %v4069, %v4071
    %v4073 = vrot.slane %v4059, 1
    %v4074 = vrot.slane %v4060, 1
    %v4075 = vsel %vm424, %v4073, %v4074
    %v4076 = vrot.slane %v4061, 1
    %v4077 = vsel %vm424, %v4074, %v4076
    %v4082 = vadd.f32 %v3972, %v4070
    %v4083 = vadd.f32 %v3973, %v4072
    %v4084 = vadd.f32 %v3974, %v4075
    %v4085 = vadd.f32 %v3975, %v4077
    %s4086 = sld [smem:[#allocation11 + $0x39]]
    %v4087 = vstv %s4086
    %v4088 = vmul.f32 %v2630, %v4087
    %v4089 = vmul.f32 %v2631, %v4087
    %v4090 = vmul.f32 %v2632, %v4087
    %v4091 = vmul.f32 %v2633, %v4087
    %v4092 = vmul.f32 %v2634, %v4087
    %v4093 = vmul.f32 %v2635, %v4087
    %v4100 = vrot.slane %v4088, 1
    %v4101 = vrot.slane %v4089, 1
    %v4102 = vsel %vm424, %v4100, %v4101
    %v4103 = vrot.slane %v4090, 1
    %v4104 = vsel %vm424, %v4101, %v4103
    %v4105 = vrot.slane %v4091, 1
    %v4106 = vrot.slane %v4092, 1
    %v4107 = vsel %vm424, %v4105, %v4106
    %v4108 = vrot.slane %v4093, 1
    %v4109 = vsel %vm424, %v4106, %v4108
    %v4114 = vadd.f32 %v3998, %v4102
    %v4115 = vadd.f32 %v3999, %v4104
    %v4116 = vadd.f32 %v4000, %v4107
    %v4117 = vadd.f32 %v4001, %v4109
    %s4118 = sld [smem:[#allocation11 + $0x66]]
    %v4119 = vstv %s4118
    %v4120 = vmul.f32 %v2630, %v4119
    %v4121 = vmul.f32 %v2631, %v4119
    %v4122 = vmul.f32 %v2632, %v4119
    %v4123 = vmul.f32 %v2633, %v4119
    %v4124 = vmul.f32 %v2634, %v4119
    %v4125 = vmul.f32 %v2635, %v4119
    %v4132 = vrot.slane %v4120, 1
    %v4133 = vrot.slane %v4121, 1
    %v4134 = vsel %vm424, %v4132, %v4133
    %v4135 = vrot.slane %v4122, 1
    %v4136 = vsel %vm424, %v4133, %v4135
    %v4137 = vrot.slane %v4123, 1
    %v4138 = vrot.slane %v4124, 1
    %v4139 = vsel %vm424, %v4137, %v4138
    %v4140 = vrot.slane %v4125, 1
    %v4141 = vsel %vm424, %v4138, %v4140
    %v4146 = vadd.f32 %v4024, %v4134
    %v4147 = vadd.f32 %v4025, %v4136
    %v4148 = vadd.f32 %v4026, %v4139
    %v4149 = vadd.f32 %v4027, %v4141
    %s4150 = sld [smem:[#allocation11 + $0x93]]
    %v4151 = vstv %s4150
    %v4152 = vmul.f32 %v2630, %v4151
    %v4153 = vmul.f32 %v2631, %v4151
    %v4154 = vmul.f32 %v2632, %v4151
    %v4155 = vmul.f32 %v2633, %v4151
    %v4156 = vmul.f32 %v2634, %v4151
    %v4157 = vmul.f32 %v2635, %v4151
    %v4164 = vrot.slane %v4152, 1
    %v4165 = vrot.slane %v4153, 1
    %v4166 = vsel %vm424, %v4164, %v4165
    %v4167 = vrot.slane %v4154, 1
    %v4168 = vsel %vm424, %v4165, %v4167
    %v4169 = vrot.slane %v4155, 1
    %v4170 = vrot.slane %v4156, 1
    %v4171 = vsel %vm424, %v4169, %v4170
    %v4172 = vrot.slane %v4157, 1
    %v4173 = vsel %vm424, %v4170, %v4172
    %v4178 = vadd.f32 %v4050, %v4166
    %v4179 = vadd.f32 %v4051, %v4168
    %v4180 = vadd.f32 %v4052, %v4171
    %v4181 = vadd.f32 %v4053, %v4173
    %s4182 = sld [smem:[#allocation11 + $0xd]]
    %v4183 = vstv %s4182
    %v4184 = vmul.f32 %v2630, %v4183
    %v4185 = vmul.f32 %v2631, %v4183
    %v4186 = vmul.f32 %v2632, %v4183
    %v4187 = vmul.f32 %v2633, %v4183
    %v4188 = vmul.f32 %v2634, %v4183
    %v4189 = vmul.f32 %v2635, %v4183
    %v4196 = vrot.slane %v4184, 1
    %v4197 = vrot.slane %v4185, 1
    %v4198 = vsel %vm424, %v4196, %v4197
    %v4199 = vrot.slane %v4186, 1
    %v4200 = vsel %vm424, %v4197, %v4199
    %v4201 = vrot.slane %v4187, 1
    %v4202 = vrot.slane %v4188, 1
    %v4203 = vsel %vm424, %v4201, %v4202
    %v4204 = vrot.slane %v4189, 1
    %v4205 = vsel %vm424, %v4202, %v4204
    %4206 = vrot.lane.b32.xlu0 %v4198, 127
    %v4207 = vpop.permute.xlu0 %4206
    %4208 = vrot.lane.b32.xlu0 %v4200, 127
    %v4209 = vpop.permute.xlu0 %4208
    %4210 = vrot.lane.b32.xlu0 %v4203, 127
    %v4211 = vpop.permute.xlu0 %4210
    %4212 = vrot.lane.b32.xlu0 %v4205, 127
    %v4213 = vpop.permute.xlu0 %4212
    %v4218 = vadd.f32 %v4082, %v4207
    %v4219 = vadd.f32 %v4083, %v4209
    %v4220 = vadd.f32 %v4084, %v4211
    %v4221 = vadd.f32 %v4085, %v4213
    %s4222 = sld [smem:[#allocation11 + $0x3a]]
    %v4223 = vstv %s4222
    %v4224 = vmul.f32 %v2630, %v4223
    %v4225 = vmul.f32 %v2631, %v4223
    %v4226 = vmul.f32 %v2632, %v4223
    %v4227 = vmul.f32 %v2633, %v4223
    %v4228 = vmul.f32 %v2634, %v4223
    %v4229 = vmul.f32 %v2635, %v4223
    %v4236 = vrot.slane %v4224, 1
    %v4237 = vrot.slane %v4225, 1
    %v4238 = vsel %vm424, %v4236, %v4237
    %v4239 = vrot.slane %v4226, 1
    %v4240 = vsel %vm424, %v4237, %v4239
    %v4241 = vrot.slane %v4227, 1
    %v4242 = vrot.slane %v4228, 1
    %v4243 = vsel %vm424, %v4241, %v4242
    %v4244 = vrot.slane %v4229, 1
    %v4245 = vsel %vm424, %v4242, %v4244
    %4246 = vrot.lane.b32.xlu0 %v4238, 127
    %v4247 = vpop.permute.xlu0 %4246
    %4248 = vrot.lane.b32.xlu0 %v4240, 127
    %v4249 = vpop.permute.xlu0 %4248
    %4250 = vrot.lane.b32.xlu0 %v4243, 127
    %v4251 = vpop.permute.xlu0 %4250
    %4252 = vrot.lane.b32.xlu0 %v4245, 127
    %v4253 = vpop.permute.xlu0 %4252
    %v4258 = vadd.f32 %v4114, %v4247
    %v4259 = vadd.f32 %v4115, %v4249
    %v4260 = vadd.f32 %v4116, %v4251
    %v4261 = vadd.f32 %v4117, %v4253
    %s4262 = sld [smem:[#allocation11 + $0x67]]
    %v4263 = vstv %s4262
    %v4264 = vmul.f32 %v2630, %v4263
    %v4265 = vmul.f32 %v2631, %v4263
    %v4266 = vmul.f32 %v2632, %v4263
    %v4267 = vmul.f32 %v2633, %v4263
    %v4268 = vmul.f32 %v2634, %v4263
    %v4269 = vmul.f32 %v2635, %v4263
    %v4276 = vrot.slane %v4264, 1
    %v4277 = vrot.slane %v4265, 1
    %v4278 = vsel %vm424, %v4276, %v4277
    %v4279 = vrot.slane %v4266, 1
    %v4280 = vsel %vm424, %v4277, %v4279
    %v4281 = vrot.slane %v4267, 1
    %v4282 = vrot.slane %v4268, 1
    %v4283 = vsel %vm424, %v4281, %v4282
    %v4284 = vrot.slane %v4269, 1
    %v4285 = vsel %vm424, %v4282, %v4284
    %4286 = vrot.lane.b32.xlu0 %v4278, 127
    %v4287 = vpop.permute.xlu0 %4286
    %4288 = vrot.lane.b32.xlu0 %v4280, 127
    %v4289 = vpop.permute.xlu0 %4288
    %4290 = vrot.lane.b32.xlu0 %v4283, 127
    %v4291 = vpop.permute.xlu0 %4290
    %4292 = vrot.lane.b32.xlu0 %v4285, 127
    %v4293 = vpop.permute.xlu0 %4292
    %v4298 = vadd.f32 %v4146, %v4287
    %v4299 = vadd.f32 %v4147, %v4289
    %v4300 = vadd.f32 %v4148, %v4291
    %v4301 = vadd.f32 %v4149, %v4293
    %s4302 = sld [smem:[#allocation11 + $0x94]]
    %v4303 = vstv %s4302
    %v4304 = vmul.f32 %v2630, %v4303
    %v4305 = vmul.f32 %v2631, %v4303
    %v4306 = vmul.f32 %v2632, %v4303
    %v4307 = vmul.f32 %v2633, %v4303
    %v4308 = vmul.f32 %v2634, %v4303
    %v4309 = vmul.f32 %v2635, %v4303
    %v4316 = vrot.slane %v4304, 1
    %v4317 = vrot.slane %v4305, 1
    %v4318 = vsel %vm424, %v4316, %v4317
    %v4319 = vrot.slane %v4306, 1
    %v4320 = vsel %vm424, %v4317, %v4319
    %v4321 = vrot.slane %v4307, 1
    %v4322 = vrot.slane %v4308, 1
    %v4323 = vsel %vm424, %v4321, %v4322
    %v4324 = vrot.slane %v4309, 1
    %v4325 = vsel %vm424, %v4322, %v4324
    %4326 = vrot.lane.b32.xlu0 %v4318, 127
    %v4327 = vpop.permute.xlu0 %4326
    %4328 = vrot.lane.b32.xlu0 %v4320, 127
    %v4329 = vpop.permute.xlu0 %4328
    %4330 = vrot.lane.b32.xlu0 %v4323, 127
    %v4331 = vpop.permute.xlu0 %4330
    %4332 = vrot.lane.b32.xlu0 %v4325, 127
    %v4333 = vpop.permute.xlu0 %4332
    %v4338 = vadd.f32 %v4178, %v4327
    %v4339 = vadd.f32 %v4179, %v4329
    %v4340 = vadd.f32 %v4180, %v4331
    %v4341 = vadd.f32 %v4181, %v4333
    %s4342 = sld [smem:[#allocation11 + $0xe]]
    %v4343 = vstv %s4342
    %v4344 = vmul.f32 %v2630, %v4343
    %v4345 = vmul.f32 %v2631, %v4343
    %v4346 = vmul.f32 %v2632, %v4343
    %v4347 = vmul.f32 %v2633, %v4343
    %v4348 = vmul.f32 %v2634, %v4343
    %v4349 = vmul.f32 %v2635, %v4343
    %v4356 = vrot.slane %v4344, 1
    %v4357 = vrot.slane %v4345, 1
    %v4358 = vsel %vm424, %v4356, %v4357
    %v4359 = vrot.slane %v4346, 1
    %v4360 = vsel %vm424, %v4357, %v4359
    %v4361 = vrot.slane %v4347, 1
    %v4362 = vrot.slane %v4348, 1
    %v4363 = vsel %vm424, %v4361, %v4362
    %v4364 = vrot.slane %v4349, 1
    %v4365 = vsel %vm424, %v4362, %v4364
    %4366 = vrot.lane.b32.xlu0 %v4358, 126
    %v4367 = vpop.permute.xlu0 %4366
    %4368 = vrot.lane.b32.xlu0 %v4360, 126
    %v4369 = vpop.permute.xlu0 %4368
    %4370 = vrot.lane.b32.xlu0 %v4363, 126
    %v4371 = vpop.permute.xlu0 %4370
    %4372 = vrot.lane.b32.xlu0 %v4365, 126
    %v4373 = vpop.permute.xlu0 %4372
    %v4378 = vadd.f32 %v4218, %v4367
    %v4379 = vadd.f32 %v4219, %v4369
    %v4380 = vadd.f32 %v4220, %v4371
    %v4381 = vadd.f32 %v4221, %v4373
    %s4382 = sld [smem:[#allocation11 + $0x3b]]
    %v4383 = vstv %s4382
    %v4384 = vmul.f32 %v2630, %v4383
    %v4385 = vmul.f32 %v2631, %v4383
    %v4386 = vmul.f32 %v2632, %v4383
    %v4387 = vmul.f32 %v2633, %v4383
    %v4388 = vmul.f32 %v2634, %v4383
    %v4389 = vmul.f32 %v2635, %v4383
    %v4396 = vrot.slane %v4384, 1
    %v4397 = vrot.slane %v4385, 1
    %v4398 = vsel %vm424, %v4396, %v4397
    %v4399 = vrot.slane %v4386, 1
    %v4400 = vsel %vm424, %v4397, %v4399
    %v4401 = vrot.slane %v4387, 1
    %v4402 = vrot.slane %v4388, 1
    %v4403 = vsel %vm424, %v4401, %v4402
    %v4404 = vrot.slane %v4389, 1
    %v4405 = vsel %vm424, %v4402, %v4404
    %4406 = vrot.lane.b32.xlu0 %v4398, 126
    %v4407 = vpop.permute.xlu0 %4406
    %4408 = vrot.lane.b32.xlu0 %v4400, 126
    %v4409 = vpop.permute.xlu0 %4408
    %4410 = vrot.lane.b32.xlu0 %v4403, 126
    %v4411 = vpop.permute.xlu0 %4410
    %4412 = vrot.lane.b32.xlu0 %v4405, 126
    %v4413 = vpop.permute.xlu0 %4412
    %v4418 = vadd.f32 %v4258, %v4407
    %v4419 = vadd.f32 %v4259, %v4409
    %v4420 = vadd.f32 %v4260, %v4411
    %v4421 = vadd.f32 %v4261, %v4413
    %s4422 = sld [smem:[#allocation11 + $0x68]]
    %v4423 = vstv %s4422
    %v4424 = vmul.f32 %v2630, %v4423
    %v4425 = vmul.f32 %v2631, %v4423
    %v4426 = vmul.f32 %v2632, %v4423
    %v4427 = vmul.f32 %v2633, %v4423
    %v4428 = vmul.f32 %v2634, %v4423
    %v4429 = vmul.f32 %v2635, %v4423
    %v4436 = vrot.slane %v4424, 1
    %v4437 = vrot.slane %v4425, 1
    %v4438 = vsel %vm424, %v4436, %v4437
    %v4439 = vrot.slane %v4426, 1
    %v4440 = vsel %vm424, %v4437, %v4439
    %v4441 = vrot.slane %v4427, 1
    %v4442 = vrot.slane %v4428, 1
    %v4443 = vsel %vm424, %v4441, %v4442
    %v4444 = vrot.slane %v4429, 1
    %v4445 = vsel %vm424, %v4442, %v4444
    %4446 = vrot.lane.b32.xlu0 %v4438, 126
    %v4447 = vpop.permute.xlu0 %4446
    %4448 = vrot.lane.b32.xlu0 %v4440, 126
    %v4449 = vpop.permute.xlu0 %4448
    %4450 = vrot.lane.b32.xlu0 %v4443, 126
    %v4451 = vpop.permute.xlu0 %4450
    %4452 = vrot.lane.b32.xlu0 %v4445, 126
    %v4453 = vpop.permute.xlu0 %4452
    %v4458 = vadd.f32 %v4298, %v4447
    %v4459 = vadd.f32 %v4299, %v4449
    %v4460 = vadd.f32 %v4300, %v4451
    %v4461 = vadd.f32 %v4301, %v4453
    %s4462 = sld [smem:[#allocation11 + $0x95]]
    %v4463 = vstv %s4462
    %v4464 = vmul.f32 %v2630, %v4463
    %v4465 = vmul.f32 %v2631, %v4463
    %v4466 = vmul.f32 %v2632, %v4463
    %v4467 = vmul.f32 %v2633, %v4463
    %v4468 = vmul.f32 %v2634, %v4463
    %v4469 = vmul.f32 %v2635, %v4463
    %v4476 = vrot.slane %v4464, 1
    %v4477 = vrot.slane %v4465, 1
    %v4478 = vsel %vm424, %v4476, %v4477
    %v4479 = vrot.slane %v4466, 1
    %v4480 = vsel %vm424, %v4477, %v4479
    %v4481 = vrot.slane %v4467, 1
    %v4482 = vrot.slane %v4468, 1
    %v4483 = vsel %vm424, %v4481, %v4482
    %v4484 = vrot.slane %v4469, 1
    %v4485 = vsel %vm424, %v4482, %v4484
    %4486 = vrot.lane.b32.xlu0 %v4478, 126
    %v4487 = vpop.permute.xlu0 %4486
    %4488 = vrot.lane.b32.xlu0 %v4480, 126
    %v4489 = vpop.permute.xlu0 %4488
    %4490 = vrot.lane.b32.xlu0 %v4483, 126
    %v4491 = vpop.permute.xlu0 %4490
    %4492 = vrot.lane.b32.xlu0 %v4485, 126
    %v4493 = vpop.permute.xlu0 %4492
    %v4498 = vadd.f32 %v4338, %v4487
    %v4499 = vadd.f32 %v4339, %v4489
    %v4500 = vadd.f32 %v4340, %v4491
    %v4501 = vadd.f32 %v4341, %v4493
    %s4502 = sld [smem:[#allocation11 + $0xf]]
    %v4503 = vstv %s4502
    %v4504 = vmul.f32 %v2630, %v4503
    %v4505 = vmul.f32 %v2631, %v4503
    %v4506 = vmul.f32 %v2632, %v4503
    %v4507 = vmul.f32 %v2633, %v4503
    %v4508 = vmul.f32 %v2634, %v4503
    %v4509 = vmul.f32 %v2635, %v4503
    %v4516 = vrot.slane %v4504, 2
    %v4517 = vrot.slane %v4505, 2
    %v4518 = vsel %vm865, %v4516, %v4517
    %v4519 = vrot.slane %v4506, 2
    %v4520 = vsel %vm865, %v4517, %v4519
    %v4521 = vrot.slane %v4507, 2
    %v4522 = vrot.slane %v4508, 2
    %v4523 = vsel %vm865, %v4521, %v4522
    %v4524 = vrot.slane %v4509, 2
    %v4525 = vsel %vm865, %v4522, %v4524
    %v4530 = vadd.f32 %v4378, %v4518
    %v4531 = vadd.f32 %v4379, %v4520
    %v4532 = vadd.f32 %v4380, %v4523
    %v4533 = vadd.f32 %v4381, %v4525
    %s4534 = sld [smem:[#allocation11 + $0x3c]]
    %v4535 = vstv %s4534
    %v4536 = vmul.f32 %v2630, %v4535
    %v4537 = vmul.f32 %v2631, %v4535
    %v4538 = vmul.f32 %v2632, %v4535
    %v4539 = vmul.f32 %v2633, %v4535
    %v4540 = vmul.f32 %v2634, %v4535
    %v4541 = vmul.f32 %v2635, %v4535
    %v4548 = vrot.slane %v4536, 2
    %v4549 = vrot.slane %v4537, 2
    %v4550 = vsel %vm865, %v4548, %v4549
    %v4551 = vrot.slane %v4538, 2
    %v4552 = vsel %vm865, %v4549, %v4551
    %v4553 = vrot.slane %v4539, 2
    %v4554 = vrot.slane %v4540, 2
    %v4555 = vsel %vm865, %v4553, %v4554
    %v4556 = vrot.slane %v4541, 2
    %v4557 = vsel %vm865, %v4554, %v4556
    %v4562 = vadd.f32 %v4418, %v4550
    %v4563 = vadd.f32 %v4419, %v4552
    %v4564 = vadd.f32 %v4420, %v4555
    %v4565 = vadd.f32 %v4421, %v4557
    %s4566 = sld [smem:[#allocation11 + $0x69]]
    %v4567 = vstv %s4566
    %v4568 = vmul.f32 %v2630, %v4567
    %v4569 = vmul.f32 %v2631, %v4567
    %v4570 = vmul.f32 %v2632, %v4567
    %v4571 = vmul.f32 %v2633, %v4567
    %v4572 = vmul.f32 %v2634, %v4567
    %v4573 = vmul.f32 %v2635, %v4567
    %v4580 = vrot.slane %v4568, 2
    %v4581 = vrot.slane %v4569, 2
    %v4582 = vsel %vm865, %v4580, %v4581
    %v4583 = vrot.slane %v4570, 2
    %v4584 = vsel %vm865, %v4581, %v4583
    %v4585 = vrot.slane %v4571, 2
    %v4586 = vrot.slane %v4572, 2
    %v4587 = vsel %vm865, %v4585, %v4586
    %v4588 = vrot.slane %v4573, 2
    %v4589 = vsel %vm865, %v4586, %v4588
    %v4594 = vadd.f32 %v4458, %v4582
    %v4595 = vadd.f32 %v4459, %v4584
    %v4596 = vadd.f32 %v4460, %v4587
    %v4597 = vadd.f32 %v4461, %v4589
    %s4598 = sld [smem:[#allocation11 + $0x96]]
    %v4599 = vstv %s4598
    %v4600 = vmul.f32 %v2630, %v4599
    %v4601 = vmul.f32 %v2631, %v4599
    %v4602 = vmul.f32 %v2632, %v4599
    %v4603 = vmul.f32 %v2633, %v4599
    %v4604 = vmul.f32 %v2634, %v4599
    %v4605 = vmul.f32 %v2635, %v4599
    %v4612 = vrot.slane %v4600, 2
    %v4613 = vrot.slane %v4601, 2
    %v4614 = vsel %vm865, %v4612, %v4613
    %v4615 = vrot.slane %v4602, 2
    %v4616 = vsel %vm865, %v4613, %v4615
    %v4617 = vrot.slane %v4603, 2
    %v4618 = vrot.slane %v4604, 2
    %v4619 = vsel %vm865, %v4617, %v4618
    %v4620 = vrot.slane %v4605, 2
    %v4621 = vsel %vm865, %v4618, %v4620
    %v4626 = vadd.f32 %v4498, %v4614
    %v4627 = vadd.f32 %v4499, %v4616
    %v4628 = vadd.f32 %v4500, %v4619
    %v4629 = vadd.f32 %v4501, %v4621
    %s4630 = sld [smem:[#allocation11 + $0x10]]
    %v4631 = vstv %s4630
    %v4632 = vmul.f32 %v2630, %v4631
    %v4633 = vmul.f32 %v2631, %v4631
    %v4634 = vmul.f32 %v2632, %v4631
    %v4635 = vmul.f32 %v2633, %v4631
    %v4636 = vmul.f32 %v2634, %v4631
    %v4637 = vmul.f32 %v2635, %v4631
    %v4644 = vrot.slane %v4632, 2
    %v4645 = vrot.slane %v4633, 2
    %v4646 = vsel %vm865, %v4644, %v4645
    %v4647 = vrot.slane %v4634, 2
    %v4648 = vsel %vm865, %v4645, %v4647
    %v4649 = vrot.slane %v4635, 2
    %v4650 = vrot.slane %v4636, 2
    %v4651 = vsel %vm865, %v4649, %v4650
    %v4652 = vrot.slane %v4637, 2
    %v4653 = vsel %vm865, %v4650, %v4652
    %4654 = vrot.lane.b32.xlu0 %v4646, 127
    %v4655 = vpop.permute.xlu0 %4654
    %4656 = vrot.lane.b32.xlu0 %v4648, 127
    %v4657 = vpop.permute.xlu0 %4656
    %4658 = vrot.lane.b32.xlu0 %v4651, 127
    %v4659 = vpop.permute.xlu0 %4658
    %4660 = vrot.lane.b32.xlu0 %v4653, 127
    %v4661 = vpop.permute.xlu0 %4660
    %v4666 = vadd.f32 %v4530, %v4655
    %v4667 = vadd.f32 %v4531, %v4657
    %v4668 = vadd.f32 %v4532, %v4659
    %v4669 = vadd.f32 %v4533, %v4661
    %s4670 = sld [smem:[#allocation11 + $0x3d]]
    %v4671 = vstv %s4670
    %v4672 = vmul.f32 %v2630, %v4671
    %v4673 = vmul.f32 %v2631, %v4671
    %v4674 = vmul.f32 %v2632, %v4671
    %v4675 = vmul.f32 %v2633, %v4671
    %v4676 = vmul.f32 %v2634, %v4671
    %v4677 = vmul.f32 %v2635, %v4671
    %v4684 = vrot.slane %v4672, 2
    %v4685 = vrot.slane %v4673, 2
    %v4686 = vsel %vm865, %v4684, %v4685
    %v4687 = vrot.slane %v4674, 2
    %v4688 = vsel %vm865, %v4685, %v4687
    %v4689 = vrot.slane %v4675, 2
    %v4690 = vrot.slane %v4676, 2
    %v4691 = vsel %vm865, %v4689, %v4690
    %v4692 = vrot.slane %v4677, 2
    %v4693 = vsel %vm865, %v4690, %v4692
    %4694 = vrot.lane.b32.xlu0 %v4686, 127
    %v4695 = vpop.permute.xlu0 %4694
    %4696 = vrot.lane.b32.xlu0 %v4688, 127
    %v4697 = vpop.permute.xlu0 %4696
    %4698 = vrot.lane.b32.xlu0 %v4691, 127
    %v4699 = vpop.permute.xlu0 %4698
    %4700 = vrot.lane.b32.xlu0 %v4693, 127
    %v4701 = vpop.permute.xlu0 %4700
    %v4706 = vadd.f32 %v4562, %v4695
    %v4707 = vadd.f32 %v4563, %v4697
    %v4708 = vadd.f32 %v4564, %v4699
    %v4709 = vadd.f32 %v4565, %v4701
    %s4710 = sld [smem:[#allocation11 + $0x6a]]
    %v4711 = vstv %s4710
    %v4712 = vmul.f32 %v2630, %v4711
    %v4713 = vmul.f32 %v2631, %v4711
    %v4714 = vmul.f32 %v2632, %v4711
    %v4715 = vmul.f32 %v2633, %v4711
    %v4716 = vmul.f32 %v2634, %v4711
    %v4717 = vmul.f32 %v2635, %v4711
    %v4724 = vrot.slane %v4712, 2
    %v4725 = vrot.slane %v4713, 2
    %v4726 = vsel %vm865, %v4724, %v4725
    %v4727 = vrot.slane %v4714, 2
    %v4728 = vsel %vm865, %v4725, %v4727
    %v4729 = vrot.slane %v4715, 2
    %v4730 = vrot.slane %v4716, 2
    %v4731 = vsel %vm865, %v4729, %v4730
    %v4732 = vrot.slane %v4717, 2
    %v4733 = vsel %vm865, %v4730, %v4732
    %4734 = vrot.lane.b32.xlu0 %v4726, 127
    %v4735 = vpop.permute.xlu0 %4734
    %4736 = vrot.lane.b32.xlu0 %v4728, 127
    %v4737 = vpop.permute.xlu0 %4736
    %4738 = vrot.lane.b32.xlu0 %v4731, 127
    %v4739 = vpop.permute.xlu0 %4738
    %4740 = vrot.lane.b32.xlu0 %v4733, 127
    %v4741 = vpop.permute.xlu0 %4740
    %v4746 = vadd.f32 %v4594, %v4735
    %v4747 = vadd.f32 %v4595, %v4737
    %v4748 = vadd.f32 %v4596, %v4739
    %v4749 = vadd.f32 %v4597, %v4741
    %s4750 = sld [smem:[#allocation11 + $0x97]]
    %v4751 = vstv %s4750
    %v4752 = vmul.f32 %v2630, %v4751
    %v4753 = vmul.f32 %v2631, %v4751
    %v4754 = vmul.f32 %v2632, %v4751
    %v4755 = vmul.f32 %v2633, %v4751
    %v4756 = vmul.f32 %v2634, %v4751
    %v4757 = vmul.f32 %v2635, %v4751
    %v4764 = vrot.slane %v4752, 2
    %v4765 = vrot.slane %v4753, 2
    %v4766 = vsel %vm865, %v4764, %v4765
    %v4767 = vrot.slane %v4754, 2
    %v4768 = vsel %vm865, %v4765, %v4767
    %v4769 = vrot.slane %v4755, 2
    %v4770 = vrot.slane %v4756, 2
    %v4771 = vsel %vm865, %v4769, %v4770
    %v4772 = vrot.slane %v4757, 2
    %v4773 = vsel %vm865, %v4770, %v4772
    %4774 = vrot.lane.b32.xlu0 %v4766, 127
    %v4775 = vpop.permute.xlu0 %4774
    %4776 = vrot.lane.b32.xlu0 %v4768, 127
    %v4777 = vpop.permute.xlu0 %4776
    %4778 = vrot.lane.b32.xlu0 %v4771, 127
    %v4779 = vpop.permute.xlu0 %4778
    %4780 = vrot.lane.b32.xlu0 %v4773, 127
    %v4781 = vpop.permute.xlu0 %4780
    %v4786 = vadd.f32 %v4626, %v4775
    %v4787 = vadd.f32 %v4627, %v4777
    %v4788 = vadd.f32 %v4628, %v4779
    %v4789 = vadd.f32 %v4629, %v4781
    %s4790 = sld [smem:[#allocation11 + $0x11]]
    %v4791 = vstv %s4790
    %v4792 = vmul.f32 %v2630, %v4791
    %v4793 = vmul.f32 %v2631, %v4791
    %v4794 = vmul.f32 %v2632, %v4791
    %v4795 = vmul.f32 %v2633, %v4791
    %v4796 = vmul.f32 %v2634, %v4791
    %v4797 = vmul.f32 %v2635, %v4791
    %v4804 = vrot.slane %v4792, 2
    %v4805 = vrot.slane %v4793, 2
    %v4806 = vsel %vm865, %v4804, %v4805
    %v4807 = vrot.slane %v4794, 2
    %v4808 = vsel %vm865, %v4805, %v4807
    %v4809 = vrot.slane %v4795, 2
    %v4810 = vrot.slane %v4796, 2
    %v4811 = vsel %vm865, %v4809, %v4810
    %v4812 = vrot.slane %v4797, 2
    %v4813 = vsel %vm865, %v4810, %v4812
    %4814 = vrot.lane.b32.xlu0 %v4806, 126
    %v4815 = vpop.permute.xlu0 %4814
    %4816 = vrot.lane.b32.xlu0 %v4808, 126
    %v4817 = vpop.permute.xlu0 %4816
    %4818 = vrot.lane.b32.xlu0 %v4811, 126
    %v4819 = vpop.permute.xlu0 %4818
    %4820 = vrot.lane.b32.xlu0 %v4813, 126
    %v4821 = vpop.permute.xlu0 %4820
    %v4826 = vadd.f32 %v4666, %v4815
    %v4827 = vadd.f32 %v4667, %v4817
    %v4828 = vadd.f32 %v4668, %v4819
    %v4829 = vadd.f32 %v4669, %v4821
    %s4830 = sld [smem:[#allocation11 + $0x3e]]
    %v4831 = vstv %s4830
    %v4832 = vmul.f32 %v2630, %v4831
    %v4833 = vmul.f32 %v2631, %v4831
    %v4834 = vmul.f32 %v2632, %v4831
    %v4835 = vmul.f32 %v2633, %v4831
    %v4836 = vmul.f32 %v2634, %v4831
    %v4837 = vmul.f32 %v2635, %v4831
    %v4844 = vrot.slane %v4832, 2
    %v4845 = vrot.slane %v4833, 2
    %v4846 = vsel %vm865, %v4844, %v4845
    %v4847 = vrot.slane %v4834, 2
    %v4848 = vsel %vm865, %v4845, %v4847
    %v4849 = vrot.slane %v4835, 2
    %v4850 = vrot.slane %v4836, 2
    %v4851 = vsel %vm865, %v4849, %v4850
    %v4852 = vrot.slane %v4837, 2
    %v4853 = vsel %vm865, %v4850, %v4852
    %4854 = vrot.lane.b32.xlu0 %v4846, 126
    %v4855 = vpop.permute.xlu0 %4854
    %4856 = vrot.lane.b32.xlu0 %v4848, 126
    %v4857 = vpop.permute.xlu0 %4856
    %4858 = vrot.lane.b32.xlu0 %v4851, 126
    %v4859 = vpop.permute.xlu0 %4858
    %4860 = vrot.lane.b32.xlu0 %v4853, 126
    %v4861 = vpop.permute.xlu0 %4860
    %v4866 = vadd.f32 %v4706, %v4855
    %v4867 = vadd.f32 %v4707, %v4857
    %v4868 = vadd.f32 %v4708, %v4859
    %v4869 = vadd.f32 %v4709, %v4861
    %s4870 = sld [smem:[#allocation11 + $0x6b]]
    %v4871 = vstv %s4870
    %v4872 = vmul.f32 %v2630, %v4871
    %v4873 = vmul.f32 %v2631, %v4871
    %v4874 = vmul.f32 %v2632, %v4871
    %v4875 = vmul.f32 %v2633, %v4871
    %v4876 = vmul.f32 %v2634, %v4871
    %v4877 = vmul.f32 %v2635, %v4871
    %v4884 = vrot.slane %v4872, 2
    %v4885 = vrot.slane %v4873, 2
    %v4886 = vsel %vm865, %v4884, %v4885
    %v4887 = vrot.slane %v4874, 2
    %v4888 = vsel %vm865, %v4885, %v4887
    %v4889 = vrot.slane %v4875, 2
    %v4890 = vrot.slane %v4876, 2
    %v4891 = vsel %vm865, %v4889, %v4890
    %v4892 = vrot.slane %v4877, 2
    %v4893 = vsel %vm865, %v4890, %v4892
    %4894 = vrot.lane.b32.xlu0 %v4886, 126
    %v4895 = vpop.permute.xlu0 %4894
    %4896 = vrot.lane.b32.xlu0 %v4888, 126
    %v4897 = vpop.permute.xlu0 %4896
    %4898 = vrot.lane.b32.xlu0 %v4891, 126
    %v4899 = vpop.permute.xlu0 %4898
    %4900 = vrot.lane.b32.xlu0 %v4893, 126
    %v4901 = vpop.permute.xlu0 %4900
    %v4906 = vadd.f32 %v4746, %v4895
    %v4907 = vadd.f32 %v4747, %v4897
    %v4908 = vadd.f32 %v4748, %v4899
    %v4909 = vadd.f32 %v4749, %v4901
    %s4910 = sld [smem:[#allocation11 + $0x98]]
    %v4911 = vstv %s4910
    %v4912 = vmul.f32 %v2630, %v4911
    %v4913 = vmul.f32 %v2631, %v4911
    %v4914 = vmul.f32 %v2632, %v4911
    %v4915 = vmul.f32 %v2633, %v4911
    %v4916 = vmul.f32 %v2634, %v4911
    %v4917 = vmul.f32 %v2635, %v4911
    %v4924 = vrot.slane %v4912, 2
    %v4925 = vrot.slane %v4913, 2
    %v4926 = vsel %vm865, %v4924, %v4925
    %v4927 = vrot.slane %v4914, 2
    %v4928 = vsel %vm865, %v4925, %v4927
    %v4929 = vrot.slane %v4915, 2
    %v4930 = vrot.slane %v4916, 2
    %v4931 = vsel %vm865, %v4929, %v4930
    %v4932 = vrot.slane %v4917, 2
    %v4933 = vsel %vm865, %v4930, %v4932
    %4934 = vrot.lane.b32.xlu0 %v4926, 126
    %v4935 = vpop.permute.xlu0 %4934
    %4936 = vrot.lane.b32.xlu0 %v4928, 126
    %v4937 = vpop.permute.xlu0 %4936
    %4938 = vrot.lane.b32.xlu0 %v4931, 126
    %v4939 = vpop.permute.xlu0 %4938
    %4940 = vrot.lane.b32.xlu0 %v4933, 126
    %v4941 = vpop.permute.xlu0 %4940
    %v4946 = vadd.f32 %v4786, %v4935
    %v4947 = vadd.f32 %v4787, %v4937
    %v4948 = vadd.f32 %v4788, %v4939
    %v4949 = vadd.f32 %v4789, %v4941
    %s4950 = sld [smem:[#allocation11 + $0x12]]
    %v4951 = vstv %s4950
    %v4952 = vmul.f32 %v2636, %v4951
    %v4953 = vmul.f32 %v2637, %v4951
    %v4954 = vmul.f32 %v2639, %v4951
    %v4955 = vmul.f32 %v2640, %v4951
    %v4956 = vadd.f32 %v4826, %v4952
    %v4957 = vadd.f32 %v4827, %v4953
    %v4958 = vadd.f32 %v4828, %v4954
    %v4959 = vadd.f32 %v4829, %v4955
    %s4960 = sld [smem:[#allocation11 + $0x3f]]
    %v4961 = vstv %s4960
    %v4962 = vmul.f32 %v2636, %v4961
    %v4963 = vmul.f32 %v2637, %v4961
    %v4964 = vmul.f32 %v2639, %v4961
    %v4965 = vmul.f32 %v2640, %v4961
    %v4966 = vadd.f32 %v4866, %v4962
    %v4967 = vadd.f32 %v4867, %v4963
    %v4968 = vadd.f32 %v4868, %v4964
    %v4969 = vadd.f32 %v4869, %v4965
    %s4970 = sld [smem:[#allocation11 + $0x6c]]
    %v4971 = vstv %s4970
    %v4972 = vmul.f32 %v2636, %v4971
    %v4973 = vmul.f32 %v2637, %v4971
    %v4974 = vmul.f32 %v2639, %v4971
    %v4975 = vmul.f32 %v2640, %v4971
    %v4976 = vadd.f32 %v4906, %v4972
    %v4977 = vadd.f32 %v4907, %v4973
    %v4978 = vadd.f32 %v4908, %v4974
    %v4979 = vadd.f32 %v4909, %v4975
    %s4980 = sld [smem:[#allocation11 + $0x99]]
    %v4981 = vstv %s4980
    %v4982 = vmul.f32 %v2636, %v4981
    %v4983 = vmul.f32 %v2637, %v4981
    %v4984 = vmul.f32 %v2639, %v4981
    %v4985 = vmul.f32 %v2640, %v4981
    %v4986 = vadd.f32 %v4946, %v4982
    %v4987 = vadd.f32 %v4947, %v4983
    %v4988 = vadd.f32 %v4948, %v4984
    %v4989 = vadd.f32 %v4949, %v4985
    %s4990 = sld [smem:[#allocation11 + $0x13]]
    %v4991 = vstv %s4990
    %v4992 = vmul.f32 %v2636, %v4991
    %v4993 = vmul.f32 %v2637, %v4991
    %v4994 = vmul.f32 %v2639, %v4991
    %v4995 = vmul.f32 %v2640, %v4991
    %5000 = vrot.lane.b32.xlu0 %v4992, 127
    %v5001 = vpop.permute.xlu0 %5000
    %5002 = vrot.lane.b32.xlu0 %v4993, 127
    %v5003 = vpop.permute.xlu0 %5002
    %5004 = vrot.lane.b32.xlu0 %v4994, 127
    %v5005 = vpop.permute.xlu0 %5004
    %5006 = vrot.lane.b32.xlu0 %v4995, 127
    %v5007 = vpop.permute.xlu0 %5006
    %v5012 = vadd.f32 %v4956, %v5001
    %v5013 = vadd.f32 %v4957, %v5003
    %v5014 = vadd.f32 %v4958, %v5005
    %v5015 = vadd.f32 %v4959, %v5007
    %s5016 = sld [smem:[#allocation11 + $0x40]]
    %v5017 = vstv %s5016
    %v5018 = vmul.f32 %v2636, %v5017
    %v5019 = vmul.f32 %v2637, %v5017
    %v5020 = vmul.f32 %v2639, %v5017
    %v5021 = vmul.f32 %v2640, %v5017
    %5026 = vrot.lane.b32.xlu0 %v5018, 127
    %v5027 = vpop.permute.xlu0 %5026
    %5028 = vrot.lane.b32.xlu0 %v5019, 127
    %v5029 = vpop.permute.xlu0 %5028
    %5030 = vrot.lane.b32.xlu0 %v5020, 127
    %v5031 = vpop.permute.xlu0 %5030
    %5032 = vrot.lane.b32.xlu0 %v5021, 127
    %v5033 = vpop.permute.xlu0 %5032
    %v5038 = vadd.f32 %v4966, %v5027
    %v5039 = vadd.f32 %v4967, %v5029
    %v5040 = vadd.f32 %v4968, %v5031
    %v5041 = vadd.f32 %v4969, %v5033
    %s5042 = sld [smem:[#allocation11 + $0x6d]]
    %v5043 = vstv %s5042
    %v5044 = vmul.f32 %v2636, %v5043
    %v5045 = vmul.f32 %v2637, %v5043
    %v5046 = vmul.f32 %v2639, %v5043
    %v5047 = vmul.f32 %v2640, %v5043
    %5052 = vrot.lane.b32.xlu0 %v5044, 127
    %v5053 = vpop.permute.xlu0 %5052
    %5054 = vrot.lane.b32.xlu0 %v5045, 127
    %v5055 = vpop.permute.xlu0 %5054
    %5056 = vrot.lane.b32.xlu0 %v5046, 127
    %v5057 = vpop.permute.xlu0 %5056
    %5058 = vrot.lane.b32.xlu0 %v5047, 127
    %v5059 = vpop.permute.xlu0 %5058
    %v5064 = vadd.f32 %v4976, %v5053
    %v5065 = vadd.f32 %v4977, %v5055
    %v5066 = vadd.f32 %v4978, %v5057
    %v5067 = vadd.f32 %v4979, %v5059
    %s5068 = sld [smem:[#allocation11 + $0x9a]]
    %v5069 = vstv %s5068
    %v5070 = vmul.f32 %v2636, %v5069
    %v5071 = vmul.f32 %v2637, %v5069
    %v5072 = vmul.f32 %v2639, %v5069
    %v5073 = vmul.f32 %v2640, %v5069
    %5078 = vrot.lane.b32.xlu0 %v5070, 127
    %v5079 = vpop.permute.xlu0 %5078
    %5080 = vrot.lane.b32.xlu0 %v5071, 127
    %v5081 = vpop.permute.xlu0 %5080
    %5082 = vrot.lane.b32.xlu0 %v5072, 127
    %v5083 = vpop.permute.xlu0 %5082
    %5084 = vrot.lane.b32.xlu0 %v5073, 127
    %v5085 = vpop.permute.xlu0 %5084
    %v5090 = vadd.f32 %v4986, %v5079
    %v5091 = vadd.f32 %v4987, %v5081
    %v5092 = vadd.f32 %v4988, %v5083
    %v5093 = vadd.f32 %v4989, %v5085
    %s5094 = sld [smem:[#allocation11 + $0x14]]
    %v5095 = vstv %s5094
    %v5096 = vmul.f32 %v2636, %v5095
    %v5097 = vmul.f32 %v2637, %v5095
    %v5098 = vmul.f32 %v2639, %v5095
    %v5099 = vmul.f32 %v2640, %v5095
    %5104 = vrot.lane.b32.xlu0 %v5096, 126
    %v5105 = vpop.permute.xlu0 %5104
    %5106 = vrot.lane.b32.xlu0 %v5097, 126
    %v5107 = vpop.permute.xlu0 %5106
    %5108 = vrot.lane.b32.xlu0 %v5098, 126
    %v5109 = vpop.permute.xlu0 %5108
    %5110 = vrot.lane.b32.xlu0 %v5099, 126
    %v5111 = vpop.permute.xlu0 %5110
    %v5116 = vadd.f32 %v5012, %v5105
    %v5117 = vadd.f32 %v5013, %v5107
    %v5118 = vadd.f32 %v5014, %v5109
    %v5119 = vadd.f32 %v5015, %v5111
    %s5120 = sld [smem:[#allocation11 + $0x41]]
    %v5121 = vstv %s5120
    %v5122 = vmul.f32 %v2636, %v5121
    %v5123 = vmul.f32 %v2637, %v5121
    %v5124 = vmul.f32 %v2639, %v5121
    %v5125 = vmul.f32 %v2640, %v5121
    %5130 = vrot.lane.b32.xlu0 %v5122, 126
    %v5131 = vpop.permute.xlu0 %5130
    %5132 = vrot.lane.b32.xlu0 %v5123, 126
    %v5133 = vpop.permute.xlu0 %5132
    %5134 = vrot.lane.b32.xlu0 %v5124, 126
    %v5135 = vpop.permute.xlu0 %5134
    %5136 = vrot.lane.b32.xlu0 %v5125, 126
    %v5137 = vpop.permute.xlu0 %5136
    %v5142 = vadd.f32 %v5038, %v5131
    %v5143 = vadd.f32 %v5039, %v5133
    %v5144 = vadd.f32 %v5040, %v5135
    %v5145 = vadd.f32 %v5041, %v5137
    %s5146 = sld [smem:[#allocation11 + $0x6e]]
    %v5147 = vstv %s5146
    %v5148 = vmul.f32 %v2636, %v5147
    %v5149 = vmul.f32 %v2637, %v5147
    %v5150 = vmul.f32 %v2639, %v5147
    %v5151 = vmul.f32 %v2640, %v5147
    %5156 = vrot.lane.b32.xlu0 %v5148, 126
    %v5157 = vpop.permute.xlu0 %5156
    %5158 = vrot.lane.b32.xlu0 %v5149, 126
    %v5159 = vpop.permute.xlu0 %5158
    %5160 = vrot.lane.b32.xlu0 %v5150, 126
    %v5161 = vpop.permute.xlu0 %5160
    %5162 = vrot.lane.b32.xlu0 %v5151, 126
    %v5163 = vpop.permute.xlu0 %5162
    %v5168 = vadd.f32 %v5064, %v5157
    %v5169 = vadd.f32 %v5065, %v5159
    %v5170 = vadd.f32 %v5066, %v5161
    %v5171 = vadd.f32 %v5067, %v5163
    %s5172 = sld [smem:[#allocation11 + $0x9b]]
    %v5173 = vstv %s5172
    %v5174 = vmul.f32 %v2636, %v5173
    %v5175 = vmul.f32 %v2637, %v5173
    %v5176 = vmul.f32 %v2639, %v5173
    %v5177 = vmul.f32 %v2640, %v5173
    %5182 = vrot.lane.b32.xlu0 %v5174, 126
    %v5183 = vpop.permute.xlu0 %5182
    %5184 = vrot.lane.b32.xlu0 %v5175, 126
    %v5185 = vpop.permute.xlu0 %5184
    %5186 = vrot.lane.b32.xlu0 %v5176, 126
    %v5187 = vpop.permute.xlu0 %5186
    %5188 = vrot.lane.b32.xlu0 %v5177, 126
    %v5189 = vpop.permute.xlu0 %5188
    %v5194 = vadd.f32 %v5090, %v5183
    %v5195 = vadd.f32 %v5091, %v5185
    %v5196 = vadd.f32 %v5092, %v5187
    %v5197 = vadd.f32 %v5093, %v5189
    %s5198 = sld [smem:[#allocation11 + $0x15]]
    %v5199 = vstv %s5198
    %v5200 = vmul.f32 %v2636, %v5199
    %v5201 = vmul.f32 %v2637, %v5199
    %v5202 = vmul.f32 %v2638, %v5199
    %v5203 = vmul.f32 %v2639, %v5199
    %v5204 = vmul.f32 %v2640, %v5199
    %v5205 = vmul.f32 %v2641, %v5199
    %v5212 = vrot.slane %v5200, 1
    %v5213 = vrot.slane %v5201, 1
    %v5214 = vsel %vm424, %v5212, %v5213
    %v5215 = vrot.slane %v5202, 1
    %v5216 = vsel %vm424, %v5213, %v5215
    %v5217 = vrot.slane %v5203, 1
    %v5218 = vrot.slane %v5204, 1
    %v5219 = vsel %vm424, %v5217, %v5218
    %v5220 = vrot.slane %v5205, 1
    %v5221 = vsel %vm424, %v5218, %v5220
    %v5226 = vadd.f32 %v5116, %v5214
    %v5227 = vadd.f32 %v5117, %v5216
    %v5228 = vadd.f32 %v5118, %v5219
    %v5229 = vadd.f32 %v5119, %v5221
    %s5230 = sld [smem:[#allocation11 + $0x42]]
    %v5231 = vstv %s5230
    %v5232 = vmul.f32 %v2636, %v5231
    %v5233 = vmul.f32 %v2637, %v5231
    %v5234 = vmul.f32 %v2638, %v5231
    %v5235 = vmul.f32 %v2639, %v5231
    %v5236 = vmul.f32 %v2640, %v5231
    %v5237 = vmul.f32 %v2641, %v5231
    %v5244 = vrot.slane %v5232, 1
    %v5245 = vrot.slane %v5233, 1
    %v5246 = vsel %vm424, %v5244, %v5245
    %v5247 = vrot.slane %v5234, 1
    %v5248 = vsel %vm424, %v5245, %v5247
    %v5249 = vrot.slane %v5235, 1
    %v5250 = vrot.slane %v5236, 1
    %v5251 = vsel %vm424, %v5249, %v5250
    %v5252 = vrot.slane %v5237, 1
    %v5253 = vsel %vm424, %v5250, %v5252
    %v5258 = vadd.f32 %v5142, %v5246
    %v5259 = vadd.f32 %v5143, %v5248
    %v5260 = vadd.f32 %v5144, %v5251
    %v5261 = vadd.f32 %v5145, %v5253
    %s5262 = sld [smem:[#allocation11 + $0x6f]]
    %v5263 = vstv %s5262
    %v5264 = vmul.f32 %v2636, %v5263
    %v5265 = vmul.f32 %v2637, %v5263
    %v5266 = vmul.f32 %v2638, %v5263
    %v5267 = vmul.f32 %v2639, %v5263
    %v5268 = vmul.f32 %v2640, %v5263
    %v5269 = vmul.f32 %v2641, %v5263
    %v5276 = vrot.slane %v5264, 1
    %v5277 = vrot.slane %v5265, 1
    %v5278 = vsel %vm424, %v5276, %v5277
    %v5279 = vrot.slane %v5266, 1
    %v5280 = vsel %vm424, %v5277, %v5279
    %v5281 = vrot.slane %v5267, 1
    %v5282 = vrot.slane %v5268, 1
    %v5283 = vsel %vm424, %v5281, %v5282
    %v5284 = vrot.slane %v5269, 1
    %v5285 = vsel %vm424, %v5282, %v5284
    %v5290 = vadd.f32 %v5168, %v5278
    %v5291 = vadd.f32 %v5169, %v5280
    %v5292 = vadd.f32 %v5170, %v5283
    %v5293 = vadd.f32 %v5171, %v5285
    %s5294 = sld [smem:[#allocation11 + $0x9c]]
    %v5295 = vstv %s5294
    %v5296 = vmul.f32 %v2636, %v5295
    %v5297 = vmul.f32 %v2637, %v5295
    %v5298 = vmul.f32 %v2638, %v5295
    %v5299 = vmul.f32 %v2639, %v5295
    %v5300 = vmul.f32 %v2640, %v5295
    %v5301 = vmul.f32 %v2641, %v5295
    %v5308 = vrot.slane %v5296, 1
    %v5309 = vrot.slane %v5297, 1
    %v5310 = vsel %vm424, %v5308, %v5309
    %v5311 = vrot.slane %v5298, 1
    %v5312 = vsel %vm424, %v5309, %v5311
    %v5313 = vrot.slane %v5299, 1
    %v5314 = vrot.slane %v5300, 1
    %v5315 = vsel %vm424, %v5313, %v5314
    %v5316 = vrot.slane %v5301, 1
    %v5317 = vsel %vm424, %v5314, %v5316
    %v5322 = vadd.f32 %v5194, %v5310
    %v5323 = vadd.f32 %v5195, %v5312
    %v5324 = vadd.f32 %v5196, %v5315
    %v5325 = vadd.f32 %v5197, %v5317
    %s5326 = sld [smem:[#allocation11 + $0x16]]
    %v5327 = vstv %s5326
    %v5328 = vmul.f32 %v2636, %v5327
    %v5329 = vmul.f32 %v2637, %v5327
    %v5330 = vmul.f32 %v2638, %v5327
    %v5331 = vmul.f32 %v2639, %v5327
    %v5332 = vmul.f32 %v2640, %v5327
    %v5333 = vmul.f32 %v2641, %v5327
    %v5340 = vrot.slane %v5328, 1
    %v5341 = vrot.slane %v5329, 1
    %v5342 = vsel %vm424, %v5340, %v5341
    %v5343 = vrot.slane %v5330, 1
    %v5344 = vsel %vm424, %v5341, %v5343
    %v5345 = vrot.slane %v5331, 1
    %v5346 = vrot.slane %v5332, 1
    %v5347 = vsel %vm424, %v5345, %v5346
    %v5348 = vrot.slane %v5333, 1
    %v5349 = vsel %vm424, %v5346, %v5348
    %5350 = vrot.lane.b32.xlu0 %v5342, 127
    %v5351 = vpop.permute.xlu0 %5350
    %5352 = vrot.lane.b32.xlu0 %v5344, 127
    %v5353 = vpop.permute.xlu0 %5352
    %5354 = vrot.lane.b32.xlu0 %v5347, 127
    %v5355 = vpop.permute.xlu0 %5354
    %5356 = vrot.lane.b32.xlu0 %v5349, 127
    %v5357 = vpop.permute.xlu0 %5356
    %v5362 = vadd.f32 %v5226, %v5351
    %v5363 = vadd.f32 %v5227, %v5353
    %v5364 = vadd.f32 %v5228, %v5355
    %v5365 = vadd.f32 %v5229, %v5357
    %s5366 = sld [smem:[#allocation11 + $0x43]]
    %v5367 = vstv %s5366
    %v5368 = vmul.f32 %v2636, %v5367
    %v5369 = vmul.f32 %v2637, %v5367
    %v5370 = vmul.f32 %v2638, %v5367
    %v5371 = vmul.f32 %v2639, %v5367
    %v5372 = vmul.f32 %v2640, %v5367
    %v5373 = vmul.f32 %v2641, %v5367
    %v5380 = vrot.slane %v5368, 1
    %v5381 = vrot.slane %v5369, 1
    %v5382 = vsel %vm424, %v5380, %v5381
    %v5383 = vrot.slane %v5370, 1
    %v5384 = vsel %vm424, %v5381, %v5383
    %v5385 = vrot.slane %v5371, 1
    %v5386 = vrot.slane %v5372, 1
    %v5387 = vsel %vm424, %v5385, %v5386
    %v5388 = vrot.slane %v5373, 1
    %v5389 = vsel %vm424, %v5386, %v5388
    %5390 = vrot.lane.b32.xlu0 %v5382, 127
    %v5391 = vpop.permute.xlu0 %5390
    %5392 = vrot.lane.b32.xlu0 %v5384, 127
    %v5393 = vpop.permute.xlu0 %5392
    %5394 = vrot.lane.b32.xlu0 %v5387, 127
    %v5395 = vpop.permute.xlu0 %5394
    %5396 = vrot.lane.b32.xlu0 %v5389, 127
    %v5397 = vpop.permute.xlu0 %5396
    %v5402 = vadd.f32 %v5258, %v5391
    %v5403 = vadd.f32 %v5259, %v5393
    %v5404 = vadd.f32 %v5260, %v5395
    %v5405 = vadd.f32 %v5261, %v5397
    %s5406 = sld [smem:[#allocation11 + $0x70]]
    %v5407 = vstv %s5406
    %v5408 = vmul.f32 %v2636, %v5407
    %v5409 = vmul.f32 %v2637, %v5407
    %v5410 = vmul.f32 %v2638, %v5407
    %v5411 = vmul.f32 %v2639, %v5407
    %v5412 = vmul.f32 %v2640, %v5407
    %v5413 = vmul.f32 %v2641, %v5407
    %v5420 = vrot.slane %v5408, 1
    %v5421 = vrot.slane %v5409, 1
    %v5422 = vsel %vm424, %v5420, %v5421
    %v5423 = vrot.slane %v5410, 1
    %v5424 = vsel %vm424, %v5421, %v5423
    %v5425 = vrot.slane %v5411, 1
    %v5426 = vrot.slane %v5412, 1
    %v5427 = vsel %vm424, %v5425, %v5426
    %v5428 = vrot.slane %v5413, 1
    %v5429 = vsel %vm424, %v5426, %v5428
    %5430 = vrot.lane.b32.xlu0 %v5422, 127
    %v5431 = vpop.permute.xlu0 %5430
    %5432 = vrot.lane.b32.xlu0 %v5424, 127
    %v5433 = vpop.permute.xlu0 %5432
    %5434 = vrot.lane.b32.xlu0 %v5427, 127
    %v5435 = vpop.permute.xlu0 %5434
    %5436 = vrot.lane.b32.xlu0 %v5429, 127
    %v5437 = vpop.permute.xlu0 %5436
    %v5442 = vadd.f32 %v5290, %v5431
    %v5443 = vadd.f32 %v5291, %v5433
    %v5444 = vadd.f32 %v5292, %v5435
    %v5445 = vadd.f32 %v5293, %v5437
    %s5446 = sld [smem:[#allocation11 + $0x9d]]
    %v5447 = vstv %s5446
    %v5448 = vmul.f32 %v2636, %v5447
    %v5449 = vmul.f32 %v2637, %v5447
    %v5450 = vmul.f32 %v2638, %v5447
    %v5451 = vmul.f32 %v2639, %v5447
    %v5452 = vmul.f32 %v2640, %v5447
    %v5453 = vmul.f32 %v2641, %v5447
    %v5460 = vrot.slane %v5448, 1
    %v5461 = vrot.slane %v5449, 1
    %v5462 = vsel %vm424, %v5460, %v5461
    %v5463 = vrot.slane %v5450, 1
    %v5464 = vsel %vm424, %v5461, %v5463
    %v5465 = vrot.slane %v5451, 1
    %v5466 = vrot.slane %v5452, 1
    %v5467 = vsel %vm424, %v5465, %v5466
    %v5468 = vrot.slane %v5453, 1
    %v5469 = vsel %vm424, %v5466, %v5468
    %5470 = vrot.lane.b32.xlu0 %v5462, 127
    %v5471 = vpop.permute.xlu0 %5470
    %5472 = vrot.lane.b32.xlu0 %v5464, 127
    %v5473 = vpop.permute.xlu0 %5472
    %5474 = vrot.lane.b32.xlu0 %v5467, 127
    %v5475 = vpop.permute.xlu0 %5474
    %5476 = vrot.lane.b32.xlu0 %v5469, 127
    %v5477 = vpop.permute.xlu0 %5476
    %v5482 = vadd.f32 %v5322, %v5471
    %v5483 = vadd.f32 %v5323, %v5473
    %v5484 = vadd.f32 %v5324, %v5475
    %v5485 = vadd.f32 %v5325, %v5477
    %s5486 = sld [smem:[#allocation11 + $0x17]]
    %v5487 = vstv %s5486
    %v5488 = vmul.f32 %v2636, %v5487
    %v5489 = vmul.f32 %v2637, %v5487
    %v5490 = vmul.f32 %v2638, %v5487
    %v5491 = vmul.f32 %v2639, %v5487
    %v5492 = vmul.f32 %v2640, %v5487
    %v5493 = vmul.f32 %v2641, %v5487
    %v5500 = vrot.slane %v5488, 1
    %v5501 = vrot.slane %v5489, 1
    %v5502 = vsel %vm424, %v5500, %v5501
    %v5503 = vrot.slane %v5490, 1
    %v5504 = vsel %vm424, %v5501, %v5503
    %v5505 = vrot.slane %v5491, 1
    %v5506 = vrot.slane %v5492, 1
    %v5507 = vsel %vm424, %v5505, %v5506
    %v5508 = vrot.slane %v5493, 1
    %v5509 = vsel %vm424, %v5506, %v5508
    %5510 = vrot.lane.b32.xlu0 %v5502, 126
    %v5511 = vpop.permute.xlu0 %5510
    %5512 = vrot.lane.b32.xlu0 %v5504, 126
    %v5513 = vpop.permute.xlu0 %5512
    %5514 = vrot.lane.b32.xlu0 %v5507, 126
    %v5515 = vpop.permute.xlu0 %5514
    %5516 = vrot.lane.b32.xlu0 %v5509, 126
    %v5517 = vpop.permute.xlu0 %5516
    %v5522 = vadd.f32 %v5362, %v5511
    %v5523 = vadd.f32 %v5363, %v5513
    %v5524 = vadd.f32 %v5364, %v5515
    %v5525 = vadd.f32 %v5365, %v5517
    %s5526 = sld [smem:[#allocation11 + $0x44]]
    %v5527 = vstv %s5526
    %v5528 = vmul.f32 %v2636, %v5527
    %v5529 = vmul.f32 %v2637, %v5527
    %v5530 = vmul.f32 %v2638, %v5527
    %v5531 = vmul.f32 %v2639, %v5527
    %v5532 = vmul.f32 %v2640, %v5527
    %v5533 = vmul.f32 %v2641, %v5527
    %v5540 = vrot.slane %v5528, 1
    %v5541 = vrot.slane %v5529, 1
    %v5542 = vsel %vm424, %v5540, %v5541
    %v5543 = vrot.slane %v5530, 1
    %v5544 = vsel %vm424, %v5541, %v5543
    %v5545 = vrot.slane %v5531, 1
    %v5546 = vrot.slane %v5532, 1
    %v5547 = vsel %vm424, %v5545, %v5546
    %v5548 = vrot.slane %v5533, 1
    %v5549 = vsel %vm424, %v5546, %v5548
    %5550 = vrot.lane.b32.xlu0 %v5542, 126
    %v5551 = vpop.permute.xlu0 %5550
    %5552 = vrot.lane.b32.xlu0 %v5544, 126
    %v5553 = vpop.permute.xlu0 %5552
    %5554 = vrot.lane.b32.xlu0 %v5547, 126
    %v5555 = vpop.permute.xlu0 %5554
    %5556 = vrot.lane.b32.xlu0 %v5549, 126
    %v5557 = vpop.permute.xlu0 %5556
    %v5562 = vadd.f32 %v5402, %v5551
    %v5563 = vadd.f32 %v5403, %v5553
    %v5564 = vadd.f32 %v5404, %v5555
    %v5565 = vadd.f32 %v5405, %v5557
    %s5566 = sld [smem:[#allocation11 + $0x71]]
    %v5567 = vstv %s5566
    %v5568 = vmul.f32 %v2636, %v5567
    %v5569 = vmul.f32 %v2637, %v5567
    %v5570 = vmul.f32 %v2638, %v5567
    %v5571 = vmul.f32 %v2639, %v5567
    %v5572 = vmul.f32 %v2640, %v5567
    %v5573 = vmul.f32 %v2641, %v5567
    %v5580 = vrot.slane %v5568, 1
    %v5581 = vrot.slane %v5569, 1
    %v5582 = vsel %vm424, %v5580, %v5581
    %v5583 = vrot.slane %v5570, 1
    %v5584 = vsel %vm424, %v5581, %v5583
    %v5585 = vrot.slane %v5571, 1
    %v5586 = vrot.slane %v5572, 1
    %v5587 = vsel %vm424, %v5585, %v5586
    %v5588 = vrot.slane %v5573, 1
    %v5589 = vsel %vm424, %v5586, %v5588
    %5590 = vrot.lane.b32.xlu0 %v5582, 126
    %v5591 = vpop.permute.xlu0 %5590
    %5592 = vrot.lane.b32.xlu0 %v5584, 126
    %v5593 = vpop.permute.xlu0 %5592
    %5594 = vrot.lane.b32.xlu0 %v5587, 126
    %v5595 = vpop.permute.xlu0 %5594
    %5596 = vrot.lane.b32.xlu0 %v5589, 126
    %v5597 = vpop.permute.xlu0 %5596
    %v5602 = vadd.f32 %v5442, %v5591
    %v5603 = vadd.f32 %v5443, %v5593
    %v5604 = vadd.f32 %v5444, %v5595
    %v5605 = vadd.f32 %v5445, %v5597
    %s5606 = sld [smem:[#allocation11 + $0x9e]]
    %v5607 = vstv %s5606
    %v5608 = vmul.f32 %v2636, %v5607
    %v5609 = vmul.f32 %v2637, %v5607
    %v5610 = vmul.f32 %v2638, %v5607
    %v5611 = vmul.f32 %v2639, %v5607
    %v5612 = vmul.f32 %v2640, %v5607
    %v5613 = vmul.f32 %v2641, %v5607
    %v5620 = vrot.slane %v5608, 1
    %v5621 = vrot.slane %v5609, 1
    %v5622 = vsel %vm424, %v5620, %v5621
    %v5623 = vrot.slane %v5610, 1
    %v5624 = vsel %vm424, %v5621, %v5623
    %v5625 = vrot.slane %v5611, 1
    %v5626 = vrot.slane %v5612, 1
    %v5627 = vsel %vm424, %v5625, %v5626
    %v5628 = vrot.slane %v5613, 1
    %v5629 = vsel %vm424, %v5626, %v5628
    %5630 = vrot.lane.b32.xlu0 %v5622, 126
    %v5631 = vpop.permute.xlu0 %5630
    %5632 = vrot.lane.b32.xlu0 %v5624, 126
    %v5633 = vpop.permute.xlu0 %5632
    %5634 = vrot.lane.b32.xlu0 %v5627, 126
    %v5635 = vpop.permute.xlu0 %5634
    %5636 = vrot.lane.b32.xlu0 %v5629, 126
    %v5637 = vpop.permute.xlu0 %5636
    %v5642 = vadd.f32 %v5482, %v5631
    %v5643 = vadd.f32 %v5483, %v5633
    %v5644 = vadd.f32 %v5484, %v5635
    %v5645 = vadd.f32 %v5485, %v5637
    %s5646 = sld [smem:[#allocation11 + $0x18]]
    %v5647 = vstv %s5646
    %v5648 = vmul.f32 %v2636, %v5647
    %v5649 = vmul.f32 %v2637, %v5647
    %v5650 = vmul.f32 %v2638, %v5647
    %v5651 = vmul.f32 %v2639, %v5647
    %v5652 = vmul.f32 %v2640, %v5647
    %v5653 = vmul.f32 %v2641, %v5647
    %v5660 = vrot.slane %v5648, 2
    %v5661 = vrot.slane %v5649, 2
    %v5662 = vsel %vm865, %v5660, %v5661
    %v5663 = vrot.slane %v5650, 2
    %v5664 = vsel %vm865, %v5661, %v5663
    %v5665 = vrot.slane %v5651, 2
    %v5666 = vrot.slane %v5652, 2
    %v5667 = vsel %vm865, %v5665, %v5666
    %v5668 = vrot.slane %v5653, 2
    %v5669 = vsel %vm865, %v5666, %v5668
    %v5674 = vadd.f32 %v5522, %v5662
    %v5675 = vadd.f32 %v5523, %v5664
    %v5676 = vadd.f32 %v5524, %v5667
    %v5677 = vadd.f32 %v5525, %v5669
    %s5678 = sld [smem:[#allocation11 + $0x45]]
    %v5679 = vstv %s5678
    %v5680 = vmul.f32 %v2636, %v5679
    %v5681 = vmul.f32 %v2637, %v5679
    %v5682 = vmul.f32 %v2638, %v5679
    %v5683 = vmul.f32 %v2639, %v5679
    %v5684 = vmul.f32 %v2640, %v5679
    %v5685 = vmul.f32 %v2641, %v5679
    %v5692 = vrot.slane %v5680, 2
    %v5693 = vrot.slane %v5681, 2
    %v5694 = vsel %vm865, %v5692, %v5693
    %v5695 = vrot.slane %v5682, 2
    %v5696 = vsel %vm865, %v5693, %v5695
    %v5697 = vrot.slane %v5683, 2
    %v5698 = vrot.slane %v5684, 2
    %v5699 = vsel %vm865, %v5697, %v5698
    %v5700 = vrot.slane %v5685, 2
    %v5701 = vsel %vm865, %v5698, %v5700
    %v5706 = vadd.f32 %v5562, %v5694
    %v5707 = vadd.f32 %v5563, %v5696
    %v5708 = vadd.f32 %v5564, %v5699
    %v5709 = vadd.f32 %v5565, %v5701
    %s5710 = sld [smem:[#allocation11 + $0x72]]
    %v5711 = vstv %s5710
    %v5712 = vmul.f32 %v2636, %v5711
    %v5713 = vmul.f32 %v2637, %v5711
    %v5714 = vmul.f32 %v2638, %v5711
    %v5715 = vmul.f32 %v2639, %v5711
    %v5716 = vmul.f32 %v2640, %v5711
    %v5717 = vmul.f32 %v2641, %v5711
    %v5724 = vrot.slane %v5712, 2
    %v5725 = vrot.slane %v5713, 2
    %v5726 = vsel %vm865, %v5724, %v5725
    %v5727 = vrot.slane %v5714, 2
    %v5728 = vsel %vm865, %v5725, %v5727
    %v5729 = vrot.slane %v5715, 2
    %v5730 = vrot.slane %v5716, 2
    %v5731 = vsel %vm865, %v5729, %v5730
    %v5732 = vrot.slane %v5717, 2
    %v5733 = vsel %vm865, %v5730, %v5732
    %v5738 = vadd.f32 %v5602, %v5726
    %v5739 = vadd.f32 %v5603, %v5728
    %v5740 = vadd.f32 %v5604, %v5731
    %v5741 = vadd.f32 %v5605, %v5733
    %s5742 = sld [smem:[#allocation11 + $0x9f]]
    %v5743 = vstv %s5742
    %v5744 = vmul.f32 %v2636, %v5743
    %v5745 = vmul.f32 %v2637, %v5743
    %v5746 = vmul.f32 %v2638, %v5743
    %v5747 = vmul.f32 %v2639, %v5743
    %v5748 = vmul.f32 %v2640, %v5743
    %v5749 = vmul.f32 %v2641, %v5743
    %v5756 = vrot.slane %v5744, 2
    %v5757 = vrot.slane %v5745, 2
    %v5758 = vsel %vm865, %v5756, %v5757
    %v5759 = vrot.slane %v5746, 2
    %v5760 = vsel %vm865, %v5757, %v5759
    %v5761 = vrot.slane %v5747, 2
    %v5762 = vrot.slane %v5748, 2
    %v5763 = vsel %vm865, %v5761, %v5762
    %v5764 = vrot.slane %v5749, 2
    %v5765 = vsel %vm865, %v5762, %v5764
    %v5770 = vadd.f32 %v5642, %v5758
    %v5771 = vadd.f32 %v5643, %v5760
    %v5772 = vadd.f32 %v5644, %v5763
    %v5773 = vadd.f32 %v5645, %v5765
    %s5774 = sld [smem:[#allocation11 + $0x19]]
    %v5775 = vstv %s5774
    %v5776 = vmul.f32 %v2636, %v5775
    %v5777 = vmul.f32 %v2637, %v5775
    %v5778 = vmul.f32 %v2638, %v5775
    %v5779 = vmul.f32 %v2639, %v5775
    %v5780 = vmul.f32 %v2640, %v5775
    %v5781 = vmul.f32 %v2641, %v5775
    %v5788 = vrot.slane %v5776, 2
    %v5789 = vrot.slane %v5777, 2
    %v5790 = vsel %vm865, %v5788, %v5789
    %v5791 = vrot.slane %v5778, 2
    %v5792 = vsel %vm865, %v5789, %v5791
    %v5793 = vrot.slane %v5779, 2
    %v5794 = vrot.slane %v5780, 2
    %v5795 = vsel %vm865, %v5793, %v5794
    %v5796 = vrot.slane %v5781, 2
    %v5797 = vsel %vm865, %v5794, %v5796
    %5798 = vrot.lane.b32.xlu0 %v5790, 127
    %v5799 = vpop.permute.xlu0 %5798
    %5800 = vrot.lane.b32.xlu0 %v5792, 127
    %v5801 = vpop.permute.xlu0 %5800
    %5802 = vrot.lane.b32.xlu0 %v5795, 127
    %v5803 = vpop.permute.xlu0 %5802
    %5804 = vrot.lane.b32.xlu0 %v5797, 127
    %v5805 = vpop.permute.xlu0 %5804
    %v5810 = vadd.f32 %v5674, %v5799
    %v5811 = vadd.f32 %v5675, %v5801
    %v5812 = vadd.f32 %v5676, %v5803
    %v5813 = vadd.f32 %v5677, %v5805
    %s5814 = sld [smem:[#allocation11 + $0x46]]
    %v5815 = vstv %s5814
    %v5816 = vmul.f32 %v2636, %v5815
    %v5817 = vmul.f32 %v2637, %v5815
    %v5818 = vmul.f32 %v2638, %v5815
    %v5819 = vmul.f32 %v2639, %v5815
    %v5820 = vmul.f32 %v2640, %v5815
    %v5821 = vmul.f32 %v2641, %v5815
    %v5828 = vrot.slane %v5816, 2
    %v5829 = vrot.slane %v5817, 2
    %v5830 = vsel %vm865, %v5828, %v5829
    %v5831 = vrot.slane %v5818, 2
    %v5832 = vsel %vm865, %v5829, %v5831
    %v5833 = vrot.slane %v5819, 2
    %v5834 = vrot.slane %v5820, 2
    %v5835 = vsel %vm865, %v5833, %v5834
    %v5836 = vrot.slane %v5821, 2
    %v5837 = vsel %vm865, %v5834, %v5836
    %5838 = vrot.lane.b32.xlu0 %v5830, 127
    %v5839 = vpop.permute.xlu0 %5838
    %5840 = vrot.lane.b32.xlu0 %v5832, 127
    %v5841 = vpop.permute.xlu0 %5840
    %5842 = vrot.lane.b32.xlu0 %v5835, 127
    %v5843 = vpop.permute.xlu0 %5842
    %5844 = vrot.lane.b32.xlu0 %v5837, 127
    %v5845 = vpop.permute.xlu0 %5844
    %v5850 = vadd.f32 %v5706, %v5839
    %v5851 = vadd.f32 %v5707, %v5841
    %v5852 = vadd.f32 %v5708, %v5843
    %v5853 = vadd.f32 %v5709, %v5845
    %s5854 = sld [smem:[#allocation11 + $0x73]]
    %v5855 = vstv %s5854
    %v5856 = vmul.f32 %v2636, %v5855
    %v5857 = vmul.f32 %v2637, %v5855
    %v5858 = vmul.f32 %v2638, %v5855
    %v5859 = vmul.f32 %v2639, %v5855
    %v5860 = vmul.f32 %v2640, %v5855
    %v5861 = vmul.f32 %v2641, %v5855
    %v5868 = vrot.slane %v5856, 2
    %v5869 = vrot.slane %v5857, 2
    %v5870 = vsel %vm865, %v5868, %v5869
    %v5871 = vrot.slane %v5858, 2
    %v5872 = vsel %vm865, %v5869, %v5871
    %v5873 = vrot.slane %v5859, 2
    %v5874 = vrot.slane %v5860, 2
    %v5875 = vsel %vm865, %v5873, %v5874
    %v5876 = vrot.slane %v5861, 2
    %v5877 = vsel %vm865, %v5874, %v5876
    %5878 = vrot.lane.b32.xlu0 %v5870, 127
    %v5879 = vpop.permute.xlu0 %5878
    %5880 = vrot.lane.b32.xlu0 %v5872, 127
    %v5881 = vpop.permute.xlu0 %5880
    %5882 = vrot.lane.b32.xlu0 %v5875, 127
    %v5883 = vpop.permute.xlu0 %5882
    %5884 = vrot.lane.b32.xlu0 %v5877, 127
    %v5885 = vpop.permute.xlu0 %5884
    %v5890 = vadd.f32 %v5738, %v5879
    %v5891 = vadd.f32 %v5739, %v5881
    %v5892 = vadd.f32 %v5740, %v5883
    %v5893 = vadd.f32 %v5741, %v5885
    %s5894 = sld [smem:[#allocation11 + $0xa0]]
    %v5895 = vstv %s5894
    %v5896 = vmul.f32 %v2636, %v5895
    %v5897 = vmul.f32 %v2637, %v5895
    %v5898 = vmul.f32 %v2638, %v5895
    %v5899 = vmul.f32 %v2639, %v5895
    %v5900 = vmul.f32 %v2640, %v5895
    %v5901 = vmul.f32 %v2641, %v5895
    %v5908 = vrot.slane %v5896, 2
    %v5909 = vrot.slane %v5897, 2
    %v5910 = vsel %vm865, %v5908, %v5909
    %v5911 = vrot.slane %v5898, 2
    %v5912 = vsel %vm865, %v5909, %v5911
    %v5913 = vrot.slane %v5899, 2
    %v5914 = vrot.slane %v5900, 2
    %v5915 = vsel %vm865, %v5913, %v5914
    %v5916 = vrot.slane %v5901, 2
    %v5917 = vsel %vm865, %v5914, %v5916
    %5918 = vrot.lane.b32.xlu0 %v5910, 127
    %v5919 = vpop.permute.xlu0 %5918
    %5920 = vrot.lane.b32.xlu0 %v5912, 127
    %v5921 = vpop.permute.xlu0 %5920
    %5922 = vrot.lane.b32.xlu0 %v5915, 127
    %v5923 = vpop.permute.xlu0 %5922
    %5924 = vrot.lane.b32.xlu0 %v5917, 127
    %v5925 = vpop.permute.xlu0 %5924
    %v5930 = vadd.f32 %v5770, %v5919
    %v5931 = vadd.f32 %v5771, %v5921
    %v5932 = vadd.f32 %v5772, %v5923
    %v5933 = vadd.f32 %v5773, %v5925
    %s5934 = sld [smem:[#allocation11 + $0x1a]]
    %v5935 = vstv %s5934
    %v5936 = vmul.f32 %v2636, %v5935
    %v5937 = vmul.f32 %v2637, %v5935
    %v5938 = vmul.f32 %v2638, %v5935
    %v5939 = vmul.f32 %v2639, %v5935
    %v5940 = vmul.f32 %v2640, %v5935
    %v5941 = vmul.f32 %v2641, %v5935
    %v5948 = vrot.slane %v5936, 2
    %v5949 = vrot.slane %v5937, 2
    %v5950 = vsel %vm865, %v5948, %v5949
    %v5951 = vrot.slane %v5938, 2
    %v5952 = vsel %vm865, %v5949, %v5951
    %v5953 = vrot.slane %v5939, 2
    %v5954 = vrot.slane %v5940, 2
    %v5955 = vsel %vm865, %v5953, %v5954
    %v5956 = vrot.slane %v5941, 2
    %v5957 = vsel %vm865, %v5954, %v5956
    %5958 = vrot.lane.b32.xlu0 %v5950, 126
    %v5959 = vpop.permute.xlu0 %5958
    %5960 = vrot.lane.b32.xlu0 %v5952, 126
    %v5961 = vpop.permute.xlu0 %5960
    %5962 = vrot.lane.b32.xlu0 %v5955, 126
    %v5963 = vpop.permute.xlu0 %5962
    %5964 = vrot.lane.b32.xlu0 %v5957, 126
    %v5965 = vpop.permute.xlu0 %5964
    %v5970 = vadd.f32 %v5810, %v5959
    %v5971 = vadd.f32 %v5811, %v5961
    %v5972 = vadd.f32 %v5812, %v5963
    %v5973 = vadd.f32 %v5813, %v5965
    %s5974 = sld [smem:[#allocation11 + $0x47]]
    %v5975 = vstv %s5974
    %v5976 = vmul.f32 %v2636, %v5975
    %v5977 = vmul.f32 %v2637, %v5975
    %v5978 = vmul.f32 %v2638, %v5975
    %v5979 = vmul.f32 %v2639, %v5975
    %v5980 = vmul.f32 %v2640, %v5975
    %v5981 = vmul.f32 %v2641, %v5975
    %v5988 = vrot.slane %v5976, 2
    %v5989 = vrot.slane %v5977, 2
    %v5990 = vsel %vm865, %v5988, %v5989
    %v5991 = vrot.slane %v5978, 2
    %v5992 = vsel %vm865, %v5989, %v5991
    %v5993 = vrot.slane %v5979, 2
    %v5994 = vrot.slane %v5980, 2
    %v5995 = vsel %vm865, %v5993, %v5994
    %v5996 = vrot.slane %v5981, 2
    %v5997 = vsel %vm865, %v5994, %v5996
    %5998 = vrot.lane.b32.xlu0 %v5990, 126
    %v5999 = vpop.permute.xlu0 %5998
    %6000 = vrot.lane.b32.xlu0 %v5992, 126
    %v6001 = vpop.permute.xlu0 %6000
    %6002 = vrot.lane.b32.xlu0 %v5995, 126
    %v6003 = vpop.permute.xlu0 %6002
    %6004 = vrot.lane.b32.xlu0 %v5997, 126
    %v6005 = vpop.permute.xlu0 %6004
    %v6010 = vadd.f32 %v5850, %v5999
    %v6011 = vadd.f32 %v5851, %v6001
    %v6012 = vadd.f32 %v5852, %v6003
    %v6013 = vadd.f32 %v5853, %v6005
    %s6014 = sld [smem:[#allocation11 + $0x74]]
    %v6015 = vstv %s6014
    %v6016 = vmul.f32 %v2636, %v6015
    %v6017 = vmul.f32 %v2637, %v6015
    %v6018 = vmul.f32 %v2638, %v6015
    %v6019 = vmul.f32 %v2639, %v6015
    %v6020 = vmul.f32 %v2640, %v6015
    %v6021 = vmul.f32 %v2641, %v6015
    %v6028 = vrot.slane %v6016, 2
    %v6029 = vrot.slane %v6017, 2
    %v6030 = vsel %vm865, %v6028, %v6029
    %v6031 = vrot.slane %v6018, 2
    %v6032 = vsel %vm865, %v6029, %v6031
    %v6033 = vrot.slane %v6019, 2
    %v6034 = vrot.slane %v6020, 2
    %v6035 = vsel %vm865, %v6033, %v6034
    %v6036 = vrot.slane %v6021, 2
    %v6037 = vsel %vm865, %v6034, %v6036
    %6038 = vrot.lane.b32.xlu0 %v6030, 126
    %v6039 = vpop.permute.xlu0 %6038
    %6040 = vrot.lane.b32.xlu0 %v6032, 126
    %v6041 = vpop.permute.xlu0 %6040
    %6042 = vrot.lane.b32.xlu0 %v6035, 126
    %v6043 = vpop.permute.xlu0 %6042
    %6044 = vrot.lane.b32.xlu0 %v6037, 126
    %v6045 = vpop.permute.xlu0 %6044
    %v6050 = vadd.f32 %v5890, %v6039
    %v6051 = vadd.f32 %v5891, %v6041
    %v6052 = vadd.f32 %v5892, %v6043
    %v6053 = vadd.f32 %v5893, %v6045
    %s6054 = sld [smem:[#allocation11 + $0xa1]]
    %v6055 = vstv %s6054
    %v6056 = vmul.f32 %v2636, %v6055
    %v6057 = vmul.f32 %v2637, %v6055
    %v6058 = vmul.f32 %v2638, %v6055
    %v6059 = vmul.f32 %v2639, %v6055
    %v6060 = vmul.f32 %v2640, %v6055
    %v6061 = vmul.f32 %v2641, %v6055
    %v6068 = vrot.slane %v6056, 2
    %v6069 = vrot.slane %v6057, 2
    %v6070 = vsel %vm865, %v6068, %v6069
    %v6071 = vrot.slane %v6058, 2
    %v6072 = vsel %vm865, %v6069, %v6071
    %v6073 = vrot.slane %v6059, 2
    %v6074 = vrot.slane %v6060, 2
    %v6075 = vsel %vm865, %v6073, %v6074
    %v6076 = vrot.slane %v6061, 2
    %v6077 = vsel %vm865, %v6074, %v6076
    %6078 = vrot.lane.b32.xlu0 %v6070, 126
    %v6079 = vpop.permute.xlu0 %6078
    %6080 = vrot.lane.b32.xlu0 %v6072, 126
    %v6081 = vpop.permute.xlu0 %6080
    %6082 = vrot.lane.b32.xlu0 %v6075, 126
    %v6083 = vpop.permute.xlu0 %6082
    %6084 = vrot.lane.b32.xlu0 %v6077, 126
    %v6085 = vpop.permute.xlu0 %6084
    %v6090 = vadd.f32 %v5930, %v6079
    %v6091 = vadd.f32 %v5931, %v6081
    %v6092 = vadd.f32 %v5932, %v6083
    %v6093 = vadd.f32 %v5933, %v6085
    %s6094 = sld [smem:[#allocation11 + $0x1b]]
    %v6095 = vstv %s6094
    %v6096 = vmul.f32 %v2642, %v6095
    %v6097 = vmul.f32 %v2643, %v6095
    %v6098 = vmul.f32 %v2645, %v6095
    %v6099 = vmul.f32 %v2646, %v6095
    %v6100 = vadd.f32 %v5970, %v6096
    %v6101 = vadd.f32 %v5971, %v6097
    %v6102 = vadd.f32 %v5972, %v6098
    %v6103 = vadd.f32 %v5973, %v6099
    %s6104 = sld [smem:[#allocation11 + $0x48]]
    %v6105 = vstv %s6104
    %v6106 = vmul.f32 %v2642, %v6105
    %v6107 = vmul.f32 %v2643, %v6105
    %v6108 = vmul.f32 %v2645, %v6105
    %v6109 = vmul.f32 %v2646, %v6105
    %v6110 = vadd.f32 %v6010, %v6106
    %v6111 = vadd.f32 %v6011, %v6107
    %v6112 = vadd.f32 %v6012, %v6108
    %v6113 = vadd.f32 %v6013, %v6109
    %s6114 = sld [smem:[#allocation11 + $0x75]]
    %v6115 = vstv %s6114
    %v6116 = vmul.f32 %v2642, %v6115
    %v6117 = vmul.f32 %v2643, %v6115
    %v6118 = vmul.f32 %v2645, %v6115
    %v6119 = vmul.f32 %v2646, %v6115
    %v6120 = vadd.f32 %v6050, %v6116
    %v6121 = vadd.f32 %v6051, %v6117
    %v6122 = vadd.f32 %v6052, %v6118
    %v6123 = vadd.f32 %v6053, %v6119
    %s6124 = sld [smem:[#allocation11 + $0xa2]]
    %v6125 = vstv %s6124
    %v6126 = vmul.f32 %v2642, %v6125
    %v6127 = vmul.f32 %v2643, %v6125
    %v6128 = vmul.f32 %v2645, %v6125
    %v6129 = vmul.f32 %v2646, %v6125
    %v6130 = vadd.f32 %v6090, %v6126
    %v6131 = vadd.f32 %v6091, %v6127
    %v6132 = vadd.f32 %v6092, %v6128
    %v6133 = vadd.f32 %v6093, %v6129
    %s6134 = sld [smem:[#allocation11 + $0x1c]]
    %v6135 = vstv %s6134
    %v6136 = vmul.f32 %v2642, %v6135
    %v6137 = vmul.f32 %v2643, %v6135
    %v6138 = vmul.f32 %v2645, %v6135
    %v6139 = vmul.f32 %v2646, %v6135
    %6144 = vrot.lane.b32.xlu0 %v6136, 127
    %v6145 = vpop.permute.xlu0 %6144
    %6146 = vrot.lane.b32.xlu0 %v6137, 127
    %v6147 = vpop.permute.xlu0 %6146
    %6148 = vrot.lane.b32.xlu0 %v6138, 127
    %v6149 = vpop.permute.xlu0 %6148
    %6150 = vrot.lane.b32.xlu0 %v6139, 127
    %v6151 = vpop.permute.xlu0 %6150
    %v6156 = vadd.f32 %v6100, %v6145
    %v6157 = vadd.f32 %v6101, %v6147
    %v6158 = vadd.f32 %v6102, %v6149
    %v6159 = vadd.f32 %v6103, %v6151
    %s6160 = sld [smem:[#allocation11 + $0x49]]
    %v6161 = vstv %s6160
    %v6162 = vmul.f32 %v2642, %v6161
    %v6163 = vmul.f32 %v2643, %v6161
    %v6164 = vmul.f32 %v2645, %v6161
    %v6165 = vmul.f32 %v2646, %v6161
    %6170 = vrot.lane.b32.xlu0 %v6162, 127
    %v6171 = vpop.permute.xlu0 %6170
    %6172 = vrot.lane.b32.xlu0 %v6163, 127
    %v6173 = vpop.permute.xlu0 %6172
    %6174 = vrot.lane.b32.xlu0 %v6164, 127
    %v6175 = vpop.permute.xlu0 %6174
    %6176 = vrot.lane.b32.xlu0 %v6165, 127
    %v6177 = vpop.permute.xlu0 %6176
    %v6182 = vadd.f32 %v6110, %v6171
    %v6183 = vadd.f32 %v6111, %v6173
    %v6184 = vadd.f32 %v6112, %v6175
    %v6185 = vadd.f32 %v6113, %v6177
    %s6186 = sld [smem:[#allocation11 + $0x76]]
    %v6187 = vstv %s6186
    %v6188 = vmul.f32 %v2642, %v6187
    %v6189 = vmul.f32 %v2643, %v6187
    %v6190 = vmul.f32 %v2645, %v6187
    %v6191 = vmul.f32 %v2646, %v6187
    %6196 = vrot.lane.b32.xlu0 %v6188, 127
    %v6197 = vpop.permute.xlu0 %6196
    %6198 = vrot.lane.b32.xlu0 %v6189, 127
    %v6199 = vpop.permute.xlu0 %6198
    %6200 = vrot.lane.b32.xlu0 %v6190, 127
    %v6201 = vpop.permute.xlu0 %6200
    %6202 = vrot.lane.b32.xlu0 %v6191, 127
    %v6203 = vpop.permute.xlu0 %6202
    %v6208 = vadd.f32 %v6120, %v6197
    %v6209 = vadd.f32 %v6121, %v6199
    %v6210 = vadd.f32 %v6122, %v6201
    %v6211 = vadd.f32 %v6123, %v6203
    %s6212 = sld [smem:[#allocation11 + $0xa3]]
    %v6213 = vstv %s6212
    %v6214 = vmul.f32 %v2642, %v6213
    %v6215 = vmul.f32 %v2643, %v6213
    %v6216 = vmul.f32 %v2645, %v6213
    %v6217 = vmul.f32 %v2646, %v6213
    %6222 = vrot.lane.b32.xlu0 %v6214, 127
    %v6223 = vpop.permute.xlu0 %6222
    %6224 = vrot.lane.b32.xlu0 %v6215, 127
    %v6225 = vpop.permute.xlu0 %6224
    %6226 = vrot.lane.b32.xlu0 %v6216, 127
    %v6227 = vpop.permute.xlu0 %6226
    %6228 = vrot.lane.b32.xlu0 %v6217, 127
    %v6229 = vpop.permute.xlu0 %6228
    %v6234 = vadd.f32 %v6130, %v6223
    %v6235 = vadd.f32 %v6131, %v6225
    %v6236 = vadd.f32 %v6132, %v6227
    %v6237 = vadd.f32 %v6133, %v6229
    %s6238 = sld [smem:[#allocation11 + $0x1d]]
    %v6239 = vstv %s6238
    %v6240 = vmul.f32 %v2642, %v6239
    %v6241 = vmul.f32 %v2643, %v6239
    %v6242 = vmul.f32 %v2645, %v6239
    %v6243 = vmul.f32 %v2646, %v6239
    %6248 = vrot.lane.b32.xlu0 %v6240, 126
    %v6249 = vpop.permute.xlu0 %6248
    %6250 = vrot.lane.b32.xlu0 %v6241, 126
    %v6251 = vpop.permute.xlu0 %6250
    %6252 = vrot.lane.b32.xlu0 %v6242, 126
    %v6253 = vpop.permute.xlu0 %6252
    %6254 = vrot.lane.b32.xlu0 %v6243, 126
    %v6255 = vpop.permute.xlu0 %6254
    %v6260 = vadd.f32 %v6156, %v6249
    %v6261 = vadd.f32 %v6157, %v6251
    %v6262 = vadd.f32 %v6158, %v6253
    %v6263 = vadd.f32 %v6159, %v6255
    %s6264 = sld [smem:[#allocation11 + $0x4a]]
    %v6265 = vstv %s6264
    %v6266 = vmul.f32 %v2642, %v6265
    %v6267 = vmul.f32 %v2643, %v6265
    %v6268 = vmul.f32 %v2645, %v6265
    %v6269 = vmul.f32 %v2646, %v6265
    %6274 = vrot.lane.b32.xlu0 %v6266, 126
    %v6275 = vpop.permute.xlu0 %6274
    %6276 = vrot.lane.b32.xlu0 %v6267, 126
    %v6277 = vpop.permute.xlu0 %6276
    %6278 = vrot.lane.b32.xlu0 %v6268, 126
    %v6279 = vpop.permute.xlu0 %6278
    %6280 = vrot.lane.b32.xlu0 %v6269, 126
    %v6281 = vpop.permute.xlu0 %6280
    %v6286 = vadd.f32 %v6182, %v6275
    %v6287 = vadd.f32 %v6183, %v6277
    %v6288 = vadd.f32 %v6184, %v6279
    %v6289 = vadd.f32 %v6185, %v6281
    %s6290 = sld [smem:[#allocation11 + $0x77]]
    %v6291 = vstv %s6290
    %v6292 = vmul.f32 %v2642, %v6291
    %v6293 = vmul.f32 %v2643, %v6291
    %v6294 = vmul.f32 %v2645, %v6291
    %v6295 = vmul.f32 %v2646, %v6291
    %6300 = vrot.lane.b32.xlu0 %v6292, 126
    %v6301 = vpop.permute.xlu0 %6300
    %6302 = vrot.lane.b32.xlu0 %v6293, 126
    %v6303 = vpop.permute.xlu0 %6302
    %6304 = vrot.lane.b32.xlu0 %v6294, 126
    %v6305 = vpop.permute.xlu0 %6304
    %6306 = vrot.lane.b32.xlu0 %v6295, 126
    %v6307 = vpop.permute.xlu0 %6306
    %v6312 = vadd.f32 %v6208, %v6301
    %v6313 = vadd.f32 %v6209, %v6303
    %v6314 = vadd.f32 %v6210, %v6305
    %v6315 = vadd.f32 %v6211, %v6307
    %s6316 = sld [smem:[#allocation11 + $0xa4]]
    %v6317 = vstv %s6316
    %v6318 = vmul.f32 %v2642, %v6317
    %v6319 = vmul.f32 %v2643, %v6317
    %v6320 = vmul.f32 %v2645, %v6317
    %v6321 = vmul.f32 %v2646, %v6317
    %6326 = vrot.lane.b32.xlu0 %v6318, 126
    %v6327 = vpop.permute.xlu0 %6326
    %6328 = vrot.lane.b32.xlu0 %v6319, 126
    %v6329 = vpop.permute.xlu0 %6328
    %6330 = vrot.lane.b32.xlu0 %v6320, 126
    %v6331 = vpop.permute.xlu0 %6330
    %6332 = vrot.lane.b32.xlu0 %v6321, 126
    %v6333 = vpop.permute.xlu0 %6332
    %v6338 = vadd.f32 %v6234, %v6327
    %v6339 = vadd.f32 %v6235, %v6329
    %v6340 = vadd.f32 %v6236, %v6331
    %v6341 = vadd.f32 %v6237, %v6333
    %s6342 = sld [smem:[#allocation11 + $0x1e]]
    %v6343 = vstv %s6342
    %v6344 = vmul.f32 %v2642, %v6343
    %v6345 = vmul.f32 %v2643, %v6343
    %v6346 = vmul.f32 %v2644, %v6343
    %v6347 = vmul.f32 %v2645, %v6343
    %v6348 = vmul.f32 %v2646, %v6343
    %v6349 = vmul.f32 %v2647, %v6343
    %v6356 = vrot.slane %v6344, 1
    %v6357 = vrot.slane %v6345, 1
    %v6358 = vsel %vm424, %v6356, %v6357
    %v6359 = vrot.slane %v6346, 1
    %v6360 = vsel %vm424, %v6357, %v6359
    %v6361 = vrot.slane %v6347, 1
    %v6362 = vrot.slane %v6348, 1
    %v6363 = vsel %vm424, %v6361, %v6362
    %v6364 = vrot.slane %v6349, 1
    %v6365 = vsel %vm424, %v6362, %v6364
    %v6370 = vadd.f32 %v6260, %v6358
    %v6371 = vadd.f32 %v6261, %v6360
    %v6372 = vadd.f32 %v6262, %v6363
    %v6373 = vadd.f32 %v6263, %v6365
    %s6374 = sld [smem:[#allocation11 + $0x4b]]
    %v6375 = vstv %s6374
    %v6376 = vmul.f32 %v2642, %v6375
    %v6377 = vmul.f32 %v2643, %v6375
    %v6378 = vmul.f32 %v2644, %v6375
    %v6379 = vmul.f32 %v2645, %v6375
    %v6380 = vmul.f32 %v2646, %v6375
    %v6381 = vmul.f32 %v2647, %v6375
    %v6388 = vrot.slane %v6376, 1
    %v6389 = vrot.slane %v6377, 1
    %v6390 = vsel %vm424, %v6388, %v6389
    %v6391 = vrot.slane %v6378, 1
    %v6392 = vsel %vm424, %v6389, %v6391
    %v6393 = vrot.slane %v6379, 1
    %v6394 = vrot.slane %v6380, 1
    %v6395 = vsel %vm424, %v6393, %v6394
    %v6396 = vrot.slane %v6381, 1
    %v6397 = vsel %vm424, %v6394, %v6396
    %v6402 = vadd.f32 %v6286, %v6390
    %v6403 = vadd.f32 %v6287, %v6392
    %v6404 = vadd.f32 %v6288, %v6395
    %v6405 = vadd.f32 %v6289, %v6397
    %s6406 = sld [smem:[#allocation11 + $0x78]]
    %v6407 = vstv %s6406
    %v6408 = vmul.f32 %v2642, %v6407
    %v6409 = vmul.f32 %v2643, %v6407
    %v6410 = vmul.f32 %v2644, %v6407
    %v6411 = vmul.f32 %v2645, %v6407
    %v6412 = vmul.f32 %v2646, %v6407
    %v6413 = vmul.f32 %v2647, %v6407
    %v6420 = vrot.slane %v6408, 1
    %v6421 = vrot.slane %v6409, 1
    %v6422 = vsel %vm424, %v6420, %v6421
    %v6423 = vrot.slane %v6410, 1
    %v6424 = vsel %vm424, %v6421, %v6423
    %v6425 = vrot.slane %v6411, 1
    %v6426 = vrot.slane %v6412, 1
    %v6427 = vsel %vm424, %v6425, %v6426
    %v6428 = vrot.slane %v6413, 1
    %v6429 = vsel %vm424, %v6426, %v6428
    %v6434 = vadd.f32 %v6312, %v6422
    %v6435 = vadd.f32 %v6313, %v6424
    %v6436 = vadd.f32 %v6314, %v6427
    %v6437 = vadd.f32 %v6315, %v6429
    %s6438 = sld [smem:[#allocation11 + $0xa5]]
    %v6439 = vstv %s6438
    %v6440 = vmul.f32 %v2642, %v6439
    %v6441 = vmul.f32 %v2643, %v6439
    %v6442 = vmul.f32 %v2644, %v6439
    %v6443 = vmul.f32 %v2645, %v6439
    %v6444 = vmul.f32 %v2646, %v6439
    %v6445 = vmul.f32 %v2647, %v6439
    %v6452 = vrot.slane %v6440, 1
    %v6453 = vrot.slane %v6441, 1
    %v6454 = vsel %vm424, %v6452, %v6453
    %v6455 = vrot.slane %v6442, 1
    %v6456 = vsel %vm424, %v6453, %v6455
    %v6457 = vrot.slane %v6443, 1
    %v6458 = vrot.slane %v6444, 1
    %v6459 = vsel %vm424, %v6457, %v6458
    %v6460 = vrot.slane %v6445, 1
    %v6461 = vsel %vm424, %v6458, %v6460
    %v6466 = vadd.f32 %v6338, %v6454
    %v6467 = vadd.f32 %v6339, %v6456
    %v6468 = vadd.f32 %v6340, %v6459
    %v6469 = vadd.f32 %v6341, %v6461
    %s6470 = sld [smem:[#allocation11 + $0x1f]]
    %v6471 = vstv %s6470
    %v6472 = vmul.f32 %v2642, %v6471
    %v6473 = vmul.f32 %v2643, %v6471
    %v6474 = vmul.f32 %v2644, %v6471
    %v6475 = vmul.f32 %v2645, %v6471
    %v6476 = vmul.f32 %v2646, %v6471
    %v6477 = vmul.f32 %v2647, %v6471
    %v6484 = vrot.slane %v6472, 1
    %v6485 = vrot.slane %v6473, 1
    %v6486 = vsel %vm424, %v6484, %v6485
    %v6487 = vrot.slane %v6474, 1
    %v6488 = vsel %vm424, %v6485, %v6487
    %v6489 = vrot.slane %v6475, 1
    %v6490 = vrot.slane %v6476, 1
    %v6491 = vsel %vm424, %v6489, %v6490
    %v6492 = vrot.slane %v6477, 1
    %v6493 = vsel %vm424, %v6490, %v6492
    %6494 = vrot.lane.b32.xlu0 %v6486, 127
    %v6495 = vpop.permute.xlu0 %6494
    %6496 = vrot.lane.b32.xlu0 %v6488, 127
    %v6497 = vpop.permute.xlu0 %6496
    %6498 = vrot.lane.b32.xlu0 %v6491, 127
    %v6499 = vpop.permute.xlu0 %6498
    %6500 = vrot.lane.b32.xlu0 %v6493, 127
    %v6501 = vpop.permute.xlu0 %6500
    %v6506 = vadd.f32 %v6370, %v6495
    %v6507 = vadd.f32 %v6371, %v6497
    %v6508 = vadd.f32 %v6372, %v6499
    %v6509 = vadd.f32 %v6373, %v6501
    %s6510 = sld [smem:[#allocation11 + $0x4c]]
    %v6511 = vstv %s6510
    %v6512 = vmul.f32 %v2642, %v6511
    %v6513 = vmul.f32 %v2643, %v6511
    %v6514 = vmul.f32 %v2644, %v6511
    %v6515 = vmul.f32 %v2645, %v6511
    %v6516 = vmul.f32 %v2646, %v6511
    %v6517 = vmul.f32 %v2647, %v6511
    %v6524 = vrot.slane %v6512, 1
    %v6525 = vrot.slane %v6513, 1
    %v6526 = vsel %vm424, %v6524, %v6525
    %v6527 = vrot.slane %v6514, 1
    %v6528 = vsel %vm424, %v6525, %v6527
    %v6529 = vrot.slane %v6515, 1
    %v6530 = vrot.slane %v6516, 1
    %v6531 = vsel %vm424, %v6529, %v6530
    %v6532 = vrot.slane %v6517, 1
    %v6533 = vsel %vm424, %v6530, %v6532
    %6534 = vrot.lane.b32.xlu0 %v6526, 127
    %v6535 = vpop.permute.xlu0 %6534
    %6536 = vrot.lane.b32.xlu0 %v6528, 127
    %v6537 = vpop.permute.xlu0 %6536
    %6538 = vrot.lane.b32.xlu0 %v6531, 127
    %v6539 = vpop.permute.xlu0 %6538
    %6540 = vrot.lane.b32.xlu0 %v6533, 127
    %v6541 = vpop.permute.xlu0 %6540
    %v6546 = vadd.f32 %v6402, %v6535
    %v6547 = vadd.f32 %v6403, %v6537
    %v6548 = vadd.f32 %v6404, %v6539
    %v6549 = vadd.f32 %v6405, %v6541
    %s6550 = sld [smem:[#allocation11 + $0x79]]
    %v6551 = vstv %s6550
    %v6552 = vmul.f32 %v2642, %v6551
    %v6553 = vmul.f32 %v2643, %v6551
    %v6554 = vmul.f32 %v2644, %v6551
    %v6555 = vmul.f32 %v2645, %v6551
    %v6556 = vmul.f32 %v2646, %v6551
    %v6557 = vmul.f32 %v2647, %v6551
    %v6564 = vrot.slane %v6552, 1
    %v6565 = vrot.slane %v6553, 1
    %v6566 = vsel %vm424, %v6564, %v6565
    %v6567 = vrot.slane %v6554, 1
    %v6568 = vsel %vm424, %v6565, %v6567
    %v6569 = vrot.slane %v6555, 1
    %v6570 = vrot.slane %v6556, 1
    %v6571 = vsel %vm424, %v6569, %v6570
    %v6572 = vrot.slane %v6557, 1
    %v6573 = vsel %vm424, %v6570, %v6572
    %6574 = vrot.lane.b32.xlu0 %v6566, 127
    %v6575 = vpop.permute.xlu0 %6574
    %6576 = vrot.lane.b32.xlu0 %v6568, 127
    %v6577 = vpop.permute.xlu0 %6576
    %6578 = vrot.lane.b32.xlu0 %v6571, 127
    %v6579 = vpop.permute.xlu0 %6578
    %6580 = vrot.lane.b32.xlu0 %v6573, 127
    %v6581 = vpop.permute.xlu0 %6580
    %v6586 = vadd.f32 %v6434, %v6575
    %v6587 = vadd.f32 %v6435, %v6577
    %v6588 = vadd.f32 %v6436, %v6579
    %v6589 = vadd.f32 %v6437, %v6581
    %s6590 = sld [smem:[#allocation11 + $0xa6]]
    %v6591 = vstv %s6590
    %v6592 = vmul.f32 %v2642, %v6591
    %v6593 = vmul.f32 %v2643, %v6591
    %v6594 = vmul.f32 %v2644, %v6591
    %v6595 = vmul.f32 %v2645, %v6591
    %v6596 = vmul.f32 %v2646, %v6591
    %v6597 = vmul.f32 %v2647, %v6591
    %v6604 = vrot.slane %v6592, 1
    %v6605 = vrot.slane %v6593, 1
    %v6606 = vsel %vm424, %v6604, %v6605
    %v6607 = vrot.slane %v6594, 1
    %v6608 = vsel %vm424, %v6605, %v6607
    %v6609 = vrot.slane %v6595, 1
    %v6610 = vrot.slane %v6596, 1
    %v6611 = vsel %vm424, %v6609, %v6610
    %v6612 = vrot.slane %v6597, 1
    %v6613 = vsel %vm424, %v6610, %v6612
    %6614 = vrot.lane.b32.xlu0 %v6606, 127
    %v6615 = vpop.permute.xlu0 %6614
    %6616 = vrot.lane.b32.xlu0 %v6608, 127
    %v6617 = vpop.permute.xlu0 %6616
    %6618 = vrot.lane.b32.xlu0 %v6611, 127
    %v6619 = vpop.permute.xlu0 %6618
    %6620 = vrot.lane.b32.xlu0 %v6613, 127
    %v6621 = vpop.permute.xlu0 %6620
    %v6626 = vadd.f32 %v6466, %v6615
    %v6627 = vadd.f32 %v6467, %v6617
    %v6628 = vadd.f32 %v6468, %v6619
    %v6629 = vadd.f32 %v6469, %v6621
    %s6630 = sld [smem:[#allocation11 + $0x20]]
    %v6631 = vstv %s6630
    %v6632 = vmul.f32 %v2642, %v6631
    %v6633 = vmul.f32 %v2643, %v6631
    %v6634 = vmul.f32 %v2644, %v6631
    %v6635 = vmul.f32 %v2645, %v6631
    %v6636 = vmul.f32 %v2646, %v6631
    %v6637 = vmul.f32 %v2647, %v6631
    %v6644 = vrot.slane %v6632, 1
    %v6645 = vrot.slane %v6633, 1
    %v6646 = vsel %vm424, %v6644, %v6645
    %v6647 = vrot.slane %v6634, 1
    %v6648 = vsel %vm424, %v6645, %v6647
    %v6649 = vrot.slane %v6635, 1
    %v6650 = vrot.slane %v6636, 1
    %v6651 = vsel %vm424, %v6649, %v6650
    %v6652 = vrot.slane %v6637, 1
    %v6653 = vsel %vm424, %v6650, %v6652
    %6654 = vrot.lane.b32.xlu0 %v6646, 126
    %v6655 = vpop.permute.xlu0 %6654
    %6656 = vrot.lane.b32.xlu0 %v6648, 126
    %v6657 = vpop.permute.xlu0 %6656
    %6658 = vrot.lane.b32.xlu0 %v6651, 126
    %v6659 = vpop.permute.xlu0 %6658
    %6660 = vrot.lane.b32.xlu0 %v6653, 126
    %v6661 = vpop.permute.xlu0 %6660
    %v6666 = vadd.f32 %v6506, %v6655
    %v6667 = vadd.f32 %v6507, %v6657
    %v6668 = vadd.f32 %v6508, %v6659
    %v6669 = vadd.f32 %v6509, %v6661
    %s6670 = sld [smem:[#allocation11 + $0x4d]]
    %v6671 = vstv %s6670
    %v6672 = vmul.f32 %v2642, %v6671
    %v6673 = vmul.f32 %v2643, %v6671
    %v6674 = vmul.f32 %v2644, %v6671
    %v6675 = vmul.f32 %v2645, %v6671
    %v6676 = vmul.f32 %v2646, %v6671
    %v6677 = vmul.f32 %v2647, %v6671
    %v6684 = vrot.slane %v6672, 1
    %v6685 = vrot.slane %v6673, 1
    %v6686 = vsel %vm424, %v6684, %v6685
    %v6687 = vrot.slane %v6674, 1
    %v6688 = vsel %vm424, %v6685, %v6687
    %v6689 = vrot.slane %v6675, 1
    %v6690 = vrot.slane %v6676, 1
    %v6691 = vsel %vm424, %v6689, %v6690
    %v6692 = vrot.slane %v6677, 1
    %v6693 = vsel %vm424, %v6690, %v6692
    %6694 = vrot.lane.b32.xlu0 %v6686, 126
    %v6695 = vpop.permute.xlu0 %6694
    %6696 = vrot.lane.b32.xlu0 %v6688, 126
    %v6697 = vpop.permute.xlu0 %6696
    %6698 = vrot.lane.b32.xlu0 %v6691, 126
    %v6699 = vpop.permute.xlu0 %6698
    %6700 = vrot.lane.b32.xlu0 %v6693, 126
    %v6701 = vpop.permute.xlu0 %6700
    %v6706 = vadd.f32 %v6546, %v6695
    %v6707 = vadd.f32 %v6547, %v6697
    %v6708 = vadd.f32 %v6548, %v6699
    %v6709 = vadd.f32 %v6549, %v6701
    %s6710 = sld [smem:[#allocation11 + $0x7a]]
    %v6711 = vstv %s6710
    %v6712 = vmul.f32 %v2642, %v6711
    %v6713 = vmul.f32 %v2643, %v6711
    %v6714 = vmul.f32 %v2644, %v6711
    %v6715 = vmul.f32 %v2645, %v6711
    %v6716 = vmul.f32 %v2646, %v6711
    %v6717 = vmul.f32 %v2647, %v6711
    %v6724 = vrot.slane %v6712, 1
    %v6725 = vrot.slane %v6713, 1
    %v6726 = vsel %vm424, %v6724, %v6725
    %v6727 = vrot.slane %v6714, 1
    %v6728 = vsel %vm424, %v6725, %v6727
    %v6729 = vrot.slane %v6715, 1
    %v6730 = vrot.slane %v6716, 1
    %v6731 = vsel %vm424, %v6729, %v6730
    %v6732 = vrot.slane %v6717, 1
    %v6733 = vsel %vm424, %v6730, %v6732
    %6734 = vrot.lane.b32.xlu0 %v6726, 126
    %v6735 = vpop.permute.xlu0 %6734
    %6736 = vrot.lane.b32.xlu0 %v6728, 126
    %v6737 = vpop.permute.xlu0 %6736
    %6738 = vrot.lane.b32.xlu0 %v6731, 126
    %v6739 = vpop.permute.xlu0 %6738
    %6740 = vrot.lane.b32.xlu0 %v6733, 126
    %v6741 = vpop.permute.xlu0 %6740
    %v6746 = vadd.f32 %v6586, %v6735
    %v6747 = vadd.f32 %v6587, %v6737
    %v6748 = vadd.f32 %v6588, %v6739
    %v6749 = vadd.f32 %v6589, %v6741
    %s6750 = sld [smem:[#allocation11 + $0xa7]]
    %v6751 = vstv %s6750
    %v6752 = vmul.f32 %v2642, %v6751
    %v6753 = vmul.f32 %v2643, %v6751
    %v6754 = vmul.f32 %v2644, %v6751
    %v6755 = vmul.f32 %v2645, %v6751
    %v6756 = vmul.f32 %v2646, %v6751
    %v6757 = vmul.f32 %v2647, %v6751
    %v6764 = vrot.slane %v6752, 1
    %v6765 = vrot.slane %v6753, 1
    %v6766 = vsel %vm424, %v6764, %v6765
    %v6767 = vrot.slane %v6754, 1
    %v6768 = vsel %vm424, %v6765, %v6767
    %v6769 = vrot.slane %v6755, 1
    %v6770 = vrot.slane %v6756, 1
    %v6771 = vsel %vm424, %v6769, %v6770
    %v6772 = vrot.slane %v6757, 1
    %v6773 = vsel %vm424, %v6770, %v6772
    %6774 = vrot.lane.b32.xlu0 %v6766, 126
    %v6775 = vpop.permute.xlu0 %6774
    %6776 = vrot.lane.b32.xlu0 %v6768, 126
    %v6777 = vpop.permute.xlu0 %6776
    %6778 = vrot.lane.b32.xlu0 %v6771, 126
    %v6779 = vpop.permute.xlu0 %6778
    %6780 = vrot.lane.b32.xlu0 %v6773, 126
    %v6781 = vpop.permute.xlu0 %6780
    %v6786 = vadd.f32 %v6626, %v6775
    %v6787 = vadd.f32 %v6627, %v6777
    %v6788 = vadd.f32 %v6628, %v6779
    %v6789 = vadd.f32 %v6629, %v6781
    %s6790 = sld [smem:[#allocation11 + $0x21]]
    %v6791 = vstv %s6790
    %v6792 = vmul.f32 %v2642, %v6791
    %v6793 = vmul.f32 %v2643, %v6791
    %v6794 = vmul.f32 %v2644, %v6791
    %v6795 = vmul.f32 %v2645, %v6791
    %v6796 = vmul.f32 %v2646, %v6791
    %v6797 = vmul.f32 %v2647, %v6791
    %v6804 = vrot.slane %v6792, 2
    %v6805 = vrot.slane %v6793, 2
    %v6806 = vsel %vm865, %v6804, %v6805
    %v6807 = vrot.slane %v6794, 2
    %v6808 = vsel %vm865, %v6805, %v6807
    %v6809 = vrot.slane %v6795, 2
    %v6810 = vrot.slane %v6796, 2
    %v6811 = vsel %vm865, %v6809, %v6810
    %v6812 = vrot.slane %v6797, 2
    %v6813 = vsel %vm865, %v6810, %v6812
    %v6818 = vadd.f32 %v6666, %v6806
    %v6819 = vadd.f32 %v6667, %v6808
    %v6820 = vadd.f32 %v6668, %v6811
    %v6821 = vadd.f32 %v6669, %v6813
    %s6822 = sld [smem:[#allocation11 + $0x4e]]
    %v6823 = vstv %s6822
    %v6824 = vmul.f32 %v2642, %v6823
    %v6825 = vmul.f32 %v2643, %v6823
    %v6826 = vmul.f32 %v2644, %v6823
    %v6827 = vmul.f32 %v2645, %v6823
    %v6828 = vmul.f32 %v2646, %v6823
    %v6829 = vmul.f32 %v2647, %v6823
    %v6836 = vrot.slane %v6824, 2
    %v6837 = vrot.slane %v6825, 2
    %v6838 = vsel %vm865, %v6836, %v6837
    %v6839 = vrot.slane %v6826, 2
    %v6840 = vsel %vm865, %v6837, %v6839
    %v6841 = vrot.slane %v6827, 2
    %v6842 = vrot.slane %v6828, 2
    %v6843 = vsel %vm865, %v6841, %v6842
    %v6844 = vrot.slane %v6829, 2
    %v6845 = vsel %vm865, %v6842, %v6844
    %v6850 = vadd.f32 %v6706, %v6838
    %v6851 = vadd.f32 %v6707, %v6840
    %v6852 = vadd.f32 %v6708, %v6843
    %v6853 = vadd.f32 %v6709, %v6845
    %s6854 = sld [smem:[#allocation11 + $0x7b]]
    %v6855 = vstv %s6854
    %v6856 = vmul.f32 %v2642, %v6855
    %v6857 = vmul.f32 %v2643, %v6855
    %v6858 = vmul.f32 %v2644, %v6855
    %v6859 = vmul.f32 %v2645, %v6855
    %v6860 = vmul.f32 %v2646, %v6855
    %v6861 = vmul.f32 %v2647, %v6855
    %v6868 = vrot.slane %v6856, 2
    %v6869 = vrot.slane %v6857, 2
    %v6870 = vsel %vm865, %v6868, %v6869
    %v6871 = vrot.slane %v6858, 2
    %v6872 = vsel %vm865, %v6869, %v6871
    %v6873 = vrot.slane %v6859, 2
    %v6874 = vrot.slane %v6860, 2
    %v6875 = vsel %vm865, %v6873, %v6874
    %v6876 = vrot.slane %v6861, 2
    %v6877 = vsel %vm865, %v6874, %v6876
    %v6882 = vadd.f32 %v6746, %v6870
    %v6883 = vadd.f32 %v6747, %v6872
    %v6884 = vadd.f32 %v6748, %v6875
    %v6885 = vadd.f32 %v6749, %v6877
    %s6886 = sld [smem:[#allocation11 + $0xa8]]
    %v6887 = vstv %s6886
    %v6888 = vmul.f32 %v2642, %v6887
    %v6889 = vmul.f32 %v2643, %v6887
    %v6890 = vmul.f32 %v2644, %v6887
    %v6891 = vmul.f32 %v2645, %v6887
    %v6892 = vmul.f32 %v2646, %v6887
    %v6893 = vmul.f32 %v2647, %v6887
    %v6900 = vrot.slane %v6888, 2
    %v6901 = vrot.slane %v6889, 2
    %v6902 = vsel %vm865, %v6900, %v6901
    %v6903 = vrot.slane %v6890, 2
    %v6904 = vsel %vm865, %v6901, %v6903
    %v6905 = vrot.slane %v6891, 2
    %v6906 = vrot.slane %v6892, 2
    %v6907 = vsel %vm865, %v6905, %v6906
    %v6908 = vrot.slane %v6893, 2
    %v6909 = vsel %vm865, %v6906, %v6908
    %v6914 = vadd.f32 %v6786, %v6902
    %v6915 = vadd.f32 %v6787, %v6904
    %v6916 = vadd.f32 %v6788, %v6907
    %v6917 = vadd.f32 %v6789, %v6909
    %s6918 = sld [smem:[#allocation11 + $0x22]]
    %v6919 = vstv %s6918
    %v6920 = vmul.f32 %v2642, %v6919
    %v6921 = vmul.f32 %v2643, %v6919
    %v6922 = vmul.f32 %v2644, %v6919
    %v6923 = vmul.f32 %v2645, %v6919
    %v6924 = vmul.f32 %v2646, %v6919
    %v6925 = vmul.f32 %v2647, %v6919
    %v6932 = vrot.slane %v6920, 2
    %v6933 = vrot.slane %v6921, 2
    %v6934 = vsel %vm865, %v6932, %v6933
    %v6935 = vrot.slane %v6922, 2
    %v6936 = vsel %vm865, %v6933, %v6935
    %v6937 = vrot.slane %v6923, 2
    %v6938 = vrot.slane %v6924, 2
    %v6939 = vsel %vm865, %v6937, %v6938
    %v6940 = vrot.slane %v6925, 2
    %v6941 = vsel %vm865, %v6938, %v6940
    %6942 = vrot.lane.b32.xlu0 %v6934, 127
    %v6943 = vpop.permute.xlu0 %6942
    %6944 = vrot.lane.b32.xlu0 %v6936, 127
    %v6945 = vpop.permute.xlu0 %6944
    %6946 = vrot.lane.b32.xlu0 %v6939, 127
    %v6947 = vpop.permute.xlu0 %6946
    %6948 = vrot.lane.b32.xlu0 %v6941, 127
    %v6949 = vpop.permute.xlu0 %6948
    %v6954 = vadd.f32 %v6818, %v6943
    %v6955 = vadd.f32 %v6819, %v6945
    %v6956 = vadd.f32 %v6820, %v6947
    %v6957 = vadd.f32 %v6821, %v6949
    %s6958 = sld [smem:[#allocation11 + $0x4f]]
    %v6959 = vstv %s6958
    %v6960 = vmul.f32 %v2642, %v6959
    %v6961 = vmul.f32 %v2643, %v6959
    %v6962 = vmul.f32 %v2644, %v6959
    %v6963 = vmul.f32 %v2645, %v6959
    %v6964 = vmul.f32 %v2646, %v6959
    %v6965 = vmul.f32 %v2647, %v6959
    %v6972 = vrot.slane %v6960, 2
    %v6973 = vrot.slane %v6961, 2
    %v6974 = vsel %vm865, %v6972, %v6973
    %v6975 = vrot.slane %v6962, 2
    %v6976 = vsel %vm865, %v6973, %v6975
    %v6977 = vrot.slane %v6963, 2
    %v6978 = vrot.slane %v6964, 2
    %v6979 = vsel %vm865, %v6977, %v6978
    %v6980 = vrot.slane %v6965, 2
    %v6981 = vsel %vm865, %v6978, %v6980
    %6982 = vrot.lane.b32.xlu0 %v6974, 127
    %v6983 = vpop.permute.xlu0 %6982
    %6984 = vrot.lane.b32.xlu0 %v6976, 127
    %v6985 = vpop.permute.xlu0 %6984
    %6986 = vrot.lane.b32.xlu0 %v6979, 127
    %v6987 = vpop.permute.xlu0 %6986
    %6988 = vrot.lane.b32.xlu0 %v6981, 127
    %v6989 = vpop.permute.xlu0 %6988
    %v6994 = vadd.f32 %v6850, %v6983
    %v6995 = vadd.f32 %v6851, %v6985
    %v6996 = vadd.f32 %v6852, %v6987
    %v6997 = vadd.f32 %v6853, %v6989
    %s6998 = sld [smem:[#allocation11 + $0x7c]]
    %v6999 = vstv %s6998
    %v7000 = vmul.f32 %v2642, %v6999
    %v7001 = vmul.f32 %v2643, %v6999
    %v7002 = vmul.f32 %v2644, %v6999
    %v7003 = vmul.f32 %v2645, %v6999
    %v7004 = vmul.f32 %v2646, %v6999
    %v7005 = vmul.f32 %v2647, %v6999
    %v7012 = vrot.slane %v7000, 2
    %v7013 = vrot.slane %v7001, 2
    %v7014 = vsel %vm865, %v7012, %v7013
    %v7015 = vrot.slane %v7002, 2
    %v7016 = vsel %vm865, %v7013, %v7015
    %v7017 = vrot.slane %v7003, 2
    %v7018 = vrot.slane %v7004, 2
    %v7019 = vsel %vm865, %v7017, %v7018
    %v7020 = vrot.slane %v7005, 2
    %v7021 = vsel %vm865, %v7018, %v7020
    %7022 = vrot.lane.b32.xlu0 %v7014, 127
    %v7023 = vpop.permute.xlu0 %7022
    %7024 = vrot.lane.b32.xlu0 %v7016, 127
    %v7025 = vpop.permute.xlu0 %7024
    %7026 = vrot.lane.b32.xlu0 %v7019, 127
    %v7027 = vpop.permute.xlu0 %7026
    %7028 = vrot.lane.b32.xlu0 %v7021, 127
    %v7029 = vpop.permute.xlu0 %7028
    %v7034 = vadd.f32 %v6882, %v7023
    %v7035 = vadd.f32 %v6883, %v7025
    %v7036 = vadd.f32 %v6884, %v7027
    %v7037 = vadd.f32 %v6885, %v7029
    %s7038 = sld [smem:[#allocation11 + $0xa9]]
    %v7039 = vstv %s7038
    %v7040 = vmul.f32 %v2642, %v7039
    %v7041 = vmul.f32 %v2643, %v7039
    %v7042 = vmul.f32 %v2644, %v7039
    %v7043 = vmul.f32 %v2645, %v7039
    %v7044 = vmul.f32 %v2646, %v7039
    %v7045 = vmul.f32 %v2647, %v7039
    %v7052 = vrot.slane %v7040, 2
    %v7053 = vrot.slane %v7041, 2
    %v7054 = vsel %vm865, %v7052, %v7053
    %v7055 = vrot.slane %v7042, 2
    %v7056 = vsel %vm865, %v7053, %v7055
    %v7057 = vrot.slane %v7043, 2
    %v7058 = vrot.slane %v7044, 2
    %v7059 = vsel %vm865, %v7057, %v7058
    %v7060 = vrot.slane %v7045, 2
    %v7061 = vsel %vm865, %v7058, %v7060
    %7062 = vrot.lane.b32.xlu0 %v7054, 127
    %v7063 = vpop.permute.xlu0 %7062
    %7064 = vrot.lane.b32.xlu0 %v7056, 127
    %v7065 = vpop.permute.xlu0 %7064
    %7066 = vrot.lane.b32.xlu0 %v7059, 127
    %v7067 = vpop.permute.xlu0 %7066
    %7068 = vrot.lane.b32.xlu0 %v7061, 127
    %v7069 = vpop.permute.xlu0 %7068
    %v7074 = vadd.f32 %v6914, %v7063
    %v7075 = vadd.f32 %v6915, %v7065
    %v7076 = vadd.f32 %v6916, %v7067
    %v7077 = vadd.f32 %v6917, %v7069
    %s7078 = sld [smem:[#allocation11 + $0x23]]
    %v7079 = vstv %s7078
    %v7080 = vmul.f32 %v2642, %v7079
    %v7081 = vmul.f32 %v2643, %v7079
    %v7082 = vmul.f32 %v2644, %v7079
    %v7083 = vmul.f32 %v2645, %v7079
    %v7084 = vmul.f32 %v2646, %v7079
    %v7085 = vmul.f32 %v2647, %v7079
    %v7092 = vrot.slane %v7080, 2
    %v7093 = vrot.slane %v7081, 2
    %v7094 = vsel %vm865, %v7092, %v7093
    %v7095 = vrot.slane %v7082, 2
    %v7096 = vsel %vm865, %v7093, %v7095
    %v7097 = vrot.slane %v7083, 2
    %v7098 = vrot.slane %v7084, 2
    %v7099 = vsel %vm865, %v7097, %v7098
    %v7100 = vrot.slane %v7085, 2
    %v7101 = vsel %vm865, %v7098, %v7100
    %7102 = vrot.lane.b32.xlu0 %v7094, 126
    %v7103 = vpop.permute.xlu0 %7102
    %7104 = vrot.lane.b32.xlu0 %v7096, 126
    %v7105 = vpop.permute.xlu0 %7104
    %7106 = vrot.lane.b32.xlu0 %v7099, 126
    %v7107 = vpop.permute.xlu0 %7106
    %7108 = vrot.lane.b32.xlu0 %v7101, 126
    %v7109 = vpop.permute.xlu0 %7108
    %v7114 = vadd.f32 %v6954, %v7103
    %v7115 = vadd.f32 %v6955, %v7105
    %v7116 = vadd.f32 %v6956, %v7107
    %v7117 = vadd.f32 %v6957, %v7109
    %s7118 = sld [smem:[#allocation11 + $0x50]]
    %v7119 = vstv %s7118
    %v7120 = vmul.f32 %v2642, %v7119
    %v7121 = vmul.f32 %v2643, %v7119
    %v7122 = vmul.f32 %v2644, %v7119
    %v7123 = vmul.f32 %v2645, %v7119
    %v7124 = vmul.f32 %v2646, %v7119
    %v7125 = vmul.f32 %v2647, %v7119
    %v7132 = vrot.slane %v7120, 2
    %v7133 = vrot.slane %v7121, 2
    %v7134 = vsel %vm865, %v7132, %v7133
    %v7135 = vrot.slane %v7122, 2
    %v7136 = vsel %vm865, %v7133, %v7135
    %v7137 = vrot.slane %v7123, 2
    %v7138 = vrot.slane %v7124, 2
    %v7139 = vsel %vm865, %v7137, %v7138
    %v7140 = vrot.slane %v7125, 2
    %v7141 = vsel %vm865, %v7138, %v7140
    %7142 = vrot.lane.b32.xlu0 %v7134, 126
    %v7143 = vpop.permute.xlu0 %7142
    %7144 = vrot.lane.b32.xlu0 %v7136, 126
    %v7145 = vpop.permute.xlu0 %7144
    %7146 = vrot.lane.b32.xlu0 %v7139, 126
    %v7147 = vpop.permute.xlu0 %7146
    %7148 = vrot.lane.b32.xlu0 %v7141, 126
    %v7149 = vpop.permute.xlu0 %7148
    %v7154 = vadd.f32 %v6994, %v7143
    %v7155 = vadd.f32 %v6995, %v7145
    %v7156 = vadd.f32 %v6996, %v7147
    %v7157 = vadd.f32 %v6997, %v7149
    %s7158 = sld [smem:[#allocation11 + $0x7d]]
    %v7159 = vstv %s7158
    %v7160 = vmul.f32 %v2642, %v7159
    %v7161 = vmul.f32 %v2643, %v7159
    %v7162 = vmul.f32 %v2644, %v7159
    %v7163 = vmul.f32 %v2645, %v7159
    %v7164 = vmul.f32 %v2646, %v7159
    %v7165 = vmul.f32 %v2647, %v7159
    %v7172 = vrot.slane %v7160, 2
    %v7173 = vrot.slane %v7161, 2
    %v7174 = vsel %vm865, %v7172, %v7173
    %v7175 = vrot.slane %v7162, 2
    %v7176 = vsel %vm865, %v7173, %v7175
    %v7177 = vrot.slane %v7163, 2
    %v7178 = vrot.slane %v7164, 2
    %v7179 = vsel %vm865, %v7177, %v7178
    %v7180 = vrot.slane %v7165, 2
    %v7181 = vsel %vm865, %v7178, %v7180
    %7182 = vrot.lane.b32.xlu0 %v7174, 126
    %v7183 = vpop.permute.xlu0 %7182
    %7184 = vrot.lane.b32.xlu0 %v7176, 126
    %v7185 = vpop.permute.xlu0 %7184
    %7186 = vrot.lane.b32.xlu0 %v7179, 126
    %v7187 = vpop.permute.xlu0 %7186
    %7188 = vrot.lane.b32.xlu0 %v7181, 126
    %v7189 = vpop.permute.xlu0 %7188
    %v7194 = vadd.f32 %v7034, %v7183
    %v7195 = vadd.f32 %v7035, %v7185
    %v7196 = vadd.f32 %v7036, %v7187
    %v7197 = vadd.f32 %v7037, %v7189
    %s7198 = sld [smem:[#allocation11 + $0xaa]]
    %v7199 = vstv %s7198
    %v7200 = vmul.f32 %v2642, %v7199
    %v7201 = vmul.f32 %v2643, %v7199
    %v7202 = vmul.f32 %v2644, %v7199
    %v7203 = vmul.f32 %v2645, %v7199
    %v7204 = vmul.f32 %v2646, %v7199
    %v7205 = vmul.f32 %v2647, %v7199
    %v7212 = vrot.slane %v7200, 2
    %v7213 = vrot.slane %v7201, 2
    %v7214 = vsel %vm865, %v7212, %v7213
    %v7215 = vrot.slane %v7202, 2
    %v7216 = vsel %vm865, %v7213, %v7215
    %v7217 = vrot.slane %v7203, 2
    %v7218 = vrot.slane %v7204, 2
    %v7219 = vsel %vm865, %v7217, %v7218
    %v7220 = vrot.slane %v7205, 2
    %v7221 = vsel %vm865, %v7218, %v7220
    %7222 = vrot.lane.b32.xlu0 %v7214, 126
    %v7223 = vpop.permute.xlu0 %7222
    %7224 = vrot.lane.b32.xlu0 %v7216, 126
    %v7225 = vpop.permute.xlu0 %7224
    %7226 = vrot.lane.b32.xlu0 %v7219, 126
    %v7227 = vpop.permute.xlu0 %7226
    %7228 = vrot.lane.b32.xlu0 %v7221, 126
    %v7229 = vpop.permute.xlu0 %7228
    %v7234 = vadd.f32 %v7074, %v7223
    %v7235 = vadd.f32 %v7075, %v7225
    %v7236 = vadd.f32 %v7076, %v7227
    %v7237 = vadd.f32 %v7077, %v7229
    %s7238 = sld [smem:[#allocation11 + $0x24]]
    %v7239 = vstv %s7238
    %v7240 = vmul.f32 %v2648, %v7239
    %v7241 = vmul.f32 %v2649, %v7239
    %v7242 = vmul.f32 %v2651, %v7239
    %v7243 = vmul.f32 %v2652, %v7239
    %v7244 = vadd.f32 %v7114, %v7240
    %v7245 = vadd.f32 %v7115, %v7241
    %v7246 = vadd.f32 %v7116, %v7242
    %v7247 = vadd.f32 %v7117, %v7243
    %s7248 = sld [smem:[#allocation11 + $0x51]]
    %v7249 = vstv %s7248
    %v7250 = vmul.f32 %v2648, %v7249
    %v7251 = vmul.f32 %v2649, %v7249
    %v7252 = vmul.f32 %v2651, %v7249
    %v7253 = vmul.f32 %v2652, %v7249
    %v7254 = vadd.f32 %v7154, %v7250
    %v7255 = vadd.f32 %v7155, %v7251
    %v7256 = vadd.f32 %v7156, %v7252
    %v7257 = vadd.f32 %v7157, %v7253
    %s7258 = sld [smem:[#allocation11 + $0x7e]]
    %v7259 = vstv %s7258
    %v7260 = vmul.f32 %v2648, %v7259
    %v7261 = vmul.f32 %v2649, %v7259
    %v7262 = vmul.f32 %v2651, %v7259
    %v7263 = vmul.f32 %v2652, %v7259
    %v7264 = vadd.f32 %v7194, %v7260
    %v7265 = vadd.f32 %v7195, %v7261
    %v7266 = vadd.f32 %v7196, %v7262
    %v7267 = vadd.f32 %v7197, %v7263
    %s7268 = sld [smem:[#allocation11 + $0xab]]
    %v7269 = vstv %s7268
    %v7270 = vmul.f32 %v2648, %v7269
    %v7271 = vmul.f32 %v2649, %v7269
    %v7272 = vmul.f32 %v2651, %v7269
    %v7273 = vmul.f32 %v2652, %v7269
    %v7274 = vadd.f32 %v7234, %v7270
    %v7275 = vadd.f32 %v7235, %v7271
    %v7276 = vadd.f32 %v7236, %v7272
    %v7277 = vadd.f32 %v7237, %v7273
    %s7278 = sld [smem:[#allocation11 + $0x25]]
    %v7279 = vstv %s7278
    %v7280 = vmul.f32 %v2648, %v7279
    %v7281 = vmul.f32 %v2649, %v7279
    %v7282 = vmul.f32 %v2651, %v7279
    %v7283 = vmul.f32 %v2652, %v7279
    %7288 = vrot.lane.b32.xlu0 %v7280, 127
    %v7289 = vpop.permute.xlu0 %7288
    %7290 = vrot.lane.b32.xlu0 %v7281, 127
    %v7291 = vpop.permute.xlu0 %7290
    %7292 = vrot.lane.b32.xlu0 %v7282, 127
    %v7293 = vpop.permute.xlu0 %7292
    %7294 = vrot.lane.b32.xlu0 %v7283, 127
    %v7295 = vpop.permute.xlu0 %7294
    %v7300 = vadd.f32 %v7244, %v7289
    %v7301 = vadd.f32 %v7245, %v7291
    %v7302 = vadd.f32 %v7246, %v7293
    %v7303 = vadd.f32 %v7247, %v7295
    %s7304 = sld [smem:[#allocation11 + $0x52]]
    %v7305 = vstv %s7304
    %v7306 = vmul.f32 %v2648, %v7305
    %v7307 = vmul.f32 %v2649, %v7305
    %v7308 = vmul.f32 %v2651, %v7305
    %v7309 = vmul.f32 %v2652, %v7305
    %7314 = vrot.lane.b32.xlu0 %v7306, 127
    %v7315 = vpop.permute.xlu0 %7314
    %7316 = vrot.lane.b32.xlu0 %v7307, 127
    %v7317 = vpop.permute.xlu0 %7316
    %7318 = vrot.lane.b32.xlu0 %v7308, 127
    %v7319 = vpop.permute.xlu0 %7318
    %7320 = vrot.lane.b32.xlu0 %v7309, 127
    %v7321 = vpop.permute.xlu0 %7320
    %v7326 = vadd.f32 %v7254, %v7315
    %v7327 = vadd.f32 %v7255, %v7317
    %v7328 = vadd.f32 %v7256, %v7319
    %v7329 = vadd.f32 %v7257, %v7321
    %s7330 = sld [smem:[#allocation11 + $0x7f]]
    %v7331 = vstv %s7330
    %v7332 = vmul.f32 %v2648, %v7331
    %v7333 = vmul.f32 %v2649, %v7331
    %v7334 = vmul.f32 %v2651, %v7331
    %v7335 = vmul.f32 %v2652, %v7331
    %7340 = vrot.lane.b32.xlu0 %v7332, 127
    %v7341 = vpop.permute.xlu0 %7340
    %7342 = vrot.lane.b32.xlu0 %v7333, 127
    %v7343 = vpop.permute.xlu0 %7342
    %7344 = vrot.lane.b32.xlu0 %v7334, 127
    %v7345 = vpop.permute.xlu0 %7344
    %7346 = vrot.lane.b32.xlu0 %v7335, 127
    %v7347 = vpop.permute.xlu0 %7346
    %v7352 = vadd.f32 %v7264, %v7341
    %v7353 = vadd.f32 %v7265, %v7343
    %v7354 = vadd.f32 %v7266, %v7345
    %v7355 = vadd.f32 %v7267, %v7347
    %s7356 = sld [smem:[#allocation11 + $0xac]]
    %v7357 = vstv %s7356
    %v7358 = vmul.f32 %v2648, %v7357
    %v7359 = vmul.f32 %v2649, %v7357
    %v7360 = vmul.f32 %v2651, %v7357
    %v7361 = vmul.f32 %v2652, %v7357
    %7366 = vrot.lane.b32.xlu0 %v7358, 127
    %v7367 = vpop.permute.xlu0 %7366
    %7368 = vrot.lane.b32.xlu0 %v7359, 127
    %v7369 = vpop.permute.xlu0 %7368
    %7370 = vrot.lane.b32.xlu0 %v7360, 127
    %v7371 = vpop.permute.xlu0 %7370
    %7372 = vrot.lane.b32.xlu0 %v7361, 127
    %v7373 = vpop.permute.xlu0 %7372
    %v7378 = vadd.f32 %v7274, %v7367
    %v7379 = vadd.f32 %v7275, %v7369
    %v7380 = vadd.f32 %v7276, %v7371
    %v7381 = vadd.f32 %v7277, %v7373
    %s7382 = sld [smem:[#allocation11 + $0x26]]
    %v7383 = vstv %s7382
    %v7384 = vmul.f32 %v2648, %v7383
    %v7385 = vmul.f32 %v2649, %v7383
    %v7386 = vmul.f32 %v2651, %v7383
    %v7387 = vmul.f32 %v2652, %v7383
    %7392 = vrot.lane.b32.xlu0 %v7384, 126
    %v7393 = vpop.permute.xlu0 %7392
    %7394 = vrot.lane.b32.xlu0 %v7385, 126
    %v7395 = vpop.permute.xlu0 %7394
    %7396 = vrot.lane.b32.xlu0 %v7386, 126
    %v7397 = vpop.permute.xlu0 %7396
    %7398 = vrot.lane.b32.xlu0 %v7387, 126
    %v7399 = vpop.permute.xlu0 %7398
    %v7404 = vadd.f32 %v7300, %v7393
    %v7405 = vadd.f32 %v7301, %v7395
    %v7406 = vadd.f32 %v7302, %v7397
    %v7407 = vadd.f32 %v7303, %v7399
    %s7408 = sld [smem:[#allocation11 + $0x53]]
    %v7409 = vstv %s7408
    %v7410 = vmul.f32 %v2648, %v7409
    %v7411 = vmul.f32 %v2649, %v7409
    %v7412 = vmul.f32 %v2651, %v7409
    %v7413 = vmul.f32 %v2652, %v7409
    %7418 = vrot.lane.b32.xlu0 %v7410, 126
    %v7419 = vpop.permute.xlu0 %7418
    %7420 = vrot.lane.b32.xlu0 %v7411, 126
    %v7421 = vpop.permute.xlu0 %7420
    %7422 = vrot.lane.b32.xlu0 %v7412, 126
    %v7423 = vpop.permute.xlu0 %7422
    %7424 = vrot.lane.b32.xlu0 %v7413, 126
    %v7425 = vpop.permute.xlu0 %7424
    %v7430 = vadd.f32 %v7326, %v7419
    %v7431 = vadd.f32 %v7327, %v7421
    %v7432 = vadd.f32 %v7328, %v7423
    %v7433 = vadd.f32 %v7329, %v7425
    %s7434 = sld [smem:[#allocation11 + $0x80]]
    %v7435 = vstv %s7434
    %v7436 = vmul.f32 %v2648, %v7435
    %v7437 = vmul.f32 %v2649, %v7435
    %v7438 = vmul.f32 %v2651, %v7435
    %v7439 = vmul.f32 %v2652, %v7435
    %7444 = vrot.lane.b32.xlu0 %v7436, 126
    %v7445 = vpop.permute.xlu0 %7444
    %7446 = vrot.lane.b32.xlu0 %v7437, 126
    %v7447 = vpop.permute.xlu0 %7446
    %7448 = vrot.lane.b32.xlu0 %v7438, 126
    %v7449 = vpop.permute.xlu0 %7448
    %7450 = vrot.lane.b32.xlu0 %v7439, 126
    %v7451 = vpop.permute.xlu0 %7450
    %v7456 = vadd.f32 %v7352, %v7445
    %v7457 = vadd.f32 %v7353, %v7447
    %v7458 = vadd.f32 %v7354, %v7449
    %v7459 = vadd.f32 %v7355, %v7451
    %s7460 = sld [smem:[#allocation11 + $0xad]]
    %v7461 = vstv %s7460
    %v7462 = vmul.f32 %v2648, %v7461
    %v7463 = vmul.f32 %v2649, %v7461
    %v7464 = vmul.f32 %v2651, %v7461
    %v7465 = vmul.f32 %v2652, %v7461
    %7470 = vrot.lane.b32.xlu0 %v7462, 126
    %v7471 = vpop.permute.xlu0 %7470
    %7472 = vrot.lane.b32.xlu0 %v7463, 126
    %v7473 = vpop.permute.xlu0 %7472
    %7474 = vrot.lane.b32.xlu0 %v7464, 126
    %v7475 = vpop.permute.xlu0 %7474
    %7476 = vrot.lane.b32.xlu0 %v7465, 126
    %v7477 = vpop.permute.xlu0 %7476
    %v7482 = vadd.f32 %v7378, %v7471
    %v7483 = vadd.f32 %v7379, %v7473
    %v7484 = vadd.f32 %v7380, %v7475
    %v7485 = vadd.f32 %v7381, %v7477
    %s7486 = sld [smem:[#allocation11 + $0x27]]
    %v7487 = vstv %s7486
    %v7488 = vmul.f32 %v2648, %v7487
    %v7489 = vmul.f32 %v2649, %v7487
    %v7490 = vmul.f32 %v2650, %v7487
    %v7491 = vmul.f32 %v2651, %v7487
    %v7492 = vmul.f32 %v2652, %v7487
    %v7493 = vmul.f32 %v2653, %v7487
    %v7500 = vrot.slane %v7488, 1
    %v7501 = vrot.slane %v7489, 1
    %v7502 = vsel %vm424, %v7500, %v7501
    %v7503 = vrot.slane %v7490, 1
    %v7504 = vsel %vm424, %v7501, %v7503
    %v7505 = vrot.slane %v7491, 1
    %v7506 = vrot.slane %v7492, 1
    %v7507 = vsel %vm424, %v7505, %v7506
    %v7508 = vrot.slane %v7493, 1
    %v7509 = vsel %vm424, %v7506, %v7508
    %v7514 = vadd.f32 %v7404, %v7502
    %v7515 = vadd.f32 %v7405, %v7504
    %v7516 = vadd.f32 %v7406, %v7507
    %v7517 = vadd.f32 %v7407, %v7509
    %s7518 = sld [smem:[#allocation11 + $0x54]]
    %v7519 = vstv %s7518
    %v7520 = vmul.f32 %v2648, %v7519
    %v7521 = vmul.f32 %v2649, %v7519
    %v7522 = vmul.f32 %v2650, %v7519
    %v7523 = vmul.f32 %v2651, %v7519
    %v7524 = vmul.f32 %v2652, %v7519
    %v7525 = vmul.f32 %v2653, %v7519
    %v7532 = vrot.slane %v7520, 1
    %v7533 = vrot.slane %v7521, 1
    %v7534 = vsel %vm424, %v7532, %v7533
    %v7535 = vrot.slane %v7522, 1
    %v7536 = vsel %vm424, %v7533, %v7535
    %v7537 = vrot.slane %v7523, 1
    %v7538 = vrot.slane %v7524, 1
    %v7539 = vsel %vm424, %v7537, %v7538
    %v7540 = vrot.slane %v7525, 1
    %v7541 = vsel %vm424, %v7538, %v7540
    %v7546 = vadd.f32 %v7430, %v7534
    %v7547 = vadd.f32 %v7431, %v7536
    %v7548 = vadd.f32 %v7432, %v7539
    %v7549 = vadd.f32 %v7433, %v7541
    %s7550 = sld [smem:[#allocation11 + $0x81]]
    %v7551 = vstv %s7550
    %v7552 = vmul.f32 %v2648, %v7551
    %v7553 = vmul.f32 %v2649, %v7551
    %v7554 = vmul.f32 %v2650, %v7551
    %v7555 = vmul.f32 %v2651, %v7551
    %v7556 = vmul.f32 %v2652, %v7551
    %v7557 = vmul.f32 %v2653, %v7551
    %v7564 = vrot.slane %v7552, 1
    %v7565 = vrot.slane %v7553, 1
    %v7566 = vsel %vm424, %v7564, %v7565
    %v7567 = vrot.slane %v7554, 1
    %v7568 = vsel %vm424, %v7565, %v7567
    %v7569 = vrot.slane %v7555, 1
    %v7570 = vrot.slane %v7556, 1
    %v7571 = vsel %vm424, %v7569, %v7570
    %v7572 = vrot.slane %v7557, 1
    %v7573 = vsel %vm424, %v7570, %v7572
    %v7578 = vadd.f32 %v7456, %v7566
    %v7579 = vadd.f32 %v7457, %v7568
    %v7580 = vadd.f32 %v7458, %v7571
    %v7581 = vadd.f32 %v7459, %v7573
    %s7582 = sld [smem:[#allocation11 + $0xae]]
    %v7583 = vstv %s7582
    %v7584 = vmul.f32 %v2648, %v7583
    %v7585 = vmul.f32 %v2649, %v7583
    %v7586 = vmul.f32 %v2650, %v7583
    %v7587 = vmul.f32 %v2651, %v7583
    %v7588 = vmul.f32 %v2652, %v7583
    %v7589 = vmul.f32 %v2653, %v7583
    %v7596 = vrot.slane %v7584, 1
    %v7597 = vrot.slane %v7585, 1
    %v7598 = vsel %vm424, %v7596, %v7597
    %v7599 = vrot.slane %v7586, 1
    %v7600 = vsel %vm424, %v7597, %v7599
    %v7601 = vrot.slane %v7587, 1
    %v7602 = vrot.slane %v7588, 1
    %v7603 = vsel %vm424, %v7601, %v7602
    %v7604 = vrot.slane %v7589, 1
    %v7605 = vsel %vm424, %v7602, %v7604
    %v7610 = vadd.f32 %v7482, %v7598
    %v7611 = vadd.f32 %v7483, %v7600
    %v7612 = vadd.f32 %v7484, %v7603
    %v7613 = vadd.f32 %v7485, %v7605
    %s7614 = sld [smem:[#allocation11 + $0x28]]
    %v7615 = vstv %s7614
    %v7616 = vmul.f32 %v2648, %v7615
    %v7617 = vmul.f32 %v2649, %v7615
    %v7618 = vmul.f32 %v2650, %v7615
    %v7619 = vmul.f32 %v2651, %v7615
    %v7620 = vmul.f32 %v2652, %v7615
    %v7621 = vmul.f32 %v2653, %v7615
    %v7628 = vrot.slane %v7616, 1
    %v7629 = vrot.slane %v7617, 1
    %v7630 = vsel %vm424, %v7628, %v7629
    %v7631 = vrot.slane %v7618, 1
    %v7632 = vsel %vm424, %v7629, %v7631
    %v7633 = vrot.slane %v7619, 1
    %v7634 = vrot.slane %v7620, 1
    %v7635 = vsel %vm424, %v7633, %v7634
    %v7636 = vrot.slane %v7621, 1
    %v7637 = vsel %vm424, %v7634, %v7636
    %7638 = vrot.lane.b32.xlu0 %v7630, 127
    %v7639 = vpop.permute.xlu0 %7638
    %7640 = vrot.lane.b32.xlu0 %v7632, 127
    %v7641 = vpop.permute.xlu0 %7640
    %7642 = vrot.lane.b32.xlu0 %v7635, 127
    %v7643 = vpop.permute.xlu0 %7642
    %7644 = vrot.lane.b32.xlu0 %v7637, 127
    %v7645 = vpop.permute.xlu0 %7644
    %v7650 = vadd.f32 %v7514, %v7639
    %v7651 = vadd.f32 %v7515, %v7641
    %v7652 = vadd.f32 %v7516, %v7643
    %v7653 = vadd.f32 %v7517, %v7645
    %s7654 = sld [smem:[#allocation11 + $0x55]]
    %v7655 = vstv %s7654
    %v7656 = vmul.f32 %v2648, %v7655
    %v7657 = vmul.f32 %v2649, %v7655
    %v7658 = vmul.f32 %v2650, %v7655
    %v7659 = vmul.f32 %v2651, %v7655
    %v7660 = vmul.f32 %v2652, %v7655
    %v7661 = vmul.f32 %v2653, %v7655
    %v7668 = vrot.slane %v7656, 1
    %v7669 = vrot.slane %v7657, 1
    %v7670 = vsel %vm424, %v7668, %v7669
    %v7671 = vrot.slane %v7658, 1
    %v7672 = vsel %vm424, %v7669, %v7671
    %v7673 = vrot.slane %v7659, 1
    %v7674 = vrot.slane %v7660, 1
    %v7675 = vsel %vm424, %v7673, %v7674
    %v7676 = vrot.slane %v7661, 1
    %v7677 = vsel %vm424, %v7674, %v7676
    %7678 = vrot.lane.b32.xlu0 %v7670, 127
    %v7679 = vpop.permute.xlu0 %7678
    %7680 = vrot.lane.b32.xlu0 %v7672, 127
    %v7681 = vpop.permute.xlu0 %7680
    %7682 = vrot.lane.b32.xlu0 %v7675, 127
    %v7683 = vpop.permute.xlu0 %7682
    %7684 = vrot.lane.b32.xlu0 %v7677, 127
    %v7685 = vpop.permute.xlu0 %7684
    %v7690 = vadd.f32 %v7546, %v7679
    %v7691 = vadd.f32 %v7547, %v7681
    %v7692 = vadd.f32 %v7548, %v7683
    %v7693 = vadd.f32 %v7549, %v7685
    %s7694 = sld [smem:[#allocation11 + $0x82]]
    %v7695 = vstv %s7694
    %v7696 = vmul.f32 %v2648, %v7695
    %v7697 = vmul.f32 %v2649, %v7695
    %v7698 = vmul.f32 %v2650, %v7695
    %v7699 = vmul.f32 %v2651, %v7695
    %v7700 = vmul.f32 %v2652, %v7695
    %v7701 = vmul.f32 %v2653, %v7695
    %v7708 = vrot.slane %v7696, 1
    %v7709 = vrot.slane %v7697, 1
    %v7710 = vsel %vm424, %v7708, %v7709
    %v7711 = vrot.slane %v7698, 1
    %v7712 = vsel %vm424, %v7709, %v7711
    %v7713 = vrot.slane %v7699, 1
    %v7714 = vrot.slane %v7700, 1
    %v7715 = vsel %vm424, %v7713, %v7714
    %v7716 = vrot.slane %v7701, 1
    %v7717 = vsel %vm424, %v7714, %v7716
    %7718 = vrot.lane.b32.xlu0 %v7710, 127
    %v7719 = vpop.permute.xlu0 %7718
    %7720 = vrot.lane.b32.xlu0 %v7712, 127
    %v7721 = vpop.permute.xlu0 %7720
    %7722 = vrot.lane.b32.xlu0 %v7715, 127
    %v7723 = vpop.permute.xlu0 %7722
    %7724 = vrot.lane.b32.xlu0 %v7717, 127
    %v7725 = vpop.permute.xlu0 %7724
    %v7730 = vadd.f32 %v7578, %v7719
    %v7731 = vadd.f32 %v7579, %v7721
    %v7732 = vadd.f32 %v7580, %v7723
    %v7733 = vadd.f32 %v7581, %v7725
    %s7734 = sld [smem:[#allocation11 + $0xaf]]
    %v7735 = vstv %s7734
    %v7736 = vmul.f32 %v2648, %v7735
    %v7737 = vmul.f32 %v2649, %v7735
    %v7738 = vmul.f32 %v2650, %v7735
    %v7739 = vmul.f32 %v2651, %v7735
    %v7740 = vmul.f32 %v2652, %v7735
    %v7741 = vmul.f32 %v2653, %v7735
    %v7748 = vrot.slane %v7736, 1
    %v7749 = vrot.slane %v7737, 1
    %v7750 = vsel %vm424, %v7748, %v7749
    %v7751 = vrot.slane %v7738, 1
    %v7752 = vsel %vm424, %v7749, %v7751
    %v7753 = vrot.slane %v7739, 1
    %v7754 = vrot.slane %v7740, 1
    %v7755 = vsel %vm424, %v7753, %v7754
    %v7756 = vrot.slane %v7741, 1
    %v7757 = vsel %vm424, %v7754, %v7756
    %7758 = vrot.lane.b32.xlu0 %v7750, 127
    %v7759 = vpop.permute.xlu0 %7758
    %7760 = vrot.lane.b32.xlu0 %v7752, 127
    %v7761 = vpop.permute.xlu0 %7760
    %7762 = vrot.lane.b32.xlu0 %v7755, 127
    %v7763 = vpop.permute.xlu0 %7762
    %7764 = vrot.lane.b32.xlu0 %v7757, 127
    %v7765 = vpop.permute.xlu0 %7764
    %v7770 = vadd.f32 %v7610, %v7759
    %v7771 = vadd.f32 %v7611, %v7761
    %v7772 = vadd.f32 %v7612, %v7763
    %v7773 = vadd.f32 %v7613, %v7765
    %s7774 = sld [smem:[#allocation11 + $0x29]]
    %v7775 = vstv %s7774
    %v7776 = vmul.f32 %v2648, %v7775
    %v7777 = vmul.f32 %v2649, %v7775
    %v7778 = vmul.f32 %v2650, %v7775
    %v7779 = vmul.f32 %v2651, %v7775
    %v7780 = vmul.f32 %v2652, %v7775
    %v7781 = vmul.f32 %v2653, %v7775
    %v7788 = vrot.slane %v7776, 1
    %v7789 = vrot.slane %v7777, 1
    %v7790 = vsel %vm424, %v7788, %v7789
    %v7791 = vrot.slane %v7778, 1
    %v7792 = vsel %vm424, %v7789, %v7791
    %v7793 = vrot.slane %v7779, 1
    %v7794 = vrot.slane %v7780, 1
    %v7795 = vsel %vm424, %v7793, %v7794
    %v7796 = vrot.slane %v7781, 1
    %v7797 = vsel %vm424, %v7794, %v7796
    %7798 = vrot.lane.b32.xlu0 %v7790, 126
    %v7799 = vpop.permute.xlu0 %7798
    %7800 = vrot.lane.b32.xlu0 %v7792, 126
    %v7801 = vpop.permute.xlu0 %7800
    %7802 = vrot.lane.b32.xlu0 %v7795, 126
    %v7803 = vpop.permute.xlu0 %7802
    %7804 = vrot.lane.b32.xlu0 %v7797, 126
    %v7805 = vpop.permute.xlu0 %7804
    %v7810 = vadd.f32 %v7650, %v7799
    %v7811 = vadd.f32 %v7651, %v7801
    %v7812 = vadd.f32 %v7652, %v7803
    %v7813 = vadd.f32 %v7653, %v7805
    %s7814 = sld [smem:[#allocation11 + $0x56]]
    %v7815 = vstv %s7814
    %v7816 = vmul.f32 %v2648, %v7815
    %v7817 = vmul.f32 %v2649, %v7815
    %v7818 = vmul.f32 %v2650, %v7815
    %v7819 = vmul.f32 %v2651, %v7815
    %v7820 = vmul.f32 %v2652, %v7815
    %v7821 = vmul.f32 %v2653, %v7815
    %v7828 = vrot.slane %v7816, 1
    %v7829 = vrot.slane %v7817, 1
    %v7830 = vsel %vm424, %v7828, %v7829
    %v7831 = vrot.slane %v7818, 1
    %v7832 = vsel %vm424, %v7829, %v7831
    %v7833 = vrot.slane %v7819, 1
    %v7834 = vrot.slane %v7820, 1
    %v7835 = vsel %vm424, %v7833, %v7834
    %v7836 = vrot.slane %v7821, 1
    %v7837 = vsel %vm424, %v7834, %v7836
    %7838 = vrot.lane.b32.xlu0 %v7830, 126
    %v7839 = vpop.permute.xlu0 %7838
    %7840 = vrot.lane.b32.xlu0 %v7832, 126
    %v7841 = vpop.permute.xlu0 %7840
    %7842 = vrot.lane.b32.xlu0 %v7835, 126
    %v7843 = vpop.permute.xlu0 %7842
    %7844 = vrot.lane.b32.xlu0 %v7837, 126
    %v7845 = vpop.permute.xlu0 %7844
    %v7850 = vadd.f32 %v7690, %v7839
    %v7851 = vadd.f32 %v7691, %v7841
    %v7852 = vadd.f32 %v7692, %v7843
    %v7853 = vadd.f32 %v7693, %v7845
    %s7854 = sld [smem:[#allocation11 + $0x83]]
    %v7855 = vstv %s7854
    %v7856 = vmul.f32 %v2648, %v7855
    %v7857 = vmul.f32 %v2649, %v7855
    %v7858 = vmul.f32 %v2650, %v7855
    %v7859 = vmul.f32 %v2651, %v7855
    %v7860 = vmul.f32 %v2652, %v7855
    %v7861 = vmul.f32 %v2653, %v7855
    %v7868 = vrot.slane %v7856, 1
    %v7869 = vrot.slane %v7857, 1
    %v7870 = vsel %vm424, %v7868, %v7869
    %v7871 = vrot.slane %v7858, 1
    %v7872 = vsel %vm424, %v7869, %v7871
    %v7873 = vrot.slane %v7859, 1
    %v7874 = vrot.slane %v7860, 1
    %v7875 = vsel %vm424, %v7873, %v7874
    %v7876 = vrot.slane %v7861, 1
    %v7877 = vsel %vm424, %v7874, %v7876
    %7878 = vrot.lane.b32.xlu0 %v7870, 126
    %v7879 = vpop.permute.xlu0 %7878
    %7880 = vrot.lane.b32.xlu0 %v7872, 126
    %v7881 = vpop.permute.xlu0 %7880
    %7882 = vrot.lane.b32.xlu0 %v7875, 126
    %v7883 = vpop.permute.xlu0 %7882
    %7884 = vrot.lane.b32.xlu0 %v7877, 126
    %v7885 = vpop.permute.xlu0 %7884
    %v7890 = vadd.f32 %v7730, %v7879
    %v7891 = vadd.f32 %v7731, %v7881
    %v7892 = vadd.f32 %v7732, %v7883
    %v7893 = vadd.f32 %v7733, %v7885
    %s7894 = sld [smem:[#allocation11 + $0xb0]]
    %v7895 = vstv %s7894
    %v7896 = vmul.f32 %v2648, %v7895
    %v7897 = vmul.f32 %v2649, %v7895
    %v7898 = vmul.f32 %v2650, %v7895
    %v7899 = vmul.f32 %v2651, %v7895
    %v7900 = vmul.f32 %v2652, %v7895
    %v7901 = vmul.f32 %v2653, %v7895
    %v7908 = vrot.slane %v7896, 1
    %v7909 = vrot.slane %v7897, 1
    %v7910 = vsel %vm424, %v7908, %v7909
    %v7911 = vrot.slane %v7898, 1
    %v7912 = vsel %vm424, %v7909, %v7911
    %v7913 = vrot.slane %v7899, 1
    %v7914 = vrot.slane %v7900, 1
    %v7915 = vsel %vm424, %v7913, %v7914
    %v7916 = vrot.slane %v7901, 1
    %v7917 = vsel %vm424, %v7914, %v7916
    %7918 = vrot.lane.b32.xlu0 %v7910, 126
    %v7919 = vpop.permute.xlu0 %7918
    %7920 = vrot.lane.b32.xlu0 %v7912, 126
    %v7921 = vpop.permute.xlu0 %7920
    %7922 = vrot.lane.b32.xlu0 %v7915, 126
    %v7923 = vpop.permute.xlu0 %7922
    %7924 = vrot.lane.b32.xlu0 %v7917, 126
    %v7925 = vpop.permute.xlu0 %7924
    %v7930 = vadd.f32 %v7770, %v7919
    %v7931 = vadd.f32 %v7771, %v7921
    %v7932 = vadd.f32 %v7772, %v7923
    %v7933 = vadd.f32 %v7773, %v7925
    %s7934 = sld [smem:[#allocation11 + $0x2a]]
    %v7935 = vstv %s7934
    %v7936 = vmul.f32 %v2648, %v7935
    %v7937 = vmul.f32 %v2649, %v7935
    %v7938 = vmul.f32 %v2650, %v7935
    %v7939 = vmul.f32 %v2651, %v7935
    %v7940 = vmul.f32 %v2652, %v7935
    %v7941 = vmul.f32 %v2653, %v7935
    %v7948 = vrot.slane %v7936, 2
    %v7949 = vrot.slane %v7937, 2
    %v7950 = vsel %vm865, %v7948, %v7949
    %v7951 = vrot.slane %v7938, 2
    %v7952 = vsel %vm865, %v7949, %v7951
    %v7953 = vrot.slane %v7939, 2
    %v7954 = vrot.slane %v7940, 2
    %v7955 = vsel %vm865, %v7953, %v7954
    %v7956 = vrot.slane %v7941, 2
    %v7957 = vsel %vm865, %v7954, %v7956
    %v7962 = vadd.f32 %v7810, %v7950
    %v7963 = vadd.f32 %v7811, %v7952
    %v7964 = vadd.f32 %v7812, %v7955
    %v7965 = vadd.f32 %v7813, %v7957
    %s7966 = sld [smem:[#allocation11 + $0x57]]
    %v7967 = vstv %s7966
    %v7968 = vmul.f32 %v2648, %v7967
    %v7969 = vmul.f32 %v2649, %v7967
    %v7970 = vmul.f32 %v2650, %v7967
    %v7971 = vmul.f32 %v2651, %v7967
    %v7972 = vmul.f32 %v2652, %v7967
    %v7973 = vmul.f32 %v2653, %v7967
    %v7980 = vrot.slane %v7968, 2
    %v7981 = vrot.slane %v7969, 2
    %v7982 = vsel %vm865, %v7980, %v7981
    %v7983 = vrot.slane %v7970, 2
    %v7984 = vsel %vm865, %v7981, %v7983
    %v7985 = vrot.slane %v7971, 2
    %v7986 = vrot.slane %v7972, 2
    %v7987 = vsel %vm865, %v7985, %v7986
    %v7988 = vrot.slane %v7973, 2
    %v7989 = vsel %vm865, %v7986, %v7988
    %v7994 = vadd.f32 %v7850, %v7982
    %v7995 = vadd.f32 %v7851, %v7984
    %v7996 = vadd.f32 %v7852, %v7987
    %v7997 = vadd.f32 %v7853, %v7989
    %s7998 = sld [smem:[#allocation11 + $0x84]]
    %v7999 = vstv %s7998
    %v8000 = vmul.f32 %v2648, %v7999
    %v8001 = vmul.f32 %v2649, %v7999
    %v8002 = vmul.f32 %v2650, %v7999
    %v8003 = vmul.f32 %v2651, %v7999
    %v8004 = vmul.f32 %v2652, %v7999
    %v8005 = vmul.f32 %v2653, %v7999
    %v8012 = vrot.slane %v8000, 2
    %v8013 = vrot.slane %v8001, 2
    %v8014 = vsel %vm865, %v8012, %v8013
    %v8015 = vrot.slane %v8002, 2
    %v8016 = vsel %vm865, %v8013, %v8015
    %v8017 = vrot.slane %v8003, 2
    %v8018 = vrot.slane %v8004, 2
    %v8019 = vsel %vm865, %v8017, %v8018
    %v8020 = vrot.slane %v8005, 2
    %v8021 = vsel %vm865, %v8018, %v8020
    %v8026 = vadd.f32 %v7890, %v8014
    %v8027 = vadd.f32 %v7891, %v8016
    %v8028 = vadd.f32 %v7892, %v8019
    %v8029 = vadd.f32 %v7893, %v8021
    %s8030 = sld [smem:[#allocation11 + $0xb1]]
    %v8031 = vstv %s8030
    %v8032 = vmul.f32 %v2648, %v8031
    %v8033 = vmul.f32 %v2649, %v8031
    %v8034 = vmul.f32 %v2650, %v8031
    %v8035 = vmul.f32 %v2651, %v8031
    %v8036 = vmul.f32 %v2652, %v8031
    %v8037 = vmul.f32 %v2653, %v8031
    %v8044 = vrot.slane %v8032, 2
    %v8045 = vrot.slane %v8033, 2
    %v8046 = vsel %vm865, %v8044, %v8045
    %v8047 = vrot.slane %v8034, 2
    %v8048 = vsel %vm865, %v8045, %v8047
    %v8049 = vrot.slane %v8035, 2
    %v8050 = vrot.slane %v8036, 2
    %v8051 = vsel %vm865, %v8049, %v8050
    %v8052 = vrot.slane %v8037, 2
    %v8053 = vsel %vm865, %v8050, %v8052
    %v8058 = vadd.f32 %v7930, %v8046
    %v8059 = vadd.f32 %v7931, %v8048
    %v8060 = vadd.f32 %v7932, %v8051
    %v8061 = vadd.f32 %v7933, %v8053
    %s8062 = sld [smem:[#allocation11 + $0x2b]]
    %v8063 = vstv %s8062
    %v8064 = vmul.f32 %v2648, %v8063
    %v8065 = vmul.f32 %v2649, %v8063
    %v8066 = vmul.f32 %v2650, %v8063
    %v8067 = vmul.f32 %v2651, %v8063
    %v8068 = vmul.f32 %v2652, %v8063
    %v8069 = vmul.f32 %v2653, %v8063
    %v8076 = vrot.slane %v8064, 2
    %v8077 = vrot.slane %v8065, 2
    %v8078 = vsel %vm865, %v8076, %v8077
    %v8079 = vrot.slane %v8066, 2
    %v8080 = vsel %vm865, %v8077, %v8079
    %v8081 = vrot.slane %v8067, 2
    %v8082 = vrot.slane %v8068, 2
    %v8083 = vsel %vm865, %v8081, %v8082
    %v8084 = vrot.slane %v8069, 2
    %v8085 = vsel %vm865, %v8082, %v8084
    %8086 = vrot.lane.b32.xlu0 %v8078, 127
    %v8087 = vpop.permute.xlu0 %8086
    %8088 = vrot.lane.b32.xlu0 %v8080, 127
    %v8089 = vpop.permute.xlu0 %8088
    %8090 = vrot.lane.b32.xlu0 %v8083, 127
    %v8091 = vpop.permute.xlu0 %8090
    %8092 = vrot.lane.b32.xlu0 %v8085, 127
    %v8093 = vpop.permute.xlu0 %8092
    %v8098 = vadd.f32 %v7962, %v8087
    %v8099 = vadd.f32 %v7963, %v8089
    %v8100 = vadd.f32 %v7964, %v8091
    %v8101 = vadd.f32 %v7965, %v8093
    %s8102 = sld [smem:[#allocation11 + $0x58]]
    %v8103 = vstv %s8102
    %v8104 = vmul.f32 %v2648, %v8103
    %v8105 = vmul.f32 %v2649, %v8103
    %v8106 = vmul.f32 %v2650, %v8103
    %v8107 = vmul.f32 %v2651, %v8103
    %v8108 = vmul.f32 %v2652, %v8103
    %v8109 = vmul.f32 %v2653, %v8103
    %v8116 = vrot.slane %v8104, 2
    %v8117 = vrot.slane %v8105, 2
    %v8118 = vsel %vm865, %v8116, %v8117
    %v8119 = vrot.slane %v8106, 2
    %v8120 = vsel %vm865, %v8117, %v8119
    %v8121 = vrot.slane %v8107, 2
    %v8122 = vrot.slane %v8108, 2
    %v8123 = vsel %vm865, %v8121, %v8122
    %v8124 = vrot.slane %v8109, 2
    %v8125 = vsel %vm865, %v8122, %v8124
    %8126 = vrot.lane.b32.xlu0 %v8118, 127
    %v8127 = vpop.permute.xlu0 %8126
    %8128 = vrot.lane.b32.xlu0 %v8120, 127
    %v8129 = vpop.permute.xlu0 %8128
    %8130 = vrot.lane.b32.xlu0 %v8123, 127
    %v8131 = vpop.permute.xlu0 %8130
    %8132 = vrot.lane.b32.xlu0 %v8125, 127
    %v8133 = vpop.permute.xlu0 %8132
    %v8138 = vadd.f32 %v7994, %v8127
    %v8139 = vadd.f32 %v7995, %v8129
    %v8140 = vadd.f32 %v7996, %v8131
    %v8141 = vadd.f32 %v7997, %v8133
    %s8142 = sld [smem:[#allocation11 + $0x85]]
    %v8143 = vstv %s8142
    %v8144 = vmul.f32 %v2648, %v8143
    %v8145 = vmul.f32 %v2649, %v8143
    %v8146 = vmul.f32 %v2650, %v8143
    %v8147 = vmul.f32 %v2651, %v8143
    %v8148 = vmul.f32 %v2652, %v8143
    %v8149 = vmul.f32 %v2653, %v8143
    %v8156 = vrot.slane %v8144, 2
    %v8157 = vrot.slane %v8145, 2
    %v8158 = vsel %vm865, %v8156, %v8157
    %v8159 = vrot.slane %v8146, 2
    %v8160 = vsel %vm865, %v8157, %v8159
    %v8161 = vrot.slane %v8147, 2
    %v8162 = vrot.slane %v8148, 2
    %v8163 = vsel %vm865, %v8161, %v8162
    %v8164 = vrot.slane %v8149, 2
    %v8165 = vsel %vm865, %v8162, %v8164
    %8166 = vrot.lane.b32.xlu0 %v8158, 127
    %v8167 = vpop.permute.xlu0 %8166
    %8168 = vrot.lane.b32.xlu0 %v8160, 127
    %v8169 = vpop.permute.xlu0 %8168
    %8170 = vrot.lane.b32.xlu0 %v8163, 127
    %v8171 = vpop.permute.xlu0 %8170
    %8172 = vrot.lane.b32.xlu0 %v8165, 127
    %v8173 = vpop.permute.xlu0 %8172
    %v8178 = vadd.f32 %v8026, %v8167
    %v8179 = vadd.f32 %v8027, %v8169
    %v8180 = vadd.f32 %v8028, %v8171
    %v8181 = vadd.f32 %v8029, %v8173
    %s8182 = sld [smem:[#allocation11 + $0xb2]]
    %v8183 = vstv %s8182
    %v8184 = vmul.f32 %v2648, %v8183
    %v8185 = vmul.f32 %v2649, %v8183
    %v8186 = vmul.f32 %v2650, %v8183
    %v8187 = vmul.f32 %v2651, %v8183
    %v8188 = vmul.f32 %v2652, %v8183
    %v8189 = vmul.f32 %v2653, %v8183
    %v8196 = vrot.slane %v8184, 2
    %v8197 = vrot.slane %v8185, 2
    %v8198 = vsel %vm865, %v8196, %v8197
    %v8199 = vrot.slane %v8186, 2
    %v8200 = vsel %vm865, %v8197, %v8199
    %v8201 = vrot.slane %v8187, 2
    %v8202 = vrot.slane %v8188, 2
    %v8203 = vsel %vm865, %v8201, %v8202
    %v8204 = vrot.slane %v8189, 2
    %v8205 = vsel %vm865, %v8202, %v8204
    %8206 = vrot.lane.b32.xlu0 %v8198, 127
    %v8207 = vpop.permute.xlu0 %8206
    %8208 = vrot.lane.b32.xlu0 %v8200, 127
    %v8209 = vpop.permute.xlu0 %8208
    %8210 = vrot.lane.b32.xlu0 %v8203, 127
    %v8211 = vpop.permute.xlu0 %8210
    %8212 = vrot.lane.b32.xlu0 %v8205, 127
    %v8213 = vpop.permute.xlu0 %8212
    %v8218 = vadd.f32 %v8058, %v8207
    %v8219 = vadd.f32 %v8059, %v8209
    %v8220 = vadd.f32 %v8060, %v8211
    %v8221 = vadd.f32 %v8061, %v8213
    %s8222 = sld [smem:[#allocation11 + $0x2c]]
    %v8223 = vstv %s8222
    %v8224 = vmul.f32 %v2648, %v8223
    %v8225 = vmul.f32 %v2649, %v8223
    %v8226 = vmul.f32 %v2650, %v8223
    %v8227 = vmul.f32 %v2651, %v8223
    %v8228 = vmul.f32 %v2652, %v8223
    %v8229 = vmul.f32 %v2653, %v8223
    %v8236 = vrot.slane %v8224, 2
    %v8237 = vrot.slane %v8225, 2
    %v8238 = vsel %vm865, %v8236, %v8237
    %v8239 = vrot.slane %v8226, 2
    %v8240 = vsel %vm865, %v8237, %v8239
    %v8241 = vrot.slane %v8227, 2
    %v8242 = vrot.slane %v8228, 2
    %v8243 = vsel %vm865, %v8241, %v8242
    %v8244 = vrot.slane %v8229, 2
    %v8245 = vsel %vm865, %v8242, %v8244
    %8246 = vrot.lane.b32.xlu0 %v8238, 126
    %v8247 = vpop.permute.xlu0 %8246
    %8248 = vrot.lane.b32.xlu0 %v8240, 126
    %v8249 = vpop.permute.xlu0 %8248
    %8250 = vrot.lane.b32.xlu0 %v8243, 126
    %v8251 = vpop.permute.xlu0 %8250
    %8252 = vrot.lane.b32.xlu0 %v8245, 126
    %v8253 = vpop.permute.xlu0 %8252
    %v8258 = vadd.f32 %v8098, %v8247
    %v8259 = vadd.f32 %v8099, %v8249
    %v8260 = vadd.f32 %v8100, %v8251
    %v8261 = vadd.f32 %v8101, %v8253
    %s8262 = sld [smem:[#allocation11 + $0x59]]
    %v8263 = vstv %s8262
    %v8264 = vmul.f32 %v2648, %v8263
    %v8265 = vmul.f32 %v2649, %v8263
    %v8266 = vmul.f32 %v2650, %v8263
    %v8267 = vmul.f32 %v2651, %v8263
    %v8268 = vmul.f32 %v2652, %v8263
    %v8269 = vmul.f32 %v2653, %v8263
    %v8276 = vrot.slane %v8264, 2
    %v8277 = vrot.slane %v8265, 2
    %v8278 = vsel %vm865, %v8276, %v8277
    %v8279 = vrot.slane %v8266, 2
    %v8280 = vsel %vm865, %v8277, %v8279
    %v8281 = vrot.slane %v8267, 2
    %v8282 = vrot.slane %v8268, 2
    %v8283 = vsel %vm865, %v8281, %v8282
    %v8284 = vrot.slane %v8269, 2
    %v8285 = vsel %vm865, %v8282, %v8284
    %8286 = vrot.lane.b32.xlu0 %v8278, 126
    %v8287 = vpop.permute.xlu0 %8286
    %8288 = vrot.lane.b32.xlu0 %v8280, 126
    %v8289 = vpop.permute.xlu0 %8288
    %8290 = vrot.lane.b32.xlu0 %v8283, 126
    %v8291 = vpop.permute.xlu0 %8290
    %8292 = vrot.lane.b32.xlu0 %v8285, 126
    %v8293 = vpop.permute.xlu0 %8292
    %v8298 = vadd.f32 %v8138, %v8287
    %v8299 = vadd.f32 %v8139, %v8289
    %v8300 = vadd.f32 %v8140, %v8291
    %v8301 = vadd.f32 %v8141, %v8293
    %s8302 = sld [smem:[#allocation11 + $0x86]]
    %v8303 = vstv %s8302
    %v8304 = vmul.f32 %v2648, %v8303
    %v8305 = vmul.f32 %v2649, %v8303
    %v8306 = vmul.f32 %v2650, %v8303
    %v8307 = vmul.f32 %v2651, %v8303
    %v8308 = vmul.f32 %v2652, %v8303
    %v8309 = vmul.f32 %v2653, %v8303
    %v8316 = vrot.slane %v8304, 2
    %v8317 = vrot.slane %v8305, 2
    %v8318 = vsel %vm865, %v8316, %v8317
    %v8319 = vrot.slane %v8306, 2
    %v8320 = vsel %vm865, %v8317, %v8319
    %v8321 = vrot.slane %v8307, 2
    %v8322 = vrot.slane %v8308, 2
    %v8323 = vsel %vm865, %v8321, %v8322
    %v8324 = vrot.slane %v8309, 2
    %v8325 = vsel %vm865, %v8322, %v8324
    %8326 = vrot.lane.b32.xlu0 %v8318, 126
    %v8327 = vpop.permute.xlu0 %8326
    %8328 = vrot.lane.b32.xlu0 %v8320, 126
    %v8329 = vpop.permute.xlu0 %8328
    %8330 = vrot.lane.b32.xlu0 %v8323, 126
    %v8331 = vpop.permute.xlu0 %8330
    %8332 = vrot.lane.b32.xlu0 %v8325, 126
    %v8333 = vpop.permute.xlu0 %8332
    %v8338 = vadd.f32 %v8178, %v8327
    %v8339 = vadd.f32 %v8179, %v8329
    %v8340 = vadd.f32 %v8180, %v8331
    %v8341 = vadd.f32 %v8181, %v8333
    %s8342 = sld [smem:[#allocation11 + $0xb3]]
    %v8343 = vstv %s8342
    %v8344 = vmul.f32 %v2648, %v8343
    %v8345 = vmul.f32 %v2649, %v8343
    %v8346 = vmul.f32 %v2650, %v8343
    %v8347 = vmul.f32 %v2651, %v8343
    %v8348 = vmul.f32 %v2652, %v8343
    %v8349 = vmul.f32 %v2653, %v8343
    %v8356 = vrot.slane %v8344, 2
    %v8357 = vrot.slane %v8345, 2
    %v8358 = vsel %vm865, %v8356, %v8357
    %v8359 = vrot.slane %v8346, 2
    %v8360 = vsel %vm865, %v8357, %v8359
    %v8361 = vrot.slane %v8347, 2
    %v8362 = vrot.slane %v8348, 2
    %v8363 = vsel %vm865, %v8361, %v8362
    %v8364 = vrot.slane %v8349, 2
    %v8365 = vsel %vm865, %v8362, %v8364
    %8366 = vrot.lane.b32.xlu0 %v8358, 126
    %v8367 = vpop.permute.xlu0 %8366
    %8368 = vrot.lane.b32.xlu0 %v8360, 126
    %v8369 = vpop.permute.xlu0 %8368
    %8370 = vrot.lane.b32.xlu0 %v8363, 126
    %v8371 = vpop.permute.xlu0 %8370
    %8372 = vrot.lane.b32.xlu0 %v8365, 126
    %v8373 = vpop.permute.xlu0 %8372
    %v8378 = vadd.f32 %v8218, %v8367
    %v8379 = vadd.f32 %v8219, %v8369
    %v8380 = vadd.f32 %v8220, %v8371
    %v8381 = vadd.f32 %v8221, %v8373
    %v8382 = vmul.f32 %v8258, %v8258
    %v8383 = vmul.f32 %v8259, %v8259
    %v8384 = vmul.f32 %v8260, %v8260
    %v8385 = vmul.f32 %v8261, %v8261
    %v8386 = vmul.f32 %v8382, %v8258
    %v8387 = vmul.f32 %v8383, %v8259
    %v8388 = vmul.f32 %v8384, %v8260
    %v8389 = vmul.f32 %v8385, %v8261
    %v8390 = vmul.f32 %v8386, 0.044715
    %v8391 = vmul.f32 %v8387, 0.044715
    %v8392 = vmul.f32 %v8388, 0.044715
    %v8393 = vmul.f32 %v8389, 0.044715
    %v8394 = vadd.f32 %v8258, %v8390
    %v8395 = vadd.f32 %v8259, %v8391
    %v8396 = vadd.f32 %v8260, %v8392
    %v8397 = vadd.f32 %v8261, %v8393
    %v8398 = vmul.f32 %v8394, 0.7978846
    %v8399 = vmul.f32 %v8395, 0.7978846
    %v8400 = vmul.f32 %v8396, 0.7978846
    %v8401 = vmul.f32 %v8397, 0.7978846
    %v8402 = vtanh.pop %v8398
    %v8403 = vtanh.pop %v8399
    %v8404 = vtanh.pop %v8400
    %v8405 = vtanh.pop %v8401
    %v8406 = vmul.f32 %v8258, 0.5
    %v8407 = vmul.f32 %v8259, 0.5
    %v8408 = vmul.f32 %v8260, 0.5
    %v8409 = vmul.f32 %v8261, 0.5
    %v8410 = vadd.f32 %v8402, 1.0
    %v8411 = vadd.f32 %v8403, 1.0
    %v8412 = vadd.f32 %v8404, 1.0
    %v8413 = vadd.f32 %v8405, 1.0
    %v8414 = vmul.f32 %v8406, %v8410
    %v8415 = vmul.f32 %v8407, %v8411
    %v8416 = vmul.f32 %v8408, %v8412
    %v8417 = vmul.f32 %v8409, %v8413
    %vm8418 = vcmask 130048
    %8419 = vst.msk [vmem:[#allocation14] sm:$0xff] %vm8418, %v8414
    %8420 = vst.msk [vmem:[#allocation14 + $0x8] sm:$0xff] %vm8418, %v8415
    %8421 = vst.msk [vmem:[#allocation14 + $0x40] sm:$0xff] %vm8418, %v8416
    %8422 = vst.msk [vmem:[#allocation14 + $0x48] sm:$0xff] %vm8418, %v8417
    %v8423 = vmul.f32 %v8298, %v8298
    %v8424 = vmul.f32 %v8299, %v8299
    %v8425 = vmul.f32 %v8300, %v8300
    %v8426 = vmul.f32 %v8301, %v8301
    %v8427 = vmul.f32 %v8423, %v8298
    %v8428 = vmul.f32 %v8424, %v8299
    %v8429 = vmul.f32 %v8425, %v8300
    %v8430 = vmul.f32 %v8426, %v8301
    %v8431 = vmul.f32 %v8427, 0.044715
    %v8432 = vmul.f32 %v8428, 0.044715
    %v8433 = vmul.f32 %v8429, 0.044715
    %v8434 = vmul.f32 %v8430, 0.044715
    %v8435 = vadd.f32 %v8298, %v8431
    %v8436 = vadd.f32 %v8299, %v8432
    %v8437 = vadd.f32 %v8300, %v8433
    %v8438 = vadd.f32 %v8301, %v8434
    %v8439 = vmul.f32 %v8435, 0.7978846
    %v8440 = vmul.f32 %v8436, 0.7978846
    %v8441 = vmul.f32 %v8437, 0.7978846
    %v8442 = vmul.f32 %v8438, 0.7978846
    %v8443 = vtanh.pop %v8439
    %v8444 = vtanh.pop %v8440
    %v8445 = vtanh.pop %v8441
    %v8446 = vtanh.pop %v8442
    %v8447 = vmul.f32 %v8298, 0.5
    %v8448 = vmul.f32 %v8299, 0.5
    %v8449 = vmul.f32 %v8300, 0.5
    %v8450 = vmul.f32 %v8301, 0.5
    %v8451 = vadd.f32 %v8443, 1.0
    %v8452 = vadd.f32 %v8444, 1.0
    %v8453 = vadd.f32 %v8445, 1.0
    %v8454 = vadd.f32 %v8446, 1.0
    %v8455 = vmul.f32 %v8447, %v8451
    %v8456 = vmul.f32 %v8448, %v8452
    %v8457 = vmul.f32 %v8449, %v8453
    %v8458 = vmul.f32 %v8450, %v8454
    %s8459 = scalar_lea.vmem [#allocation14], 16
    %8460 = vst.msk [vmem:[%s8459] sm:$0xff] %vm8418, %v8455
    %8461 = vst.msk [vmem:[%s8459 + $0x8] sm:$0xff] %vm8418, %v8456
    %8462 = vst.msk [vmem:[%s8459 + $0x40] sm:$0xff] %vm8418, %v8457
    %8463 = vst.msk [vmem:[%s8459 + $0x48] sm:$0xff] %vm8418, %v8458
    %v8464 = vmul.f32 %v8338, %v8338
    %v8465 = vmul.f32 %v8339, %v8339
    %v8466 = vmul.f32 %v8340, %v8340
    %v8467 = vmul.f32 %v8341, %v8341
    %v8468 = vmul.f32 %v8464, %v8338
    %v8469 = vmul.f32 %v8465, %v8339
    %v8470 = vmul.f32 %v8466, %v8340
    %v8471 = vmul.f32 %v8467, %v8341
    %v8472 = vmul.f32 %v8468, 0.044715
    %v8473 = vmul.f32 %v8469, 0.044715
    %v8474 = vmul.f32 %v8470, 0.044715
    %v8475 = vmul.f32 %v8471, 0.044715
    %v8476 = vadd.f32 %v8338, %v8472
    %v8477 = vadd.f32 %v8339, %v8473
    %v8478 = vadd.f32 %v8340, %v8474
    %v8479 = vadd.f32 %v8341, %v8475
    %v8480 = vmul.f32 %v8476, 0.7978846
    %v8481 = vmul.f32 %v8477, 0.7978846
    %v8482 = vmul.f32 %v8478, 0.7978846
    %v8483 = vmul.f32 %v8479, 0.7978846
    %v8484 = vtanh.pop %v8480
    %v8485 = vtanh.pop %v8481
    %v8486 = vtanh.pop %v8482
    %v8487 = vtanh.pop %v8483
    %v8488 = vmul.f32 %v8338, 0.5
    %v8489 = vmul.f32 %v8339, 0.5
    %v8490 = vmul.f32 %v8340, 0.5
    %v8491 = vmul.f32 %v8341, 0.5
    %v8492 = vadd.f32 %v8484, 1.0
    %v8493 = vadd.f32 %v8485, 1.0
    %v8494 = vadd.f32 %v8486, 1.0
    %v8495 = vadd.f32 %v8487, 1.0
    %v8496 = vmul.f32 %v8488, %v8492
    %v8497 = vmul.f32 %v8489, %v8493
    %v8498 = vmul.f32 %v8490, %v8494
    %v8499 = vmul.f32 %v8491, %v8495
    %s8500 = scalar_lea.vmem [#allocation14], 32
    %8501 = vst.msk [vmem:[%s8500] sm:$0xff] %vm8418, %v8496
    %8502 = vst.msk [vmem:[%s8500 + $0x8] sm:$0xff] %vm8418, %v8497
    %8503 = vst.msk [vmem:[%s8500 + $0x40] sm:$0xff] %vm8418, %v8498
    %8504 = vst.msk [vmem:[%s8500 + $0x48] sm:$0xff] %vm8418, %v8499
    %v8505 = vmul.f32 %v8378, %v8378
    %v8506 = vmul.f32 %v8379, %v8379
    %v8507 = vmul.f32 %v8380, %v8380
    %v8508 = vmul.f32 %v8381, %v8381
    %v8509 = vmul.f32 %v8505, %v8378
    %v8510 = vmul.f32 %v8506, %v8379
    %v8511 = vmul.f32 %v8507, %v8380
    %v8512 = vmul.f32 %v8508, %v8381
    %v8513 = vmul.f32 %v8509, 0.044715
    %v8514 = vmul.f32 %v8510, 0.044715
    %v8515 = vmul.f32 %v8511, 0.044715
    %v8516 = vmul.f32 %v8512, 0.044715
    %v8517 = vadd.f32 %v8378, %v8513
    %v8518 = vadd.f32 %v8379, %v8514
    %v8519 = vadd.f32 %v8380, %v8515
    %v8520 = vadd.f32 %v8381, %v8516
    %v8521 = vmul.f32 %v8517, 0.7978846
    %v8522 = vmul.f32 %v8518, 0.7978846
    %v8523 = vmul.f32 %v8519, 0.7978846
    %v8524 = vmul.f32 %v8520, 0.7978846
    %v8525 = vtanh.pop %v8521
    %v8526 = vtanh.pop %v8522
    %v8527 = vtanh.pop %v8523
    %v8528 = vtanh.pop %v8524
    %v8529 = vmul.f32 %v8378, 0.5
    %v8530 = vmul.f32 %v8379, 0.5
    %v8531 = vmul.f32 %v8380, 0.5
    %v8532 = vmul.f32 %v8381, 0.5
    %v8533 = vadd.f32 %v8525, 1.0
    %v8534 = vadd.f32 %v8526, 1.0
    %v8535 = vadd.f32 %v8527, 1.0
    %v8536 = vadd.f32 %v8528, 1.0
    %v8537 = vmul.f32 %v8529, %v8533
    %v8538 = vmul.f32 %v8530, %v8534
    %v8539 = vmul.f32 %v8531, %v8535
    %v8540 = vmul.f32 %v8532, %v8536
    %s8541 = scalar_lea.vmem [#allocation14], 48
    %8542 = vst.msk [vmem:[%s8541] sm:$0xff] %vm8418, %v8537
    %8543 = vst.msk [vmem:[%s8541 + $0x8] sm:$0xff] %vm8418, %v8538
    %8544 = vst.msk [vmem:[%s8541 + $0x40] sm:$0xff] %vm8418, %v8539
    %8545 = vst.msk [vmem:[%s8541 + $0x48] sm:$0xff] %vm8418, %v8540
    // Predicated region
    $region42: #{tpu_custom_call.1} parent=1 // pred_check
      _
    $region43: #{tpu_custom_call.1} parent=1 // pred_check_branch
      %8547 = sbr.rel (0) target = $region45
    $region44: #{tpu_custom_call.1} parent=1 // pred_region
      %8549 = vsyncadd [#allocation5], 0
      %s8550 = sshll.u32 [#allocation14], 4
      %s8551 = int_to_ptr.vmem [resolvable:$true] %s8550
      %s8552 = sshll.u32 %s5, 4
      %s8553 = int_to_ptr.hbm [resolvable:$true] %s8552
      %8558 = dma.vmem_to_hbm [thread:$0]  %s8551, 2048, %s8553, [#allocation5], 128, 128, 8
    $region45: #{tpu_custom_call.1} parent=1 // pred_fallthru
      _
    // Predicated region
    $region46: #{tpu_custom_call.1} parent=1 // pred_check
      _
    $region47: #{tpu_custom_call.1} parent=1 // pred_check_branch
      %8560 = sbr.rel (0) target = $region49
    $region48: #{tpu_custom_call.1} parent=1 // pred_region
      %8562 = dma.done [#allocation5], 2048
    $region49: #{tpu_custom_call.1} parent=1 // pred_fallthru
      _
    %8563 = vsyncpa [#allocation4], 1
    %8564 = vsyncpa [#allocation5], 1
    %8565 = vsyncpa [#allocation6], 1
    %8566 = vsyncpa [#allocation10], 1
    %8567 = vsyncpa [#allocation7], 1
    %8568 = vsyncpa [#allocation13], 1

</llo_original>
